<compile_context>
chip_gen: v7x
topology: tpu7x:2x2x1
jax: 0.10.0
libtpu: 0.0.40
codegen_flags: <defaults>
</compile_context>

<pallas_src>
import functools

import jax
import jax.numpy as jnp
from jax.experimental import pallas as pl
from jax.experimental.pallas import tpu as pltpu

EPS = 1e-5
_KS = 5                                # fused footprint: 5x5 covers both branches


# --------------------------------------------------------------------------
# generation-aware VMEM budgeting
# --------------------------------------------------------------------------
def _vmem_limits():
    """Return (scoped vmem_limit_bytes, per-step working-set budget)."""
    try:
        cap = int(pltpu.get_tpu_info().vmem_capacity_bytes)
    except Exception:                                    # conservative fallback
        cap = 64 * 1024 * 1024
    if cap <= 64 * 1024 * 1024:
        # v7x-class parts (64 MiB): leave headroom for compiler scratch.
        return min(int(cap * 0.65), 42 * 1024 * 1024), min(int(cap * 0.2), 10 * 1024 * 1024)
    # v5e / v6e (128 MiB VMEM): spend it on big tiles.
    return 100 * 1024 * 1024, 40 * 1024 * 1024


def _pick_tile_h(H, W, cin, c2, n_batch, budget_bytes, pack_taps):
    """Largest H-tile (divides H, multiple of 4) whose working set fits the
    budget, preferring tiles that leave >=2 grid steps for megacore."""
    cands = [t for t in (256, 128, 64, 32, 16, 8, 4)
             if H % t == 0 and (t == H or (t * W) % 16 == 0)]
    if not cands:
        return H
    k_taps = _KS * _KS if pack_taps else _KS

    def work(th):
        return (2 * 2 * th * W * cin                    # bf16 body input, 2x buffered
                + 2 * 2 * 2 * 4 * W * cin               # two 4-row halo blocks, 2x buffered
                + 2 * 2 * _KS * _KS * cin * c2          # bf16 weights (2x buffered today)
                + 2 * (th + 4) * (W + 4) * cin          # bf16 padded activation slab
                + 2 * th * W * k_taps * cin             # bf16 im2col patch
                + 4 * th * W * c2                       # f32 accumulator
                + 2 * 2 * th * W * c2)                  # bf16 y output, 2x buffered

    fitting = [t for t in cands if work(t) <= budget_bytes]
    if not fitting:
        return cands[-1]
    multi = [t for t in fitting if n_batch * (H // t) >= 2]
    return multi[0] if multi else fitting[0]


def _pick_tile_m(m, c2, budget_bytes):
    """Row-tile for the elementwise epilogue (>=2 grid steps when possible)."""
    for tm in (8192, 4096, 2048, 1024, 512, 256, 128, 64, 32, 16):
        if m % tm == 0 and m // tm >= 2 and tm * c2 * 12 <= budget_bytes:
            return tm
    return m


# --------------------------------------------------------------------------
# kernels
# --------------------------------------------------------------------------
def _conv_stage_kernel(xb_ref, xt_ref, xd_ref, scale_ref, shift_ref, w_ref,
                       y_ref, st_ref, *, th, w_out, cin, apply_prologue, pack_taps):
    """One (batch, H-tile) grid step of the fused dual-branch conv.

    xb_ref : (1, th, W, Cin)   body rows of the UNPADDED input
    xt_ref : (1, 4,  W, Cin)   4 rows just above the body (clamped at the top)
    xd_ref : (1, 4,  W, Cin)   4 rows just below the body (clamped at the bottom)
    scale/shift : (1, Cin) f32 folded BN of the PREVIOUS stage (fused prologue)
    w_ref  : (25*Cin, C2) bf16 fused (3x3 zero-padded || 5x5) weights
    y_ref  : (1, th*W, C2) bf16 raw pre-BN conv output tile
    st_ref : (1, 1, 2, C2) f32  per-tile [sum, sum_sq] of the f32 accumulator
    """
    c2 = w_ref.shape[-1]
    t = pl.program_id(1)
    n_h = pl.num_programs(1)

    if apply_prologue:
        scale = scale_ref[...].reshape(1, 1, cin)
        shift = shift_ref[...].reshape(1, 1, cin)

    def prologue(v):
        v = v.astype(jnp.float32)
        if apply_prologue:                 # previous stage's BN + ReLU, fused here
            v = jnp.maximum(v * scale + shift, 0.0)
        return v

    body = prologue(xb_ref[...][0])                      # (th, W, Cin)
    top = prologue(xt_ref[...][0, 2:4])                  # (2,  W, Cin)
    bot = prologue(xd_ref[...][0, 0:2])                  # (2,  W, Cin)
    # Zero the H halo at the image boundary -> conv zero padding of the
    # (post-prologue) activation, exactly like padding=1/2 in the module.
    top = top * jnp.where(t > 0, 1.0, 0.0)
    bot = bot * jnp.where(t < n_h - 1, 1.0, 0.0)

    # (th+4, W+4, Cin) bf16 activation slab with the 2-column W zero padding.
    # TODO(synk): replace the slab/patch concats with pltpu.roll + iota masks to
    # avoid the extra VMEM copies if they ever dominate the MXU time.
    rows = jnp.concatenate([top, body, bot], axis=0).astype(jnp.bfloat16)
    zcol = jnp.zeros((th + 4, 2, cin), jnp.bfloat16)
    slab = jnp.concatenate([zcol, rows, zcol], axis=1)

    if pack_taps:
        # Small Cin: all 25 taps in one K=25*Cin matmul (fills the 256-deep MXU).
        patch = jnp.concatenate(
            [slab[kh:kh + th, kw:kw + w_out, :]
             for kh in range(_KS) for kw in range(_KS)], axis=-1)
        acc = jnp.dot(patch.reshape(th * w_out, _KS * _KS * cin), w_ref[...],
                      preferred_element_type=jnp.float32)
    else:
        # Large Cin: one matmul per kh tap (K = 5*Cin is already MXU-deep).
        acc = jnp.zeros((th * w_out, c2), jnp.float32)
        w_all = w_ref[...]
        for kh in range(_KS):
            rows_kh = slab[kh:kh + th]
            patch = jnp.concatenate(
                [rows_kh[:, kw:kw + w_out, :] for kw in range(_KS)], axis=-1)
            acc += jnp.dot(patch.reshape(th * w_out, _KS * cin),
                           w_all[kh * _KS * cin:(kh + 1) * _KS * cin, :],
                           preferred_element_type=jnp.float32)

    # bf16 pre-BN activation (stats below stay in f32).  Lane dim is C2, which
    # is >=128 at production channel counts (Cmid >= 64).
    y_ref[...] = acc.reshape(1, th * w_out, c2).astype(y_ref.dtype)
    ssum = jnp.sum(acc, axis=0, keepdims=True)            # (1, C2)
    ssq = jnp.sum(acc * acc, axis=0, keepdims=True)       # (1, C2)
    st_ref[...] = jnp.concatenate([ssum, ssq], axis=0).reshape(1, 1, 2, c2)


def _bn_relu_kernel(y_ref, scale_ref, shift_ref, o_ref):
    """Final elementwise epilogue: y * scale + shift, then ReLU."""
    y = y_ref[...].astype(jnp.float32)
    o_ref[...] = jnp.maximum(y * scale_ref[...] + shift_ref[...],
                             0.0).astype(o_ref.dtype)


# --------------------------------------------------------------------------
# wrappers
# --------------------------------------------------------------------------
def _fold_bn(mean, var, gamma, beta):
    inv = jax.lax.rsqrt(var + EPS)
    scale = gamma * inv
    shift = beta - mean * scale
    return (scale.reshape(1, -1).astype(jnp.float32),
            shift.reshape(1, -1).astype(jnp.float32))


def _conv_stage(x_nhwc, w3, w5, scale_in, shift_in, *, apply_prologue, tile_h=None):
    """Fused (prev-stage BN/ReLU prologue) + (conv3x3 || conv5x5) pair.

    Returns (y, mean, var): y is the raw pre-BN conv output of shape
    (N, H*W, 2*Cmid) in bf16; mean/var are the training-mode batch statistics.
    """
    N, H, W, Cin = x_nhwc.shape
    Cmid = w3.shape[-1]
    C2 = 2 * Cmid
    assert H % 4 == 0 and H >= 4, "this kernel assumes H is a multiple of 4"

    vmem_limit, tile_budget = _vmem_limits()
    pack_taps = (_KS * Cin) < 256          # fill the MXU K-dim on small Cin stages
    TH = tile_h if tile_h is not None else _pick_tile_h(
        H, W, Cin, C2, N, tile_budget, pack_taps)
    assert H % TH == 0 and TH % 4 == 0, (H, TH)
    assert TH == H or (TH * W) % 16 == 0, (TH, W)
    n_h = H // TH
    hb = TH // 4
    nb_h = H // 4

    # Branch fusion: zero-pad the 3x3 kernel to 5x5 and concatenate with the
    # 5x5 kernel along output channels -> single (25*Cin, 2*Cmid) bf16 weight.
    w3p = jnp.zeros((_KS, _KS, Cin, Cmid), w3.dtype).at[1:4, 1:4].set(w3)
    w_comb = jnp.concatenate([w3p, w5], axis=-1).reshape(_KS * _KS * Cin, C2)
    w_comb = w_comb.astype(jnp.bfloat16)

    if scale_in is None:                   # stage 1: no fused prologue
        scale_in = jnp.ones((1, Cin), jnp.float32)
        shift_in = jnp.zeros((1, Cin), jnp.float32)

    x_in = x_nhwc.astype(jnp.bfloat16)

    kernel = functools.partial(
        _conv_stage_kernel, th=TH, w_out=W, cin=Cin,
        apply_prologue=apply_prologue, pack_taps=pack_taps)

    y, stats = pl.pallas_call(
        kernel,
        grid=(N, n_h),
        in_specs=[
            # body rows [t*TH, t*TH+TH) of the unpadded input
            pl.BlockSpec((1, TH, W, Cin), lambda n, t: (n, t, 0, 0)),
            # 4 rows just above the body tile (clamped at the top edge)
            pl.BlockSpec((1, 4, W, Cin),
                         lambda n, t: (n, jnp.maximum(t * hb - 1, 0), 0, 0)),
            # 4 rows just below the body tile (clamped at the bottom edge)
            pl.BlockSpec((1, 4, W, Cin),
                         lambda n, t: (n, jnp.minimum((t + 1) * hb, nb_h - 1), 0, 0)),
            # folded BN scale/shift of the previous stage (tiny, resident)
            pl.BlockSpec((1, Cin), lambda n, t: (0, 0)),
            pl.BlockSpec((1, Cin), lambda n, t: (0, 0)),
            # fused weights: constant block index, stays resident across the grid
            # TODO(synk): single-buffer this block (pl.Buffered(1)) on v7x once
            # pipeline_mode is reliably plumbed through grid-based pallas_call.
            pl.BlockSpec((_KS * _KS * Cin, C2), lambda n, t: (0, 0)),
        ],
        out_specs=[
            pl.BlockSpec((1, TH * W, C2), lambda n, t: (n, t, 0)),
            pl.BlockSpec((1, 1, 2, C2), lambda n, t: (n, t, 0, 0)),
        ],
        out_shape=[
            jax.ShapeDtypeStruct((N, H * W, C2), jnp.bfloat16),
            jax.ShapeDtypeStruct((N, n_h, 2, C2), jnp.float32),
        ],
        compiler_params=pltpu.CompilerParams(
            dimension_semantics=("parallel", "parallel"),
            vmem_limit_bytes=vmem_limit,
        ),
    )(x_in, x_in, x_in, scale_in, shift_in, w_comb)

    m = N * H * W
    ssum = jnp.sum(stats[:, :, 0, :], axis=(0, 1))
    ssq = jnp.sum(stats[:, :, 1, :], axis=(0, 1))
    mean = ssum / m
    var = jnp.maximum(ssq / m - mean * mean, 0.0)   # biased variance (BN train mode)
    return y, mean, var


def _bn_relu(y_flat, scale, shift):
    """Final-stage BN + ReLU over a flattened (M, C2) bf16 activation -> f32."""
    M, C2 = y_flat.shape
    vmem_limit, tile_budget = _vmem_limits()
    TM = _pick_tile_m(M, C2, tile_budget)
    return pl.pallas_call(
        _bn_relu_kernel,
        grid=(M // TM,),
        in_specs=[
            pl.BlockSpec((TM, C2), lambda i: (i, 0)),
            pl.BlockSpec((1, C2), lambda i: (0, 0)),
            pl.BlockSpec((1, C2), lambda i: (0, 0)),
        ],
        out_specs=pl.BlockSpec((TM, C2), lambda i: (i, 0)),
        out_shape=jax.ShapeDtypeStruct((M, C2), jnp.float32),
        compiler_params=pltpu.CompilerParams(
            dimension_semantics=("parallel",),
            vmem_limit_bytes=vmem_limit),
    )(y_flat, scale, shift)


def init_params(key, in_channels, out_channels, mid_channels=None):
    if not mid_channels:
        mid_channels = out_channels
    ks = jax.random.split(key, 12)
    s = 0.1
    # Conv biases are kept only for parity with the PyTorch module: training-
    # mode BatchNorm cancels them exactly, so the kernels do not consume them.
    return {
        "w13": s * jax.random.normal(ks[0], (3, 3, in_channels, mid_channels), jnp.float32),
        "b13": s * jax.random.normal(ks[1], (mid_channels,), jnp.float32),
        "w15": s * jax.random.normal(ks[2], (5, 5, in_channels, mid_channels), jnp.float32),
        "b15": s * jax.random.normal(ks[3], (mid_channels,), jnp.float32),
        "g1": 1.0 + s * jax.random.normal(ks[8], (2 * mid_channels,), jnp.float32),
        "be1": s * jax.random.normal(ks[9], (2 * mid_channels,), jnp.float32),
        "w23": s * jax.random.normal(ks[4], (3, 3, 2 * mid_channels, out_channels), jnp.float32),
        "b23": s * jax.random.normal(ks[5], (out_channels,), jnp.float32),
        "w25": s * jax.random.normal(ks[6], (5, 5, 2 * mid_channels, out_channels), jnp.float32),
        "b25": s * jax.random.normal(ks[7], (out_channels,), jnp.float32),
        "g2": 1.0 + s * jax.random.normal(ks[10], (2 * out_channels,), jnp.float32),
        "be2": s * jax.random.normal(ks[11], (2 * out_channels,), jnp.float32),
    }


@functools.partial(jax.jit, static_argnames=("tile_h",))
def double_conv(x_nchw, params, tile_h=None):
    """DoubleConv forward pass.  Input/output are NCHW like the PyTorch module."""
    x = jnp.transpose(x_nchw, (0, 2, 3, 1))                    # NCHW -> NHWC
    N, H, W, _ = x.shape

    # Stage 1: (conv3||conv5) + batch stats.  Its BN/ReLU is deferred and fused
    # into the input path of stage 2's conv kernel.
    y1, m1, v1 = _conv_stage(x, params["w13"], params["w15"], None, None,
                             apply_prologue=False, tile_h=tile_h)
    s1, b1 = _fold_bn(m1, v1, params["g1"], params["be1"])

    # Stage 2: BN1+ReLU1 prologue fused, then (conv3||conv5) + batch stats.
    C2_1 = y1.shape[-1]
    y2, m2, v2 = _conv_stage(y1.reshape(N, H, W, C2_1),
                             params["w23"], params["w25"], s1, b1,
                             apply_prologue=True, tile_h=tile_h)
    s2, b2 = _fold_bn(m2, v2, params["g2"], params["be2"])

    # Final BN2 + ReLU2 epilogue (f32 module output).
    C2_2 = y2.shape[-1]
    out = _bn_relu(y2.reshape(N * H * W, C2_2), s2, b2)
    return jnp.transpose(out.reshape(N, H, W, C2_2), (0, 3, 1, 2))   # -> NCHW


# --------------------------------------------------------------------------
# pure-JAX reference (mirrors the kernel's precision: bf16 conv inputs and a
# bf16 pre-BN intermediate; includes the conv biases to demonstrate that
# train-mode BN cancels them)
# --------------------------------------------------------------------------
def _ref_stage(x, w3, b3, w5, b5, gamma, beta):
    dn = ("NHWC", "HWIO", "NHWC")
    xb = x.astype(jnp.bfloat16)
    o3 = jax.lax.conv_general_dilated(
        xb, w3.astype(jnp.bfloat16), (1, 1), ((1, 1), (1, 1)),
        dimension_numbers=dn, preferred_element_type=jnp.float32) + b3
    o5 = jax.lax.conv_general_dilated(
        xb, w5.astype(jnp.bfloat16), (1, 1), ((2, 2), (2, 2)),
        dimension_numbers=dn, preferred_element_type=jnp.float32) + b5
    y32 = jnp.concatenate([o3, o5], axis=-1)
    mean = jnp.mean(y32, axis=(0, 1, 2), keepdims=True)
    var = jnp.mean((y32 - mean) ** 2, axis=(0, 1, 2), keepdims=True)
    y = y32.astype(jnp.bfloat16).astype(jnp.float32)     # mirror bf16 storage of y
    y = (y - mean) * jax.lax.rsqrt(var + EPS) * gamma + beta
    return jnp.maximum(y, 0.0)


def double_conv_ref(x_nchw, p):
    x = jnp.transpose(x_nchw, (0, 2, 3, 1))
    h = _ref_stage(x, p["w13"], p["b13"], p["w15"], p["b15"], p["g1"], p["be1"])
    o = _ref_stage(h, p["w23"], p["b23"], p["w25"], p["b25"], p["g2"], p["be2"])
    return jnp.transpose(o, (0, 3, 1, 2))


if __name__ == "__main__":
    key = jax.random.PRNGKey(0)
    kx, kp = jax.random.split(key)

    N, Cin, H, W = 2, 4, 16, 16
    Cout = 8                       # mid_channels defaults to out_channels
    x = jax.random.normal(kx, (N, Cin, H, W), jnp.float32)
    params = init_params(kp, Cin, Cout)

    # default tile choice
    out = jax.block_until_ready(double_conv(x, params))
    assert out.shape == (N, 2 * Cout, H, W), out.shape
    # force multiple H-tiles to exercise the halo / partial-stats path
    out_t8 = jax.block_until_ready(double_conv(x, params, tile_h=8))

    ref = double_conv_ref(x, params)
    err = float(jnp.max(jnp.abs(out - ref)))
    err8 = float(jnp.max(jnp.abs(out_t8 - ref)))
    assert jnp.allclose(out, ref, rtol=3e-2, atol=3e-2), err
    assert jnp.allclose(out_t8, ref, rtol=3e-2, atol=3e-2), err8

    print("KERNEL_OK")
</pallas_src>

<mosaic_0001>
module attributes {stable_mosaic.version = 11 : i64} {
  func.func @_conv_stage_kernel(%arg0: i32, %arg1: i32, %arg2: memref<1x16x16x4xbf16, #tpu.memory_space<vmem>>, %arg3: memref<1x4x16x4xbf16, #tpu.memory_space<vmem>>, %arg4: memref<1x4x16x4xbf16, #tpu.memory_space<vmem>>, %arg5: memref<1x4xf32, #tpu.memory_space<vmem>>, %arg6: memref<1x4xf32, #tpu.memory_space<vmem>>, %arg7: memref<100x16xbf16, #tpu.memory_space<vmem>>, %arg8: memref<1x256x16xbf16, #tpu.memory_space<vmem>>, %arg9: memref<1x1x2x16xf32, #tpu.memory_space<vmem>>) attributes {dimension_semantics = [#tpu.dimension_semantics<parallel>, #tpu.dimension_semantics<parallel>], iteration_bounds = array<i64: 2, 1>, scalar_prefetch = 0 : i64, scratch_operands = 0 : i64, tpu.core_type = #tpu.core_type<tc>, window_params = [{transform_indices = @transform_0, window_bounds = array<i64: 1, 16, 16, 4>}, {transform_indices = @transform_1, window_bounds = array<i64: 1, 4, 16, 4>}, {transform_indices = @transform_2, window_bounds = array<i64: 1, 4, 16, 4>}, {pipeline_mode = #tpu.pipeline_mode<synchronous>, transform_indices = @transform_3, window_bounds = array<i64: 1, 4>}, {pipeline_mode = #tpu.pipeline_mode<synchronous>, transform_indices = @transform_4, window_bounds = array<i64: 1, 4>}, {pipeline_mode = #tpu.pipeline_mode<synchronous>, transform_indices = @transform_5, window_bounds = array<i64: 100, 16>}, {transform_indices = @transform_6, window_bounds = array<i64: 1, 256, 16>}, {transform_indices = @transform_7, window_bounds = array<i64: 1, 1, 2, 16>}]} {
    %c0 = arith.constant 0 : index
    %c0_0 = arith.constant 0 : index
    %c0_1 = arith.constant 0 : index
    %c0_2 = arith.constant 0 : index
    %0 = vector.load %arg2[%c0, %c0_0, %c0_1, %c0_2] : memref<1x16x16x4xbf16, #tpu.memory_space<vmem>>, vector<1x16x16x4xbf16>
    %1 = vector.shape_cast %0 : vector<1x16x16x4xbf16> to vector<16x16x4xbf16>
    %2 = arith.extf %1 : vector<16x16x4xbf16> to vector<16x16x4xf32>
    %c0_3 = arith.constant 0 : index
    %c0_4 = arith.constant 0 : index
    %c0_5 = arith.constant 0 : index
    %c0_6 = arith.constant 0 : index
    %3 = vector.load %arg3[%c0_3, %c0_4, %c0_5, %c0_6] : memref<1x4x16x4xbf16, #tpu.memory_space<vmem>>, vector<1x4x16x4xbf16>
    %4 = vector.extract_strided_slice %3 {offsets = [0, 2, 0, 0], sizes = [1, 2, 16, 4], strides = [1, 1, 1, 1]} : vector<1x4x16x4xbf16> to vector<1x2x16x4xbf16>
    %5 = vector.shape_cast %4 : vector<1x2x16x4xbf16> to vector<2x16x4xbf16>
    %6 = arith.extf %5 : vector<2x16x4xbf16> to vector<2x16x4xf32>
    %c0_7 = arith.constant 0 : index
    %c0_8 = arith.constant 0 : index
    %c0_9 = arith.constant 0 : index
    %c0_10 = arith.constant 0 : index
    %7 = vector.load %arg4[%c0_7, %c0_8, %c0_9, %c0_10] : memref<1x4x16x4xbf16, #tpu.memory_space<vmem>>, vector<1x4x16x4xbf16>
    %8 = vector.extract_strided_slice %7 {offsets = [0, 0, 0, 0], sizes = [1, 2, 16, 4], strides = [1, 1, 1, 1]} : vector<1x4x16x4xbf16> to vector<1x2x16x4xbf16>
    %9 = vector.shape_cast %8 : vector<1x2x16x4xbf16> to vector<2x16x4xbf16>
    %10 = arith.extf %9 : vector<2x16x4xbf16> to vector<2x16x4xf32>
    %c0_i32 = arith.constant 0 : i32
    %11 = arith.cmpi sgt, %arg1, %c0_i32 : i32
    %cst = arith.constant 1.000000e+00 : f32
    %cst_11 = arith.constant 0.000000e+00 : f32
    %12 = arith.select %11, %cst, %cst_11 : f32
    %13 = vector.broadcast %12 : f32 to vector<2x16x4xf32>
    %14 = arith.mulf %6, %13 : vector<2x16x4xf32>
    %c0_i32_12 = arith.constant 0 : i32
    %15 = arith.cmpi slt, %arg1, %c0_i32_12 : i32
    %cst_13 = arith.constant 1.000000e+00 : f32
    %cst_14 = arith.constant 0.000000e+00 : f32
    %16 = arith.select %15, %cst_13, %cst_14 : f32
    %17 = vector.broadcast %16 : f32 to vector<2x16x4xf32>
    %18 = arith.mulf %10, %17 : vector<2x16x4xf32>
    %19 = tpu.concatenate %14, %2, %18 in 0 : vector<2x16x4xf32>, vector<16x16x4xf32>, vector<2x16x4xf32> -> vector<20x16x4xf32>
    %20 = arith.truncf %19 : vector<20x16x4xf32> to vector<20x16x4xbf16>
    %cst_15 = arith.constant 0.000000e+00 : bf16
    %21 = vector.broadcast %cst_15 : bf16 to vector<20x2x4xbf16>
    %22 = tpu.concatenate %21, %20, %21 in 1 : vector<20x2x4xbf16>, vector<20x16x4xbf16>, vector<20x2x4xbf16> -> vector<20x20x4xbf16>
    %23 = vector.extract_strided_slice %22 {offsets = [0, 0, 0], sizes = [16, 16, 4], strides = [1, 1, 1]} : vector<20x20x4xbf16> to vector<16x16x4xbf16>
    %24 = vector.extract_strided_slice %22 {offsets = [0, 1, 0], sizes = [16, 16, 4], strides = [1, 1, 1]} : vector<20x20x4xbf16> to vector<16x16x4xbf16>
    %25 = vector.extract_strided_slice %22 {offsets = [0, 2, 0], sizes = [16, 16, 4], strides = [1, 1, 1]} : vector<20x20x4xbf16> to vector<16x16x4xbf16>
    %26 = vector.extract_strided_slice %22 {offsets = [0, 3, 0], sizes = [16, 16, 4], strides = [1, 1, 1]} : vector<20x20x4xbf16> to vector<16x16x4xbf16>
    %27 = vector.extract_strided_slice %22 {offsets = [0, 4, 0], sizes = [16, 16, 4], strides = [1, 1, 1]} : vector<20x20x4xbf16> to vector<16x16x4xbf16>
    %28 = vector.extract_strided_slice %22 {offsets = [1, 0, 0], sizes = [16, 16, 4], strides = [1, 1, 1]} : vector<20x20x4xbf16> to vector<16x16x4xbf16>
    %29 = vector.extract_strided_slice %22 {offsets = [1, 1, 0], sizes = [16, 16, 4], strides = [1, 1, 1]} : vector<20x20x4xbf16> to vector<16x16x4xbf16>
    %30 = vector.extract_strided_slice %22 {offsets = [1, 2, 0], sizes = [16, 16, 4], strides = [1, 1, 1]} : vector<20x20x4xbf16> to vector<16x16x4xbf16>
    %31 = vector.extract_strided_slice %22 {offsets = [1, 3, 0], sizes = [16, 16, 4], strides = [1, 1, 1]} : vector<20x20x4xbf16> to vector<16x16x4xbf16>
    %32 = vector.extract_strided_slice %22 {offsets = [1, 4, 0], sizes = [16, 16, 4], strides = [1, 1, 1]} : vector<20x20x4xbf16> to vector<16x16x4xbf16>
    %33 = vector.extract_strided_slice %22 {offsets = [2, 0, 0], sizes = [16, 16, 4], strides = [1, 1, 1]} : vector<20x20x4xbf16> to vector<16x16x4xbf16>
    %34 = vector.extract_strided_slice %22 {offsets = [2, 1, 0], sizes = [16, 16, 4], strides = [1, 1, 1]} : vector<20x20x4xbf16> to vector<16x16x4xbf16>
    %35 = vector.extract_strided_slice %22 {offsets = [2, 2, 0], sizes = [16, 16, 4], strides = [1, 1, 1]} : vector<20x20x4xbf16> to vector<16x16x4xbf16>
    %36 = vector.extract_strided_slice %22 {offsets = [2, 3, 0], sizes = [16, 16, 4], strides = [1, 1, 1]} : vector<20x20x4xbf16> to vector<16x16x4xbf16>
    %37 = vector.extract_strided_slice %22 {offsets = [2, 4, 0], sizes = [16, 16, 4], strides = [1, 1, 1]} : vector<20x20x4xbf16> to vector<16x16x4xbf16>
    %38 = vector.extract_strided_slice %22 {offsets = [3, 0, 0], sizes = [16, 16, 4], strides = [1, 1, 1]} : vector<20x20x4xbf16> to vector<16x16x4xbf16>
    %39 = vector.extract_strided_slice %22 {offsets = [3, 1, 0], sizes = [16, 16, 4], strides = [1, 1, 1]} : vector<20x20x4xbf16> to vector<16x16x4xbf16>
    %40 = vector.extract_strided_slice %22 {offsets = [3, 2, 0], sizes = [16, 16, 4], strides = [1, 1, 1]} : vector<20x20x4xbf16> to vector<16x16x4xbf16>
    %41 = vector.extract_strided_slice %22 {offsets = [3, 3, 0], sizes = [16, 16, 4], strides = [1, 1, 1]} : vector<20x20x4xbf16> to vector<16x16x4xbf16>
    %42 = vector.extract_strided_slice %22 {offsets = [3, 4, 0], sizes = [16, 16, 4], strides = [1, 1, 1]} : vector<20x20x4xbf16> to vector<16x16x4xbf16>
    %43 = vector.extract_strided_slice %22 {offsets = [4, 0, 0], sizes = [16, 16, 4], strides = [1, 1, 1]} : vector<20x20x4xbf16> to vector<16x16x4xbf16>
    %44 = vector.extract_strided_slice %22 {offsets = [4, 1, 0], sizes = [16, 16, 4], strides = [1, 1, 1]} : vector<20x20x4xbf16> to vector<16x16x4xbf16>
    %45 = vector.extract_strided_slice %22 {offsets = [4, 2, 0], sizes = [16, 16, 4], strides = [1, 1, 1]} : vector<20x20x4xbf16> to vector<16x16x4xbf16>
    %46 = vector.extract_strided_slice %22 {offsets = [4, 3, 0], sizes = [16, 16, 4], strides = [1, 1, 1]} : vector<20x20x4xbf16> to vector<16x16x4xbf16>
    %47 = vector.extract_strided_slice %22 {offsets = [4, 4, 0], sizes = [16, 16, 4], strides = [1, 1, 1]} : vector<20x20x4xbf16> to vector<16x16x4xbf16>
    %48 = tpu.concatenate %23, %24, %25, %26, %27, %28, %29, %30, %31, %32, %33, %34, %35, %36, %37, %38 in 2 : vector<16x16x4xbf16>, vector<16x16x4xbf16>, vector<16x16x4xbf16>, vector<16x16x4xbf16>, vector<16x16x4xbf16>, vector<16x16x4xbf16>, vector<16x16x4xbf16>, vector<16x16x4xbf16>, vector<16x16x4xbf16>, vector<16x16x4xbf16>, vector<16x16x4xbf16>, vector<16x16x4xbf16>, vector<16x16x4xbf16>, vector<16x16x4xbf16>, vector<16x16x4xbf16>, vector<16x16x4xbf16> -> vector<16x16x64xbf16>
    %49 = tpu.concatenate %39, %40, %41, %42, %43, %44, %45, %46, %47 in 2 : vector<16x16x4xbf16>, vector<16x16x4xbf16>, vector<16x16x4xbf16>, vector<16x16x4xbf16>, vector<16x16x4xbf16>, vector<16x16x4xbf16>, vector<16x16x4xbf16>, vector<16x16x4xbf16>, vector<16x16x4xbf16> -> vector<16x16x36xbf16>
    %50 = tpu.concatenate %48, %49 in 2 : vector<16x16x64xbf16>, vector<16x16x36xbf16> -> vector<16x16x100xbf16>
    %51 = vector.shape_cast %50 : vector<16x16x100xbf16> to vector<256x100xbf16>
    %c0_16 = arith.constant 0 : index
    %c0_17 = arith.constant 0 : index
    %52 = vector.load %arg7[%c0_16, %c0_17] : memref<100x16xbf16, #tpu.memory_space<vmem>>, vector<100x16xbf16>
    %cst_18 = arith.constant dense<0.000000e+00> : vector<256x16xf32>
    %53 = tpu.matmul %51, %52, %cst_18 {dimension_numbers = #tpu.dot_dimension_numbers<[1], [0], [0], [1], [0, 0, 1, 1], [], []>} : vector<256x100xbf16>, vector<100x16xbf16>, vector<256x16xf32> -> vector<256x16xf32>
    %54 = vector.shape_cast %53 : vector<256x16xf32> to vector<1x256x16xf32>
    %55 = arith.truncf %54 : vector<1x256x16xf32> to vector<1x256x16xbf16>
    %c0_19 = arith.constant 0 : index
    %c0_20 = arith.constant 0 : index
    %c0_21 = arith.constant 0 : index
    %56 = vector.load %arg8[%c0_19, %c0_20, %c0_21] : memref<1x256x16xbf16, #tpu.memory_space<vmem>>, vector<1x256x16xbf16>
    tpu.vector_store %arg8[%c0_19, %c0_20, %c0_21], %55 {strides = array<i32>} : memref<1x256x16xbf16, #tpu.memory_space<vmem>>, vector<1x256x16xbf16>,
    %cst_22 = arith.constant dense<0.000000e+00> : vector<16xf32>
    %57 = vector.multi_reduction <add>, %53, %cst_22 [0] : vector<256x16xf32> to vector<16xf32>
    %58 = vector.shape_cast %57 : vector<16xf32> to vector<1x16xf32>
    %59 = arith.mulf %53, %53 : vector<256x16xf32>
    %cst_23 = arith.constant dense<0.000000e+00> : vector<16xf32>
    %60 = vector.multi_reduction <add>, %59, %cst_23 [0] : vector<256x16xf32> to vector<16xf32>
    %61 = vector.shape_cast %60 : vector<16xf32> to vector<1x16xf32>
    %62 = tpu.concatenate %58, %61 in 0 : vector<1x16xf32>, vector<1x16xf32> -> vector<2x16xf32>
    %63 = vector.shape_cast %62 : vector<2x16xf32> to vector<1x1x2x16xf32>
    %c0_24 = arith.constant 0 : index
    %c0_25 = arith.constant 0 : index
    %c0_26 = arith.constant 0 : index
    %c0_27 = arith.constant 0 : index
    %64 = vector.load %arg9[%c0_24, %c0_25, %c0_26, %c0_27] : memref<1x1x2x16xf32, #tpu.memory_space<vmem>>, vector<1x1x2x16xf32>
    tpu.vector_store %arg9[%c0_24, %c0_25, %c0_26, %c0_27], %63 {strides = array<i32>} : memref<1x1x2x16xf32, #tpu.memory_space<vmem>>, vector<1x1x2x16xf32>,
    return
  }
  func.func @transform_0(%arg0: i32, %arg1: i32) -> (i32, i32, i32, i32) {
    %c0_i32 = arith.constant 0 : i32
    %c0_i32_0 = arith.constant 0 : i32
    %c0_i32_1 = arith.constant 0 : i32
    return %arg0, %arg1, %c0_i32, %c0_i32_0 : i32, i32, i32, i32
  }
  func.func @transform_1(%arg0: i32, %arg1: i32) -> (i32, i32, i32, i32) {
    %c4_i32 = arith.constant 4 : i32
    %0 = arith.muli %arg1, %c4_i32 : i32
    %c1_i32 = arith.constant 1 : i32
    %1 = arith.subi %0, %c1_i32 : i32
    %c0_i32 = arith.constant 0 : i32
    %2 = arith.maxsi %1, %c0_i32 : i32
    %c0_i32_0 = arith.constant 0 : i32
    %c0_i32_1 = arith.constant 0 : i32
    %c0_i32_2 = arith.constant 0 : i32
    return %arg0, %2, %c0_i32_0, %c0_i32_1 : i32, i32, i32, i32
  }
  func.func @transform_2(%arg0: i32, %arg1: i32) -> (i32, i32, i32, i32) {
    %c1_i32 = arith.constant 1 : i32
    %0 = arith.addi %arg1, %c1_i32 : i32
    %c4_i32 = arith.constant 4 : i32
    %1 = arith.muli %0, %c4_i32 : i32
    %c3_i32 = arith.constant 3 : i32
    %2 = arith.minsi %1, %c3_i32 : i32
    %c0_i32 = arith.constant 0 : i32
    %c0_i32_0 = arith.constant 0 : i32
    %c0_i32_1 = arith.constant 0 : i32
    return %arg0, %2, %c0_i32, %c0_i32_0 : i32, i32, i32, i32
  }
  func.func @transform_3(%arg0: i32, %arg1: i32) -> (i32, i32) {
    %c0_i32 = arith.constant 0 : i32
    %c0_i32_0 = arith.constant 0 : i32
    %c0_i32_1 = arith.constant 0 : i32
    return %c0_i32, %c0_i32_0 : i32, i32
  }
  func.func @transform_4(%arg0: i32, %arg1: i32) -> (i32, i32) {
    %c0_i32 = arith.constant 0 : i32
    %c0_i32_0 = arith.constant 0 : i32
    %c0_i32_1 = arith.constant 0 : i32
    return %c0_i32, %c0_i32_0 : i32, i32
  }
  func.func @transform_5(%arg0: i32, %arg1: i32) -> (i32, i32) {
    %c0_i32 = arith.constant 0 : i32
    %c0_i32_0 = arith.constant 0 : i32
    %c0_i32_1 = arith.constant 0 : i32
    return %c0_i32, %c0_i32_0 : i32, i32
  }
  func.func @transform_6(%arg0: i32, %arg1: i32) -> (i32, i32, i32) {
    %c0_i32 = arith.constant 0 : i32
    %c0_i32_0 = arith.constant 0 : i32
    return %arg0, %arg1, %c0_i32 : i32, i32, i32
  }
  func.func @transform_7(%arg0: i32, %arg1: i32) -> (i32, i32, i32, i32) {
    %c0_i32 = arith.constant 0 : i32
    %c0_i32_0 = arith.constant 0 : i32
    %c0_i32_1 = arith.constant 0 : i32
    return %arg0, %arg1, %c0_i32, %c0_i32_0 : i32, i32, i32, i32
  }
}

module attributes {stable_mosaic.version = 11 : i64} {
  func.func @_conv_stage_kernel(%arg0: i32, %arg1: i32, %arg2: memref<1x16x16x16xbf16, #tpu.memory_space<vmem>>, %arg3: memref<1x4x16x16xbf16, #tpu.memory_space<vmem>>, %arg4: memref<1x4x16x16xbf16, #tpu.memory_space<vmem>>, %arg5: memref<1x16xf32, #tpu.memory_space<vmem>>, %arg6: memref<1x16xf32, #tpu.memory_space<vmem>>, %arg7: memref<400x16xbf16, #tpu.memory_space<vmem>>, %arg8: memref<1x256x16xbf16, #tpu.memory_space<vmem>>, %arg9: memref<1x1x2x16xf32, #tpu.memory_space<vmem>>) attributes {dimension_semantics = [#tpu.dimension_semantics<parallel>, #tpu.dimension_semantics<parallel>], iteration_bounds = array<i64: 2, 1>, scalar_prefetch = 0 : i64, scratch_operands = 0 : i64, tpu.core_type = #tpu.core_type<tc>, window_params = [{transform_indices = @transform_0, window_bounds = array<i64: 1, 16, 16, 16>}, {transform_indices = @transform_1, window_bounds = array<i64: 1, 4, 16, 16>}, {transform_indices = @transform_2, window_bounds = array<i64: 1, 4, 16, 16>}, {pipeline_mode = #tpu.pipeline_mode<synchronous>, transform_indices = @transform_3, window_bounds = array<i64: 1, 16>}, {pipeline_mode = #tpu.pipeline_mode<synchronous>, transform_indices = @transform_4, window_bounds = array<i64: 1, 16>}, {pipeline_mode = #tpu.pipeline_mode<synchronous>, transform_indices = @transform_5, window_bounds = array<i64: 400, 16>}, {transform_indices = @transform_6, window_bounds = array<i64: 1, 256, 16>}, {transform_indices = @transform_7, window_bounds = array<i64: 1, 1, 2, 16>}]} {
    %c0 = arith.constant 0 : index
    %c0_0 = arith.constant 0 : index
    %0 = vector.load %arg5[%c0, %c0_0] : memref<1x16xf32, #tpu.memory_space<vmem>>, vector<1x16xf32>
    %1 = vector.shape_cast %0 : vector<1x16xf32> to vector<1x1x16xf32>
    %c0_1 = arith.constant 0 : index
    %c0_2 = arith.constant 0 : index
    %2 = vector.load %arg6[%c0_1, %c0_2] : memref<1x16xf32, #tpu.memory_space<vmem>>, vector<1x16xf32>
    %3 = vector.shape_cast %2 : vector<1x16xf32> to vector<1x1x16xf32>
    %c0_3 = arith.constant 0 : index
    %c0_4 = arith.constant 0 : index
    %c0_5 = arith.constant 0 : index
    %c0_6 = arith.constant 0 : index
    %4 = vector.load %arg2[%c0_3, %c0_4, %c0_5, %c0_6] : memref<1x16x16x16xbf16, #tpu.memory_space<vmem>>, vector<1x16x16x16xbf16>
    %5 = vector.shape_cast %4 : vector<1x16x16x16xbf16> to vector<16x16x16xbf16>
    %6 = arith.extf %5 : vector<16x16x16xbf16> to vector<16x16x16xf32>
    %7 = vector.broadcast %1 : vector<1x1x16xf32> to vector<16x16x16xf32>
    %8 = arith.mulf %6, %7 : vector<16x16x16xf32>
    %9 = vector.broadcast %3 : vector<1x1x16xf32> to vector<16x16x16xf32>
    %10 = arith.addf %8, %9 : vector<16x16x16xf32>
    %cst = arith.constant 0.000000e+00 : f32
    %11 = vector.broadcast %cst : f32 to vector<16x16x16xf32>
    %12 = arith.maximumf %10, %11 : vector<16x16x16xf32>
    %c0_7 = arith.constant 0 : index
    %c0_8 = arith.constant 0 : index
    %c0_9 = arith.constant 0 : index
    %c0_10 = arith.constant 0 : index
    %13 = vector.load %arg3[%c0_7, %c0_8, %c0_9, %c0_10] : memref<1x4x16x16xbf16, #tpu.memory_space<vmem>>, vector<1x4x16x16xbf16>
    %14 = vector.extract_strided_slice %13 {offsets = [0, 2, 0, 0], sizes = [1, 2, 16, 16], strides = [1, 1, 1, 1]} : vector<1x4x16x16xbf16> to vector<1x2x16x16xbf16>
    %15 = vector.shape_cast %14 : vector<1x2x16x16xbf16> to vector<2x16x16xbf16>
    %16 = arith.extf %15 : vector<2x16x16xbf16> to vector<2x16x16xf32>
    %17 = vector.broadcast %1 : vector<1x1x16xf32> to vector<2x16x16xf32>
    %18 = arith.mulf %16, %17 : vector<2x16x16xf32>
    %19 = vector.broadcast %3 : vector<1x1x16xf32> to vector<2x16x16xf32>
    %20 = arith.addf %18, %19 : vector<2x16x16xf32>
    %cst_11 = arith.constant 0.000000e+00 : f32
    %21 = vector.broadcast %cst_11 : f32 to vector<2x16x16xf32>
    %22 = arith.maximumf %20, %21 : vector<2x16x16xf32>
    %c0_12 = arith.constant 0 : index
    %c0_13 = arith.constant 0 : index
    %c0_14 = arith.constant 0 : index
    %c0_15 = arith.constant 0 : index
    %23 = vector.load %arg4[%c0_12, %c0_13, %c0_14, %c0_15] : memref<1x4x16x16xbf16, #tpu.memory_space<vmem>>, vector<1x4x16x16xbf16>
    %24 = vector.extract_strided_slice %23 {offsets = [0, 0, 0, 0], sizes = [1, 2, 16, 16], strides = [1, 1, 1, 1]} : vector<1x4x16x16xbf16> to vector<1x2x16x16xbf16>
    %25 = vector.shape_cast %24 : vector<1x2x16x16xbf16> to vector<2x16x16xbf16>
    %26 = arith.extf %25 : vector<2x16x16xbf16> to vector<2x16x16xf32>
    %27 = vector.broadcast %1 : vector<1x1x16xf32> to vector<2x16x16xf32>
    %28 = arith.mulf %26, %27 : vector<2x16x16xf32>
    %29 = vector.broadcast %3 : vector<1x1x16xf32> to vector<2x16x16xf32>
    %30 = arith.addf %28, %29 : vector<2x16x16xf32>
    %cst_16 = arith.constant 0.000000e+00 : f32
    %31 = vector.broadcast %cst_16 : f32 to vector<2x16x16xf32>
    %32 = arith.maximumf %30, %31 : vector<2x16x16xf32>
    %c0_i32 = arith.constant 0 : i32
    %33 = arith.cmpi sgt, %arg1, %c0_i32 : i32
    %cst_17 = arith.constant 1.000000e+00 : f32
    %cst_18 = arith.constant 0.000000e+00 : f32
    %34 = arith.select %33, %cst_17, %cst_18 : f32
    %35 = vector.broadcast %34 : f32 to vector<2x16x16xf32>
    %36 = arith.mulf %22, %35 : vector<2x16x16xf32>
    %c0_i32_19 = arith.constant 0 : i32
    %37 = arith.cmpi slt, %arg1, %c0_i32_19 : i32
    %cst_20 = arith.constant 1.000000e+00 : f32
    %cst_21 = arith.constant 0.000000e+00 : f32
    %38 = arith.select %37, %cst_20, %cst_21 : f32
    %39 = vector.broadcast %38 : f32 to vector<2x16x16xf32>
    %40 = arith.mulf %32, %39 : vector<2x16x16xf32>
    %41 = tpu.concatenate %36, %12, %40 in 0 : vector<2x16x16xf32>, vector<16x16x16xf32>, vector<2x16x16xf32> -> vector<20x16x16xf32>
    %42 = arith.truncf %41 : vector<20x16x16xf32> to vector<20x16x16xbf16>
    %cst_22 = arith.constant 0.000000e+00 : bf16
    %43 = vector.broadcast %cst_22 : bf16 to vector<20x2x16xbf16>
    %44 = tpu.concatenate %43, %42, %43 in 1 : vector<20x2x16xbf16>, vector<20x16x16xbf16>, vector<20x2x16xbf16> -> vector<20x20x16xbf16>
    %45 = vector.extract_strided_slice %44 {offsets = [0, 0, 0], sizes = [16, 16, 16], strides = [1, 1, 1]} : vector<20x20x16xbf16> to vector<16x16x16xbf16>
    %46 = vector.extract_strided_slice %44 {offsets = [0, 1, 0], sizes = [16, 16, 16], strides = [1, 1, 1]} : vector<20x20x16xbf16> to vector<16x16x16xbf16>
    %47 = vector.extract_strided_slice %44 {offsets = [0, 2, 0], sizes = [16, 16, 16], strides = [1, 1, 1]} : vector<20x20x16xbf16> to vector<16x16x16xbf16>
    %48 = vector.extract_strided_slice %44 {offsets = [0, 3, 0], sizes = [16, 16, 16], strides = [1, 1, 1]} : vector<20x20x16xbf16> to vector<16x16x16xbf16>
    %49 = vector.extract_strided_slice %44 {offsets = [0, 4, 0], sizes = [16, 16, 16], strides = [1, 1, 1]} : vector<20x20x16xbf16> to vector<16x16x16xbf16>
    %50 = vector.extract_strided_slice %44 {offsets = [1, 0, 0], sizes = [16, 16, 16], strides = [1, 1, 1]} : vector<20x20x16xbf16> to vector<16x16x16xbf16>
    %51 = vector.extract_strided_slice %44 {offsets = [1, 1, 0], sizes = [16, 16, 16], strides = [1, 1, 1]} : vector<20x20x16xbf16> to vector<16x16x16xbf16>
    %52 = vector.extract_strided_slice %44 {offsets = [1, 2, 0], sizes = [16, 16, 16], strides = [1, 1, 1]} : vector<20x20x16xbf16> to vector<16x16x16xbf16>
    %53 = vector.extract_strided_slice %44 {offsets = [1, 3, 0], sizes = [16, 16, 16], strides = [1, 1, 1]} : vector<20x20x16xbf16> to vector<16x16x16xbf16>
    %54 = vector.extract_strided_slice %44 {offsets = [1, 4, 0], sizes = [16, 16, 16], strides = [1, 1, 1]} : vector<20x20x16xbf16> to vector<16x16x16xbf16>
    %55 = vector.extract_strided_slice %44 {offsets = [2, 0, 0], sizes = [16, 16, 16], strides = [1, 1, 1]} : vector<20x20x16xbf16> to vector<16x16x16xbf16>
    %56 = vector.extract_strided_slice %44 {offsets = [2, 1, 0], sizes = [16, 16, 16], strides = [1, 1, 1]} : vector<20x20x16xbf16> to vector<16x16x16xbf16>
    %57 = vector.extract_strided_slice %44 {offsets = [2, 2, 0], sizes = [16, 16, 16], strides = [1, 1, 1]} : vector<20x20x16xbf16> to vector<16x16x16xbf16>
    %58 = vector.extract_strided_slice %44 {offsets = [2, 3, 0], sizes = [16, 16, 16], strides = [1, 1, 1]} : vector<20x20x16xbf16> to vector<16x16x16xbf16>
    %59 = vector.extract_strided_slice %44 {offsets = [2, 4, 0], sizes = [16, 16, 16], strides = [1, 1, 1]} : vector<20x20x16xbf16> to vector<16x16x16xbf16>
    %60 = vector.extract_strided_slice %44 {offsets = [3, 0, 0], sizes = [16, 16, 16], strides = [1, 1, 1]} : vector<20x20x16xbf16> to vector<16x16x16xbf16>
    %61 = vector.extract_strided_slice %44 {offsets = [3, 1, 0], sizes = [16, 16, 16], strides = [1, 1, 1]} : vector<20x20x16xbf16> to vector<16x16x16xbf16>
    %62 = vector.extract_strided_slice %44 {offsets = [3, 2, 0], sizes = [16, 16, 16], strides = [1, 1, 1]} : vector<20x20x16xbf16> to vector<16x16x16xbf16>
    %63 = vector.extract_strided_slice %44 {offsets = [3, 3, 0], sizes = [16, 16, 16], strides = [1, 1, 1]} : vector<20x20x16xbf16> to vector<16x16x16xbf16>
    %64 = vector.extract_strided_slice %44 {offsets = [3, 4, 0], sizes = [16, 16, 16], strides = [1, 1, 1]} : vector<20x20x16xbf16> to vector<16x16x16xbf16>
    %65 = vector.extract_strided_slice %44 {offsets = [4, 0, 0], sizes = [16, 16, 16], strides = [1, 1, 1]} : vector<20x20x16xbf16> to vector<16x16x16xbf16>
    %66 = vector.extract_strided_slice %44 {offsets = [4, 1, 0], sizes = [16, 16, 16], strides = [1, 1, 1]} : vector<20x20x16xbf16> to vector<16x16x16xbf16>
    %67 = vector.extract_strided_slice %44 {offsets = [4, 2, 0], sizes = [16, 16, 16], strides = [1, 1, 1]} : vector<20x20x16xbf16> to vector<16x16x16xbf16>
    %68 = vector.extract_strided_slice %44 {offsets = [4, 3, 0], sizes = [16, 16, 16], strides = [1, 1, 1]} : vector<20x20x16xbf16> to vector<16x16x16xbf16>
    %69 = vector.extract_strided_slice %44 {offsets = [4, 4, 0], sizes = [16, 16, 16], strides = [1, 1, 1]} : vector<20x20x16xbf16> to vector<16x16x16xbf16>
    %70 = tpu.concatenate %45, %46, %47, %48, %49, %50, %51, %52, %53, %54, %55, %56, %57, %58, %59, %60 in 2 : vector<16x16x16xbf16>, vector<16x16x16xbf16>, vector<16x16x16xbf16>, vector<16x16x16xbf16>, vector<16x16x16xbf16>, vector<16x16x16xbf16>, vector<16x16x16xbf16>, vector<16x16x16xbf16>, vector<16x16x16xbf16>, vector<16x16x16xbf16>, vector<16x16x16xbf16>, vector<16x16x16xbf16>, vector<16x16x16xbf16>, vector<16x16x16xbf16>, vector<16x16x16xbf16>, vector<16x16x16xbf16> -> vector<16x16x256xbf16>
    %71 = tpu.concatenate %61, %62, %63, %64, %65, %66, %67, %68, %69 in 2 : vector<16x16x16xbf16>, vector<16x16x16xbf16>, vector<16x16x16xbf16>, vector<16x16x16xbf16>, vector<16x16x16xbf16>, vector<16x16x16xbf16>, vector<16x16x16xbf16>, vector<16x16x16xbf16>, vector<16x16x16xbf16> -> vector<16x16x144xbf16>
    %72 = tpu.concatenate %70, %71 in 2 : vector<16x16x256xbf16>, vector<16x16x144xbf16> -> vector<16x16x400xbf16>
    %73 = vector.shape_cast %72 : vector<16x16x400xbf16> to vector<256x400xbf16>
    %c0_23 = arith.constant 0 : index
    %c0_24 = arith.constant 0 : index
    %74 = vector.load %arg7[%c0_23, %c0_24] : memref<400x16xbf16, #tpu.memory_space<vmem>>, vector<400x16xbf16>
    %cst_25 = arith.constant dense<0.000000e+00> : vector<256x16xf32>
    %75 = tpu.matmul %73, %74, %cst_25 {dimension_numbers = #tpu.dot_dimension_numbers<[1], [0], [0], [1], [0, 0, 1, 1], [], []>} : vector<256x400xbf16>, vector<400x16xbf16>, vector<256x16xf32> -> vector<256x16xf32>
    %76 = vector.shape_cast %75 : vector<256x16xf32> to vector<1x256x16xf32>
    %77 = arith.truncf %76 : vector<1x256x16xf32> to vector<1x256x16xbf16>
    %c0_26 = arith.constant 0 : index
    %c0_27 = arith.constant 0 : index
    %c0_28 = arith.constant 0 : index
    %78 = vector.load %arg8[%c0_26, %c0_27, %c0_28] : memref<1x256x16xbf16, #tpu.memory_space<vmem>>, vector<1x256x16xbf16>
    tpu.vector_store %arg8[%c0_26, %c0_27, %c0_28], %77 {strides = array<i32>} : memref<1x256x16xbf16, #tpu.memory_space<vmem>>, vector<1x256x16xbf16>,
    %cst_29 = arith.constant dense<0.000000e+00> : vector<16xf32>
    %79 = vector.multi_reduction <add>, %75, %cst_29 [0] : vector<256x16xf32> to vector<16xf32>
    %80 = vector.shape_cast %79 : vector<16xf32> to vector<1x16xf32>
    %81 = arith.mulf %75, %75 : vector<256x16xf32>
    %cst_30 = arith.constant dense<0.000000e+00> : vector<16xf32>
    %82 = vector.multi_reduction <add>, %81, %cst_30 [0] : vector<256x16xf32> to vector<16xf32>
    %83 = vector.shape_cast %82 : vector<16xf32> to vector<1x16xf32>
    %84 = tpu.concatenate %80, %83 in 0 : vector<1x16xf32>, vector<1x16xf32> -> vector<2x16xf32>
    %85 = vector.shape_cast %84 : vector<2x16xf32> to vector<1x1x2x16xf32>
    %c0_31 = arith.constant 0 : index
    %c0_32 = arith.constant 0 : index
    %c0_33 = arith.constant 0 : index
    %c0_34 = arith.constant 0 : index
    %86 = vector.load %arg9[%c0_31, %c0_32, %c0_33, %c0_34] : memref<1x1x2x16xf32, #tpu.memory_space<vmem>>, vector<1x1x2x16xf32>
    tpu.vector_store %arg9[%c0_31, %c0_32, %c0_33, %c0_34], %85 {strides = array<i32>} : memref<1x1x2x16xf32, #tpu.memory_space<vmem>>, vector<1x1x2x16xf32>,
    return
  }
  func.func @transform_0(%arg0: i32, %arg1: i32) -> (i32, i32, i32, i32) {
    %c0_i32 = arith.constant 0 : i32
    %c0_i32_0 = arith.constant 0 : i32
    %c0_i32_1 = arith.constant 0 : i32
    return %arg0, %arg1, %c0_i32, %c0_i32_0 : i32, i32, i32, i32
  }
  func.func @transform_1(%arg0: i32, %arg1: i32) -> (i32, i32, i32, i32) {
    %c4_i32 = arith.constant 4 : i32
    %0 = arith.muli %arg1, %c4_i32 : i32
    %c1_i32 = arith.constant 1 : i32
    %1 = arith.subi %0, %c1_i32 : i32
    %c0_i32 = arith.constant 0 : i32
    %2 = arith.maxsi %1, %c0_i32 : i32
    %c0_i32_0 = arith.constant 0 : i32
    %c0_i32_1 = arith.constant 0 : i32
    %c0_i32_2 = arith.constant 0 : i32
    return %arg0, %2, %c0_i32_0, %c0_i32_1 : i32, i32, i32, i32
  }
  func.func @transform_2(%arg0: i32, %arg1: i32) -> (i32, i32, i32, i32) {
    %c1_i32 = arith.constant 1 : i32
    %0 = arith.addi %arg1, %c1_i32 : i32
    %c4_i32 = arith.constant 4 : i32
    %1 = arith.muli %0, %c4_i32 : i32
    %c3_i32 = arith.constant 3 : i32
    %2 = arith.minsi %1, %c3_i32 : i32
    %c0_i32 = arith.constant 0 : i32
    %c0_i32_0 = arith.constant 0 : i32
    %c0_i32_1 = arith.constant 0 : i32
    return %arg0, %2, %c0_i32, %c0_i32_0 : i32, i32, i32, i32
  }
  func.func @transform_3(%arg0: i32, %arg1: i32) -> (i32, i32) {
    %c0_i32 = arith.constant 0 : i32
    %c0_i32_0 = arith.constant 0 : i32
    %c0_i32_1 = arith.constant 0 : i32
    return %c0_i32, %c0_i32_0 : i32, i32
  }
  func.func @transform_4(%arg0: i32, %arg1: i32) -> (i32, i32) {
    %c0_i32 = arith.constant 0 : i32
    %c0_i32_0 = arith.constant 0 : i32
    %c0_i32_1 = arith.constant 0 : i32
    return %c0_i32, %c0_i32_0 : i32, i32
  }
  func.func @transform_5(%arg0: i32, %arg1: i32) -> (i32, i32) {
    %c0_i32 = arith.constant 0 : i32
    %c0_i32_0 = arith.constant 0 : i32
    %c0_i32_1 = arith.constant 0 : i32
    return %c0_i32, %c0_i32_0 : i32, i32
  }
  func.func @transform_6(%arg0: i32, %arg1: i32) -> (i32, i32, i32) {
    %c0_i32 = arith.constant 0 : i32
    %c0_i32_0 = arith.constant 0 : i32
    return %arg0, %arg1, %c0_i32 : i32, i32, i32
  }
  func.func @transform_7(%arg0: i32, %arg1: i32) -> (i32, i32, i32, i32) {
    %c0_i32 = arith.constant 0 : i32
    %c0_i32_0 = arith.constant 0 : i32
    %c0_i32_1 = arith.constant 0 : i32
    return %arg0, %arg1, %c0_i32, %c0_i32_0 : i32, i32, i32, i32
  }
}

module attributes {stable_mosaic.version = 11 : i64} {
  func.func @_bn_relu_kernel(%arg0: i32, %arg1: memref<256x16xbf16, #tpu.memory_space<vmem>>, %arg2: memref<1x16xf32, #tpu.memory_space<vmem>>, %arg3: memref<1x16xf32, #tpu.memory_space<vmem>>, %arg4: memref<256x16xf32, #tpu.memory_space<vmem>>) attributes {dimension_semantics = [#tpu.dimension_semantics<parallel>], iteration_bounds = array<i64: 2>, scalar_prefetch = 0 : i64, scratch_operands = 0 : i64, tpu.core_type = #tpu.core_type<tc>, window_params = [{transform_indices = @transform_0, window_bounds = array<i64: 256, 16>}, {pipeline_mode = #tpu.pipeline_mode<synchronous>, transform_indices = @transform_1, window_bounds = array<i64: 1, 16>}, {pipeline_mode = #tpu.pipeline_mode<synchronous>, transform_indices = @transform_2, window_bounds = array<i64: 1, 16>}, {transform_indices = @transform_3, window_bounds = array<i64: 256, 16>}]} {
    %c0 = arith.constant 0 : index
    %c0_0 = arith.constant 0 : index
    %0 = vector.load %arg1[%c0, %c0_0] : memref<256x16xbf16, #tpu.memory_space<vmem>>, vector<256x16xbf16>
    %1 = arith.extf %0 : vector<256x16xbf16> to vector<256x16xf32>
    %c0_1 = arith.constant 0 : index
    %c0_2 = arith.constant 0 : index
    %2 = vector.load %arg2[%c0_1, %c0_2] : memref<1x16xf32, #tpu.memory_space<vmem>>, vector<1x16xf32>
    %3 = vector.broadcast %2 : vector<1x16xf32> to vector<256x16xf32>
    %4 = arith.mulf %1, %3 : vector<256x16xf32>
    %c0_3 = arith.constant 0 : index
    %c0_4 = arith.constant 0 : index
    %5 = vector.load %arg3[%c0_3, %c0_4] : memref<1x16xf32, #tpu.memory_space<vmem>>, vector<1x16xf32>
    %6 = vector.broadcast %5 : vector<1x16xf32> to vector<256x16xf32>
    %7 = arith.addf %4, %6 : vector<256x16xf32>
    %cst = arith.constant 0.000000e+00 : f32
    %8 = vector.broadcast %cst : f32 to vector<256x16xf32>
    %9 = arith.maximumf %7, %8 : vector<256x16xf32>
    %c0_5 = arith.constant 0 : index
    %c0_6 = arith.constant 0 : index
    %10 = vector.load %arg4[%c0_5, %c0_6] : memref<256x16xf32, #tpu.memory_space<vmem>>, vector<256x16xf32>
    tpu.vector_store %arg4[%c0_5, %c0_6], %9 {strides = array<i32>} : memref<256x16xf32, #tpu.memory_space<vmem>>, vector<256x16xf32>,
    return
  }
  func.func @transform_0(%arg0: i32) -> (i32, i32) {
    %c0_i32 = arith.constant 0 : i32
    %c0_i32_0 = arith.constant 0 : i32
    return %arg0, %c0_i32 : i32, i32
  }
  func.func @transform_1(%arg0: i32) -> (i32, i32) {
    %c0_i32 = arith.constant 0 : i32
    %c0_i32_0 = arith.constant 0 : i32
    %c0_i32_1 = arith.constant 0 : i32
    return %c0_i32, %c0_i32_0 : i32, i32
  }
  func.func @transform_2(%arg0: i32) -> (i32, i32) {
    %c0_i32 = arith.constant 0 : i32
    %c0_i32_0 = arith.constant 0 : i32
    %c0_i32_1 = arith.constant 0 : i32
    return %c0_i32, %c0_i32_0 : i32, i32
  }
  func.func @transform_3(%arg0: i32) -> (i32, i32) {
    %c0_i32 = arith.constant 0 : i32
    %c0_i32_0 = arith.constant 0 : i32
    return %arg0, %c0_i32 : i32, i32
  }
}

</mosaic_0001>

<llo_original>
// kernel: double_conv.5
$region0: #{double_conv.5}
  #allocation0 [shape = 'u32[]', space=smem, size = 0x4, offset = 0x4, fixed_abs, tag = 'smem constant byte address 0x4 - core index']
  #allocation1 [shape = 'u32[144,128]{1,0:T(1,128)}', space=vmem, size = 0x12000, scoped, tag = 'internal scratch']
  %s0 = inlined_call_operand.vmem [shape: bf16[512,16], index: 0, kind: input, shape index: {}]
  %s1 = inlined_call_operand.vmem [shape: f32[1,16], index: 1, kind: input, shape index: {}]
  %s2 = inlined_call_operand.vmem [shape: f32[1,16], index: 2, kind: input, shape index: {}]
  %s3 = inlined_call_operand.vmem [shape: f32[512,16], index: 3, kind: output, shape index: {}]
  %s4 = sld [smem:[#allocation0]]
  $region45: #{double_conv.5} parent=0
    _
  %s6 = ssub.s32 1, %s4
  %s7 = scalar_select 0, %s6, %s4
  loop: start=0, step=1, limit=4
  $region2: #{double_conv.5} parent=0 // loop_pre_header
    _
  $region3: #{double_conv.5} parent=0 // loop_header
    %s9 = sphi 0, %s13
    %p10 = scmp.ge.s32.totalorder %s9, 4
    %s19 = sphi 0, %s21
    %s22 = sphi 0, %s19
    %s23 = sphi 0, %s22
    %s39 = sphi 0, %s23
    %s43 = sphi 0, %s43
    %s45 = sphi 0, %s43
    %s46 = sphi 0, %s45
    %s60 = sphi 0, %s46
    %s64 = sphi 0, %s64
    %s66 = sphi 0, %s64
    %s67 = sphi 0, %s66
    %s81 = sphi 0, %s67
    %s87 = sphi 0, %s89
    %s90 = sphi 0, %s87
    %s91 = sphi 0, %s90
    %s107 = sphi 0, %s91
  $region4: #{double_conv.5} parent=0 // loop_header_branch
    %12 = sbr.rel (%p10) target = $region8
  $region5: #{double_conv.5} parent=0 // loop_body
    %s14 = ssub.s32 %s9, 1
    %s15 = ssub.s32 %s9, 2
    %s16 = sadd.s32 %s9, 1
    %s17 = ssub.s32 %s9, %s16
    %p18 = scmp.eq.s32.totalorder %s17, 0
    %s20 = sadd.s32 %s19, 1
    %s21 = scalar_select %p18, %s19, %s20
    %p24 = pneg %p18
    %p25 = scmp.eq.s32.totalorder %s9, 1
    %p26 = por %p24, %p25
    %p27 = scmp.ne.s32.totalorder %s19, %s22
    %p28 = scmp.eq.s32.totalorder %s9, 0
    %p29 = por %p27, %p28
    %p30 = scmp.ne.s32.totalorder %s19, %s22
    %p31 = scmp.eq.s32.totalorder %s14, 1
    %p32 = por %p30, %p31
    %p33 = scmp.ne.s32.totalorder %s22, %s23
    %p34 = scmp.eq.s32.totalorder %s14, 0
    %p35 = por %p33, %p34
    %p36 = scmp.ne.s32.totalorder %s22, %s23
    %p37 = scmp.eq.s32.totalorder %s15, 1
    %p38 = por %p36, %p37
    %p40 = scmp.ne.s32.totalorder %s23, %s39
    %p41 = scmp.eq.s32.totalorder %s15, 0
    %p42 = por %p40, %p41
    %s44 = sadd.s32 %s43, 1
    %p47 = scmp.eq.s32.totalorder %s9, 1
    %p48 = scmp.ne.s32.totalorder %s43, %s45
    %p49 = scmp.eq.s32.totalorder %s9, 0
    %p50 = por %p48, %p49
    %p51 = scmp.ne.s32.totalorder %s43, %s45
    %p52 = scmp.eq.s32.totalorder %s14, 1
    %p53 = por %p51, %p52
    %p54 = scmp.ne.s32.totalorder %s45, %s46
    %p55 = scmp.eq.s32.totalorder %s14, 0
    %p56 = por %p54, %p55
    %p57 = scmp.ne.s32.totalorder %s45, %s46
    %p58 = scmp.eq.s32.totalorder %s15, 1
    %p59 = por %p57, %p58
    %p61 = scmp.ne.s32.totalorder %s46, %s60
    %p62 = scmp.eq.s32.totalorder %s15, 0
    %p63 = por %p61, %p62
    %s65 = sadd.s32 %s64, 1
    %p68 = scmp.eq.s32.totalorder %s9, 1
    %p69 = scmp.ne.s32.totalorder %s64, %s66
    %p70 = scmp.eq.s32.totalorder %s9, 0
    %p71 = por %p69, %p70
    %p72 = scmp.ne.s32.totalorder %s64, %s66
    %p73 = scmp.eq.s32.totalorder %s14, 1
    %p74 = por %p72, %p73
    %p75 = scmp.ne.s32.totalorder %s66, %s67
    %p76 = scmp.eq.s32.totalorder %s14, 0
    %p77 = por %p75, %p76
    %p78 = scmp.ne.s32.totalorder %s66, %s67
    %p79 = scmp.eq.s32.totalorder %s15, 1
    %p80 = por %p78, %p79
    %p82 = scmp.ne.s32.totalorder %s67, %s81
    %p83 = scmp.eq.s32.totalorder %s15, 0
    %p84 = por %p82, %p83
    %s85 = ssub.s32 %s9, %s16
    %p86 = scmp.eq.s32.totalorder %s85, 0
    %s88 = sadd.s32 %s87, 1
    %s89 = scalar_select %p86, %s87, %s88
    %p92 = pneg %p86
    %p93 = scmp.eq.s32.totalorder %s9, 1
    %p94 = por %p92, %p93
    %p95 = scmp.ne.s32.totalorder %s87, %s90
    %p96 = scmp.eq.s32.totalorder %s9, 0
    %p97 = por %p95, %p96
    %p98 = scmp.ne.s32.totalorder %s87, %s90
    %p99 = scmp.eq.s32.totalorder %s14, 1
    %p100 = por %p98, %p99
    %p101 = scmp.ne.s32.totalorder %s90, %s91
    %p102 = scmp.eq.s32.totalorder %s14, 0
    %p103 = por %p101, %p102
    %p104 = scmp.ne.s32.totalorder %s90, %s91
    %p105 = scmp.eq.s32.totalorder %s15, 1
    %p106 = por %p104, %p105
    %p108 = scmp.ne.s32.totalorder %s91, %s107
    %p109 = scmp.eq.s32.totalorder %s15, 0
    %p110 = por %p108, %p109
    %p111 = scmp.le.s32.totalorder 1, %s9
    %p112 = scmp.lt.s32.totalorder %s9, 3
    %p113 = pnand %p111, %p112
    %p114 = pneg %p113
    // Predicated region
    $region9: #{double_conv.5} parent=5 // pred_check
      _
    $region10: #{double_conv.5} parent=5 // pred_check_branch
      %116 = sbr.rel (%p113) target = $region12
    $region11: #{double_conv.5} parent=5 // pred_region
      %s117 = ssub.s32 %s9, 1
      // Predicated region
      $region13: #{double_conv.5} parent=11 // pred_check
        %p118 = pneg %p56
      $region14: #{double_conv.5} parent=11 // pred_check_branch
        %120 = sbr.rel (%p118) target = $region16
      $region15: #{double_conv.5} parent=11 // pred_region
        _
      $region16: #{double_conv.5} parent=11 // pred_fallthru
        _
      // Predicated region
      $region17: #{double_conv.5} parent=11 // pred_check
        %p121 = pneg %p77
      $region18: #{double_conv.5} parent=11 // pred_check_branch
        %123 = sbr.rel (%p121) target = $region20
      $region19: #{double_conv.5} parent=11 // pred_region
        _
      $region20: #{double_conv.5} parent=11 // pred_fallthru
        _
    $region12: #{double_conv.5} parent=5 // pred_fallthru
      _
    %p124 = scmp.lt.s32.totalorder %s9, 2
    // Predicated region
    $region21: #{double_conv.5} parent=5 // pred_check
      %p125 = pneg %p124
    $region22: #{double_conv.5} parent=5 // pred_check_branch
      %127 = sbr.rel (%p125) target = $region24
    $region23: #{double_conv.5} parent=5 // pred_region
      // Predicated region
      $region25: #{double_conv.5} parent=23 // pred_check
        %p128 = pneg %p29
      $region26: #{double_conv.5} parent=23 // pred_check_branch
        %130 = sbr.rel (%p128) target = $region28
      $region27: #{double_conv.5} parent=23 // pred_region
        %s131 = smul.u32 32, %s9
        %p132 = scmp.lt.s32.totalorder %s131, 63
        %s133 = scalar_select %p132, %s131, 63
        %s134 = smul.addr %s133, 4
        %s135 = scalar_lea.vmem %s0, %s134
        %s136 = smul.u32 32, %s9
      $region28: #{double_conv.5} parent=23 // pred_fallthru
        _
    $region24: #{double_conv.5} parent=5 // pred_fallthru
      _
    %p137 = scmp.le.s32.totalorder 1, %s9
    %p138 = scmp.lt.s32.totalorder %s9, 3
    %p139 = pnand %p137, %p138
    %p140 = pneg %p139
    // Predicated region
    $region29: #{double_conv.5} parent=5 // pred_check
      _
    $region30: #{double_conv.5} parent=5 // pred_check_branch
      %142 = sbr.rel (%p139) target = $region32
    $region31: #{double_conv.5} parent=5 // pred_region
      %s143 = ssub.s32 %s9, 1
      %s144 = smul.u32 32, %s14
      %p145 = scmp.lt.s32.totalorder %s144, 63
      %s146 = scalar_select %p145, %s144, 63
      %s147 = smul.addr %s146, 4
      %s148 = scalar_lea.vmem %s0, %s147
      %p149 = pneg %p35
      %p150 = pneg %p32
      %p151 = pneg %p56
      %p152 = pneg %p53
      %p153 = pneg %p77
      %p154 = pneg %p74
      %p155 = pneg %p103
      %p156 = pneg %p100
      %s157 = smul.u32 32, %s14
      %p158 = scmp.lt.s32.totalorder %s157, 63
      %s159 = scalar_select %p158, %s157, 63
      %s160 = smul.addr %s159, 8
      %s161 = scalar_lea.vmem %s3, %s160
      %s162 = smul.u32 32, %s14
      %p163 = scmp.lt.s32.totalorder %s162, 63
      %s164 = scalar_select %p163, %s162, 63
      %s165 = smul.addr %s164, 4
      %s166 = scalar_lea.vmem %s0, %s165
      %s167 = smul.u32 32, %s14
      %s168 = smul.u32 32, %s14
      %p169 = scmp.lt.s32.totalorder %s168, 63
      %s170 = scalar_select %p169, %s168, 63
      %s171 = smul.addr %s170, 8
      %s172 = scalar_lea.vmem %s3, %s171
      %s173 = smul.u32 32, %s14
      %v174 = vld [vmem:[%s166] sm:$0xf]
      %v175 = vld [vmem:[%s166 + $0x4] sm:$0xf]
      %v176 = vld [vmem:[%s166 + $0x8] sm:$0xf]
      %v177 = vld [vmem:[%s166 + $0xc] sm:$0xf]
      %v178 = vld [vmem:[%s166 + $0x10] sm:$0xf]
      %v179 = vld [vmem:[%s166 + $0x14] sm:$0xf]
      %v180 = vld [vmem:[%s166 + $0x18] sm:$0xf]
      %v181 = vld [vmem:[%s166 + $0x1c] sm:$0xf]
      %v182 = vld [vmem:[%s166 + $0x20] sm:$0xf]
      %v183 = vld [vmem:[%s166 + $0x24] sm:$0xf]
      %v184 = vld [vmem:[%s166 + $0x28] sm:$0xf]
      %v185 = vld [vmem:[%s166 + $0x2c] sm:$0xf]
      %v186 = vld [vmem:[%s166 + $0x30] sm:$0xf]
      %v187 = vld [vmem:[%s166 + $0x34] sm:$0xf]
      %v188 = vld [vmem:[%s166 + $0x38] sm:$0xf]
      %v189 = vld [vmem:[%s166 + $0x3c] sm:$0xf]
      %v190 = vld [vmem:[%s166 + $0x40] sm:$0xf]
      %v191 = vld [vmem:[%s166 + $0x44] sm:$0xf]
      %v192 = vld [vmem:[%s166 + $0x48] sm:$0xf]
      %v193 = vld [vmem:[%s166 + $0x4c] sm:$0xf]
      %v194 = vld [vmem:[%s166 + $0x50] sm:$0xf]
      %v195 = vld [vmem:[%s166 + $0x54] sm:$0xf]
      %v196 = vld [vmem:[%s166 + $0x58] sm:$0xf]
      %v197 = vld [vmem:[%s166 + $0x5c] sm:$0xf]
      %v198 = vld [vmem:[%s166 + $0x60] sm:$0xf]
      %v199 = vld [vmem:[%s166 + $0x64] sm:$0xf]
      %v200 = vld [vmem:[%s166 + $0x68] sm:$0xf]
      %v201 = vld [vmem:[%s166 + $0x6c] sm:$0xf]
      %v202 = vld [vmem:[%s166 + $0x70] sm:$0xf]
      %v203 = vld [vmem:[%s166 + $0x74] sm:$0xf]
      %v204 = vld [vmem:[%s166 + $0x78] sm:$0xf]
      %v205 = vld [vmem:[%s166 + $0x7c] sm:$0xf]
      %v206 = vunpack.c.l.bf16 %v174
      %v207 = vunpack.c.l.bf16 %v175
      %v208 = vunpack.c.l.bf16 %v176
      %v209 = vunpack.c.l.bf16 %v177
      %v210 = vunpack.c.l.bf16 %v178
      %v211 = vunpack.c.l.bf16 %v179
      %v212 = vunpack.c.l.bf16 %v180
      %v213 = vunpack.c.l.bf16 %v181
      %v214 = vunpack.c.l.bf16 %v182
      %v215 = vunpack.c.l.bf16 %v183
      %v216 = vunpack.c.l.bf16 %v184
      %v217 = vunpack.c.l.bf16 %v185
      %v218 = vunpack.c.l.bf16 %v186
      %v219 = vunpack.c.l.bf16 %v187
      %v220 = vunpack.c.l.bf16 %v188
      %v221 = vunpack.c.l.bf16 %v189
      %v222 = vunpack.c.l.bf16 %v190
      %v223 = vunpack.c.l.bf16 %v191
      %v224 = vunpack.c.l.bf16 %v192
      %v225 = vunpack.c.l.bf16 %v193
      %v226 = vunpack.c.l.bf16 %v194
      %v227 = vunpack.c.l.bf16 %v195
      %v228 = vunpack.c.l.bf16 %v196
      %v229 = vunpack.c.l.bf16 %v197
      %v230 = vunpack.c.l.bf16 %v198
      %v231 = vunpack.c.l.bf16 %v199
      %v232 = vunpack.c.l.bf16 %v200
      %v233 = vunpack.c.l.bf16 %v201
      %v234 = vunpack.c.l.bf16 %v202
      %v235 = vunpack.c.l.bf16 %v203
      %v236 = vunpack.c.l.bf16 %v204
      %v237 = vunpack.c.l.bf16 %v205
      %v238 = vld [vmem:[%s1] sm:$0x1]
      %v240 = vlaneseq
      %v241 = vshrl.u32 %v240, 7
      %v242 = vsub.s32 0, %v241
      %v243 = vrot.slane %v238, %v242
      %v245 = vmul.f32 %v206, %v243
      %v246 = vmul.f32 %v207, %v243
      %v247 = vmul.f32 %v208, %v243
      %v248 = vmul.f32 %v209, %v243
      %v249 = vmul.f32 %v210, %v243
      %v250 = vmul.f32 %v211, %v243
      %v251 = vmul.f32 %v212, %v243
      %v252 = vmul.f32 %v213, %v243
      %v253 = vmul.f32 %v214, %v243
      %v254 = vmul.f32 %v215, %v243
      %v255 = vmul.f32 %v216, %v243
      %v256 = vmul.f32 %v217, %v243
      %v257 = vmul.f32 %v218, %v243
      %v258 = vmul.f32 %v219, %v243
      %v259 = vmul.f32 %v220, %v243
      %v260 = vmul.f32 %v221, %v243
      %v261 = vmul.f32 %v222, %v243
      %v262 = vmul.f32 %v223, %v243
      %v263 = vmul.f32 %v224, %v243
      %v264 = vmul.f32 %v225, %v243
      %v265 = vmul.f32 %v226, %v243
      %v266 = vmul.f32 %v227, %v243
      %v267 = vmul.f32 %v228, %v243
      %v268 = vmul.f32 %v229, %v243
      %v269 = vmul.f32 %v230, %v243
      %v270 = vmul.f32 %v231, %v243
      %v271 = vmul.f32 %v232, %v243
      %v272 = vmul.f32 %v233, %v243
      %v273 = vmul.f32 %v234, %v243
      %v274 = vmul.f32 %v235, %v243
      %v275 = vmul.f32 %v236, %v243
      %v276 = vmul.f32 %v237, %v243
      %v277 = vld [vmem:[%s2] sm:$0x1]
      %v279 = vlaneseq
      %v280 = vshrl.u32 %v279, 7
      %v281 = vsub.s32 0, %v280
      %v282 = vrot.slane %v277, %v281
      %v284 = vadd.f32 %v245, %v282
      %v285 = vadd.f32 %v246, %v282
      %v286 = vadd.f32 %v247, %v282
      %v287 = vadd.f32 %v248, %v282
      %v288 = vadd.f32 %v249, %v282
      %v289 = vadd.f32 %v250, %v282
      %v290 = vadd.f32 %v251, %v282
      %v291 = vadd.f32 %v252, %v282
      %v292 = vadd.f32 %v253, %v282
      %v293 = vadd.f32 %v254, %v282
      %v294 = vadd.f32 %v255, %v282
      %v295 = vadd.f32 %v256, %v282
      %v296 = vadd.f32 %v257, %v282
      %v297 = vadd.f32 %v258, %v282
      %v298 = vadd.f32 %v259, %v282
      %v299 = vadd.f32 %v260, %v282
      %v300 = vadd.f32 %v261, %v282
      %v301 = vadd.f32 %v262, %v282
      %v302 = vadd.f32 %v263, %v282
      %v303 = vadd.f32 %v264, %v282
      %v304 = vadd.f32 %v265, %v282
      %v305 = vadd.f32 %v266, %v282
      %v306 = vadd.f32 %v267, %v282
      %v307 = vadd.f32 %v268, %v282
      %v308 = vadd.f32 %v269, %v282
      %v309 = vadd.f32 %v270, %v282
      %v310 = vadd.f32 %v271, %v282
      %v311 = vadd.f32 %v272, %v282
      %v312 = vadd.f32 %v273, %v282
      %v313 = vadd.f32 %v274, %v282
      %v314 = vadd.f32 %v275, %v282
      %v315 = vadd.f32 %v276, %v282
      %v316 = vmax.f32 %v284, 0.0
      %v317 = vmax.f32 %v285, 0.0
      %v318 = vmax.f32 %v286, 0.0
      %v319 = vmax.f32 %v287, 0.0
      %v320 = vmax.f32 %v288, 0.0
      %v321 = vmax.f32 %v289, 0.0
      %v322 = vmax.f32 %v290, 0.0
      %v323 = vmax.f32 %v291, 0.0
      %v324 = vmax.f32 %v292, 0.0
      %v325 = vmax.f32 %v293, 0.0
      %v326 = vmax.f32 %v294, 0.0
      %v327 = vmax.f32 %v295, 0.0
      %v328 = vmax.f32 %v296, 0.0
      %v329 = vmax.f32 %v297, 0.0
      %v330 = vmax.f32 %v298, 0.0
      %v331 = vmax.f32 %v299, 0.0
      %v332 = vmax.f32 %v300, 0.0
      %v333 = vmax.f32 %v301, 0.0
      %v334 = vmax.f32 %v302, 0.0
      %v335 = vmax.f32 %v303, 0.0
      %v336 = vmax.f32 %v304, 0.0
      %v337 = vmax.f32 %v305, 0.0
      %v338 = vmax.f32 %v306, 0.0
      %v339 = vmax.f32 %v307, 0.0
      %v340 = vmax.f32 %v308, 0.0
      %v341 = vmax.f32 %v309, 0.0
      %v342 = vmax.f32 %v310, 0.0
      %v343 = vmax.f32 %v311, 0.0
      %v344 = vmax.f32 %v312, 0.0
      %v345 = vmax.f32 %v313, 0.0
      %v346 = vmax.f32 %v314, 0.0
      %v347 = vmax.f32 %v315, 0.0
      %vm348 = vcmask 130048
      %349 = vst.msk [vmem:[%s172] sm:$0xff] %vm348, %v316
      %350 = vst.msk [vmem:[%s172 + $0x8] sm:$0xff] %vm348, %v317
      %351 = vst.msk [vmem:[%s172 + $0x10] sm:$0xff] %vm348, %v318
      %352 = vst.msk [vmem:[%s172 + $0x18] sm:$0xff] %vm348, %v319
      %353 = vst.msk [vmem:[%s172 + $0x20] sm:$0xff] %vm348, %v320
      %354 = vst.msk [vmem:[%s172 + $0x28] sm:$0xff] %vm348, %v321
      %355 = vst.msk [vmem:[%s172 + $0x30] sm:$0xff] %vm348, %v322
      %356 = vst.msk [vmem:[%s172 + $0x38] sm:$0xff] %vm348, %v323
      %357 = vst.msk [vmem:[%s172 + $0x40] sm:$0xff] %vm348, %v324
      %358 = vst.msk [vmem:[%s172 + $0x48] sm:$0xff] %vm348, %v325
      %359 = vst.msk [vmem:[%s172 + $0x50] sm:$0xff] %vm348, %v326
      %360 = vst.msk [vmem:[%s172 + $0x58] sm:$0xff] %vm348, %v327
      %361 = vst.msk [vmem:[%s172 + $0x60] sm:$0xff] %vm348, %v328
      %362 = vst.msk [vmem:[%s172 + $0x68] sm:$0xff] %vm348, %v329
      %363 = vst.msk [vmem:[%s172 + $0x70] sm:$0xff] %vm348, %v330
      %364 = vst.msk [vmem:[%s172 + $0x78] sm:$0xff] %vm348, %v331
      %365 = vst.msk [vmem:[%s172 + $0x80] sm:$0xff] %vm348, %v332
      %366 = vst.msk [vmem:[%s172 + $0x88] sm:$0xff] %vm348, %v333
      %367 = vst.msk [vmem:[%s172 + $0x90] sm:$0xff] %vm348, %v334
      %368 = vst.msk [vmem:[%s172 + $0x98] sm:$0xff] %vm348, %v335
      %369 = vst.msk [vmem:[%s172 + $0xa0] sm:$0xff] %vm348, %v336
      %370 = vst.msk [vmem:[%s172 + $0xa8] sm:$0xff] %vm348, %v337
      %371 = vst.msk [vmem:[%s172 + $0xb0] sm:$0xff] %vm348, %v338
      %372 = vst.msk [vmem:[%s172 + $0xb8] sm:$0xff] %vm348, %v339
      %373 = vst.msk [vmem:[%s172 + $0xc0] sm:$0xff] %vm348, %v340
      %374 = vst.msk [vmem:[%s172 + $0xc8] sm:$0xff] %vm348, %v341
      %375 = vst.msk [vmem:[%s172 + $0xd0] sm:$0xff] %vm348, %v342
      %376 = vst.msk [vmem:[%s172 + $0xd8] sm:$0xff] %vm348, %v343
      %377 = vst.msk [vmem:[%s172 + $0xe0] sm:$0xff] %vm348, %v344
      %378 = vst.msk [vmem:[%s172 + $0xe8] sm:$0xff] %vm348, %v345
      %379 = vst.msk [vmem:[%s172 + $0xf0] sm:$0xff] %vm348, %v346
      %380 = vst.msk [vmem:[%s172 + $0xf8] sm:$0xff] %vm348, %v347
      %s381 = smul.u32 32, %s14
      %p382 = scmp.lt.s32.totalorder %s381, 63
      %s383 = scalar_select %p382, %s381, 63
      %s384 = smul.addr %s383, 8
      %s385 = scalar_lea.vmem %s3, %s384
      // Predicated region
      $region33: #{double_conv.5} parent=31 // pred_check
        %p386 = pneg %p100
      $region34: #{double_conv.5} parent=31 // pred_check_branch
        %388 = sbr.rel (%p386) target = $region36
      $region35: #{double_conv.5} parent=31 // pred_region
        %s389 = smul.u32 32, %s14
      $region36: #{double_conv.5} parent=31 // pred_fallthru
        _
    $region32: #{double_conv.5} parent=5 // pred_fallthru
      _
    %p390 = scmp.le.s32.totalorder 2, %s9
    // Predicated region
    $region37: #{double_conv.5} parent=5 // pred_check
      %p391 = pneg %p390
    $region38: #{double_conv.5} parent=5 // pred_check_branch
      %393 = sbr.rel (%p391) target = $region40
    $region39: #{double_conv.5} parent=5 // pred_region
      %s394 = ssub.s32 %s9, 2
      // Predicated region
      $region41: #{double_conv.5} parent=39 // pred_check
        %p395 = pneg %p106
      $region42: #{double_conv.5} parent=39 // pred_check_branch
        %397 = sbr.rel (%p395) target = $region44
      $region43: #{double_conv.5} parent=39 // pred_region
        %s398 = smul.u32 32, %s15
        %p399 = scmp.lt.s32.totalorder %s398, 63
        %s400 = scalar_select %p399, %s398, 63
        %s401 = smul.addr %s400, 8
        %s402 = scalar_lea.vmem %s3, %s401
      $region44: #{double_conv.5} parent=39 // pred_fallthru
        _
    $region40: #{double_conv.5} parent=5 // pred_fallthru
      _
  $region6: #{double_conv.5} parent=0 // loop_footer
    %s13 = sadd.s32 1, %s9
  $region7: #{double_conv.5} parent=0 // loop_footer_branch
    %8 = sbr.rel target = $region3
  $region8: #{double_conv.5} parent=0 // loop_exit
    _

// kernel: double_conv.3
$region0: #{double_conv.3}
  #allocation0 [shape = 'u32[]', space=smem, size = 0x4, offset = 0x4, fixed_abs, tag = 'smem constant byte address 0x4 - core index']
  #allocation1 [shape = 'u32[144,128]{1,0:T(1,128)}', space=vmem, size = 0x12000, scoped, tag = 'internal scratch']
  %s0 = inlined_call_operand.vmem [shape: bf16[2,16,16,4], index: 0, kind: input, shape index: {}, may-alias: {0,1,2}]
  %s1 = inlined_call_operand.vmem [shape: bf16[2,16,16,4], index: 1, kind: input, shape index: {}, may-alias: {0,1,2}]
  %s2 = inlined_call_operand.vmem [shape: bf16[2,16,16,4], index: 2, kind: input, shape index: {}, may-alias: {0,1,2}]
  %s3 = inlined_call_operand.vmem [shape: f32[1,4], index: 3, kind: input, shape index: {}]
  %s4 = inlined_call_operand.vmem [shape: f32[1,4], index: 4, kind: input, shape index: {}]
  %s5 = inlined_call_operand.vmem [shape: bf16[100,16], index: 5, kind: input, shape index: {}]
  %s6 = inlined_call_operand.vmem [shape: bf16[2,256,16], index: 6, kind: output, shape index: {0}]
  %s7 = inlined_call_operand.vmem [shape: f32[2,1,2,16], index: 7, kind: output, shape index: {1}]
  %8 = xla_tuple %s6, %s7
  %s9 = sld [smem:[#allocation0]]
  $region65: #{double_conv.3} parent=0
    _
  %s11 = ssub.s32 1, %s9
  %s12 = scalar_select 0, %s11, %s9
  loop: start=0, step=1, limit=4
  $region2: #{double_conv.3} parent=0 // loop_pre_header
    _
  $region3: #{double_conv.3} parent=0 // loop_header
    %s14 = sphi 0, %s18
    %p15 = scmp.ge.s32.totalorder %s14, 4
    %s21 = sphi 0, %s33
    %s22 = sphi 0, %s29
    %s23 = sphi 0, %s21
    %s24 = sphi 0, %s22
    %s25 = sphi 0, %s23
    %s26 = sphi 0, %s24
    %s38 = sphi 0, %s40
    %s41 = sphi 0, %s38
    %s42 = sphi 0, %s41
    %s58 = sphi 0, %s42
    %s74 = sphi 0, %s76
    %s77 = sphi 0, %s74
    %s78 = sphi 0, %s77
    %s94 = sphi 0, %s78
    %s110 = sphi 0, %s112
    %s113 = sphi 0, %s110
    %s114 = sphi 0, %s113
    %s130 = sphi 0, %s114
    %s134 = sphi 0, %s134
    %s136 = sphi 0, %s134
    %s137 = sphi 0, %s136
    %s151 = sphi 0, %s137
    %s155 = sphi 0, %s155
    %s157 = sphi 0, %s155
    %s158 = sphi 0, %s157
    %s172 = sphi 0, %s158
    %s176 = sphi 0, %s176
    %s178 = sphi 0, %s176
    %s179 = sphi 0, %s178
    %s193 = sphi 0, %s179
    %s201 = sphi 0, %s203
    %s204 = sphi 0, %s201
    %s205 = sphi 0, %s204
    %s221 = sphi 0, %s205
    %s229 = sphi 0, %s231
    %s232 = sphi 0, %s229
    %s233 = sphi 0, %s232
    %s249 = sphi 0, %s233
  $region4: #{double_conv.3} parent=0 // loop_header_branch
    %17 = sbr.rel (%p15) target = $region8
  $region5: #{double_conv.3} parent=0 // loop_body
    %s19 = ssub.s32 %s14, 1
    %s20 = ssub.s32 %s14, 2
    %s27 = sadd.s32 1, %s22
    %p28 = scmp.ge.s32.totalorder %s27, 1
    %s29 = scalar_select %p28, 0, %s27
    %s30 = sadd.s32 1, %s21
    %s31 = scalar_select %p28, %s30, %s21
    %p32 = scmp.ge.s32.totalorder %s31, 2
    %s33 = scalar_select %p32, 0, %s31
    %s34 = ssub.s32 %s21, %s33
    %s35 = ssub.s32 %s22, %s29
    %s36 = sor.u32 %s34, %s35
    %p37 = scmp.eq.s32.totalorder %s36, 0
    %s39 = sadd.s32 %s38, 1
    %s40 = scalar_select %p37, %s38, %s39
    %p43 = pneg %p37
    %p44 = scmp.eq.s32.totalorder %s14, 1
    %p45 = por %p43, %p44
    %p46 = scmp.ne.s32.totalorder %s38, %s41
    %p47 = scmp.eq.s32.totalorder %s14, 0
    %p48 = por %p46, %p47
    %p49 = scmp.ne.s32.totalorder %s38, %s41
    %p50 = scmp.eq.s32.totalorder %s19, 1
    %p51 = por %p49, %p50
    %p52 = scmp.ne.s32.totalorder %s41, %s42
    %p53 = scmp.eq.s32.totalorder %s19, 0
    %p54 = por %p52, %p53
    %p55 = scmp.ne.s32.totalorder %s41, %s42
    %p56 = scmp.eq.s32.totalorder %s20, 1
    %p57 = por %p55, %p56
    %p59 = scmp.ne.s32.totalorder %s42, %s58
    %p60 = scmp.eq.s32.totalorder %s20, 0
    %p61 = por %p59, %p60
    %s62 = smul.u32 %s22, 4
    %s63 = ssub.s32 %s62, 1
    %p64 = scmp.gt.s32.totalorder %s63, 0
    %s65 = scalar_select %p64, %s63, 0
    %s66 = smul.u32 %s29, 4
    %s67 = ssub.s32 %s66, 1
    %p68 = scmp.gt.s32.totalorder %s67, 0
    %s69 = scalar_select %p68, %s67, 0
    %s70 = ssub.s32 %s21, %s33
    %s71 = ssub.s32 %s65, %s69
    %s72 = sor.u32 %s70, %s71
    %p73 = scmp.eq.s32.totalorder %s72, 0
    %s75 = sadd.s32 %s74, 1
    %s76 = scalar_select %p73, %s74, %s75
    %p79 = pneg %p73
    %p80 = scmp.eq.s32.totalorder %s14, 1
    %p81 = por %p79, %p80
    %p82 = scmp.ne.s32.totalorder %s74, %s77
    %p83 = scmp.eq.s32.totalorder %s14, 0
    %p84 = por %p82, %p83
    %p85 = scmp.ne.s32.totalorder %s74, %s77
    %p86 = scmp.eq.s32.totalorder %s19, 1
    %p87 = por %p85, %p86
    %p88 = scmp.ne.s32.totalorder %s77, %s78
    %p89 = scmp.eq.s32.totalorder %s19, 0
    %p90 = por %p88, %p89
    %p91 = scmp.ne.s32.totalorder %s77, %s78
    %p92 = scmp.eq.s32.totalorder %s20, 1
    %p93 = por %p91, %p92
    %p95 = scmp.ne.s32.totalorder %s78, %s94
    %p96 = scmp.eq.s32.totalorder %s20, 0
    %p97 = por %p95, %p96
    %s98 = sadd.s32 %s22, 1
    %s99 = smul.u32 %s98, 4
    %p100 = scmp.lt.s32.totalorder %s99, 3
    %s101 = scalar_select %p100, %s99, 3
    %s102 = sadd.s32 %s29, 1
    %s103 = smul.u32 %s102, 4
    %p104 = scmp.lt.s32.totalorder %s103, 3
    %s105 = scalar_select %p104, %s103, 3
    %s106 = ssub.s32 %s21, %s33
    %s107 = ssub.s32 %s101, %s105
    %s108 = sor.u32 %s106, %s107
    %p109 = scmp.eq.s32.totalorder %s108, 0
    %s111 = sadd.s32 %s110, 1
    %s112 = scalar_select %p109, %s110, %s111
    %p115 = pneg %p109
    %p116 = scmp.eq.s32.totalorder %s14, 1
    %p117 = por %p115, %p116
    %p118 = scmp.ne.s32.totalorder %s110, %s113
    %p119 = scmp.eq.s32.totalorder %s14, 0
    %p120 = por %p118, %p119
    %p121 = scmp.ne.s32.totalorder %s110, %s113
    %p122 = scmp.eq.s32.totalorder %s19, 1
    %p123 = por %p121, %p122
    %p124 = scmp.ne.s32.totalorder %s113, %s114
    %p125 = scmp.eq.s32.totalorder %s19, 0
    %p126 = por %p124, %p125
    %p127 = scmp.ne.s32.totalorder %s113, %s114
    %p128 = scmp.eq.s32.totalorder %s20, 1
    %p129 = por %p127, %p128
    %p131 = scmp.ne.s32.totalorder %s114, %s130
    %p132 = scmp.eq.s32.totalorder %s20, 0
    %p133 = por %p131, %p132
    %s135 = sadd.s32 %s134, 1
    %p138 = scmp.eq.s32.totalorder %s14, 1
    %p139 = scmp.ne.s32.totalorder %s134, %s136
    %p140 = scmp.eq.s32.totalorder %s14, 0
    %p141 = por %p139, %p140
    %p142 = scmp.ne.s32.totalorder %s134, %s136
    %p143 = scmp.eq.s32.totalorder %s19, 1
    %p144 = por %p142, %p143
    %p145 = scmp.ne.s32.totalorder %s136, %s137
    %p146 = scmp.eq.s32.totalorder %s19, 0
    %p147 = por %p145, %p146
    %p148 = scmp.ne.s32.totalorder %s136, %s137
    %p149 = scmp.eq.s32.totalorder %s20, 1
    %p150 = por %p148, %p149
    %p152 = scmp.ne.s32.totalorder %s137, %s151
    %p153 = scmp.eq.s32.totalorder %s20, 0
    %p154 = por %p152, %p153
    %s156 = sadd.s32 %s155, 1
    %p159 = scmp.eq.s32.totalorder %s14, 1
    %p160 = scmp.ne.s32.totalorder %s155, %s157
    %p161 = scmp.eq.s32.totalorder %s14, 0
    %p162 = por %p160, %p161
    %p163 = scmp.ne.s32.totalorder %s155, %s157
    %p164 = scmp.eq.s32.totalorder %s19, 1
    %p165 = por %p163, %p164
    %p166 = scmp.ne.s32.totalorder %s157, %s158
    %p167 = scmp.eq.s32.totalorder %s19, 0
    %p168 = por %p166, %p167
    %p169 = scmp.ne.s32.totalorder %s157, %s158
    %p170 = scmp.eq.s32.totalorder %s20, 1
    %p171 = por %p169, %p170
    %p173 = scmp.ne.s32.totalorder %s158, %s172
    %p174 = scmp.eq.s32.totalorder %s20, 0
    %p175 = por %p173, %p174
    %s177 = sadd.s32 %s176, 1
    %p180 = scmp.eq.s32.totalorder %s14, 1
    %p181 = scmp.ne.s32.totalorder %s176, %s178
    %p182 = scmp.eq.s32.totalorder %s14, 0
    %p183 = por %p181, %p182
    %p184 = scmp.ne.s32.totalorder %s176, %s178
    %p185 = scmp.eq.s32.totalorder %s19, 1
    %p186 = por %p184, %p185
    %p187 = scmp.ne.s32.totalorder %s178, %s179
    %p188 = scmp.eq.s32.totalorder %s19, 0
    %p189 = por %p187, %p188
    %p190 = scmp.ne.s32.totalorder %s178, %s179
    %p191 = scmp.eq.s32.totalorder %s20, 1
    %p192 = por %p190, %p191
    %p194 = scmp.ne.s32.totalorder %s179, %s193
    %p195 = scmp.eq.s32.totalorder %s20, 0
    %p196 = por %p194, %p195
    %s197 = ssub.s32 %s21, %s33
    %s198 = ssub.s32 %s22, %s29
    %s199 = sor.u32 %s197, %s198
    %p200 = scmp.eq.s32.totalorder %s199, 0
    %s202 = sadd.s32 %s201, 1
    %s203 = scalar_select %p200, %s201, %s202
    %p206 = pneg %p200
    %p207 = scmp.eq.s32.totalorder %s14, 1
    %p208 = por %p206, %p207
    %p209 = scmp.ne.s32.totalorder %s201, %s204
    %p210 = scmp.eq.s32.totalorder %s14, 0
    %p211 = por %p209, %p210
    %p212 = scmp.ne.s32.totalorder %s201, %s204
    %p213 = scmp.eq.s32.totalorder %s19, 1
    %p214 = por %p212, %p213
    %p215 = scmp.ne.s32.totalorder %s204, %s205
    %p216 = scmp.eq.s32.totalorder %s19, 0
    %p217 = por %p215, %p216
    %p218 = scmp.ne.s32.totalorder %s204, %s205
    %p219 = scmp.eq.s32.totalorder %s20, 1
    %p220 = por %p218, %p219
    %p222 = scmp.ne.s32.totalorder %s205, %s221
    %p223 = scmp.eq.s32.totalorder %s20, 0
    %p224 = por %p222, %p223
    %s225 = ssub.s32 %s21, %s33
    %s226 = ssub.s32 %s22, %s29
    %s227 = sor.u32 %s225, %s226
    %p228 = scmp.eq.s32.totalorder %s227, 0
    %s230 = sadd.s32 %s229, 1
    %s231 = scalar_select %p228, %s229, %s230
    %p234 = pneg %p228
    %p235 = scmp.eq.s32.totalorder %s14, 1
    %p236 = por %p234, %p235
    %p237 = scmp.ne.s32.totalorder %s229, %s232
    %p238 = scmp.eq.s32.totalorder %s14, 0
    %p239 = por %p237, %p238
    %p240 = scmp.ne.s32.totalorder %s229, %s232
    %p241 = scmp.eq.s32.totalorder %s19, 1
    %p242 = por %p240, %p241
    %p243 = scmp.ne.s32.totalorder %s232, %s233
    %p244 = scmp.eq.s32.totalorder %s19, 0
    %p245 = por %p243, %p244
    %p246 = scmp.ne.s32.totalorder %s232, %s233
    %p247 = scmp.eq.s32.totalorder %s20, 1
    %p248 = por %p246, %p247
    %p250 = scmp.ne.s32.totalorder %s233, %s249
    %p251 = scmp.eq.s32.totalorder %s20, 0
    %p252 = por %p250, %p251
    %p253 = scmp.le.s32.totalorder 1, %s14
    %p254 = scmp.lt.s32.totalorder %s14, 3
    %p255 = pnand %p253, %p254
    %p256 = pneg %p255
    // Predicated region
    $region9: #{double_conv.3} parent=5 // pred_check
      _
    $region10: #{double_conv.3} parent=5 // pred_check_branch
      %258 = sbr.rel (%p255) target = $region12
    $region11: #{double_conv.3} parent=5 // pred_region
      %s259 = ssub.s32 %s14, 1
      // Predicated region
      $region13: #{double_conv.3} parent=11 // pred_check
        %p260 = pneg %p147
      $region14: #{double_conv.3} parent=11 // pred_check_branch
        %262 = sbr.rel (%p260) target = $region16
      $region15: #{double_conv.3} parent=11 // pred_region
        _
      $region16: #{double_conv.3} parent=11 // pred_fallthru
        _
      // Predicated region
      $region17: #{double_conv.3} parent=11 // pred_check
        %p263 = pneg %p168
      $region18: #{double_conv.3} parent=11 // pred_check_branch
        %265 = sbr.rel (%p263) target = $region20
      $region19: #{double_conv.3} parent=11 // pred_region
        _
      $region20: #{double_conv.3} parent=11 // pred_fallthru
        _
      // Predicated region
      $region21: #{double_conv.3} parent=11 // pred_check
        %p266 = pneg %p189
      $region22: #{double_conv.3} parent=11 // pred_check_branch
        %268 = sbr.rel (%p266) target = $region24
      $region23: #{double_conv.3} parent=11 // pred_region
        _
      $region24: #{double_conv.3} parent=11 // pred_fallthru
        _
    $region12: #{double_conv.3} parent=5 // pred_fallthru
      _
    %p269 = scmp.lt.s32.totalorder %s14, 2
    // Predicated region
    $region25: #{double_conv.3} parent=5 // pred_check
      %p270 = pneg %p269
    $region26: #{double_conv.3} parent=5 // pred_check_branch
      %272 = sbr.rel (%p270) target = $region28
    $region27: #{double_conv.3} parent=5 // pred_region
      // Predicated region
      $region29: #{double_conv.3} parent=27 // pred_check
        %p273 = pneg %p48
      $region30: #{double_conv.3} parent=27 // pred_check_branch
        %275 = sbr.rel (%p273) target = $region32
      $region31: #{double_conv.3} parent=27 // pred_region
        %s276 = smul.u32 16, %s22
        %p277 = scmp.lt.s32.totalorder %s21, 1
        %s278 = scalar_select %p277, %s21, 1
        %p279 = scmp.lt.s32.totalorder %s276, 15
        %s280 = scalar_select %p279, %s276, 15
        %s281 = smul.addr %s280, 2
        %s282 = smul.addr %s278, 32
        %s283 = sadd.s32 %s281, %s282
        %s284 = smul.addr %s283, 4
        %s285 = scalar_lea.vmem %s0, %s284
        %s286 = smul.u32 16, %s22
      $region32: #{double_conv.3} parent=27 // pred_fallthru
        _
      // Predicated region
      $region33: #{double_conv.3} parent=27 // pred_check
        %p287 = pneg %p84
      $region34: #{double_conv.3} parent=27 // pred_check_branch
        %289 = sbr.rel (%p287) target = $region36
      $region35: #{double_conv.3} parent=27 // pred_region
        %s290 = smul.u32 %s22, 4
        %s291 = ssub.s32 %s290, 1
        %p292 = scmp.gt.s32.totalorder %s291, 0
        %s293 = scalar_select %p292, %s291, 0
        %s294 = smul.u32 4, %s293
        %p295 = scmp.lt.s32.totalorder %s21, 1
        %s296 = scalar_select %p295, %s21, 1
        %p297 = scmp.lt.s32.totalorder %s294, 15
        %s298 = scalar_select %p297, %s294, 15
        %s299 = smul.addr %s298, 2
        %s300 = smul.addr %s296, 32
        %s301 = sadd.s32 %s299, %s300
        %s302 = smul.addr %s301, 4
        %s303 = scalar_lea.vmem %s1, %s302
        %s304 = smul.u32 %s22, 4
        %s305 = ssub.s32 %s304, 1
        %p306 = scmp.gt.s32.totalorder %s305, 0
        %s307 = scalar_select %p306, %s305, 0
        %s308 = smul.u32 4, %s307
      $region36: #{double_conv.3} parent=27 // pred_fallthru
        _
      // Predicated region
      $region37: #{double_conv.3} parent=27 // pred_check
        %p309 = pneg %p120
      $region38: #{double_conv.3} parent=27 // pred_check_branch
        %311 = sbr.rel (%p309) target = $region40
      $region39: #{double_conv.3} parent=27 // pred_region
        %s312 = sadd.s32 %s22, 1
        %s313 = smul.u32 %s312, 4
        %p314 = scmp.lt.s32.totalorder %s313, 3
        %s315 = scalar_select %p314, %s313, 3
        %s316 = smul.u32 4, %s315
        %p317 = scmp.lt.s32.totalorder %s21, 1
        %s318 = scalar_select %p317, %s21, 1
        %p319 = scmp.lt.s32.totalorder %s316, 15
        %s320 = scalar_select %p319, %s316, 15
        %s321 = smul.addr %s320, 2
        %s322 = smul.addr %s318, 32
        %s323 = sadd.s32 %s321, %s322
        %s324 = smul.addr %s323, 4
        %s325 = scalar_lea.vmem %s2, %s324
        %s326 = sadd.s32 %s22, 1
        %s327 = smul.u32 %s326, 4
        %p328 = scmp.lt.s32.totalorder %s327, 3
        %s329 = scalar_select %p328, %s327, 3
        %s330 = smul.u32 4, %s329
      $region40: #{double_conv.3} parent=27 // pred_fallthru
        _
    $region28: #{double_conv.3} parent=5 // pred_fallthru
      _
    %p331 = scmp.le.s32.totalorder 1, %s14
    %p332 = scmp.lt.s32.totalorder %s14, 3
    %p333 = pnand %p331, %p332
    %p334 = pneg %p333
    // Predicated region
    $region41: #{double_conv.3} parent=5 // pred_check
      _
    $region42: #{double_conv.3} parent=5 // pred_check_branch
      %336 = sbr.rel (%p333) target = $region44
    $region43: #{double_conv.3} parent=5 // pred_region
      %s337 = ssub.s32 %s14, 1
      %s338 = smul.u32 16, %s24
      %p339 = scmp.lt.s32.totalorder %s23, 1
      %s340 = scalar_select %p339, %s23, 1
      %p341 = scmp.lt.s32.totalorder %s338, 15
      %s342 = scalar_select %p341, %s338, 15
      %s343 = smul.addr %s342, 2
      %s344 = smul.addr %s340, 32
      %s345 = sadd.s32 %s343, %s344
      %s346 = smul.addr %s345, 4
      %s347 = scalar_lea.vmem %s0, %s346
      %p348 = pneg %p54
      %p349 = pneg %p51
      %s350 = smul.u32 %s24, 4
      %s351 = ssub.s32 %s350, 1
      %p352 = scmp.gt.s32.totalorder %s351, 0
      %s353 = scalar_select %p352, %s351, 0
      %s354 = smul.u32 4, %s353
      %p355 = scmp.lt.s32.totalorder %s23, 1
      %s356 = scalar_select %p355, %s23, 1
      %p357 = scmp.lt.s32.totalorder %s354, 15
      %s358 = scalar_select %p357, %s354, 15
      %s359 = smul.addr %s358, 2
      %s360 = smul.addr %s356, 32
      %s361 = sadd.s32 %s359, %s360
      %s362 = smul.addr %s361, 4
      %s363 = scalar_lea.vmem %s1, %s362
      %p364 = pneg %p90
      %p365 = pneg %p87
      %s366 = sadd.s32 %s24, 1
      %s367 = smul.u32 %s366, 4
      %p368 = scmp.lt.s32.totalorder %s367, 3
      %s369 = scalar_select %p368, %s367, 3
      %s370 = smul.u32 4, %s369
      %p371 = scmp.lt.s32.totalorder %s23, 1
      %s372 = scalar_select %p371, %s23, 1
      %p373 = scmp.lt.s32.totalorder %s370, 15
      %s374 = scalar_select %p373, %s370, 15
      %s375 = smul.addr %s374, 2
      %s376 = smul.addr %s372, 32
      %s377 = sadd.s32 %s375, %s376
      %s378 = smul.addr %s377, 4
      %s379 = scalar_lea.vmem %s2, %s378
      %p380 = pneg %p126
      %p381 = pneg %p123
      %p382 = pneg %p147
      %p383 = pneg %p144
      %p384 = pneg %p168
      %p385 = pneg %p165
      %p386 = pneg %p189
      %p387 = pneg %p186
      %p388 = pneg %p217
      %p389 = pneg %p214
      %s390 = smul.u32 32, %s24
      %p391 = scmp.lt.s32.totalorder %s23, 1
      %s392 = scalar_select %p391, %s23, 1
      %p393 = scmp.lt.s32.totalorder %s390, 31
      %s394 = scalar_select %p393, %s390, 31
      %s395 = smul.addr %s392, 32
      %s396 = sadd.s32 %s394, %s395
      %s397 = smul.addr %s396, 4
      %s398 = scalar_lea.vmem %s6, %s397
      %p399 = pneg %p245
      %p400 = pneg %p242
      %p401 = scmp.lt.s32.totalorder %s23, 1
      %s402 = scalar_select %p401, %s23, 1
      %p403 = scmp.lt.s32.totalorder %s24, 0
      %s404 = scalar_select %p403, %s24, 0
      %s405 = sadd.s32 %s404, %s402
      %s406 = smul.addr %s405, 2
      %s407 = scalar_lea.vmem %s7, %s406
      %s408 = smul.u32 16, %s24
      %p409 = scmp.lt.s32.totalorder %s23, 1
      %s410 = scalar_select %p409, %s23, 1
      %p411 = scmp.lt.s32.totalorder %s408, 15
      %s412 = scalar_select %p411, %s408, 15
      %s413 = smul.addr %s412, 2
      %s414 = smul.addr %s410, 32
      %s415 = sadd.s32 %s413, %s414
      %s416 = smul.addr %s415, 4
      %s417 = scalar_lea.vmem %s0, %s416
      %s418 = smul.u32 16, %s24
      %s419 = smul.u32 %s24, 4
      %s420 = ssub.s32 %s419, 1
      %p421 = scmp.gt.s32.totalorder %s420, 0
      %s422 = scalar_select %p421, %s420, 0
      %s423 = smul.u32 4, %s422
      %p424 = scmp.lt.s32.totalorder %s23, 1
      %s425 = scalar_select %p424, %s23, 1
      %p426 = scmp.lt.s32.totalorder %s423, 15
      %s427 = scalar_select %p426, %s423, 15
      %s428 = smul.addr %s427, 2
      %s429 = smul.addr %s425, 32
      %s430 = sadd.s32 %s428, %s429
      %s431 = smul.addr %s430, 4
      %s432 = scalar_lea.vmem %s1, %s431
      %s433 = smul.u32 %s24, 4
      %s434 = ssub.s32 %s433, 1
      %p435 = scmp.gt.s32.totalorder %s434, 0
      %s436 = scalar_select %p435, %s434, 0
      %s437 = smul.u32 4, %s436
      %s438 = sadd.s32 %s24, 1
      %s439 = smul.u32 %s438, 4
      %p440 = scmp.lt.s32.totalorder %s439, 3
      %s441 = scalar_select %p440, %s439, 3
      %s442 = smul.u32 4, %s441
      %p443 = scmp.lt.s32.totalorder %s23, 1
      %s444 = scalar_select %p443, %s23, 1
      %p445 = scmp.lt.s32.totalorder %s442, 15
      %s446 = scalar_select %p445, %s442, 15
      %s447 = smul.addr %s446, 2
      %s448 = smul.addr %s444, 32
      %s449 = sadd.s32 %s447, %s448
      %s450 = smul.addr %s449, 4
      %s451 = scalar_lea.vmem %s2, %s450
      %s452 = sadd.s32 %s24, 1
      %s453 = smul.u32 %s452, 4
      %p454 = scmp.lt.s32.totalorder %s453, 3
      %s455 = scalar_select %p454, %s453, 3
      %s456 = smul.u32 4, %s455
      %s457 = smul.u32 32, %s24
      %p458 = scmp.lt.s32.totalorder %s23, 1
      %s459 = scalar_select %p458, %s23, 1
      %p460 = scmp.lt.s32.totalorder %s457, 31
      %s461 = scalar_select %p460, %s457, 31
      %s462 = smul.addr %s459, 32
      %s463 = sadd.s32 %s461, %s462
      %s464 = smul.addr %s463, 4
      %s465 = scalar_lea.vmem %s6, %s464
      %s466 = smul.u32 32, %s24
      %p467 = scmp.lt.s32.totalorder %s23, 1
      %s468 = scalar_select %p467, %s23, 1
      %p469 = scmp.lt.s32.totalorder %s24, 0
      %s470 = scalar_select %p469, %s24, 0
      %s471 = sadd.s32 %s470, %s468
      %s472 = smul.addr %s471, 2
      %s473 = scalar_lea.vmem %s7, %s472
      %v475 = vld [vmem:[%s417] sm:$0xf]
      %v476 = vld [vmem:[%s417 + $0x4] sm:$0xf]
      %v477 = vld [vmem:[%s417 + $0x8] sm:$0xf]
      %v478 = vld [vmem:[%s417 + $0xc] sm:$0xf]
      %v479 = vld [vmem:[%s417 + $0x10] sm:$0xf]
      %v480 = vld [vmem:[%s417 + $0x14] sm:$0xf]
      %v481 = vld [vmem:[%s417 + $0x18] sm:$0xf]
      %v482 = vld [vmem:[%s417 + $0x1c] sm:$0xf]
      %v483 = vld [vmem:[%s417 + $0x20] sm:$0xf]
      %v484 = vld [vmem:[%s417 + $0x24] sm:$0xf]
      %v485 = vld [vmem:[%s417 + $0x28] sm:$0xf]
      %v486 = vld [vmem:[%s417 + $0x2c] sm:$0xf]
      %v487 = vld [vmem:[%s417 + $0x30] sm:$0xf]
      %v488 = vld [vmem:[%s417 + $0x34] sm:$0xf]
      %v489 = vld [vmem:[%s417 + $0x38] sm:$0xf]
      %v490 = vld [vmem:[%s417 + $0x3c] sm:$0xf]
      %v491 = vld [vmem:[%s417 + $0x40] sm:$0xf]
      %v492 = vld [vmem:[%s417 + $0x44] sm:$0xf]
      %v493 = vld [vmem:[%s417 + $0x48] sm:$0xf]
      %v494 = vld [vmem:[%s417 + $0x4c] sm:$0xf]
      %v495 = vld [vmem:[%s417 + $0x50] sm:$0xf]
      %v496 = vld [vmem:[%s417 + $0x54] sm:$0xf]
      %v497 = vld [vmem:[%s417 + $0x58] sm:$0xf]
      %v498 = vld [vmem:[%s417 + $0x5c] sm:$0xf]
      %v499 = vld [vmem:[%s417 + $0x60] sm:$0xf]
      %v500 = vld [vmem:[%s417 + $0x64] sm:$0xf]
      %v501 = vld [vmem:[%s417 + $0x68] sm:$0xf]
      %v502 = vld [vmem:[%s417 + $0x6c] sm:$0xf]
      %v503 = vld [vmem:[%s417 + $0x70] sm:$0xf]
      %v504 = vld [vmem:[%s417 + $0x74] sm:$0xf]
      %v505 = vld [vmem:[%s417 + $0x78] sm:$0xf]
      %v506 = vld [vmem:[%s417 + $0x7c] sm:$0xf]
      %v507 = vunpack.c.l.bf16 %v475
      %v508 = vunpack.c.l.bf16 %v476
      %v509 = vunpack.c.l.bf16 %v477
      %v510 = vunpack.c.l.bf16 %v478
      %v511 = vunpack.c.l.bf16 %v479
      %v512 = vunpack.c.l.bf16 %v480
      %v513 = vunpack.c.l.bf16 %v481
      %v514 = vunpack.c.l.bf16 %v482
      %v515 = vunpack.c.l.bf16 %v483
      %v516 = vunpack.c.l.bf16 %v484
      %v517 = vunpack.c.l.bf16 %v485
      %v518 = vunpack.c.l.bf16 %v486
      %v519 = vunpack.c.l.bf16 %v487
      %v520 = vunpack.c.l.bf16 %v488
      %v521 = vunpack.c.l.bf16 %v489
      %v522 = vunpack.c.l.bf16 %v490
      %v523 = vunpack.c.l.bf16 %v491
      %v524 = vunpack.c.l.bf16 %v492
      %v525 = vunpack.c.l.bf16 %v493
      %v526 = vunpack.c.l.bf16 %v494
      %v527 = vunpack.c.l.bf16 %v495
      %v528 = vunpack.c.l.bf16 %v496
      %v529 = vunpack.c.l.bf16 %v497
      %v530 = vunpack.c.l.bf16 %v498
      %v531 = vunpack.c.l.bf16 %v499
      %v532 = vunpack.c.l.bf16 %v500
      %v533 = vunpack.c.l.bf16 %v501
      %v534 = vunpack.c.l.bf16 %v502
      %v535 = vunpack.c.l.bf16 %v503
      %v536 = vunpack.c.l.bf16 %v504
      %v537 = vunpack.c.l.bf16 %v505
      %v538 = vunpack.c.l.bf16 %v506
      %v539 = vld [vmem:[%s432 + $0x10] sm:$0xf]
      %v540 = vld [vmem:[%s432 + $0x14] sm:$0xf]
      %v541 = vld [vmem:[%s432 + $0x18] sm:$0xf]
      %v542 = vld [vmem:[%s432 + $0x1c] sm:$0xf]
      %v543 = vunpack.c.l.bf16 %v539
      %v544 = vunpack.c.l.bf16 %v540
      %v545 = vunpack.c.l.bf16 %v541
      %v546 = vunpack.c.l.bf16 %v542
      %v547 = vld [vmem:[%s451] sm:$0xf]
      %v548 = vld [vmem:[%s451 + $0x4] sm:$0xf]
      %v549 = vld [vmem:[%s451 + $0x8] sm:$0xf]
      %v550 = vld [vmem:[%s451 + $0xc] sm:$0xf]
      %v551 = vunpack.c.l.bf16 %v547
      %v552 = vunpack.c.l.bf16 %v548
      %v553 = vunpack.c.l.bf16 %v549
      %v554 = vunpack.c.l.bf16 %v550
      %p555 = scmp.gt.s32.totalorder %s24, 0
      %s556 = scalar_select %p555, 1.0, 0.0
      %v557 = vstv %s556
      %v558 = vmul.f32 %v543, %v557
      %v559 = vmul.f32 %v544, %v557
      %v560 = vmul.f32 %v545, %v557
      %v561 = vmul.f32 %v546, %v557
      %p562 = scmp.lt.s32.totalorder %s24, 0
      %s563 = scalar_select %p562, 1.0, 0.0
      %v564 = vstv %s563
      %v565 = vmul.f32 %v551, %v564
      %v566 = vmul.f32 %v552, %v564
      %v567 = vmul.f32 %v553, %v564
      %v568 = vmul.f32 %v554, %v564
      %v569 = vpack.c.bf16 %v559, %v558
      %v570 = vpack.c.bf16 %v561, %v560
      %v571 = vpack.c.bf16 %v508, %v507
      %v572 = vpack.c.bf16 %v510, %v509
      %v573 = vpack.c.bf16 %v512, %v511
      %v574 = vpack.c.bf16 %v514, %v513
      %v575 = vpack.c.bf16 %v516, %v515
      %v576 = vpack.c.bf16 %v518, %v517
      %v577 = vpack.c.bf16 %v520, %v519
      %v578 = vpack.c.bf16 %v522, %v521
      %v579 = vpack.c.bf16 %v524, %v523
      %v580 = vpack.c.bf16 %v526, %v525
      %v581 = vpack.c.bf16 %v528, %v527
      %v582 = vpack.c.bf16 %v530, %v529
      %v583 = vpack.c.bf16 %v532, %v531
      %v584 = vpack.c.bf16 %v534, %v533
      %v585 = vpack.c.bf16 %v536, %v535
      %v586 = vpack.c.bf16 %v538, %v537
      %v587 = vpack.c.bf16 %v566, %v565
      %v588 = vpack.c.bf16 %v568, %v567
      %v609 = vrot.slane %v569, 7
      %v610 = vrot.slane %v570, 7
      %v611 = vrot.slane %v571, 7
      %v612 = vrot.slane %v572, 7
      %v613 = vrot.slane %v573, 7
      %v614 = vrot.slane %v574, 7
      %v615 = vrot.slane %v575, 7
      %v616 = vrot.slane %v576, 7
      %v617 = vrot.slane %v577, 7
      %v618 = vrot.slane %v578, 7
      %v619 = vrot.slane %v579, 7
      %v620 = vrot.slane %v580, 7
      %v621 = vrot.slane %v581, 7
      %v622 = vrot.slane %v582, 7
      %v623 = vrot.slane %v583, 7
      %v624 = vrot.slane %v584, 7
      %v625 = vrot.slane %v585, 7
      %v626 = vrot.slane %v586, 7
      %v627 = vrot.slane %v587, 7
      %v628 = vrot.slane %v588, 7
      %vm629 = vcmask 1040384
      %v632 = vsel %vm629, 0, %v609
      %v634 = vsel %vm629, 0, %v610
      %v636 = vsel %vm629, 0, %v611
      %v638 = vsel %vm629, 0, %v612
      %v640 = vsel %vm629, 0, %v613
      %v642 = vsel %vm629, 0, %v614
      %v644 = vsel %vm629, 0, %v615
      %v646 = vsel %vm629, 0, %v616
      %v648 = vsel %vm629, 0, %v617
      %v650 = vsel %vm629, 0, %v618
      %v652 = vsel %vm629, 0, %v619
      %v654 = vsel %vm629, 0, %v620
      %v656 = vsel %vm629, 0, %v621
      %v658 = vsel %vm629, 0, %v622
      %v660 = vsel %vm629, 0, %v623
      %v662 = vsel %vm629, 0, %v624
      %v664 = vsel %vm629, 0, %v625
      %v666 = vsel %vm629, 0, %v626
      %v668 = vsel %vm629, 0, %v627
      %v670 = vsel %vm629, 0, %v628
      %v671 = vsel %vm629, %v609, 0
      %v672 = vsel %vm629, %v610, 0
      %v673 = vsel %vm629, %v611, 0
      %v674 = vsel %vm629, %v612, 0
      %v675 = vsel %vm629, %v613, 0
      %v676 = vsel %vm629, %v614, 0
      %v677 = vsel %vm629, %v615, 0
      %v678 = vsel %vm629, %v616, 0
      %v679 = vsel %vm629, %v617, 0
      %v680 = vsel %vm629, %v618, 0
      %v681 = vsel %vm629, %v619, 0
      %v682 = vsel %vm629, %v620, 0
      %v683 = vsel %vm629, %v621, 0
      %v684 = vsel %vm629, %v622, 0
      %v685 = vsel %vm629, %v623, 0
      %v686 = vsel %vm629, %v624, 0
      %v687 = vsel %vm629, %v625, 0
      %v688 = vsel %vm629, %v626, 0
      %v689 = vsel %vm629, %v627, 0
      %v690 = vsel %vm629, %v628, 0
      %vm691 = vsmask.f32 7424
      %v692 = vshrl.u32 %v632, 16
      %v694 = vshll.u32 %v632, 16
      %v696 = vrot.slane %v694, 1
      %v697 = vor.u32 %v692, %v696
      %v698 = vshll.u32 %v671, 16
      %v700 = vrot.slane %v698, 1
      %v701 = vsel %vm691, %v697, %v700
      %v702 = vshrl.u32 %v634, 16
      %v704 = vshll.u32 %v634, 16
      %v706 = vrot.slane %v704, 1
      %v707 = vor.u32 %v702, %v706
      %v708 = vshll.u32 %v672, 16
      %v710 = vrot.slane %v708, 1
      %v711 = vsel %vm691, %v707, %v710
      %v712 = vshrl.u32 %v636, 16
      %v714 = vshll.u32 %v636, 16
      %v716 = vrot.slane %v714, 1
      %v717 = vor.u32 %v712, %v716
      %v718 = vshll.u32 %v673, 16
      %v720 = vrot.slane %v718, 1
      %v721 = vsel %vm691, %v717, %v720
      %v722 = vshrl.u32 %v638, 16
      %v724 = vshll.u32 %v638, 16
      %v726 = vrot.slane %v724, 1
      %v727 = vor.u32 %v722, %v726
      %v728 = vshll.u32 %v674, 16
      %v730 = vrot.slane %v728, 1
      %v731 = vsel %vm691, %v727, %v730
      %v732 = vshrl.u32 %v640, 16
      %v734 = vshll.u32 %v640, 16
      %v736 = vrot.slane %v734, 1
      %v737 = vor.u32 %v732, %v736
      %v738 = vshll.u32 %v675, 16
      %v740 = vrot.slane %v738, 1
      %v741 = vsel %vm691, %v737, %v740
      %v742 = vshrl.u32 %v642, 16
      %v744 = vshll.u32 %v642, 16
      %v746 = vrot.slane %v744, 1
      %v747 = vor.u32 %v742, %v746
      %v748 = vshll.u32 %v676, 16
      %v750 = vrot.slane %v748, 1
      %v751 = vsel %vm691, %v747, %v750
      %v752 = vshrl.u32 %v644, 16
      %v754 = vshll.u32 %v644, 16
      %v756 = vrot.slane %v754, 1
      %v757 = vor.u32 %v752, %v756
      %v758 = vshll.u32 %v677, 16
      %v760 = vrot.slane %v758, 1
      %v761 = vsel %vm691, %v757, %v760
      %v762 = vshrl.u32 %v646, 16
      %v764 = vshll.u32 %v646, 16
      %v766 = vrot.slane %v764, 1
      %v767 = vor.u32 %v762, %v766
      %v768 = vshll.u32 %v678, 16
      %v770 = vrot.slane %v768, 1
      %v771 = vsel %vm691, %v767, %v770
      %v772 = vshrl.u32 %v648, 16
      %v774 = vshll.u32 %v648, 16
      %v776 = vrot.slane %v774, 1
      %v777 = vor.u32 %v772, %v776
      %v778 = vshll.u32 %v679, 16
      %v780 = vrot.slane %v778, 1
      %v781 = vsel %vm691, %v777, %v780
      %v782 = vshrl.u32 %v650, 16
      %v784 = vshll.u32 %v650, 16
      %v786 = vrot.slane %v784, 1
      %v787 = vor.u32 %v782, %v786
      %v788 = vshll.u32 %v680, 16
      %v790 = vrot.slane %v788, 1
      %v791 = vsel %vm691, %v787, %v790
      %v792 = vshrl.u32 %v652, 16
      %v794 = vshll.u32 %v652, 16
      %v796 = vrot.slane %v794, 1
      %v797 = vor.u32 %v792, %v796
      %v798 = vshll.u32 %v681, 16
      %v800 = vrot.slane %v798, 1
      %v801 = vsel %vm691, %v797, %v800
      %v802 = vshrl.u32 %v654, 16
      %v804 = vshll.u32 %v654, 16
      %v806 = vrot.slane %v804, 1
      %v807 = vor.u32 %v802, %v806
      %v808 = vshll.u32 %v682, 16
      %v810 = vrot.slane %v808, 1
      %v811 = vsel %vm691, %v807, %v810
      %v812 = vshrl.u32 %v656, 16
      %v814 = vshll.u32 %v656, 16
      %v816 = vrot.slane %v814, 1
      %v817 = vor.u32 %v812, %v816
      %v818 = vshll.u32 %v683, 16
      %v820 = vrot.slane %v818, 1
      %v821 = vsel %vm691, %v817, %v820
      %v822 = vshrl.u32 %v658, 16
      %v824 = vshll.u32 %v658, 16
      %v826 = vrot.slane %v824, 1
      %v827 = vor.u32 %v822, %v826
      %v828 = vshll.u32 %v684, 16
      %v830 = vrot.slane %v828, 1
      %v831 = vsel %vm691, %v827, %v830
      %v832 = vshrl.u32 %v660, 16
      %v834 = vshll.u32 %v660, 16
      %v836 = vrot.slane %v834, 1
      %v837 = vor.u32 %v832, %v836
      %v838 = vshll.u32 %v685, 16
      %v840 = vrot.slane %v838, 1
      %v841 = vsel %vm691, %v837, %v840
      %v842 = vshrl.u32 %v662, 16
      %v844 = vshll.u32 %v662, 16
      %v846 = vrot.slane %v844, 1
      %v847 = vor.u32 %v842, %v846
      %v848 = vshll.u32 %v686, 16
      %v850 = vrot.slane %v848, 1
      %v851 = vsel %vm691, %v847, %v850
      %852 = vrot.lane.b32.xlu0 %v701, 4
      %v853 = vpop.permute.xlu0 %852
      %854 = vrot.lane.b32.xlu0 %v711, 4
      %v855 = vpop.permute.xlu0 %854
      %856 = vrot.lane.b32.xlu0 %v721, 4
      %v857 = vpop.permute.xlu0 %856
      %858 = vrot.lane.b32.xlu0 %v731, 4
      %v859 = vpop.permute.xlu0 %858
      %860 = vrot.lane.b32.xlu0 %v741, 4
      %v861 = vpop.permute.xlu0 %860
      %862 = vrot.lane.b32.xlu0 %v751, 4
      %v863 = vpop.permute.xlu0 %862
      %864 = vrot.lane.b32.xlu0 %v761, 4
      %v865 = vpop.permute.xlu0 %864
      %866 = vrot.lane.b32.xlu0 %v771, 4
      %v867 = vpop.permute.xlu0 %866
      %868 = vrot.lane.b32.xlu0 %v781, 4
      %v869 = vpop.permute.xlu0 %868
      %870 = vrot.lane.b32.xlu0 %v791, 4
      %v871 = vpop.permute.xlu0 %870
      %872 = vrot.lane.b32.xlu0 %v801, 4
      %v873 = vpop.permute.xlu0 %872
      %874 = vrot.lane.b32.xlu0 %v811, 4
      %v875 = vpop.permute.xlu0 %874
      %876 = vrot.lane.b32.xlu0 %v821, 4
      %v877 = vpop.permute.xlu0 %876
      %878 = vrot.lane.b32.xlu0 %v831, 4
      %v879 = vpop.permute.xlu0 %878
      %880 = vrot.lane.b32.xlu0 %v841, 4
      %v881 = vpop.permute.xlu0 %880
      %882 = vrot.lane.b32.xlu0 %v851, 4
      %v883 = vpop.permute.xlu0 %882
      %vm916 = vcmask 1046528
      %v917 = vrot.slane %v632, 1
      %v918 = vrot.slane %v671, 1
      %v919 = vsel %vm916, %v917, %v918
      %v920 = vrot.slane %v634, 1
      %v921 = vrot.slane %v672, 1
      %v922 = vsel %vm916, %v920, %v921
      %v923 = vrot.slane %v636, 1
      %v924 = vrot.slane %v673, 1
      %v925 = vsel %vm916, %v923, %v924
      %v926 = vrot.slane %v638, 1
      %v927 = vrot.slane %v674, 1
      %v928 = vsel %vm916, %v926, %v927
      %v929 = vrot.slane %v640, 1
      %v930 = vrot.slane %v675, 1
      %v931 = vsel %vm916, %v929, %v930
      %v932 = vrot.slane %v642, 1
      %v933 = vrot.slane %v676, 1
      %v934 = vsel %vm916, %v932, %v933
      %v935 = vrot.slane %v644, 1
      %v936 = vrot.slane %v677, 1
      %v937 = vsel %vm916, %v935, %v936
      %v938 = vrot.slane %v646, 1
      %v939 = vrot.slane %v678, 1
      %v940 = vsel %vm916, %v938, %v939
      %v941 = vrot.slane %v648, 1
      %v942 = vrot.slane %v679, 1
      %v943 = vsel %vm916, %v941, %v942
      %v944 = vrot.slane %v650, 1
      %v945 = vrot.slane %v680, 1
      %v946 = vsel %vm916, %v944, %v945
      %v947 = vrot.slane %v652, 1
      %v948 = vrot.slane %v681, 1
      %v949 = vsel %vm916, %v947, %v948
      %v950 = vrot.slane %v654, 1
      %v951 = vrot.slane %v682, 1
      %v952 = vsel %vm916, %v950, %v951
      %v953 = vrot.slane %v656, 1
      %v954 = vrot.slane %v683, 1
      %v955 = vsel %vm916, %v953, %v954
      %v956 = vrot.slane %v658, 1
      %v957 = vrot.slane %v684, 1
      %v958 = vsel %vm916, %v956, %v957
      %v959 = vrot.slane %v660, 1
      %v960 = vrot.slane %v685, 1
      %v961 = vsel %vm916, %v959, %v960
      %v962 = vrot.slane %v662, 1
      %v963 = vrot.slane %v686, 1
      %v964 = vsel %vm916, %v962, %v963
      %965 = vrot.lane.b32.xlu0 %v919, 8
      %v966 = vpop.permute.xlu0 %965
      %967 = vrot.lane.b32.xlu0 %v922, 8
      %v968 = vpop.permute.xlu0 %967
      %969 = vrot.lane.b32.xlu0 %v925, 8
      %v970 = vpop.permute.xlu0 %969
      %971 = vrot.lane.b32.xlu0 %v928, 8
      %v972 = vpop.permute.xlu0 %971
      %973 = vrot.lane.b32.xlu0 %v931, 8
      %v974 = vpop.permute.xlu0 %973
      %975 = vrot.lane.b32.xlu0 %v934, 8
      %v976 = vpop.permute.xlu0 %975
      %977 = vrot.lane.b32.xlu0 %v937, 8
      %v978 = vpop.permute.xlu0 %977
      %979 = vrot.lane.b32.xlu0 %v940, 8
      %v980 = vpop.permute.xlu0 %979
      %981 = vrot.lane.b32.xlu0 %v943, 8
      %v982 = vpop.permute.xlu0 %981
      %983 = vrot.lane.b32.xlu0 %v946, 8
      %v984 = vpop.permute.xlu0 %983
      %985 = vrot.lane.b32.xlu0 %v949, 8
      %v986 = vpop.permute.xlu0 %985
      %987 = vrot.lane.b32.xlu0 %v952, 8
      %v988 = vpop.permute.xlu0 %987
      %989 = vrot.lane.b32.xlu0 %v955, 8
      %v990 = vpop.permute.xlu0 %989
      %991 = vrot.lane.b32.xlu0 %v958, 8
      %v992 = vpop.permute.xlu0 %991
      %993 = vrot.lane.b32.xlu0 %v961, 8
      %v994 = vpop.permute.xlu0 %993
      %995 = vrot.lane.b32.xlu0 %v964, 8
      %v996 = vpop.permute.xlu0 %995
      %vm997 = vsmask.f32 6400
      %v998 = vrot.slane %v692, 1
      %v999 = vrot.slane %v694, 2
      %v1000 = vor.u32 %v998, %v999
      %v1001 = vshrl.u32 %v671, 16
      %v1003 = vrot.slane %v1001, 1
      %v1004 = vrot.slane %v698, 2
      %v1005 = vor.u32 %v1003, %v1004
      %v1006 = vsel %vm997, %v1000, %v1005
      %v1007 = vrot.slane %v702, 1
      %v1008 = vrot.slane %v704, 2
      %v1009 = vor.u32 %v1007, %v1008
      %v1010 = vshrl.u32 %v672, 16
      %v1012 = vrot.slane %v1010, 1
      %v1013 = vrot.slane %v708, 2
      %v1014 = vor.u32 %v1012, %v1013
      %v1015 = vsel %vm997, %v1009, %v1014
      %v1016 = vrot.slane %v712, 1
      %v1017 = vrot.slane %v714, 2
      %v1018 = vor.u32 %v1016, %v1017
      %v1019 = vshrl.u32 %v673, 16
      %v1021 = vrot.slane %v1019, 1
      %v1022 = vrot.slane %v718, 2
      %v1023 = vor.u32 %v1021, %v1022
      %v1024 = vsel %vm997, %v1018, %v1023
      %v1025 = vrot.slane %v722, 1
      %v1026 = vrot.slane %v724, 2
      %v1027 = vor.u32 %v1025, %v1026
      %v1028 = vshrl.u32 %v674, 16
      %v1030 = vrot.slane %v1028, 1
      %v1031 = vrot.slane %v728, 2
      %v1032 = vor.u32 %v1030, %v1031
      %v1033 = vsel %vm997, %v1027, %v1032
      %v1034 = vrot.slane %v732, 1
      %v1035 = vrot.slane %v734, 2
      %v1036 = vor.u32 %v1034, %v1035
      %v1037 = vshrl.u32 %v675, 16
      %v1039 = vrot.slane %v1037, 1
      %v1040 = vrot.slane %v738, 2
      %v1041 = vor.u32 %v1039, %v1040
      %v1042 = vsel %vm997, %v1036, %v1041
      %v1043 = vrot.slane %v742, 1
      %v1044 = vrot.slane %v744, 2
      %v1045 = vor.u32 %v1043, %v1044
      %v1046 = vshrl.u32 %v676, 16
      %v1048 = vrot.slane %v1046, 1
      %v1049 = vrot.slane %v748, 2
      %v1050 = vor.u32 %v1048, %v1049
      %v1051 = vsel %vm997, %v1045, %v1050
      %v1052 = vrot.slane %v752, 1
      %v1053 = vrot.slane %v754, 2
      %v1054 = vor.u32 %v1052, %v1053
      %v1055 = vshrl.u32 %v677, 16
      %v1057 = vrot.slane %v1055, 1
      %v1058 = vrot.slane %v758, 2
      %v1059 = vor.u32 %v1057, %v1058
      %v1060 = vsel %vm997, %v1054, %v1059
      %v1061 = vrot.slane %v762, 1
      %v1062 = vrot.slane %v764, 2
      %v1063 = vor.u32 %v1061, %v1062
      %v1064 = vshrl.u32 %v678, 16
      %v1066 = vrot.slane %v1064, 1
      %v1067 = vrot.slane %v768, 2
      %v1068 = vor.u32 %v1066, %v1067
      %v1069 = vsel %vm997, %v1063, %v1068
      %v1070 = vrot.slane %v772, 1
      %v1071 = vrot.slane %v774, 2
      %v1072 = vor.u32 %v1070, %v1071
      %v1073 = vshrl.u32 %v679, 16
      %v1075 = vrot.slane %v1073, 1
      %v1076 = vrot.slane %v778, 2
      %v1077 = vor.u32 %v1075, %v1076
      %v1078 = vsel %vm997, %v1072, %v1077
      %v1079 = vrot.slane %v782, 1
      %v1080 = vrot.slane %v784, 2
      %v1081 = vor.u32 %v1079, %v1080
      %v1082 = vshrl.u32 %v680, 16
      %v1084 = vrot.slane %v1082, 1
      %v1085 = vrot.slane %v788, 2
      %v1086 = vor.u32 %v1084, %v1085
      %v1087 = vsel %vm997, %v1081, %v1086
      %v1088 = vrot.slane %v792, 1
      %v1089 = vrot.slane %v794, 2
      %v1090 = vor.u32 %v1088, %v1089
      %v1091 = vshrl.u32 %v681, 16
      %v1093 = vrot.slane %v1091, 1
      %v1094 = vrot.slane %v798, 2
      %v1095 = vor.u32 %v1093, %v1094
      %v1096 = vsel %vm997, %v1090, %v1095
      %v1097 = vrot.slane %v802, 1
      %v1098 = vrot.slane %v804, 2
      %v1099 = vor.u32 %v1097, %v1098
      %v1100 = vshrl.u32 %v682, 16
      %v1102 = vrot.slane %v1100, 1
      %v1103 = vrot.slane %v808, 2
      %v1104 = vor.u32 %v1102, %v1103
      %v1105 = vsel %vm997, %v1099, %v1104
      %v1106 = vrot.slane %v812, 1
      %v1107 = vrot.slane %v814, 2
      %v1108 = vor.u32 %v1106, %v1107
      %v1109 = vshrl.u32 %v683, 16
      %v1111 = vrot.slane %v1109, 1
      %v1112 = vrot.slane %v818, 2
      %v1113 = vor.u32 %v1111, %v1112
      %v1114 = vsel %vm997, %v1108, %v1113
      %v1115 = vrot.slane %v822, 1
      %v1116 = vrot.slane %v824, 2
      %v1117 = vor.u32 %v1115, %v1116
      %v1118 = vshrl.u32 %v684, 16
      %v1120 = vrot.slane %v1118, 1
      %v1121 = vrot.slane %v828, 2
      %v1122 = vor.u32 %v1120, %v1121
      %v1123 = vsel %vm997, %v1117, %v1122
      %v1124 = vrot.slane %v832, 1
      %v1125 = vrot.slane %v834, 2
      %v1126 = vor.u32 %v1124, %v1125
      %v1127 = vshrl.u32 %v685, 16
      %v1129 = vrot.slane %v1127, 1
      %v1130 = vrot.slane %v838, 2
      %v1131 = vor.u32 %v1129, %v1130
      %v1132 = vsel %vm997, %v1126, %v1131
      %v1133 = vrot.slane %v842, 1
      %v1134 = vrot.slane %v844, 2
      %v1135 = vor.u32 %v1133, %v1134
      %v1136 = vshrl.u32 %v686, 16
      %v1138 = vrot.slane %v1136, 1
      %v1139 = vrot.slane %v848, 2
      %v1140 = vor.u32 %v1138, %v1139
      %v1141 = vsel %vm997, %v1135, %v1140
      %1142 = vrot.lane.b32.xlu0 %v1006, 12
      %v1143 = vpop.permute.xlu0 %1142
      %1144 = vrot.lane.b32.xlu0 %v1015, 12
      %v1145 = vpop.permute.xlu0 %1144
      %1146 = vrot.lane.b32.xlu0 %v1024, 12
      %v1147 = vpop.permute.xlu0 %1146
      %1148 = vrot.lane.b32.xlu0 %v1033, 12
      %v1149 = vpop.permute.xlu0 %1148
      %1150 = vrot.lane.b32.xlu0 %v1042, 12
      %v1151 = vpop.permute.xlu0 %1150
      %1152 = vrot.lane.b32.xlu0 %v1051, 12
      %v1153 = vpop.permute.xlu0 %1152
      %1154 = vrot.lane.b32.xlu0 %v1060, 12
      %v1155 = vpop.permute.xlu0 %1154
      %1156 = vrot.lane.b32.xlu0 %v1069, 12
      %v1157 = vpop.permute.xlu0 %1156
      %1158 = vrot.lane.b32.xlu0 %v1078, 12
      %v1159 = vpop.permute.xlu0 %1158
      %1160 = vrot.lane.b32.xlu0 %v1087, 12
      %v1161 = vpop.permute.xlu0 %1160
      %1162 = vrot.lane.b32.xlu0 %v1096, 12
      %v1163 = vpop.permute.xlu0 %1162
      %1164 = vrot.lane.b32.xlu0 %v1105, 12
      %v1165 = vpop.permute.xlu0 %1164
      %1166 = vrot.lane.b32.xlu0 %v1114, 12
      %v1167 = vpop.permute.xlu0 %1166
      %1168 = vrot.lane.b32.xlu0 %v1123, 12
      %v1169 = vpop.permute.xlu0 %1168
      %1170 = vrot.lane.b32.xlu0 %v1132, 12
      %v1171 = vpop.permute.xlu0 %1170
      %1172 = vrot.lane.b32.xlu0 %v1141, 12
      %v1173 = vpop.permute.xlu0 %1172
      %vm1174 = vcmask 1045504
      %v1175 = vrot.slane %v632, 2
      %v1176 = vrot.slane %v671, 2
      %v1177 = vsel %vm1174, %v1175, %v1176
      %v1178 = vrot.slane %v634, 2
      %v1179 = vrot.slane %v672, 2
      %v1180 = vsel %vm1174, %v1178, %v1179
      %v1181 = vrot.slane %v636, 2
      %v1182 = vrot.slane %v673, 2
      %v1183 = vsel %vm1174, %v1181, %v1182
      %v1184 = vrot.slane %v638, 2
      %v1185 = vrot.slane %v674, 2
      %v1186 = vsel %vm1174, %v1184, %v1185
      %v1187 = vrot.slane %v640, 2
      %v1188 = vrot.slane %v675, 2
      %v1189 = vsel %vm1174, %v1187, %v1188
      %v1190 = vrot.slane %v642, 2
      %v1191 = vrot.slane %v676, 2
      %v1192 = vsel %vm1174, %v1190, %v1191
      %v1193 = vrot.slane %v644, 2
      %v1194 = vrot.slane %v677, 2
      %v1195 = vsel %vm1174, %v1193, %v1194
      %v1196 = vrot.slane %v646, 2
      %v1197 = vrot.slane %v678, 2
      %v1198 = vsel %vm1174, %v1196, %v1197
      %v1199 = vrot.slane %v648, 2
      %v1200 = vrot.slane %v679, 2
      %v1201 = vsel %vm1174, %v1199, %v1200
      %v1202 = vrot.slane %v650, 2
      %v1203 = vrot.slane %v680, 2
      %v1204 = vsel %vm1174, %v1202, %v1203
      %v1205 = vrot.slane %v652, 2
      %v1206 = vrot.slane %v681, 2
      %v1207 = vsel %vm1174, %v1205, %v1206
      %v1208 = vrot.slane %v654, 2
      %v1209 = vrot.slane %v682, 2
      %v1210 = vsel %vm1174, %v1208, %v1209
      %v1211 = vrot.slane %v656, 2
      %v1212 = vrot.slane %v683, 2
      %v1213 = vsel %vm1174, %v1211, %v1212
      %v1214 = vrot.slane %v658, 2
      %v1215 = vrot.slane %v684, 2
      %v1216 = vsel %vm1174, %v1214, %v1215
      %v1217 = vrot.slane %v660, 2
      %v1218 = vrot.slane %v685, 2
      %v1219 = vsel %vm1174, %v1217, %v1218
      %v1220 = vrot.slane %v662, 2
      %v1221 = vrot.slane %v686, 2
      %v1222 = vsel %vm1174, %v1220, %v1221
      %1223 = vrot.lane.b32.xlu0 %v1177, 16
      %v1224 = vpop.permute.xlu0 %1223
      %1225 = vrot.lane.b32.xlu0 %v1180, 16
      %v1226 = vpop.permute.xlu0 %1225
      %1227 = vrot.lane.b32.xlu0 %v1183, 16
      %v1228 = vpop.permute.xlu0 %1227
      %1229 = vrot.lane.b32.xlu0 %v1186, 16
      %v1230 = vpop.permute.xlu0 %1229
      %1231 = vrot.lane.b32.xlu0 %v1189, 16
      %v1232 = vpop.permute.xlu0 %1231
      %1233 = vrot.lane.b32.xlu0 %v1192, 16
      %v1234 = vpop.permute.xlu0 %1233
      %1235 = vrot.lane.b32.xlu0 %v1195, 16
      %v1236 = vpop.permute.xlu0 %1235
      %1237 = vrot.lane.b32.xlu0 %v1198, 16
      %v1238 = vpop.permute.xlu0 %1237
      %1239 = vrot.lane.b32.xlu0 %v1201, 16
      %v1240 = vpop.permute.xlu0 %1239
      %1241 = vrot.lane.b32.xlu0 %v1204, 16
      %v1242 = vpop.permute.xlu0 %1241
      %1243 = vrot.lane.b32.xlu0 %v1207, 16
      %v1244 = vpop.permute.xlu0 %1243
      %1245 = vrot.lane.b32.xlu0 %v1210, 16
      %v1246 = vpop.permute.xlu0 %1245
      %1247 = vrot.lane.b32.xlu0 %v1213, 16
      %v1248 = vpop.permute.xlu0 %1247
      %1249 = vrot.lane.b32.xlu0 %v1216, 16
      %v1250 = vpop.permute.xlu0 %1249
      %1251 = vrot.lane.b32.xlu0 %v1219, 16
      %v1252 = vpop.permute.xlu0 %1251
      %1253 = vrot.lane.b32.xlu0 %v1222, 16
      %v1254 = vpop.permute.xlu0 %1253
      %1256 = vrot.lane.b32.xlu0 %v634, 20
      %v1257 = vpop.permute.xlu0 %1256
      %1258 = vrot.lane.b32.xlu0 %v636, 20
      %v1259 = vpop.permute.xlu0 %1258
      %1260 = vrot.lane.b32.xlu0 %v638, 20
      %v1261 = vpop.permute.xlu0 %1260
      %1262 = vrot.lane.b32.xlu0 %v640, 20
      %v1263 = vpop.permute.xlu0 %1262
      %1264 = vrot.lane.b32.xlu0 %v642, 20
      %v1265 = vpop.permute.xlu0 %1264
      %1266 = vrot.lane.b32.xlu0 %v644, 20
      %v1267 = vpop.permute.xlu0 %1266
      %1268 = vrot.lane.b32.xlu0 %v646, 20
      %v1269 = vpop.permute.xlu0 %1268
      %1270 = vrot.lane.b32.xlu0 %v648, 20
      %v1271 = vpop.permute.xlu0 %1270
      %1272 = vrot.lane.b32.xlu0 %v650, 20
      %v1273 = vpop.permute.xlu0 %1272
      %1274 = vrot.lane.b32.xlu0 %v652, 20
      %v1275 = vpop.permute.xlu0 %1274
      %1276 = vrot.lane.b32.xlu0 %v654, 20
      %v1277 = vpop.permute.xlu0 %1276
      %1278 = vrot.lane.b32.xlu0 %v656, 20
      %v1279 = vpop.permute.xlu0 %1278
      %1280 = vrot.lane.b32.xlu0 %v658, 20
      %v1281 = vpop.permute.xlu0 %1280
      %1282 = vrot.lane.b32.xlu0 %v660, 20
      %v1283 = vpop.permute.xlu0 %1282
      %1284 = vrot.lane.b32.xlu0 %v662, 20
      %v1285 = vpop.permute.xlu0 %1284
      %1286 = vrot.lane.b32.xlu0 %v664, 20
      %v1287 = vpop.permute.xlu0 %1286
      %v1288 = vshrl.u32 %v664, 16
      %v1290 = vshll.u32 %v664, 16
      %v1292 = vrot.slane %v1290, 1
      %v1293 = vor.u32 %v1288, %v1292
      %v1294 = vshll.u32 %v687, 16
      %v1296 = vrot.slane %v1294, 1
      %v1297 = vsel %vm691, %v1293, %v1296
      %1298 = vrot.lane.b32.xlu0 %v711, 24
      %v1299 = vpop.permute.xlu0 %1298
      %1300 = vrot.lane.b32.xlu0 %v721, 24
      %v1301 = vpop.permute.xlu0 %1300
      %1302 = vrot.lane.b32.xlu0 %v731, 24
      %v1303 = vpop.permute.xlu0 %1302
      %1304 = vrot.lane.b32.xlu0 %v741, 24
      %v1305 = vpop.permute.xlu0 %1304
      %1306 = vrot.lane.b32.xlu0 %v751, 24
      %v1307 = vpop.permute.xlu0 %1306
      %1308 = vrot.lane.b32.xlu0 %v761, 24
      %v1309 = vpop.permute.xlu0 %1308
      %1310 = vrot.lane.b32.xlu0 %v771, 24
      %v1311 = vpop.permute.xlu0 %1310
      %1312 = vrot.lane.b32.xlu0 %v781, 24
      %v1313 = vpop.permute.xlu0 %1312
      %1314 = vrot.lane.b32.xlu0 %v791, 24
      %v1315 = vpop.permute.xlu0 %1314
      %1316 = vrot.lane.b32.xlu0 %v801, 24
      %v1317 = vpop.permute.xlu0 %1316
      %1318 = vrot.lane.b32.xlu0 %v811, 24
      %v1319 = vpop.permute.xlu0 %1318
      %1320 = vrot.lane.b32.xlu0 %v821, 24
      %v1321 = vpop.permute.xlu0 %1320
      %1322 = vrot.lane.b32.xlu0 %v831, 24
      %v1323 = vpop.permute.xlu0 %1322
      %1324 = vrot.lane.b32.xlu0 %v841, 24
      %v1325 = vpop.permute.xlu0 %1324
      %1326 = vrot.lane.b32.xlu0 %v851, 24
      %v1327 = vpop.permute.xlu0 %1326
      %1328 = vrot.lane.b32.xlu0 %v1297, 24
      %v1329 = vpop.permute.xlu0 %1328
      %v1331 = vrot.slane %v664, 1
      %v1332 = vrot.slane %v687, 1
      %v1333 = vsel %vm916, %v1331, %v1332
      %1334 = vrot.lane.b32.xlu0 %v922, 28
      %v1335 = vpop.permute.xlu0 %1334
      %1336 = vrot.lane.b32.xlu0 %v925, 28
      %v1337 = vpop.permute.xlu0 %1336
      %1338 = vrot.lane.b32.xlu0 %v928, 28
      %v1339 = vpop.permute.xlu0 %1338
      %1340 = vrot.lane.b32.xlu0 %v931, 28
      %v1341 = vpop.permute.xlu0 %1340
      %1342 = vrot.lane.b32.xlu0 %v934, 28
      %v1343 = vpop.permute.xlu0 %1342
      %1344 = vrot.lane.b32.xlu0 %v937, 28
      %v1345 = vpop.permute.xlu0 %1344
      %1346 = vrot.lane.b32.xlu0 %v940, 28
      %v1347 = vpop.permute.xlu0 %1346
      %1348 = vrot.lane.b32.xlu0 %v943, 28
      %v1349 = vpop.permute.xlu0 %1348
      %1350 = vrot.lane.b32.xlu0 %v946, 28
      %v1351 = vpop.permute.xlu0 %1350
      %1352 = vrot.lane.b32.xlu0 %v949, 28
      %v1353 = vpop.permute.xlu0 %1352
      %1354 = vrot.lane.b32.xlu0 %v952, 28
      %v1355 = vpop.permute.xlu0 %1354
      %1356 = vrot.lane.b32.xlu0 %v955, 28
      %v1357 = vpop.permute.xlu0 %1356
      %1358 = vrot.lane.b32.xlu0 %v958, 28
      %v1359 = vpop.permute.xlu0 %1358
      %1360 = vrot.lane.b32.xlu0 %v961, 28
      %v1361 = vpop.permute.xlu0 %1360
      %1362 = vrot.lane.b32.xlu0 %v964, 28
      %v1363 = vpop.permute.xlu0 %1362
      %1364 = vrot.lane.b32.xlu0 %v1333, 28
      %v1365 = vpop.permute.xlu0 %1364
      %v1366 = vrot.slane %v1288, 1
      %v1367 = vrot.slane %v1290, 2
      %v1368 = vor.u32 %v1366, %v1367
      %v1369 = vshrl.u32 %v687, 16
      %v1371 = vrot.slane %v1369, 1
      %v1372 = vrot.slane %v1294, 2
      %v1373 = vor.u32 %v1371, %v1372
      %v1374 = vsel %vm997, %v1368, %v1373
      %1375 = vrot.lane.b32.xlu0 %v1015, 32
      %v1376 = vpop.permute.xlu0 %1375
      %1377 = vrot.lane.b32.xlu0 %v1024, 32
      %v1378 = vpop.permute.xlu0 %1377
      %1379 = vrot.lane.b32.xlu0 %v1033, 32
      %v1380 = vpop.permute.xlu0 %1379
      %1381 = vrot.lane.b32.xlu0 %v1042, 32
      %v1382 = vpop.permute.xlu0 %1381
      %1383 = vrot.lane.b32.xlu0 %v1051, 32
      %v1384 = vpop.permute.xlu0 %1383
      %1385 = vrot.lane.b32.xlu0 %v1060, 32
      %v1386 = vpop.permute.xlu0 %1385
      %1387 = vrot.lane.b32.xlu0 %v1069, 32
      %v1388 = vpop.permute.xlu0 %1387
      %1389 = vrot.lane.b32.xlu0 %v1078, 32
      %v1390 = vpop.permute.xlu0 %1389
      %1391 = vrot.lane.b32.xlu0 %v1087, 32
      %v1392 = vpop.permute.xlu0 %1391
      %1393 = vrot.lane.b32.xlu0 %v1096, 32
      %v1394 = vpop.permute.xlu0 %1393
      %1395 = vrot.lane.b32.xlu0 %v1105, 32
      %v1396 = vpop.permute.xlu0 %1395
      %1397 = vrot.lane.b32.xlu0 %v1114, 32
      %v1398 = vpop.permute.xlu0 %1397
      %1399 = vrot.lane.b32.xlu0 %v1123, 32
      %v1400 = vpop.permute.xlu0 %1399
      %1401 = vrot.lane.b32.xlu0 %v1132, 32
      %v1402 = vpop.permute.xlu0 %1401
      %1403 = vrot.lane.b32.xlu0 %v1141, 32
      %v1404 = vpop.permute.xlu0 %1403
      %1405 = vrot.lane.b32.xlu0 %v1374, 32
      %v1406 = vpop.permute.xlu0 %1405
      %v1407 = vrot.slane %v664, 2
      %v1408 = vrot.slane %v687, 2
      %v1409 = vsel %vm1174, %v1407, %v1408
      %1410 = vrot.lane.b32.xlu0 %v1180, 36
      %v1411 = vpop.permute.xlu0 %1410
      %1412 = vrot.lane.b32.xlu0 %v1183, 36
      %v1413 = vpop.permute.xlu0 %1412
      %1414 = vrot.lane.b32.xlu0 %v1186, 36
      %v1415 = vpop.permute.xlu0 %1414
      %1416 = vrot.lane.b32.xlu0 %v1189, 36
      %v1417 = vpop.permute.xlu0 %1416
      %1418 = vrot.lane.b32.xlu0 %v1192, 36
      %v1419 = vpop.permute.xlu0 %1418
      %1420 = vrot.lane.b32.xlu0 %v1195, 36
      %v1421 = vpop.permute.xlu0 %1420
      %1422 = vrot.lane.b32.xlu0 %v1198, 36
      %v1423 = vpop.permute.xlu0 %1422
      %1424 = vrot.lane.b32.xlu0 %v1201, 36
      %v1425 = vpop.permute.xlu0 %1424
      %1426 = vrot.lane.b32.xlu0 %v1204, 36
      %v1427 = vpop.permute.xlu0 %1426
      %1428 = vrot.lane.b32.xlu0 %v1207, 36
      %v1429 = vpop.permute.xlu0 %1428
      %1430 = vrot.lane.b32.xlu0 %v1210, 36
      %v1431 = vpop.permute.xlu0 %1430
      %1432 = vrot.lane.b32.xlu0 %v1213, 36
      %v1433 = vpop.permute.xlu0 %1432
      %1434 = vrot.lane.b32.xlu0 %v1216, 36
      %v1435 = vpop.permute.xlu0 %1434
      %1436 = vrot.lane.b32.xlu0 %v1219, 36
      %v1437 = vpop.permute.xlu0 %1436
      %1438 = vrot.lane.b32.xlu0 %v1222, 36
      %v1439 = vpop.permute.xlu0 %1438
      %1440 = vrot.lane.b32.xlu0 %v1409, 36
      %v1441 = vpop.permute.xlu0 %1440
      %1443 = vrot.lane.b32.xlu0 %v636, 40
      %v1444 = vpop.permute.xlu0 %1443
      %1445 = vrot.lane.b32.xlu0 %v638, 40
      %v1446 = vpop.permute.xlu0 %1445
      %1447 = vrot.lane.b32.xlu0 %v640, 40
      %v1448 = vpop.permute.xlu0 %1447
      %1449 = vrot.lane.b32.xlu0 %v642, 40
      %v1450 = vpop.permute.xlu0 %1449
      %1451 = vrot.lane.b32.xlu0 %v644, 40
      %v1452 = vpop.permute.xlu0 %1451
      %1453 = vrot.lane.b32.xlu0 %v646, 40
      %v1454 = vpop.permute.xlu0 %1453
      %1455 = vrot.lane.b32.xlu0 %v648, 40
      %v1456 = vpop.permute.xlu0 %1455
      %1457 = vrot.lane.b32.xlu0 %v650, 40
      %v1458 = vpop.permute.xlu0 %1457
      %1459 = vrot.lane.b32.xlu0 %v652, 40
      %v1460 = vpop.permute.xlu0 %1459
      %1461 = vrot.lane.b32.xlu0 %v654, 40
      %v1462 = vpop.permute.xlu0 %1461
      %1463 = vrot.lane.b32.xlu0 %v656, 40
      %v1464 = vpop.permute.xlu0 %1463
      %1465 = vrot.lane.b32.xlu0 %v658, 40
      %v1466 = vpop.permute.xlu0 %1465
      %1467 = vrot.lane.b32.xlu0 %v660, 40
      %v1468 = vpop.permute.xlu0 %1467
      %1469 = vrot.lane.b32.xlu0 %v662, 40
      %v1470 = vpop.permute.xlu0 %1469
      %1471 = vrot.lane.b32.xlu0 %v664, 40
      %v1472 = vpop.permute.xlu0 %1471
      %1473 = vrot.lane.b32.xlu0 %v666, 40
      %v1474 = vpop.permute.xlu0 %1473
      %v1475 = vshrl.u32 %v666, 16
      %v1477 = vshll.u32 %v666, 16
      %v1479 = vrot.slane %v1477, 1
      %v1480 = vor.u32 %v1475, %v1479
      %v1481 = vshll.u32 %v688, 16
      %v1483 = vrot.slane %v1481, 1
      %v1484 = vsel %vm691, %v1480, %v1483
      %1485 = vrot.lane.b32.xlu0 %v721, 44
      %v1486 = vpop.permute.xlu0 %1485
      %1487 = vrot.lane.b32.xlu0 %v731, 44
      %v1488 = vpop.permute.xlu0 %1487
      %1489 = vrot.lane.b32.xlu0 %v741, 44
      %v1490 = vpop.permute.xlu0 %1489
      %1491 = vrot.lane.b32.xlu0 %v751, 44
      %v1492 = vpop.permute.xlu0 %1491
      %1493 = vrot.lane.b32.xlu0 %v761, 44
      %v1494 = vpop.permute.xlu0 %1493
      %1495 = vrot.lane.b32.xlu0 %v771, 44
      %v1496 = vpop.permute.xlu0 %1495
      %1497 = vrot.lane.b32.xlu0 %v781, 44
      %v1498 = vpop.permute.xlu0 %1497
      %1499 = vrot.lane.b32.xlu0 %v791, 44
      %v1500 = vpop.permute.xlu0 %1499
      %1501 = vrot.lane.b32.xlu0 %v801, 44
      %v1502 = vpop.permute.xlu0 %1501
      %1503 = vrot.lane.b32.xlu0 %v811, 44
      %v1504 = vpop.permute.xlu0 %1503
      %1505 = vrot.lane.b32.xlu0 %v821, 44
      %v1506 = vpop.permute.xlu0 %1505
      %1507 = vrot.lane.b32.xlu0 %v831, 44
      %v1508 = vpop.permute.xlu0 %1507
      %1509 = vrot.lane.b32.xlu0 %v841, 44
      %v1510 = vpop.permute.xlu0 %1509
      %1511 = vrot.lane.b32.xlu0 %v851, 44
      %v1512 = vpop.permute.xlu0 %1511
      %1513 = vrot.lane.b32.xlu0 %v1297, 44
      %v1514 = vpop.permute.xlu0 %1513
      %1515 = vrot.lane.b32.xlu0 %v1484, 44
      %v1516 = vpop.permute.xlu0 %1515
      %v1518 = vrot.slane %v666, 1
      %v1519 = vrot.slane %v688, 1
      %v1520 = vsel %vm916, %v1518, %v1519
      %1521 = vrot.lane.b32.xlu0 %v925, 48
      %v1522 = vpop.permute.xlu0 %1521
      %1523 = vrot.lane.b32.xlu0 %v928, 48
      %v1524 = vpop.permute.xlu0 %1523
      %1525 = vrot.lane.b32.xlu0 %v931, 48
      %v1526 = vpop.permute.xlu0 %1525
      %1527 = vrot.lane.b32.xlu0 %v934, 48
      %v1528 = vpop.permute.xlu0 %1527
      %1529 = vrot.lane.b32.xlu0 %v937, 48
      %v1530 = vpop.permute.xlu0 %1529
      %1531 = vrot.lane.b32.xlu0 %v940, 48
      %v1532 = vpop.permute.xlu0 %1531
      %1533 = vrot.lane.b32.xlu0 %v943, 48
      %v1534 = vpop.permute.xlu0 %1533
      %1535 = vrot.lane.b32.xlu0 %v946, 48
      %v1536 = vpop.permute.xlu0 %1535
      %1537 = vrot.lane.b32.xlu0 %v949, 48
      %v1538 = vpop.permute.xlu0 %1537
      %1539 = vrot.lane.b32.xlu0 %v952, 48
      %v1540 = vpop.permute.xlu0 %1539
      %1541 = vrot.lane.b32.xlu0 %v955, 48
      %v1542 = vpop.permute.xlu0 %1541
      %1543 = vrot.lane.b32.xlu0 %v958, 48
      %v1544 = vpop.permute.xlu0 %1543
      %1545 = vrot.lane.b32.xlu0 %v961, 48
      %v1546 = vpop.permute.xlu0 %1545
      %1547 = vrot.lane.b32.xlu0 %v964, 48
      %v1548 = vpop.permute.xlu0 %1547
      %1549 = vrot.lane.b32.xlu0 %v1333, 48
      %v1550 = vpop.permute.xlu0 %1549
      %1551 = vrot.lane.b32.xlu0 %v1520, 48
      %v1552 = vpop.permute.xlu0 %1551
      %v1553 = vrot.slane %v1475, 1
      %v1554 = vrot.slane %v1477, 2
      %v1555 = vor.u32 %v1553, %v1554
      %v1556 = vshrl.u32 %v688, 16
      %v1558 = vrot.slane %v1556, 1
      %v1559 = vrot.slane %v1481, 2
      %v1560 = vor.u32 %v1558, %v1559
      %v1561 = vsel %vm997, %v1555, %v1560
      %1562 = vrot.lane.b32.xlu0 %v1024, 52
      %v1563 = vpop.permute.xlu0 %1562
      %1564 = vrot.lane.b32.xlu0 %v1033, 52
      %v1565 = vpop.permute.xlu0 %1564
      %1566 = vrot.lane.b32.xlu0 %v1042, 52
      %v1567 = vpop.permute.xlu0 %1566
      %1568 = vrot.lane.b32.xlu0 %v1051, 52
      %v1569 = vpop.permute.xlu0 %1568
      %1570 = vrot.lane.b32.xlu0 %v1060, 52
      %v1571 = vpop.permute.xlu0 %1570
      %1572 = vrot.lane.b32.xlu0 %v1069, 52
      %v1573 = vpop.permute.xlu0 %1572
      %1574 = vrot.lane.b32.xlu0 %v1078, 52
      %v1575 = vpop.permute.xlu0 %1574
      %1576 = vrot.lane.b32.xlu0 %v1087, 52
      %v1577 = vpop.permute.xlu0 %1576
      %1578 = vrot.lane.b32.xlu0 %v1096, 52
      %v1579 = vpop.permute.xlu0 %1578
      %1580 = vrot.lane.b32.xlu0 %v1105, 52
      %v1581 = vpop.permute.xlu0 %1580
      %1582 = vrot.lane.b32.xlu0 %v1114, 52
      %v1583 = vpop.permute.xlu0 %1582
      %1584 = vrot.lane.b32.xlu0 %v1123, 52
      %v1585 = vpop.permute.xlu0 %1584
      %1586 = vrot.lane.b32.xlu0 %v1132, 52
      %v1587 = vpop.permute.xlu0 %1586
      %1588 = vrot.lane.b32.xlu0 %v1141, 52
      %v1589 = vpop.permute.xlu0 %1588
      %1590 = vrot.lane.b32.xlu0 %v1374, 52
      %v1591 = vpop.permute.xlu0 %1590
      %1592 = vrot.lane.b32.xlu0 %v1561, 52
      %v1593 = vpop.permute.xlu0 %1592
      %v1594 = vrot.slane %v666, 2
      %v1595 = vrot.slane %v688, 2
      %v1596 = vsel %vm1174, %v1594, %v1595
      %1597 = vrot.lane.b32.xlu0 %v1183, 56
      %v1598 = vpop.permute.xlu0 %1597
      %1599 = vrot.lane.b32.xlu0 %v1186, 56
      %v1600 = vpop.permute.xlu0 %1599
      %1601 = vrot.lane.b32.xlu0 %v1189, 56
      %v1602 = vpop.permute.xlu0 %1601
      %1603 = vrot.lane.b32.xlu0 %v1192, 56
      %v1604 = vpop.permute.xlu0 %1603
      %1605 = vrot.lane.b32.xlu0 %v1195, 56
      %v1606 = vpop.permute.xlu0 %1605
      %1607 = vrot.lane.b32.xlu0 %v1198, 56
      %v1608 = vpop.permute.xlu0 %1607
      %1609 = vrot.lane.b32.xlu0 %v1201, 56
      %v1610 = vpop.permute.xlu0 %1609
      %1611 = vrot.lane.b32.xlu0 %v1204, 56
      %v1612 = vpop.permute.xlu0 %1611
      %1613 = vrot.lane.b32.xlu0 %v1207, 56
      %v1614 = vpop.permute.xlu0 %1613
      %1615 = vrot.lane.b32.xlu0 %v1210, 56
      %v1616 = vpop.permute.xlu0 %1615
      %1617 = vrot.lane.b32.xlu0 %v1213, 56
      %v1618 = vpop.permute.xlu0 %1617
      %1619 = vrot.lane.b32.xlu0 %v1216, 56
      %v1620 = vpop.permute.xlu0 %1619
      %1621 = vrot.lane.b32.xlu0 %v1219, 56
      %v1622 = vpop.permute.xlu0 %1621
      %1623 = vrot.lane.b32.xlu0 %v1222, 56
      %v1624 = vpop.permute.xlu0 %1623
      %1625 = vrot.lane.b32.xlu0 %v1409, 56
      %v1626 = vpop.permute.xlu0 %1625
      %1627 = vrot.lane.b32.xlu0 %v1596, 56
      %v1628 = vpop.permute.xlu0 %1627
      %1630 = vrot.lane.b32.xlu0 %v638, 60
      %v1631 = vpop.permute.xlu0 %1630
      %1632 = vrot.lane.b32.xlu0 %v640, 60
      %v1633 = vpop.permute.xlu0 %1632
      %1634 = vrot.lane.b32.xlu0 %v642, 60
      %v1635 = vpop.permute.xlu0 %1634
      %1636 = vrot.lane.b32.xlu0 %v644, 60
      %v1637 = vpop.permute.xlu0 %1636
      %1638 = vrot.lane.b32.xlu0 %v646, 60
      %v1639 = vpop.permute.xlu0 %1638
      %1640 = vrot.lane.b32.xlu0 %v648, 60
      %v1641 = vpop.permute.xlu0 %1640
      %1642 = vrot.lane.b32.xlu0 %v650, 60
      %v1643 = vpop.permute.xlu0 %1642
      %1644 = vrot.lane.b32.xlu0 %v652, 60
      %v1645 = vpop.permute.xlu0 %1644
      %1646 = vrot.lane.b32.xlu0 %v654, 60
      %v1647 = vpop.permute.xlu0 %1646
      %1648 = vrot.lane.b32.xlu0 %v656, 60
      %v1649 = vpop.permute.xlu0 %1648
      %1650 = vrot.lane.b32.xlu0 %v658, 60
      %v1651 = vpop.permute.xlu0 %1650
      %1652 = vrot.lane.b32.xlu0 %v660, 60
      %v1653 = vpop.permute.xlu0 %1652
      %1654 = vrot.lane.b32.xlu0 %v662, 60
      %v1655 = vpop.permute.xlu0 %1654
      %1656 = vrot.lane.b32.xlu0 %v664, 60
      %v1657 = vpop.permute.xlu0 %1656
      %1658 = vrot.lane.b32.xlu0 %v666, 60
      %v1659 = vpop.permute.xlu0 %1658
      %1660 = vrot.lane.b32.xlu0 %v668, 60
      %v1661 = vpop.permute.xlu0 %1660
      %vm1662 = vcmask 31744
      %v1664 = vsel %vm1662, %v632, %v853
      %v1666 = vsel %vm1662, %v634, %v855
      %v1668 = vsel %vm1662, %v636, %v857
      %v1670 = vsel %vm1662, %v638, %v859
      %v1672 = vsel %vm1662, %v640, %v861
      %v1674 = vsel %vm1662, %v642, %v863
      %v1676 = vsel %vm1662, %v644, %v865
      %v1678 = vsel %vm1662, %v646, %v867
      %v1680 = vsel %vm1662, %v648, %v869
      %v1682 = vsel %vm1662, %v650, %v871
      %v1684 = vsel %vm1662, %v652, %v873
      %v1686 = vsel %vm1662, %v654, %v875
      %v1688 = vsel %vm1662, %v656, %v877
      %v1690 = vsel %vm1662, %v658, %v879
      %v1692 = vsel %vm1662, %v660, %v881
      %v1694 = vsel %vm1662, %v662, %v883
      %vm1695 = vcmask 64512
      %v1697 = vsel %vm1695, %v1664, %v966
      %v1699 = vsel %vm1695, %v1666, %v968
      %v1701 = vsel %vm1695, %v1668, %v970
      %v1703 = vsel %vm1695, %v1670, %v972
      %v1705 = vsel %vm1695, %v1672, %v974
      %v1707 = vsel %vm1695, %v1674, %v976
      %v1709 = vsel %vm1695, %v1676, %v978
      %v1711 = vsel %vm1695, %v1678, %v980
      %v1713 = vsel %vm1695, %v1680, %v982
      %v1715 = vsel %vm1695, %v1682, %v984
      %v1717 = vsel %vm1695, %v1684, %v986
      %v1719 = vsel %vm1695, %v1686, %v988
      %v1721 = vsel %vm1695, %v1688, %v990
      %v1723 = vsel %vm1695, %v1690, %v992
      %v1725 = vsel %vm1695, %v1692, %v994
      %v1727 = vsel %vm1695, %v1694, %v996
      %vm1728 = vcmask 97280
      %v1730 = vsel %vm1728, %v1697, %v1143
      %v1732 = vsel %vm1728, %v1699, %v1145
      %v1734 = vsel %vm1728, %v1701, %v1147
      %v1736 = vsel %vm1728, %v1703, %v1149
      %v1738 = vsel %vm1728, %v1705, %v1151
      %v1740 = vsel %vm1728, %v1707, %v1153
      %v1742 = vsel %vm1728, %v1709, %v1155
      %v1744 = vsel %vm1728, %v1711, %v1157
      %v1746 = vsel %vm1728, %v1713, %v1159
      %v1748 = vsel %vm1728, %v1715, %v1161
      %v1750 = vsel %vm1728, %v1717, %v1163
      %v1752 = vsel %vm1728, %v1719, %v1165
      %v1754 = vsel %vm1728, %v1721, %v1167
      %v1756 = vsel %vm1728, %v1723, %v1169
      %v1758 = vsel %vm1728, %v1725, %v1171
      %v1760 = vsel %vm1728, %v1727, %v1173
      %vm1761 = vcmask 130048
      %v1763 = vsel %vm1761, %v1730, %v1224
      %v1765 = vsel %vm1761, %v1732, %v1226
      %v1767 = vsel %vm1761, %v1734, %v1228
      %v1769 = vsel %vm1761, %v1736, %v1230
      %v1771 = vsel %vm1761, %v1738, %v1232
      %v1773 = vsel %vm1761, %v1740, %v1234
      %v1775 = vsel %vm1761, %v1742, %v1236
      %v1777 = vsel %vm1761, %v1744, %v1238
      %v1779 = vsel %vm1761, %v1746, %v1240
      %v1781 = vsel %vm1761, %v1748, %v1242
      %v1783 = vsel %vm1761, %v1750, %v1244
      %v1785 = vsel %vm1761, %v1752, %v1246
      %v1787 = vsel %vm1761, %v1754, %v1248
      %v1789 = vsel %vm1761, %v1756, %v1250
      %v1791 = vsel %vm1761, %v1758, %v1252
      %v1793 = vsel %vm1761, %v1760, %v1254
      %vm1794 = vcmask 162816
      %v1796 = vsel %vm1794, %v1763, %v1257
      %v1798 = vsel %vm1794, %v1765, %v1259
      %v1800 = vsel %vm1794, %v1767, %v1261
      %v1802 = vsel %vm1794, %v1769, %v1263
      %v1804 = vsel %vm1794, %v1771, %v1265
      %v1806 = vsel %vm1794, %v1773, %v1267
      %v1808 = vsel %vm1794, %v1775, %v1269
      %v1810 = vsel %vm1794, %v1777, %v1271
      %v1812 = vsel %vm1794, %v1779, %v1273
      %v1814 = vsel %vm1794, %v1781, %v1275
      %v1816 = vsel %vm1794, %v1783, %v1277
      %v1818 = vsel %vm1794, %v1785, %v1279
      %v1820 = vsel %vm1794, %v1787, %v1281
      %v1822 = vsel %vm1794, %v1789, %v1283
      %v1824 = vsel %vm1794, %v1791, %v1285
      %v1826 = vsel %vm1794, %v1793, %v1287
      %vm1827 = vcmask 195584
      %v1829 = vsel %vm1827, %v1796, %v1299
      %v1831 = vsel %vm1827, %v1798, %v1301
      %v1833 = vsel %vm1827, %v1800, %v1303
      %v1835 = vsel %vm1827, %v1802, %v1305
      %v1837 = vsel %vm1827, %v1804, %v1307
      %v1839 = vsel %vm1827, %v1806, %v1309
      %v1841 = vsel %vm1827, %v1808, %v1311
      %v1843 = vsel %vm1827, %v1810, %v1313
      %v1845 = vsel %vm1827, %v1812, %v1315
      %v1847 = vsel %vm1827, %v1814, %v1317
      %v1849 = vsel %vm1827, %v1816, %v1319
      %v1851 = vsel %vm1827, %v1818, %v1321
      %v1853 = vsel %vm1827, %v1820, %v1323
      %v1855 = vsel %vm1827, %v1822, %v1325
      %v1857 = vsel %vm1827, %v1824, %v1327
      %v1859 = vsel %vm1827, %v1826, %v1329
      %vm1860 = vcmask 228352
      %v1862 = vsel %vm1860, %v1829, %v1335
      %v1864 = vsel %vm1860, %v1831, %v1337
      %v1866 = vsel %vm1860, %v1833, %v1339
      %v1868 = vsel %vm1860, %v1835, %v1341
      %v1870 = vsel %vm1860, %v1837, %v1343
      %v1872 = vsel %vm1860, %v1839, %v1345
      %v1874 = vsel %vm1860, %v1841, %v1347
      %v1876 = vsel %vm1860, %v1843, %v1349
      %v1878 = vsel %vm1860, %v1845, %v1351
      %v1880 = vsel %vm1860, %v1847, %v1353
      %v1882 = vsel %vm1860, %v1849, %v1355
      %v1884 = vsel %vm1860, %v1851, %v1357
      %v1886 = vsel %vm1860, %v1853, %v1359
      %v1888 = vsel %vm1860, %v1855, %v1361
      %v1890 = vsel %vm1860, %v1857, %v1363
      %v1892 = vsel %vm1860, %v1859, %v1365
      %vm1893 = vcmask 261120
      %v1895 = vsel %vm1893, %v1862, %v1376
      %v1897 = vsel %vm1893, %v1864, %v1378
      %v1899 = vsel %vm1893, %v1866, %v1380
      %v1901 = vsel %vm1893, %v1868, %v1382
      %v1903 = vsel %vm1893, %v1870, %v1384
      %v1905 = vsel %vm1893, %v1872, %v1386
      %v1907 = vsel %vm1893, %v1874, %v1388
      %v1909 = vsel %vm1893, %v1876, %v1390
      %v1911 = vsel %vm1893, %v1878, %v1392
      %v1913 = vsel %vm1893, %v1880, %v1394
      %v1915 = vsel %vm1893, %v1882, %v1396
      %v1917 = vsel %vm1893, %v1884, %v1398
      %v1919 = vsel %vm1893, %v1886, %v1400
      %v1921 = vsel %vm1893, %v1888, %v1402
      %v1923 = vsel %vm1893, %v1890, %v1404
      %v1925 = vsel %vm1893, %v1892, %v1406
      %vm1926 = vcmask 293888
      %v1928 = vsel %vm1926, %v1895, %v1411
      %v1930 = vsel %vm1926, %v1897, %v1413
      %v1932 = vsel %vm1926, %v1899, %v1415
      %v1934 = vsel %vm1926, %v1901, %v1417
      %v1936 = vsel %vm1926, %v1903, %v1419
      %v1938 = vsel %vm1926, %v1905, %v1421
      %v1940 = vsel %vm1926, %v1907, %v1423
      %v1942 = vsel %vm1926, %v1909, %v1425
      %v1944 = vsel %vm1926, %v1911, %v1427
      %v1946 = vsel %vm1926, %v1913, %v1429
      %v1948 = vsel %vm1926, %v1915, %v1431
      %v1950 = vsel %vm1926, %v1917, %v1433
      %v1952 = vsel %vm1926, %v1919, %v1435
      %v1954 = vsel %vm1926, %v1921, %v1437
      %v1956 = vsel %vm1926, %v1923, %v1439
      %v1958 = vsel %vm1926, %v1925, %v1441
      %vm1959 = vcmask 326656
      %v1961 = vsel %vm1959, %v1928, %v1444
      %v1963 = vsel %vm1959, %v1930, %v1446
      %v1965 = vsel %vm1959, %v1932, %v1448
      %v1967 = vsel %vm1959, %v1934, %v1450
      %v1969 = vsel %vm1959, %v1936, %v1452
      %v1971 = vsel %vm1959, %v1938, %v1454
      %v1973 = vsel %vm1959, %v1940, %v1456
      %v1975 = vsel %vm1959, %v1942, %v1458
      %v1977 = vsel %vm1959, %v1944, %v1460
      %v1979 = vsel %vm1959, %v1946, %v1462
      %v1981 = vsel %vm1959, %v1948, %v1464
      %v1983 = vsel %vm1959, %v1950, %v1466
      %v1985 = vsel %vm1959, %v1952, %v1468
      %v1987 = vsel %vm1959, %v1954, %v1470
      %v1989 = vsel %vm1959, %v1956, %v1472
      %v1991 = vsel %vm1959, %v1958, %v1474
      %vm1992 = vcmask 359424
      %v1994 = vsel %vm1992, %v1961, %v1486
      %v1996 = vsel %vm1992, %v1963, %v1488
      %v1998 = vsel %vm1992, %v1965, %v1490
      %v2000 = vsel %vm1992, %v1967, %v1492
      %v2002 = vsel %vm1992, %v1969, %v1494
      %v2004 = vsel %vm1992, %v1971, %v1496
      %v2006 = vsel %vm1992, %v1973, %v1498
      %v2008 = vsel %vm1992, %v1975, %v1500
      %v2010 = vsel %vm1992, %v1977, %v1502
      %v2012 = vsel %vm1992, %v1979, %v1504
      %v2014 = vsel %vm1992, %v1981, %v1506
      %v2016 = vsel %vm1992, %v1983, %v1508
      %v2018 = vsel %vm1992, %v1985, %v1510
      %v2020 = vsel %vm1992, %v1987, %v1512
      %v2022 = vsel %vm1992, %v1989, %v1514
      %v2024 = vsel %vm1992, %v1991, %v1516
      %vm2025 = vcmask 392192
      %v2027 = vsel %vm2025, %v1994, %v1522
      %v2029 = vsel %vm2025, %v1996, %v1524
      %v2031 = vsel %vm2025, %v1998, %v1526
      %v2033 = vsel %vm2025, %v2000, %v1528
      %v2035 = vsel %vm2025, %v2002, %v1530
      %v2037 = vsel %vm2025, %v2004, %v1532
      %v2039 = vsel %vm2025, %v2006, %v1534
      %v2041 = vsel %vm2025, %v2008, %v1536
      %v2043 = vsel %vm2025, %v2010, %v1538
      %v2045 = vsel %vm2025, %v2012, %v1540
      %v2047 = vsel %vm2025, %v2014, %v1542
      %v2049 = vsel %vm2025, %v2016, %v1544
      %v2051 = vsel %vm2025, %v2018, %v1546
      %v2053 = vsel %vm2025, %v2020, %v1548
      %v2055 = vsel %vm2025, %v2022, %v1550
      %v2057 = vsel %vm2025, %v2024, %v1552
      %vm2058 = vcmask 424960
      %v2060 = vsel %vm2058, %v2027, %v1563
      %v2062 = vsel %vm2058, %v2029, %v1565
      %v2064 = vsel %vm2058, %v2031, %v1567
      %v2066 = vsel %vm2058, %v2033, %v1569
      %v2068 = vsel %vm2058, %v2035, %v1571
      %v2070 = vsel %vm2058, %v2037, %v1573
      %v2072 = vsel %vm2058, %v2039, %v1575
      %v2074 = vsel %vm2058, %v2041, %v1577
      %v2076 = vsel %vm2058, %v2043, %v1579
      %v2078 = vsel %vm2058, %v2045, %v1581
      %v2080 = vsel %vm2058, %v2047, %v1583
      %v2082 = vsel %vm2058, %v2049, %v1585
      %v2084 = vsel %vm2058, %v2051, %v1587
      %v2086 = vsel %vm2058, %v2053, %v1589
      %v2088 = vsel %vm2058, %v2055, %v1591
      %v2090 = vsel %vm2058, %v2057, %v1593
      %vm2091 = vcmask 457728
      %v2093 = vsel %vm2091, %v2060, %v1598
      %v2095 = vsel %vm2091, %v2062, %v1600
      %v2097 = vsel %vm2091, %v2064, %v1602
      %v2099 = vsel %vm2091, %v2066, %v1604
      %v2101 = vsel %vm2091, %v2068, %v1606
      %v2103 = vsel %vm2091, %v2070, %v1608
      %v2105 = vsel %vm2091, %v2072, %v1610
      %v2107 = vsel %vm2091, %v2074, %v1612
      %v2109 = vsel %vm2091, %v2076, %v1614
      %v2111 = vsel %vm2091, %v2078, %v1616
      %v2113 = vsel %vm2091, %v2080, %v1618
      %v2115 = vsel %vm2091, %v2082, %v1620
      %v2117 = vsel %vm2091, %v2084, %v1622
      %v2119 = vsel %vm2091, %v2086, %v1624
      %v2121 = vsel %vm2091, %v2088, %v1626
      %v2123 = vsel %vm2091, %v2090, %v1628
      %vm2124 = vcmask 490496
      %v2126 = vsel %vm2124, %v2093, %v1631
      %v2128 = vsel %vm2124, %v2095, %v1633
      %v2130 = vsel %vm2124, %v2097, %v1635
      %v2132 = vsel %vm2124, %v2099, %v1637
      %v2134 = vsel %vm2124, %v2101, %v1639
      %v2136 = vsel %vm2124, %v2103, %v1641
      %v2138 = vsel %vm2124, %v2105, %v1643
      %v2140 = vsel %vm2124, %v2107, %v1645
      %v2142 = vsel %vm2124, %v2109, %v1647
      %v2144 = vsel %vm2124, %v2111, %v1649
      %v2146 = vsel %vm2124, %v2113, %v1651
      %v2148 = vsel %vm2124, %v2115, %v1653
      %v2150 = vsel %vm2124, %v2117, %v1655
      %v2152 = vsel %vm2124, %v2119, %v1657
      %v2154 = vsel %vm2124, %v2121, %v1659
      %v2156 = vsel %vm2124, %v2123, %v1661
      %v2157 = vshrl.u32 %v668, 16
      %v2159 = vshll.u32 %v668, 16
      %v2161 = vrot.slane %v2159, 1
      %v2162 = vor.u32 %v2157, %v2161
      %v2163 = vshll.u32 %v689, 16
      %v2165 = vrot.slane %v2163, 1
      %v2166 = vsel %vm691, %v2162, %v2165
      %v2167 = vshrl.u32 %v689, 16
      %2169 = vrot.lane.b32.xlu0 %v1028, 4
      %v2170 = vpop.permute.xlu0 %2169
      %2171 = vrot.lane.b32.xlu0 %v1037, 4
      %v2172 = vpop.permute.xlu0 %2171
      %2173 = vrot.lane.b32.xlu0 %v1046, 4
      %v2174 = vpop.permute.xlu0 %2173
      %2175 = vrot.lane.b32.xlu0 %v1055, 4
      %v2176 = vpop.permute.xlu0 %2175
      %2177 = vrot.lane.b32.xlu0 %v1064, 4
      %v2178 = vpop.permute.xlu0 %2177
      %2179 = vrot.lane.b32.xlu0 %v1073, 4
      %v2180 = vpop.permute.xlu0 %2179
      %2181 = vrot.lane.b32.xlu0 %v1082, 4
      %v2182 = vpop.permute.xlu0 %2181
      %2183 = vrot.lane.b32.xlu0 %v1091, 4
      %v2184 = vpop.permute.xlu0 %2183
      %2185 = vrot.lane.b32.xlu0 %v1100, 4
      %v2186 = vpop.permute.xlu0 %2185
      %2187 = vrot.lane.b32.xlu0 %v1109, 4
      %v2188 = vpop.permute.xlu0 %2187
      %2189 = vrot.lane.b32.xlu0 %v1118, 4
      %v2190 = vpop.permute.xlu0 %2189
      %2191 = vrot.lane.b32.xlu0 %v1127, 4
      %v2192 = vpop.permute.xlu0 %2191
      %2193 = vrot.lane.b32.xlu0 %v1136, 4
      %v2194 = vpop.permute.xlu0 %2193
      %2195 = vrot.lane.b32.xlu0 %v1297, 4
      %v2196 = vpop.permute.xlu0 %2195
      %2197 = vrot.lane.b32.xlu0 %v1369, 4
      %v2198 = vpop.permute.xlu0 %2197
      %2199 = vrot.lane.b32.xlu0 %v1484, 4
      %v2200 = vpop.permute.xlu0 %2199
      %2201 = vrot.lane.b32.xlu0 %v1556, 4
      %v2202 = vpop.permute.xlu0 %2201
      %2203 = vrot.lane.b32.xlu0 %v2166, 4
      %v2204 = vpop.permute.xlu0 %2203
      %2205 = vrot.lane.b32.xlu0 %v2167, 4
      %v2206 = vpop.permute.xlu0 %2205
      %v2208 = vrot.slane %v668, 1
      %v2209 = vrot.slane %v689, 1
      %v2210 = vsel %vm916, %v2208, %v2209
      %2211 = vrot.lane.b32.xlu0 %v927, 8
      %v2212 = vpop.permute.xlu0 %2211
      %2213 = vrot.lane.b32.xlu0 %v930, 8
      %v2214 = vpop.permute.xlu0 %2213
      %2215 = vrot.lane.b32.xlu0 %v933, 8
      %v2216 = vpop.permute.xlu0 %2215
      %2217 = vrot.lane.b32.xlu0 %v936, 8
      %v2218 = vpop.permute.xlu0 %2217
      %2219 = vrot.lane.b32.xlu0 %v939, 8
      %v2220 = vpop.permute.xlu0 %2219
      %2221 = vrot.lane.b32.xlu0 %v942, 8
      %v2222 = vpop.permute.xlu0 %2221
      %2223 = vrot.lane.b32.xlu0 %v945, 8
      %v2224 = vpop.permute.xlu0 %2223
      %2225 = vrot.lane.b32.xlu0 %v948, 8
      %v2226 = vpop.permute.xlu0 %2225
      %2227 = vrot.lane.b32.xlu0 %v951, 8
      %v2228 = vpop.permute.xlu0 %2227
      %2229 = vrot.lane.b32.xlu0 %v954, 8
      %v2230 = vpop.permute.xlu0 %2229
      %2231 = vrot.lane.b32.xlu0 %v957, 8
      %v2232 = vpop.permute.xlu0 %2231
      %2233 = vrot.lane.b32.xlu0 %v960, 8
      %v2234 = vpop.permute.xlu0 %2233
      %2235 = vrot.lane.b32.xlu0 %v963, 8
      %v2236 = vpop.permute.xlu0 %2235
      %2237 = vrot.lane.b32.xlu0 %v1333, 8
      %v2238 = vpop.permute.xlu0 %2237
      %2239 = vrot.lane.b32.xlu0 %v1332, 8
      %v2240 = vpop.permute.xlu0 %2239
      %2241 = vrot.lane.b32.xlu0 %v1520, 8
      %v2242 = vpop.permute.xlu0 %2241
      %2243 = vrot.lane.b32.xlu0 %v1519, 8
      %v2244 = vpop.permute.xlu0 %2243
      %2245 = vrot.lane.b32.xlu0 %v2210, 8
      %v2246 = vpop.permute.xlu0 %2245
      %2247 = vrot.lane.b32.xlu0 %v2209, 8
      %v2248 = vpop.permute.xlu0 %2247
      %v2249 = vrot.slane %v2157, 1
      %v2250 = vrot.slane %v2159, 2
      %v2251 = vor.u32 %v2249, %v2250
      %v2252 = vrot.slane %v2167, 1
      %v2253 = vrot.slane %v2163, 2
      %v2254 = vor.u32 %v2252, %v2253
      %v2255 = vsel %vm997, %v2251, %v2254
      %2256 = vrot.lane.b32.xlu0 %v1030, 12
      %v2257 = vpop.permute.xlu0 %2256
      %2258 = vrot.lane.b32.xlu0 %v1039, 12
      %v2259 = vpop.permute.xlu0 %2258
      %2260 = vrot.lane.b32.xlu0 %v1048, 12
      %v2261 = vpop.permute.xlu0 %2260
      %2262 = vrot.lane.b32.xlu0 %v1057, 12
      %v2263 = vpop.permute.xlu0 %2262
      %2264 = vrot.lane.b32.xlu0 %v1066, 12
      %v2265 = vpop.permute.xlu0 %2264
      %2266 = vrot.lane.b32.xlu0 %v1075, 12
      %v2267 = vpop.permute.xlu0 %2266
      %2268 = vrot.lane.b32.xlu0 %v1084, 12
      %v2269 = vpop.permute.xlu0 %2268
      %2270 = vrot.lane.b32.xlu0 %v1093, 12
      %v2271 = vpop.permute.xlu0 %2270
      %2272 = vrot.lane.b32.xlu0 %v1102, 12
      %v2273 = vpop.permute.xlu0 %2272
      %2274 = vrot.lane.b32.xlu0 %v1111, 12
      %v2275 = vpop.permute.xlu0 %2274
      %2276 = vrot.lane.b32.xlu0 %v1120, 12
      %v2277 = vpop.permute.xlu0 %2276
      %2278 = vrot.lane.b32.xlu0 %v1129, 12
      %v2279 = vpop.permute.xlu0 %2278
      %2280 = vrot.lane.b32.xlu0 %v1138, 12
      %v2281 = vpop.permute.xlu0 %2280
      %2282 = vrot.lane.b32.xlu0 %v1374, 12
      %v2283 = vpop.permute.xlu0 %2282
      %2284 = vrot.lane.b32.xlu0 %v1371, 12
      %v2285 = vpop.permute.xlu0 %2284
      %2286 = vrot.lane.b32.xlu0 %v1561, 12
      %v2287 = vpop.permute.xlu0 %2286
      %2288 = vrot.lane.b32.xlu0 %v1558, 12
      %v2289 = vpop.permute.xlu0 %2288
      %2290 = vrot.lane.b32.xlu0 %v2255, 12
      %v2291 = vpop.permute.xlu0 %2290
      %2292 = vrot.lane.b32.xlu0 %v2252, 12
      %v2293 = vpop.permute.xlu0 %2292
      %v2294 = vrot.slane %v732, 7
      %v2295 = vor.u32 %v2294, %v734
      %v2296 = vrot.slane %v742, 7
      %v2297 = vor.u32 %v2296, %v744
      %v2298 = vrot.slane %v752, 7
      %v2299 = vor.u32 %v2298, %v754
      %v2300 = vrot.slane %v762, 7
      %v2301 = vor.u32 %v2300, %v764
      %v2302 = vrot.slane %v772, 7
      %v2303 = vor.u32 %v2302, %v774
      %v2304 = vrot.slane %v782, 7
      %v2305 = vor.u32 %v2304, %v784
      %v2306 = vrot.slane %v792, 7
      %v2307 = vor.u32 %v2306, %v794
      %v2308 = vrot.slane %v802, 7
      %v2309 = vor.u32 %v2308, %v804
      %v2310 = vrot.slane %v812, 7
      %v2311 = vor.u32 %v2310, %v814
      %v2312 = vrot.slane %v822, 7
      %v2313 = vor.u32 %v2312, %v824
      %v2314 = vrot.slane %v832, 7
      %v2315 = vor.u32 %v2314, %v834
      %v2316 = vrot.slane %v842, 7
      %v2317 = vor.u32 %v2316, %v844
      %v2318 = vrot.slane %v1288, 7
      %v2319 = vor.u32 %v2318, %v1290
      %v2320 = vrot.slane %v1475, 7
      %v2321 = vor.u32 %v2320, %v1477
      %v2322 = vrot.slane %v2157, 7
      %v2323 = vor.u32 %v2322, %v2159
      %v2324 = vshrl.u32 %v670, 16
      %v2326 = vrot.slane %v2324, 7
      %v2327 = vshll.u32 %v670, 16
      %v2329 = vor.u32 %v2326, %v2327
      %2330 = vrot.lane.b32.xlu0 %v2295, 16
      %v2331 = vpop.permute.xlu0 %2330
      %2332 = vrot.lane.b32.xlu0 %v2294, 16
      %v2333 = vpop.permute.xlu0 %2332
      %2334 = vrot.lane.b32.xlu0 %v2297, 16
      %v2335 = vpop.permute.xlu0 %2334
      %2336 = vrot.lane.b32.xlu0 %v2296, 16
      %v2337 = vpop.permute.xlu0 %2336
      %2338 = vrot.lane.b32.xlu0 %v2299, 16
      %v2339 = vpop.permute.xlu0 %2338
      %2340 = vrot.lane.b32.xlu0 %v2298, 16
      %v2341 = vpop.permute.xlu0 %2340
      %2342 = vrot.lane.b32.xlu0 %v2301, 16
      %v2343 = vpop.permute.xlu0 %2342
      %2344 = vrot.lane.b32.xlu0 %v2300, 16
      %v2345 = vpop.permute.xlu0 %2344
      %2346 = vrot.lane.b32.xlu0 %v2303, 16
      %v2347 = vpop.permute.xlu0 %2346
      %2348 = vrot.lane.b32.xlu0 %v2302, 16
      %v2349 = vpop.permute.xlu0 %2348
      %2350 = vrot.lane.b32.xlu0 %v2305, 16
      %v2351 = vpop.permute.xlu0 %2350
      %2352 = vrot.lane.b32.xlu0 %v2304, 16
      %v2353 = vpop.permute.xlu0 %2352
      %2354 = vrot.lane.b32.xlu0 %v2307, 16
      %v2355 = vpop.permute.xlu0 %2354
      %2356 = vrot.lane.b32.xlu0 %v2306, 16
      %v2357 = vpop.permute.xlu0 %2356
      %2358 = vrot.lane.b32.xlu0 %v2309, 16
      %v2359 = vpop.permute.xlu0 %2358
      %2360 = vrot.lane.b32.xlu0 %v2308, 16
      %v2361 = vpop.permute.xlu0 %2360
      %2362 = vrot.lane.b32.xlu0 %v2311, 16
      %v2363 = vpop.permute.xlu0 %2362
      %2364 = vrot.lane.b32.xlu0 %v2310, 16
      %v2365 = vpop.permute.xlu0 %2364
      %2366 = vrot.lane.b32.xlu0 %v2313, 16
      %v2367 = vpop.permute.xlu0 %2366
      %2368 = vrot.lane.b32.xlu0 %v2312, 16
      %v2369 = vpop.permute.xlu0 %2368
      %2370 = vrot.lane.b32.xlu0 %v2315, 16
      %v2371 = vpop.permute.xlu0 %2370
      %2372 = vrot.lane.b32.xlu0 %v2314, 16
      %v2373 = vpop.permute.xlu0 %2372
      %2374 = vrot.lane.b32.xlu0 %v2317, 16
      %v2375 = vpop.permute.xlu0 %2374
      %2376 = vrot.lane.b32.xlu0 %v2316, 16
      %v2377 = vpop.permute.xlu0 %2376
      %2378 = vrot.lane.b32.xlu0 %v2319, 16
      %v2379 = vpop.permute.xlu0 %2378
      %2380 = vrot.lane.b32.xlu0 %v2318, 16
      %v2381 = vpop.permute.xlu0 %2380
      %2382 = vrot.lane.b32.xlu0 %v2321, 16
      %v2383 = vpop.permute.xlu0 %2382
      %2384 = vrot.lane.b32.xlu0 %v2320, 16
      %v2385 = vpop.permute.xlu0 %2384
      %2386 = vrot.lane.b32.xlu0 %v2323, 16
      %v2387 = vpop.permute.xlu0 %2386
      %2388 = vrot.lane.b32.xlu0 %v2322, 16
      %v2389 = vpop.permute.xlu0 %2388
      %2390 = vrot.lane.b32.xlu0 %v2329, 16
      %v2391 = vpop.permute.xlu0 %2390
      %2392 = vrot.lane.b32.xlu0 %v2326, 16
      %v2393 = vpop.permute.xlu0 %2392
      %2396 = vrot.lane.b32.xlu0 %v675, 20
      %v2397 = vpop.permute.xlu0 %2396
      %2398 = vrot.lane.b32.xlu0 %v676, 20
      %v2399 = vpop.permute.xlu0 %2398
      %2400 = vrot.lane.b32.xlu0 %v677, 20
      %v2401 = vpop.permute.xlu0 %2400
      %2402 = vrot.lane.b32.xlu0 %v678, 20
      %v2403 = vpop.permute.xlu0 %2402
      %2404 = vrot.lane.b32.xlu0 %v679, 20
      %v2405 = vpop.permute.xlu0 %2404
      %2406 = vrot.lane.b32.xlu0 %v680, 20
      %v2407 = vpop.permute.xlu0 %2406
      %2408 = vrot.lane.b32.xlu0 %v681, 20
      %v2409 = vpop.permute.xlu0 %2408
      %2410 = vrot.lane.b32.xlu0 %v682, 20
      %v2411 = vpop.permute.xlu0 %2410
      %2412 = vrot.lane.b32.xlu0 %v683, 20
      %v2413 = vpop.permute.xlu0 %2412
      %2414 = vrot.lane.b32.xlu0 %v684, 20
      %v2415 = vpop.permute.xlu0 %2414
      %2416 = vrot.lane.b32.xlu0 %v685, 20
      %v2417 = vpop.permute.xlu0 %2416
      %2418 = vrot.lane.b32.xlu0 %v686, 20
      %v2419 = vpop.permute.xlu0 %2418
      %2420 = vrot.lane.b32.xlu0 %v687, 20
      %v2421 = vpop.permute.xlu0 %2420
      %2422 = vrot.lane.b32.xlu0 %v666, 20
      %v2423 = vpop.permute.xlu0 %2422
      %2424 = vrot.lane.b32.xlu0 %v688, 20
      %v2425 = vpop.permute.xlu0 %2424
      %2426 = vrot.lane.b32.xlu0 %v668, 20
      %v2427 = vpop.permute.xlu0 %2426
      %2428 = vrot.lane.b32.xlu0 %v689, 20
      %v2429 = vpop.permute.xlu0 %2428
      %2430 = vrot.lane.b32.xlu0 %v670, 20
      %v2431 = vpop.permute.xlu0 %2430
      %2432 = vrot.lane.b32.xlu0 %v690, 20
      %v2433 = vpop.permute.xlu0 %2432
      %v2434 = vrot.slane %v2327, 1
      %v2435 = vor.u32 %v2324, %v2434
      %v2436 = vshll.u32 %v690, 16
      %v2438 = vrot.slane %v2436, 1
      %v2439 = vsel %vm691, %v2435, %v2438
      %v2440 = vshrl.u32 %v690, 16
      %2442 = vrot.lane.b32.xlu0 %v1037, 24
      %v2443 = vpop.permute.xlu0 %2442
      %2444 = vrot.lane.b32.xlu0 %v1046, 24
      %v2445 = vpop.permute.xlu0 %2444
      %2446 = vrot.lane.b32.xlu0 %v1055, 24
      %v2447 = vpop.permute.xlu0 %2446
      %2448 = vrot.lane.b32.xlu0 %v1064, 24
      %v2449 = vpop.permute.xlu0 %2448
      %2450 = vrot.lane.b32.xlu0 %v1073, 24
      %v2451 = vpop.permute.xlu0 %2450
      %2452 = vrot.lane.b32.xlu0 %v1082, 24
      %v2453 = vpop.permute.xlu0 %2452
      %2454 = vrot.lane.b32.xlu0 %v1091, 24
      %v2455 = vpop.permute.xlu0 %2454
      %2456 = vrot.lane.b32.xlu0 %v1100, 24
      %v2457 = vpop.permute.xlu0 %2456
      %2458 = vrot.lane.b32.xlu0 %v1109, 24
      %v2459 = vpop.permute.xlu0 %2458
      %2460 = vrot.lane.b32.xlu0 %v1118, 24
      %v2461 = vpop.permute.xlu0 %2460
      %2462 = vrot.lane.b32.xlu0 %v1127, 24
      %v2463 = vpop.permute.xlu0 %2462
      %2464 = vrot.lane.b32.xlu0 %v1136, 24
      %v2465 = vpop.permute.xlu0 %2464
      %2466 = vrot.lane.b32.xlu0 %v1369, 24
      %v2467 = vpop.permute.xlu0 %2466
      %2468 = vrot.lane.b32.xlu0 %v1484, 24
      %v2469 = vpop.permute.xlu0 %2468
      %2470 = vrot.lane.b32.xlu0 %v1556, 24
      %v2471 = vpop.permute.xlu0 %2470
      %2472 = vrot.lane.b32.xlu0 %v2166, 24
      %v2473 = vpop.permute.xlu0 %2472
      %2474 = vrot.lane.b32.xlu0 %v2167, 24
      %v2475 = vpop.permute.xlu0 %2474
      %2476 = vrot.lane.b32.xlu0 %v2439, 24
      %v2477 = vpop.permute.xlu0 %2476
      %2478 = vrot.lane.b32.xlu0 %v2440, 24
      %v2479 = vpop.permute.xlu0 %2478
      %v2480 = vrot.slane %v670, 1
      %v2481 = vrot.slane %v690, 1
      %v2482 = vsel %vm916, %v2480, %v2481
      %2483 = vrot.lane.b32.xlu0 %v930, 28
      %v2484 = vpop.permute.xlu0 %2483
      %2485 = vrot.lane.b32.xlu0 %v933, 28
      %v2486 = vpop.permute.xlu0 %2485
      %2487 = vrot.lane.b32.xlu0 %v936, 28
      %v2488 = vpop.permute.xlu0 %2487
      %2489 = vrot.lane.b32.xlu0 %v939, 28
      %v2490 = vpop.permute.xlu0 %2489
      %2491 = vrot.lane.b32.xlu0 %v942, 28
      %v2492 = vpop.permute.xlu0 %2491
      %2493 = vrot.lane.b32.xlu0 %v945, 28
      %v2494 = vpop.permute.xlu0 %2493
      %2495 = vrot.lane.b32.xlu0 %v948, 28
      %v2496 = vpop.permute.xlu0 %2495
      %2497 = vrot.lane.b32.xlu0 %v951, 28
      %v2498 = vpop.permute.xlu0 %2497
      %2499 = vrot.lane.b32.xlu0 %v954, 28
      %v2500 = vpop.permute.xlu0 %2499
      %2501 = vrot.lane.b32.xlu0 %v957, 28
      %v2502 = vpop.permute.xlu0 %2501
      %2503 = vrot.lane.b32.xlu0 %v960, 28
      %v2504 = vpop.permute.xlu0 %2503
      %2505 = vrot.lane.b32.xlu0 %v963, 28
      %v2506 = vpop.permute.xlu0 %2505
      %2507 = vrot.lane.b32.xlu0 %v1332, 28
      %v2508 = vpop.permute.xlu0 %2507
      %2509 = vrot.lane.b32.xlu0 %v1520, 28
      %v2510 = vpop.permute.xlu0 %2509
      %2511 = vrot.lane.b32.xlu0 %v1519, 28
      %v2512 = vpop.permute.xlu0 %2511
      %2513 = vrot.lane.b32.xlu0 %v2210, 28
      %v2514 = vpop.permute.xlu0 %2513
      %2515 = vrot.lane.b32.xlu0 %v2209, 28
      %v2516 = vpop.permute.xlu0 %2515
      %2517 = vrot.lane.b32.xlu0 %v2482, 28
      %v2518 = vpop.permute.xlu0 %2517
      %2519 = vrot.lane.b32.xlu0 %v2481, 28
      %v2520 = vpop.permute.xlu0 %2519
      %v2521 = vrot.slane %v2324, 1
      %v2522 = vrot.slane %v2327, 2
      %v2523 = vor.u32 %v2521, %v2522
      %v2524 = vrot.slane %v2440, 1
      %v2525 = vrot.slane %v2436, 2
      %v2526 = vor.u32 %v2524, %v2525
      %v2527 = vsel %vm997, %v2523, %v2526
      %2528 = vrot.lane.b32.xlu0 %v1039, 32
      %v2529 = vpop.permute.xlu0 %2528
      %2530 = vrot.lane.b32.xlu0 %v1048, 32
      %v2531 = vpop.permute.xlu0 %2530
      %2532 = vrot.lane.b32.xlu0 %v1057, 32
      %v2533 = vpop.permute.xlu0 %2532
      %2534 = vrot.lane.b32.xlu0 %v1066, 32
      %v2535 = vpop.permute.xlu0 %2534
      %2536 = vrot.lane.b32.xlu0 %v1075, 32
      %v2537 = vpop.permute.xlu0 %2536
      %2538 = vrot.lane.b32.xlu0 %v1084, 32
      %v2539 = vpop.permute.xlu0 %2538
      %2540 = vrot.lane.b32.xlu0 %v1093, 32
      %v2541 = vpop.permute.xlu0 %2540
      %2542 = vrot.lane.b32.xlu0 %v1102, 32
      %v2543 = vpop.permute.xlu0 %2542
      %2544 = vrot.lane.b32.xlu0 %v1111, 32
      %v2545 = vpop.permute.xlu0 %2544
      %2546 = vrot.lane.b32.xlu0 %v1120, 32
      %v2547 = vpop.permute.xlu0 %2546
      %2548 = vrot.lane.b32.xlu0 %v1129, 32
      %v2549 = vpop.permute.xlu0 %2548
      %2550 = vrot.lane.b32.xlu0 %v1138, 32
      %v2551 = vpop.permute.xlu0 %2550
      %2552 = vrot.lane.b32.xlu0 %v1371, 32
      %v2553 = vpop.permute.xlu0 %2552
      %2554 = vrot.lane.b32.xlu0 %v1561, 32
      %v2555 = vpop.permute.xlu0 %2554
      %2556 = vrot.lane.b32.xlu0 %v1558, 32
      %v2557 = vpop.permute.xlu0 %2556
      %2558 = vrot.lane.b32.xlu0 %v2255, 32
      %v2559 = vpop.permute.xlu0 %2558
      %2560 = vrot.lane.b32.xlu0 %v2252, 32
      %v2561 = vpop.permute.xlu0 %2560
      %2562 = vrot.lane.b32.xlu0 %v2527, 32
      %v2563 = vpop.permute.xlu0 %2562
      %2564 = vrot.lane.b32.xlu0 %v2524, 32
      %v2565 = vpop.permute.xlu0 %2564
      %v2567 = vsel %vm1662, %v674, %v2170
      %v2569 = vsel %vm1662, %v675, %v2172
      %v2571 = vsel %vm1662, %v676, %v2174
      %v2573 = vsel %vm1662, %v677, %v2176
      %v2575 = vsel %vm1662, %v678, %v2178
      %v2577 = vsel %vm1662, %v679, %v2180
      %v2579 = vsel %vm1662, %v680, %v2182
      %v2581 = vsel %vm1662, %v681, %v2184
      %v2583 = vsel %vm1662, %v682, %v2186
      %v2585 = vsel %vm1662, %v683, %v2188
      %v2587 = vsel %vm1662, %v684, %v2190
      %v2589 = vsel %vm1662, %v685, %v2192
      %v2591 = vsel %vm1662, %v686, %v2194
      %v2593 = vsel %vm1662, %v664, %v2196
      %v2595 = vsel %vm1662, %v687, %v2198
      %v2597 = vsel %vm1662, %v666, %v2200
      %v2599 = vsel %vm1662, %v688, %v2202
      %v2601 = vsel %vm1662, %v668, %v2204
      %v2603 = vsel %vm1662, %v689, %v2206
      %v2605 = vsel %vm1695, %v2567, %v2212
      %v2607 = vsel %vm1695, %v2569, %v2214
      %v2609 = vsel %vm1695, %v2571, %v2216
      %v2611 = vsel %vm1695, %v2573, %v2218
      %v2613 = vsel %vm1695, %v2575, %v2220
      %v2615 = vsel %vm1695, %v2577, %v2222
      %v2617 = vsel %vm1695, %v2579, %v2224
      %v2619 = vsel %vm1695, %v2581, %v2226
      %v2621 = vsel %vm1695, %v2583, %v2228
      %v2623 = vsel %vm1695, %v2585, %v2230
      %v2625 = vsel %vm1695, %v2587, %v2232
      %v2627 = vsel %vm1695, %v2589, %v2234
      %v2629 = vsel %vm1695, %v2591, %v2236
      %v2631 = vsel %vm1695, %v2593, %v2238
      %v2633 = vsel %vm1695, %v2595, %v2240
      %v2635 = vsel %vm1695, %v2597, %v2242
      %v2637 = vsel %vm1695, %v2599, %v2244
      %v2639 = vsel %vm1695, %v2601, %v2246
      %v2641 = vsel %vm1695, %v2603, %v2248
      %v2643 = vsel %vm1728, %v2605, %v2257
      %v2645 = vsel %vm1728, %v2607, %v2259
      %v2647 = vsel %vm1728, %v2609, %v2261
      %v2649 = vsel %vm1728, %v2611, %v2263
      %v2651 = vsel %vm1728, %v2613, %v2265
      %v2653 = vsel %vm1728, %v2615, %v2267
      %v2655 = vsel %vm1728, %v2617, %v2269
      %v2657 = vsel %vm1728, %v2619, %v2271
      %v2659 = vsel %vm1728, %v2621, %v2273
      %v2661 = vsel %vm1728, %v2623, %v2275
      %v2663 = vsel %vm1728, %v2625, %v2277
      %v2665 = vsel %vm1728, %v2627, %v2279
      %v2667 = vsel %vm1728, %v2629, %v2281
      %v2669 = vsel %vm1728, %v2631, %v2283
      %v2671 = vsel %vm1728, %v2633, %v2285
      %v2673 = vsel %vm1728, %v2635, %v2287
      %v2675 = vsel %vm1728, %v2637, %v2289
      %v2677 = vsel %vm1728, %v2639, %v2291
      %v2679 = vsel %vm1728, %v2641, %v2293
      %v2681 = vsel %vm1761, %v1736, %v2331
      %v2683 = vsel %vm1761, %v2643, %v2333
      %v2685 = vsel %vm1761, %v1738, %v2335
      %v2687 = vsel %vm1761, %v2645, %v2337
      %v2689 = vsel %vm1761, %v1740, %v2339
      %v2691 = vsel %vm1761, %v2647, %v2341
      %v2693 = vsel %vm1761, %v1742, %v2343
      %v2695 = vsel %vm1761, %v2649, %v2345
      %v2697 = vsel %vm1761, %v1744, %v2347
      %v2699 = vsel %vm1761, %v2651, %v2349
      %v2701 = vsel %vm1761, %v1746, %v2351
      %v2703 = vsel %vm1761, %v2653, %v2353
      %v2705 = vsel %vm1761, %v1748, %v2355
      %v2707 = vsel %vm1761, %v2655, %v2357
      %v2709 = vsel %vm1761, %v1750, %v2359
      %v2711 = vsel %vm1761, %v2657, %v2361
      %v2713 = vsel %vm1761, %v1752, %v2363
      %v2715 = vsel %vm1761, %v2659, %v2365
      %v2717 = vsel %vm1761, %v1754, %v2367
      %v2719 = vsel %vm1761, %v2661, %v2369
      %v2721 = vsel %vm1761, %v1756, %v2371
      %v2723 = vsel %vm1761, %v2663, %v2373
      %v2725 = vsel %vm1761, %v1758, %v2375
      %v2727 = vsel %vm1761, %v2665, %v2377
      %v2729 = vsel %vm1761, %v1760, %v2379
      %v2731 = vsel %vm1761, %v2667, %v2381
      %v2733 = vsel %vm1761, %v2669, %v2383
      %v2735 = vsel %vm1761, %v2671, %v2385
      %v2737 = vsel %vm1761, %v2673, %v2387
      %v2739 = vsel %vm1761, %v2675, %v2389
      %v2741 = vsel %vm1761, %v2677, %v2391
      %v2743 = vsel %vm1761, %v2679, %v2393
      %v2744 = vsel %vm1794, %v2681, %v1263
      %v2746 = vsel %vm1794, %v2683, %v2397
      %v2747 = vsel %vm1794, %v2685, %v1265
      %v2749 = vsel %vm1794, %v2687, %v2399
      %v2750 = vsel %vm1794, %v2689, %v1267
      %v2752 = vsel %vm1794, %v2691, %v2401
      %v2753 = vsel %vm1794, %v2693, %v1269
      %v2755 = vsel %vm1794, %v2695, %v2403
      %v2756 = vsel %vm1794, %v2697, %v1271
      %v2758 = vsel %vm1794, %v2699, %v2405
      %v2759 = vsel %vm1794, %v2701, %v1273
      %v2761 = vsel %vm1794, %v2703, %v2407
      %v2762 = vsel %vm1794, %v2705, %v1275
      %v2764 = vsel %vm1794, %v2707, %v2409
      %v2765 = vsel %vm1794, %v2709, %v1277
      %v2767 = vsel %vm1794, %v2711, %v2411
      %v2768 = vsel %vm1794, %v2713, %v1279
      %v2770 = vsel %vm1794, %v2715, %v2413
      %v2771 = vsel %vm1794, %v2717, %v1281
      %v2773 = vsel %vm1794, %v2719, %v2415
      %v2774 = vsel %vm1794, %v2721, %v1283
      %v2776 = vsel %vm1794, %v2723, %v2417
      %v2777 = vsel %vm1794, %v2725, %v1285
      %v2779 = vsel %vm1794, %v2727, %v2419
      %v2780 = vsel %vm1794, %v2729, %v1287
      %v2782 = vsel %vm1794, %v2731, %v2421
      %v2784 = vsel %vm1794, %v2733, %v2423
      %v2786 = vsel %vm1794, %v2735, %v2425
      %v2788 = vsel %vm1794, %v2737, %v2427
      %v2790 = vsel %vm1794, %v2739, %v2429
      %v2792 = vsel %vm1794, %v2741, %v2431
      %v2794 = vsel %vm1794, %v2743, %v2433
      %v2795 = vsel %vm1827, %v2744, %v1305
      %v2797 = vsel %vm1827, %v2746, %v2443
      %v2798 = vsel %vm1827, %v2747, %v1307
      %v2800 = vsel %vm1827, %v2749, %v2445
      %v2801 = vsel %vm1827, %v2750, %v1309
      %v2803 = vsel %vm1827, %v2752, %v2447
      %v2804 = vsel %vm1827, %v2753, %v1311
      %v2806 = vsel %vm1827, %v2755, %v2449
      %v2807 = vsel %vm1827, %v2756, %v1313
      %v2809 = vsel %vm1827, %v2758, %v2451
      %v2810 = vsel %vm1827, %v2759, %v1315
      %v2812 = vsel %vm1827, %v2761, %v2453
      %v2813 = vsel %vm1827, %v2762, %v1317
      %v2815 = vsel %vm1827, %v2764, %v2455
      %v2816 = vsel %vm1827, %v2765, %v1319
      %v2818 = vsel %vm1827, %v2767, %v2457
      %v2819 = vsel %vm1827, %v2768, %v1321
      %v2821 = vsel %vm1827, %v2770, %v2459
      %v2822 = vsel %vm1827, %v2771, %v1323
      %v2824 = vsel %vm1827, %v2773, %v2461
      %v2825 = vsel %vm1827, %v2774, %v1325
      %v2827 = vsel %vm1827, %v2776, %v2463
      %v2828 = vsel %vm1827, %v2777, %v1327
      %v2830 = vsel %vm1827, %v2779, %v2465
      %v2831 = vsel %vm1827, %v2780, %v1329
      %v2833 = vsel %vm1827, %v2782, %v2467
      %v2835 = vsel %vm1827, %v2784, %v2469
      %v2837 = vsel %vm1827, %v2786, %v2471
      %v2839 = vsel %vm1827, %v2788, %v2473
      %v2841 = vsel %vm1827, %v2790, %v2475
      %v2843 = vsel %vm1827, %v2792, %v2477
      %v2845 = vsel %vm1827, %v2794, %v2479
      %v2846 = vsel %vm1860, %v2795, %v1341
      %v2848 = vsel %vm1860, %v2797, %v2484
      %v2849 = vsel %vm1860, %v2798, %v1343
      %v2851 = vsel %vm1860, %v2800, %v2486
      %v2852 = vsel %vm1860, %v2801, %v1345
      %v2854 = vsel %vm1860, %v2803, %v2488
      %v2855 = vsel %vm1860, %v2804, %v1347
      %v2857 = vsel %vm1860, %v2806, %v2490
      %v2858 = vsel %vm1860, %v2807, %v1349
      %v2860 = vsel %vm1860, %v2809, %v2492
      %v2861 = vsel %vm1860, %v2810, %v1351
      %v2863 = vsel %vm1860, %v2812, %v2494
      %v2864 = vsel %vm1860, %v2813, %v1353
      %v2866 = vsel %vm1860, %v2815, %v2496
      %v2867 = vsel %vm1860, %v2816, %v1355
      %v2869 = vsel %vm1860, %v2818, %v2498
      %v2870 = vsel %vm1860, %v2819, %v1357
      %v2872 = vsel %vm1860, %v2821, %v2500
      %v2873 = vsel %vm1860, %v2822, %v1359
      %v2875 = vsel %vm1860, %v2824, %v2502
      %v2876 = vsel %vm1860, %v2825, %v1361
      %v2878 = vsel %vm1860, %v2827, %v2504
      %v2879 = vsel %vm1860, %v2828, %v1363
      %v2881 = vsel %vm1860, %v2830, %v2506
      %v2882 = vsel %vm1860, %v2831, %v1365
      %v2884 = vsel %vm1860, %v2833, %v2508
      %v2886 = vsel %vm1860, %v2835, %v2510
      %v2888 = vsel %vm1860, %v2837, %v2512
      %v2890 = vsel %vm1860, %v2839, %v2514
      %v2892 = vsel %vm1860, %v2841, %v2516
      %v2894 = vsel %vm1860, %v2843, %v2518
      %v2896 = vsel %vm1860, %v2845, %v2520
      %v2897 = vsel %vm1893, %v2846, %v1382
      %v2899 = vsel %vm1893, %v2848, %v2529
      %v2900 = vsel %vm1893, %v2849, %v1384
      %v2902 = vsel %vm1893, %v2851, %v2531
      %v2903 = vsel %vm1893, %v2852, %v1386
      %v2905 = vsel %vm1893, %v2854, %v2533
      %v2906 = vsel %vm1893, %v2855, %v1388
      %v2908 = vsel %vm1893, %v2857, %v2535
      %v2909 = vsel %vm1893, %v2858, %v1390
      %v2911 = vsel %vm1893, %v2860, %v2537
      %v2912 = vsel %vm1893, %v2861, %v1392
      %v2914 = vsel %vm1893, %v2863, %v2539
      %v2915 = vsel %vm1893, %v2864, %v1394
      %v2917 = vsel %vm1893, %v2866, %v2541
      %v2918 = vsel %vm1893, %v2867, %v1396
      %v2920 = vsel %vm1893, %v2869, %v2543
      %v2921 = vsel %vm1893, %v2870, %v1398
      %v2923 = vsel %vm1893, %v2872, %v2545
      %v2924 = vsel %vm1893, %v2873, %v1400
      %v2926 = vsel %vm1893, %v2875, %v2547
      %v2927 = vsel %vm1893, %v2876, %v1402
      %v2929 = vsel %vm1893, %v2878, %v2549
      %v2930 = vsel %vm1893, %v2879, %v1404
      %v2932 = vsel %vm1893, %v2881, %v2551
      %v2933 = vsel %vm1893, %v2882, %v1406
      %v2935 = vsel %vm1893, %v2884, %v2553
      %v2937 = vsel %vm1893, %v2886, %v2555
      %v2939 = vsel %vm1893, %v2888, %v2557
      %v2941 = vsel %vm1893, %v2890, %v2559
      %v2943 = vsel %vm1893, %v2892, %v2561
      %v2945 = vsel %vm1893, %v2894, %v2563
      %v2947 = vsel %vm1893, %v2896, %v2565
      %v2948 = vshrl.u32 %v2897, 16
      %v2950 = vshll.u32 %v2897, 16
      %v2952 = vrot.slane %v2950, 1
      %v2953 = vor.u32 %v2948, %v2952
      %v2954 = vshll.u32 %v2899, 16
      %v2956 = vrot.slane %v2954, 1
      %v2957 = vsel %vm691, %v2953, %v2956
      %v2958 = vshrl.u32 %v2900, 16
      %v2960 = vshll.u32 %v2900, 16
      %v2962 = vrot.slane %v2960, 1
      %v2963 = vor.u32 %v2958, %v2962
      %v2964 = vshll.u32 %v2902, 16
      %v2966 = vrot.slane %v2964, 1
      %v2967 = vsel %vm691, %v2963, %v2966
      %v2968 = vshrl.u32 %v2903, 16
      %v2970 = vshll.u32 %v2903, 16
      %v2972 = vrot.slane %v2970, 1
      %v2973 = vor.u32 %v2968, %v2972
      %v2974 = vshll.u32 %v2905, 16
      %v2976 = vrot.slane %v2974, 1
      %v2977 = vsel %vm691, %v2973, %v2976
      %v2978 = vshrl.u32 %v2906, 16
      %v2980 = vshll.u32 %v2906, 16
      %v2982 = vrot.slane %v2980, 1
      %v2983 = vor.u32 %v2978, %v2982
      %v2984 = vshll.u32 %v2908, 16
      %v2986 = vrot.slane %v2984, 1
      %v2987 = vsel %vm691, %v2983, %v2986
      %v2988 = vshrl.u32 %v2909, 16
      %v2990 = vshll.u32 %v2909, 16
      %v2992 = vrot.slane %v2990, 1
      %v2993 = vor.u32 %v2988, %v2992
      %v2994 = vshll.u32 %v2911, 16
      %v2996 = vrot.slane %v2994, 1
      %v2997 = vsel %vm691, %v2993, %v2996
      %v2998 = vshrl.u32 %v2912, 16
      %v3000 = vshll.u32 %v2912, 16
      %v3002 = vrot.slane %v3000, 1
      %v3003 = vor.u32 %v2998, %v3002
      %v3004 = vshll.u32 %v2914, 16
      %v3006 = vrot.slane %v3004, 1
      %v3007 = vsel %vm691, %v3003, %v3006
      %v3008 = vshrl.u32 %v2915, 16
      %v3010 = vshll.u32 %v2915, 16
      %v3012 = vrot.slane %v3010, 1
      %v3013 = vor.u32 %v3008, %v3012
      %v3014 = vshll.u32 %v2917, 16
      %v3016 = vrot.slane %v3014, 1
      %v3017 = vsel %vm691, %v3013, %v3016
      %v3018 = vshrl.u32 %v2918, 16
      %v3020 = vshll.u32 %v2918, 16
      %v3022 = vrot.slane %v3020, 1
      %v3023 = vor.u32 %v3018, %v3022
      %v3024 = vshll.u32 %v2920, 16
      %v3026 = vrot.slane %v3024, 1
      %v3027 = vsel %vm691, %v3023, %v3026
      %v3028 = vshrl.u32 %v2921, 16
      %v3030 = vshll.u32 %v2921, 16
      %v3032 = vrot.slane %v3030, 1
      %v3033 = vor.u32 %v3028, %v3032
      %v3034 = vshll.u32 %v2923, 16
      %v3036 = vrot.slane %v3034, 1
      %v3037 = vsel %vm691, %v3033, %v3036
      %v3038 = vshrl.u32 %v2924, 16
      %v3040 = vshll.u32 %v2924, 16
      %v3042 = vrot.slane %v3040, 1
      %v3043 = vor.u32 %v3038, %v3042
      %v3044 = vshll.u32 %v2926, 16
      %v3046 = vrot.slane %v3044, 1
      %v3047 = vsel %vm691, %v3043, %v3046
      %v3048 = vshrl.u32 %v2927, 16
      %v3050 = vshll.u32 %v2927, 16
      %v3052 = vrot.slane %v3050, 1
      %v3053 = vor.u32 %v3048, %v3052
      %v3054 = vshll.u32 %v2929, 16
      %v3056 = vrot.slane %v3054, 1
      %v3057 = vsel %vm691, %v3053, %v3056
      %v3058 = vshrl.u32 %v2930, 16
      %v3060 = vshll.u32 %v2930, 16
      %v3062 = vrot.slane %v3060, 1
      %v3063 = vor.u32 %v3058, %v3062
      %v3064 = vshll.u32 %v2932, 16
      %v3066 = vrot.slane %v3064, 1
      %v3067 = vsel %vm691, %v3063, %v3066
      %v3068 = vshrl.u32 %v2933, 16
      %v3070 = vshll.u32 %v2933, 16
      %v3072 = vrot.slane %v3070, 1
      %v3073 = vor.u32 %v3068, %v3072
      %v3074 = vshll.u32 %v2935, 16
      %v3076 = vrot.slane %v3074, 1
      %v3077 = vsel %vm691, %v3073, %v3076
      %v3078 = vshrl.u32 %v2937, 16
      %v3080 = vshll.u32 %v2937, 16
      %v3082 = vrot.slane %v3080, 1
      %v3083 = vor.u32 %v3078, %v3082
      %v3084 = vshll.u32 %v2939, 16
      %v3086 = vrot.slane %v3084, 1
      %v3087 = vsel %vm691, %v3083, %v3086
      %v3088 = vshrl.u32 %v2941, 16
      %v3090 = vshll.u32 %v2941, 16
      %v3092 = vrot.slane %v3090, 1
      %v3093 = vor.u32 %v3088, %v3092
      %v3094 = vshll.u32 %v2943, 16
      %v3096 = vrot.slane %v3094, 1
      %v3097 = vsel %vm691, %v3093, %v3096
      %v3098 = vshrl.u32 %v2945, 16
      %v3100 = vshll.u32 %v2945, 16
      %v3102 = vrot.slane %v3100, 1
      %v3103 = vor.u32 %v3098, %v3102
      %v3104 = vshll.u32 %v2947, 16
      %v3106 = vrot.slane %v3104, 1
      %v3107 = vsel %vm691, %v3103, %v3106
      %3108 = vrot.lane.b32.xlu0 %v2957, 64
      %v3109 = vpop.permute.xlu0 %3108
      %3110 = vrot.lane.b32.xlu0 %v2967, 64
      %v3111 = vpop.permute.xlu0 %3110
      %3112 = vrot.lane.b32.xlu0 %v2977, 64
      %v3113 = vpop.permute.xlu0 %3112
      %3114 = vrot.lane.b32.xlu0 %v2987, 64
      %v3115 = vpop.permute.xlu0 %3114
      %3116 = vrot.lane.b32.xlu0 %v2997, 64
      %v3117 = vpop.permute.xlu0 %3116
      %3118 = vrot.lane.b32.xlu0 %v3007, 64
      %v3119 = vpop.permute.xlu0 %3118
      %3120 = vrot.lane.b32.xlu0 %v3017, 64
      %v3121 = vpop.permute.xlu0 %3120
      %3122 = vrot.lane.b32.xlu0 %v3027, 64
      %v3123 = vpop.permute.xlu0 %3122
      %3124 = vrot.lane.b32.xlu0 %v3037, 64
      %v3125 = vpop.permute.xlu0 %3124
      %3126 = vrot.lane.b32.xlu0 %v3047, 64
      %v3127 = vpop.permute.xlu0 %3126
      %3128 = vrot.lane.b32.xlu0 %v3057, 64
      %v3129 = vpop.permute.xlu0 %3128
      %3130 = vrot.lane.b32.xlu0 %v3067, 64
      %v3131 = vpop.permute.xlu0 %3130
      %3132 = vrot.lane.b32.xlu0 %v3077, 64
      %v3133 = vpop.permute.xlu0 %3132
      %3134 = vrot.lane.b32.xlu0 %v3087, 64
      %v3135 = vpop.permute.xlu0 %3134
      %3136 = vrot.lane.b32.xlu0 %v3097, 64
      %v3137 = vpop.permute.xlu0 %3136
      %3138 = vrot.lane.b32.xlu0 %v3107, 64
      %v3139 = vpop.permute.xlu0 %3138
      %vm3140 = vcmask 523264
      %v3142 = vsel %vm3140, %v2126, %v3109
      %v3144 = vsel %vm3140, %v2128, %v3111
      %v3146 = vsel %vm3140, %v2130, %v3113
      %v3148 = vsel %vm3140, %v2132, %v3115
      %v3150 = vsel %vm3140, %v2134, %v3117
      %v3152 = vsel %vm3140, %v2136, %v3119
      %v3154 = vsel %vm3140, %v2138, %v3121
      %v3156 = vsel %vm3140, %v2140, %v3123
      %v3158 = vsel %vm3140, %v2142, %v3125
      %v3160 = vsel %vm3140, %v2144, %v3127
      %v3162 = vsel %vm3140, %v2146, %v3129
      %v3164 = vsel %vm3140, %v2148, %v3131
      %v3166 = vsel %vm3140, %v2150, %v3133
      %v3168 = vsel %vm3140, %v2152, %v3135
      %v3170 = vsel %vm3140, %v2154, %v3137
      %v3172 = vsel %vm3140, %v2156, %v3139
      %v3173 = vld [vmem:[%s5] sm:$0xf]
      %v3174 = vld [vmem:[%s5 + $0x4] sm:$0xf]
      %v3175 = vld [vmem:[%s5 + $0x8] sm:$0xf]
      %v3176 = vld [vmem:[%s5 + $0xc] sm:$0xf]
      %v3177 = vld [vmem:[%s5 + $0x10] sm:$0xf]
      %v3178 = vld [vmem:[%s5 + $0x14] sm:$0xf]
      %v3179 = vld [vmem:[%s5 + $0x18] sm:$0xf]
      %v3180 = vld [vmem:[%s5 + $0x1c] sm:$0xf]
      %v3181 = vld [vmem:[%s5 + $0x20] sm:$0xf]
      %v3182 = vld [vmem:[%s5 + $0x24] sm:$0xf]
      %v3183 = vld [vmem:[%s5 + $0x28] sm:$0xf]
      %v3184 = vld [vmem:[%s5 + $0x2c] sm:$0xf]
      %v3185 = vld [vmem:[%s5 + $0x30] sm:$0x3]
      %v3199 = vunpack.c.l.b16 %v3173
      %v3200 = vunpack.c.l.b16 %v3174
      %v3201 = vunpack.c.l.b16 %v3175
      %v3202 = vunpack.c.l.b16 %v3176
      %v3203 = vunpack.c.l.b16 %v3177
      %v3204 = vunpack.c.l.b16 %v3178
      %v3205 = vunpack.c.l.b16 %v3179
      %v3206 = vunpack.c.l.b16 %v3180
      %v3207 = vunpack.c.l.b16 %v3181
      %v3208 = vunpack.c.l.b16 %v3182
      %v3209 = vunpack.c.l.b16 %v3183
      %v3210 = vunpack.c.l.b16 %v3184
      %v3211 = vunpack.c.l.b16 %v3185
      %v3212 = vpack.c.b16 %v3200, %v3199
      %v3213 = vpack.c.b16 %v3202, %v3201
      %v3214 = vpack.c.b16 %v3204, %v3203
      %v3215 = vpack.c.b16 %v3206, %v3205
      %v3216 = vpack.c.b16 %v3208, %v3207
      %v3217 = vpack.c.b16 %v3210, %v3209
      %v3218 = vpack.c.b16 %v3211, %v3211
      %vm3225 = vcmask 818176
      %v3226 = vsel %vm3225, %v3142, 0
      %v3228 = vsel %vm3225, %v3144, 0
      %v3230 = vsel %vm3225, %v3146, 0
      %v3232 = vsel %vm3225, %v3148, 0
      %v3234 = vsel %vm3225, %v3150, 0
      %v3236 = vsel %vm3225, %v3152, 0
      %v3238 = vsel %vm3225, %v3154, 0
      %v3240 = vsel %vm3225, %v3156, 0
      %v3242 = vsel %vm3225, %v3158, 0
      %v3244 = vsel %vm3225, %v3160, 0
      %v3246 = vsel %vm3225, %v3162, 0
      %v3248 = vsel %vm3225, %v3164, 0
      %v3250 = vsel %vm3225, %v3166, 0
      %v3252 = vsel %vm3225, %v3168, 0
      %v3254 = vsel %vm3225, %v3170, 0
      %v3256 = vsel %vm3225, %v3172, 0
      %vm3258 = vcmask 1041408
      %v3260 = vsel %vm3258, %v3218, 0
      %3262 = vmatprep.subr.bf16.mxu0 0
      %3263 = vmatpush1.bf16.msra.mxu0 %v3212
      %3264 = vmatprep.subr.bf16.mxu0 0
      %3265 = vmatpush1.bf16.msra.mxu0 %v3213
      %3266 = vmatprep.subr.bf16.mxu0 0
      %3267 = vmatpush1.bf16.msra.mxu0 %v3214
      %3268 = vmatprep.subr.bf16.mxu0 0
      %3269 = vmatpush1.bf16.msra.mxu0 %v3215
      %3270 = vmatprep.subr.bf16.mxu0 0
      %3271 = vmatpush1.bf16.msra.mxu0 %v3216
      %3272 = vmatprep.subr.bf16.mxu0 0
      %3273 = vmatpush1.bf16.msra.mxu0 %v3217
      %3274 = vmatprep.subr.bf16.mxu0 0
      %3275 = vmatpush1.bf16.msra.mxu0 %v3260
      %3276 = vmatprep.subr.bf16.mxu0 0
      %3277 = vmatpush1.bf16.msra.mxu0 0
      %3278 = vmatprep.subr.bf16.mxu0 0
      %3279 = vmatpush1.bf16.msra.mxu0 0
      %3280 = vmatprep.subr.bf16.mxu0 0
      %3281 = vmatpush1.bf16.msra.mxu0 0
      %3282 = vmatprep.subr.bf16.mxu0 0
      %3283 = vmatpush1.bf16.msra.mxu0 0
      %3284 = vmatprep.subr.bf16.mxu0 0
      %3285 = vmatpush1.bf16.msra.mxu0 0
      %3286 = vmatprep.subr.bf16.mxu0 0
      %3287 = vmatpush1.bf16.msra.mxu0 0
      %3288 = vmatprep.subr.bf16.mxu0 0
      %3289 = vmatpush1.bf16.msra.mxu0 0
      %3290 = vmatprep.subr.bf16.mxu0 0
      %3291 = vmatpush1.bf16.msra.mxu0 0
      %3292 = vmatprep.subr.bf16.mxu0 0
      %3293 = vmatpush1.bf16.msra.mxu0 0
      %3294 = vmatprep.mubr.bf16.mxu0 0
      %3295 = vmatmul.mubr.bf16.gmra.mrb[0].mxu0 %v3226
      %v3296 = vpop.f32.mrb[0].mxu0
      %v3297 = vadd.f32 0.0, %v3296
      %v3298 = vpop.f32.mrb[0].mxu0
      %v3299 = vpop.f32.mrb[0].mxu0
      %v3300 = vadd.f32 0.0, %v3299
      %v3301 = vpop.f32.mrb[0].mxu0
      %3302 = vmatprep.mubr.bf16.mxu0 0
      %3303 = vmatmul.mubr.bf16.gmra.mrb[0].mxu0 %v3228
      %v3304 = vpop.f32.mrb[0].mxu0
      %v3305 = vadd.f32 0.0, %v3304
      %v3306 = vpop.f32.mrb[0].mxu0
      %v3307 = vpop.f32.mrb[0].mxu0
      %v3308 = vadd.f32 0.0, %v3307
      %v3309 = vpop.f32.mrb[0].mxu0
      %3310 = vmatprep.mubr.bf16.mxu0 0
      %3311 = vmatmul.mubr.bf16.gmra.mrb[0].mxu0 %v3230
      %v3312 = vpop.f32.mrb[0].mxu0
      %v3313 = vadd.f32 0.0, %v3312
      %v3314 = vpop.f32.mrb[0].mxu0
      %v3315 = vpop.f32.mrb[0].mxu0
      %v3316 = vadd.f32 0.0, %v3315
      %v3317 = vpop.f32.mrb[0].mxu0
      %3318 = vmatprep.mubr.bf16.mxu0 0
      %3319 = vmatmul.mubr.bf16.gmra.mrb[0].mxu0 %v3232
      %v3320 = vpop.f32.mrb[0].mxu0
      %v3321 = vadd.f32 0.0, %v3320
      %v3322 = vpop.f32.mrb[0].mxu0
      %v3323 = vpop.f32.mrb[0].mxu0
      %v3324 = vadd.f32 0.0, %v3323
      %v3325 = vpop.f32.mrb[0].mxu0
      %3326 = vmatprep.mubr.bf16.mxu0 0
      %3327 = vmatmul.mubr.bf16.gmra.mrb[0].mxu0 %v3234
      %v3328 = vpop.f32.mrb[0].mxu0
      %v3329 = vadd.f32 0.0, %v3328
      %v3330 = vpop.f32.mrb[0].mxu0
      %v3331 = vpop.f32.mrb[0].mxu0
      %v3332 = vadd.f32 0.0, %v3331
      %v3333 = vpop.f32.mrb[0].mxu0
      %3334 = vmatprep.mubr.bf16.mxu0 0
      %3335 = vmatmul.mubr.bf16.gmra.mrb[0].mxu0 %v3236
      %v3336 = vpop.f32.mrb[0].mxu0
      %v3337 = vadd.f32 0.0, %v3336
      %v3338 = vpop.f32.mrb[0].mxu0
      %v3339 = vpop.f32.mrb[0].mxu0
      %v3340 = vadd.f32 0.0, %v3339
      %v3341 = vpop.f32.mrb[0].mxu0
      %3342 = vmatprep.mubr.bf16.mxu0 0
      %3343 = vmatmul.mubr.bf16.gmra.mrb[0].mxu0 %v3238
      %v3344 = vpop.f32.mrb[0].mxu0
      %v3345 = vadd.f32 0.0, %v3344
      %v3346 = vpop.f32.mrb[0].mxu0
      %v3347 = vpop.f32.mrb[0].mxu0
      %v3348 = vadd.f32 0.0, %v3347
      %v3349 = vpop.f32.mrb[0].mxu0
      %3350 = vmatprep.mubr.bf16.mxu0 0
      %3351 = vmatmul.mubr.bf16.gmra.mrb[0].mxu0 %v3240
      %v3352 = vpop.f32.mrb[0].mxu0
      %v3353 = vadd.f32 0.0, %v3352
      %v3354 = vpop.f32.mrb[0].mxu0
      %v3355 = vpop.f32.mrb[0].mxu0
      %v3356 = vadd.f32 0.0, %v3355
      %v3357 = vpop.f32.mrb[0].mxu0
      %3358 = vmatprep.mubr.bf16.mxu0 0
      %3359 = vmatmul.mubr.bf16.gmra.mrb[0].mxu0 %v3242
      %v3360 = vpop.f32.mrb[0].mxu0
      %v3361 = vadd.f32 0.0, %v3360
      %v3362 = vpop.f32.mrb[0].mxu0
      %v3363 = vpop.f32.mrb[0].mxu0
      %v3364 = vadd.f32 0.0, %v3363
      %v3365 = vpop.f32.mrb[0].mxu0
      %3366 = vmatprep.mubr.bf16.mxu0 0
      %3367 = vmatmul.mubr.bf16.gmra.mrb[0].mxu0 %v3244
      %v3368 = vpop.f32.mrb[0].mxu0
      %v3369 = vadd.f32 0.0, %v3368
      %v3370 = vpop.f32.mrb[0].mxu0
      %v3371 = vpop.f32.mrb[0].mxu0
      %v3372 = vadd.f32 0.0, %v3371
      %v3373 = vpop.f32.mrb[0].mxu0
      %3374 = vmatprep.mubr.bf16.mxu0 0
      %3375 = vmatmul.mubr.bf16.gmra.mrb[0].mxu0 %v3246
      %v3376 = vpop.f32.mrb[0].mxu0
      %v3377 = vadd.f32 0.0, %v3376
      %v3378 = vpop.f32.mrb[0].mxu0
      %v3379 = vpop.f32.mrb[0].mxu0
      %v3380 = vadd.f32 0.0, %v3379
      %v3381 = vpop.f32.mrb[0].mxu0
      %3382 = vmatprep.mubr.bf16.mxu0 0
      %3383 = vmatmul.mubr.bf16.gmra.mrb[0].mxu0 %v3248
      %v3384 = vpop.f32.mrb[0].mxu0
      %v3385 = vadd.f32 0.0, %v3384
      %v3386 = vpop.f32.mrb[0].mxu0
      %v3387 = vpop.f32.mrb[0].mxu0
      %v3388 = vadd.f32 0.0, %v3387
      %v3389 = vpop.f32.mrb[0].mxu0
      %3390 = vmatprep.mubr.bf16.mxu0 0
      %3391 = vmatmul.mubr.bf16.gmra.mrb[0].mxu0 %v3250
      %v3392 = vpop.f32.mrb[0].mxu0
      %v3393 = vadd.f32 0.0, %v3392
      %v3394 = vpop.f32.mrb[0].mxu0
      %v3395 = vpop.f32.mrb[0].mxu0
      %v3396 = vadd.f32 0.0, %v3395
      %v3397 = vpop.f32.mrb[0].mxu0
      %3398 = vmatprep.mubr.bf16.mxu0 0
      %3399 = vmatmul.mubr.bf16.gmra.mrb[0].mxu0 %v3252
      %v3400 = vpop.f32.mrb[0].mxu0
      %v3401 = vadd.f32 0.0, %v3400
      %v3402 = vpop.f32.mrb[0].mxu0
      %v3403 = vpop.f32.mrb[0].mxu0
      %v3404 = vadd.f32 0.0, %v3403
      %v3405 = vpop.f32.mrb[0].mxu0
      %3406 = vmatprep.mubr.bf16.mxu0 0
      %3407 = vmatmul.mubr.bf16.gmra.mrb[0].mxu0 %v3254
      %v3408 = vpop.f32.mrb[0].mxu0
      %v3409 = vadd.f32 0.0, %v3408
      %v3410 = vpop.f32.mrb[0].mxu0
      %v3411 = vpop.f32.mrb[0].mxu0
      %v3412 = vadd.f32 0.0, %v3411
      %v3413 = vpop.f32.mrb[0].mxu0
      %3414 = vmatprep.mubr.bf16.mxu0 0
      %3415 = vmatmul.mubr.bf16.gmra.mrb[0].mxu0 %v3256
      %v3416 = vpop.f32.mrb[0].mxu0
      %v3417 = vadd.f32 0.0, %v3416
      %v3418 = vpop.f32.mrb[0].mxu0
      %v3419 = vpop.f32.mrb[0].mxu0
      %v3420 = vadd.f32 0.0, %v3419
      %v3421 = vpop.f32.mrb[0].mxu0
      %3422 = vdwg.mxu0
      %v3423 = vpack.c.bf16 %v3300, %v3297
      %v3424 = vpack.c.bf16 %v3308, %v3305
      %v3425 = vpack.c.bf16 %v3316, %v3313
      %v3426 = vpack.c.bf16 %v3324, %v3321
      %v3427 = vpack.c.bf16 %v3332, %v3329
      %v3428 = vpack.c.bf16 %v3340, %v3337
      %v3429 = vpack.c.bf16 %v3348, %v3345
      %v3430 = vpack.c.bf16 %v3356, %v3353
      %v3431 = vpack.c.bf16 %v3364, %v3361
      %v3432 = vpack.c.bf16 %v3372, %v3369
      %v3433 = vpack.c.bf16 %v3380, %v3377
      %v3434 = vpack.c.bf16 %v3388, %v3385
      %v3435 = vpack.c.bf16 %v3396, %v3393
      %v3436 = vpack.c.bf16 %v3404, %v3401
      %v3437 = vpack.c.bf16 %v3412, %v3409
      %v3438 = vpack.c.bf16 %v3420, %v3417
      %v3455 = vunpack.c.l.b16 %v3423
      %v3456 = vunpack.c.h.b16 %v3423
      %v3457 = vunpack.c.l.b16 %v3424
      %v3458 = vunpack.c.h.b16 %v3424
      %v3459 = vunpack.c.l.b16 %v3425
      %v3460 = vunpack.c.h.b16 %v3425
      %v3461 = vunpack.c.l.b16 %v3426
      %v3462 = vunpack.c.h.b16 %v3426
      %v3463 = vunpack.c.l.b16 %v3427
      %v3464 = vunpack.c.h.b16 %v3427
      %v3465 = vunpack.c.l.b16 %v3428
      %v3466 = vunpack.c.h.b16 %v3428
      %v3467 = vunpack.c.l.b16 %v3429
      %v3468 = vunpack.c.h.b16 %v3429
      %v3469 = vunpack.c.l.b16 %v3430
      %v3470 = vunpack.c.h.b16 %v3430
      %v3471 = vunpack.c.l.b16 %v3431
      %v3472 = vunpack.c.h.b16 %v3431
      %v3473 = vunpack.c.l.b16 %v3432
      %v3474 = vunpack.c.h.b16 %v3432
      %v3475 = vunpack.c.l.b16 %v3433
      %v3476 = vunpack.c.h.b16 %v3433
      %v3477 = vunpack.c.l.b16 %v3434
      %v3478 = vunpack.c.h.b16 %v3434
      %v3479 = vunpack.c.l.b16 %v3435
      %v3480 = vunpack.c.h.b16 %v3435
      %v3481 = vunpack.c.l.b16 %v3436
      %v3482 = vunpack.c.h.b16 %v3436
      %v3483 = vunpack.c.l.b16 %v3437
      %v3484 = vunpack.c.h.b16 %v3437
      %v3485 = vunpack.c.l.b16 %v3438
      %v3486 = vunpack.c.h.b16 %v3438
      %v3487 = vpack.c.b16 %v3455, %v3455
      %v3488 = vpack.c.b16 %v3456, %v3456
      %v3489 = vpack.c.b16 %v3457, %v3457
      %v3490 = vpack.c.b16 %v3458, %v3458
      %v3491 = vpack.c.b16 %v3459, %v3459
      %v3492 = vpack.c.b16 %v3460, %v3460
      %v3493 = vpack.c.b16 %v3461, %v3461
      %v3494 = vpack.c.b16 %v3462, %v3462
      %v3495 = vpack.c.b16 %v3463, %v3463
      %v3496 = vpack.c.b16 %v3464, %v3464
      %v3497 = vpack.c.b16 %v3465, %v3465
      %v3498 = vpack.c.b16 %v3466, %v3466
      %v3499 = vpack.c.b16 %v3467, %v3467
      %v3500 = vpack.c.b16 %v3468, %v3468
      %v3501 = vpack.c.b16 %v3469, %v3469
      %v3502 = vpack.c.b16 %v3470, %v3470
      %v3503 = vpack.c.b16 %v3471, %v3471
      %v3504 = vpack.c.b16 %v3472, %v3472
      %v3505 = vpack.c.b16 %v3473, %v3473
      %v3506 = vpack.c.b16 %v3474, %v3474
      %v3507 = vpack.c.b16 %v3475, %v3475
      %v3508 = vpack.c.b16 %v3476, %v3476
      %v3509 = vpack.c.b16 %v3477, %v3477
      %v3510 = vpack.c.b16 %v3478, %v3478
      %v3511 = vpack.c.b16 %v3479, %v3479
      %v3512 = vpack.c.b16 %v3480, %v3480
      %v3513 = vpack.c.b16 %v3481, %v3481
      %v3514 = vpack.c.b16 %v3482, %v3482
      %v3515 = vpack.c.b16 %v3483, %v3483
      %v3516 = vpack.c.b16 %v3484, %v3484
      %v3517 = vpack.c.b16 %v3485, %v3485
      %v3518 = vpack.c.b16 %v3486, %v3486
      %vm3551 = vcmask 125952
      %3552 = vst.msk [vmem:[%s465] sm:$0xf] %vm3551, %v3487
      %3553 = vst.msk [vmem:[%s465 + $0x4] sm:$0xf] %vm3551, %v3488
      %3554 = vst.msk [vmem:[%s465 + $0x8] sm:$0xf] %vm3551, %v3489
      %3555 = vst.msk [vmem:[%s465 + $0xc] sm:$0xf] %vm3551, %v3490
      %3556 = vst.msk [vmem:[%s465 + $0x10] sm:$0xf] %vm3551, %v3491
      %3557 = vst.msk [vmem:[%s465 + $0x14] sm:$0xf] %vm3551, %v3492
      %3558 = vst.msk [vmem:[%s465 + $0x18] sm:$0xf] %vm3551, %v3493
      %3559 = vst.msk [vmem:[%s465 + $0x1c] sm:$0xf] %vm3551, %v3494
      %3560 = vst.msk [vmem:[%s465 + $0x20] sm:$0xf] %vm3551, %v3495
      %3561 = vst.msk [vmem:[%s465 + $0x24] sm:$0xf] %vm3551, %v3496
      %3562 = vst.msk [vmem:[%s465 + $0x28] sm:$0xf] %vm3551, %v3497
      %3563 = vst.msk [vmem:[%s465 + $0x2c] sm:$0xf] %vm3551, %v3498
      %3564 = vst.msk [vmem:[%s465 + $0x30] sm:$0xf] %vm3551, %v3499
      %3565 = vst.msk [vmem:[%s465 + $0x34] sm:$0xf] %vm3551, %v3500
      %3566 = vst.msk [vmem:[%s465 + $0x38] sm:$0xf] %vm3551, %v3501
      %3567 = vst.msk [vmem:[%s465 + $0x3c] sm:$0xf] %vm3551, %v3502
      %3568 = vst.msk [vmem:[%s465 + $0x40] sm:$0xf] %vm3551, %v3503
      %3569 = vst.msk [vmem:[%s465 + $0x44] sm:$0xf] %vm3551, %v3504
      %3570 = vst.msk [vmem:[%s465 + $0x48] sm:$0xf] %vm3551, %v3505
      %3571 = vst.msk [vmem:[%s465 + $0x4c] sm:$0xf] %vm3551, %v3506
      %3572 = vst.msk [vmem:[%s465 + $0x50] sm:$0xf] %vm3551, %v3507
      %3573 = vst.msk [vmem:[%s465 + $0x54] sm:$0xf] %vm3551, %v3508
      %3574 = vst.msk [vmem:[%s465 + $0x58] sm:$0xf] %vm3551, %v3509
      %3575 = vst.msk [vmem:[%s465 + $0x5c] sm:$0xf] %vm3551, %v3510
      %3576 = vst.msk [vmem:[%s465 + $0x60] sm:$0xf] %vm3551, %v3511
      %3577 = vst.msk [vmem:[%s465 + $0x64] sm:$0xf] %vm3551, %v3512
      %3578 = vst.msk [vmem:[%s465 + $0x68] sm:$0xf] %vm3551, %v3513
      %3579 = vst.msk [vmem:[%s465 + $0x6c] sm:$0xf] %vm3551, %v3514
      %3580 = vst.msk [vmem:[%s465 + $0x70] sm:$0xf] %vm3551, %v3515
      %3581 = vst.msk [vmem:[%s465 + $0x74] sm:$0xf] %vm3551, %v3516
      %3582 = vst.msk [vmem:[%s465 + $0x78] sm:$0xf] %vm3551, %v3517
      %3583 = vst.msk [vmem:[%s465 + $0x7c] sm:$0xf] %vm3551, %v3518
      %v3584 = vsel %vm1761, %v3297, 0.0
      %v3585 = vsel %vm1761, %v3300, 0.0
      %v3586 = vadd.f32 %v3584, %v3585
      %v3587 = vsel %vm1761, %v3305, 0.0
      %v3588 = vadd.f32 %v3586, %v3587
      %v3589 = vsel %vm1761, %v3308, 0.0
      %v3590 = vadd.f32 %v3588, %v3589
      %v3591 = vsel %vm1761, %v3313, 0.0
      %v3592 = vadd.f32 %v3590, %v3591
      %v3593 = vsel %vm1761, %v3316, 0.0
      %v3594 = vadd.f32 %v3592, %v3593
      %v3595 = vsel %vm1761, %v3321, 0.0
      %v3596 = vadd.f32 %v3594, %v3595
      %v3597 = vsel %vm1761, %v3324, 0.0
      %v3598 = vadd.f32 %v3596, %v3597
      %v3599 = vsel %vm1761, %v3329, 0.0
      %v3600 = vadd.f32 %v3598, %v3599
      %v3601 = vsel %vm1761, %v3332, 0.0
      %v3602 = vadd.f32 %v3600, %v3601
      %v3603 = vsel %vm1761, %v3337, 0.0
      %v3604 = vadd.f32 %v3602, %v3603
      %v3605 = vsel %vm1761, %v3340, 0.0
      %v3606 = vadd.f32 %v3604, %v3605
      %v3607 = vsel %vm1761, %v3345, 0.0
      %v3608 = vadd.f32 %v3606, %v3607
      %v3609 = vsel %vm1761, %v3348, 0.0
      %v3610 = vadd.f32 %v3608, %v3609
      %v3611 = vsel %vm1761, %v3353, 0.0
      %v3612 = vadd.f32 %v3610, %v3611
      %v3613 = vsel %vm1761, %v3356, 0.0
      %v3614 = vadd.f32 %v3612, %v3613
      %v3615 = vsel %vm1761, %v3361, 0.0
      %v3616 = vadd.f32 %v3614, %v3615
      %v3617 = vsel %vm1761, %v3364, 0.0
      %v3618 = vadd.f32 %v3616, %v3617
      %v3619 = vsel %vm1761, %v3369, 0.0
      %v3620 = vadd.f32 %v3618, %v3619
      %v3621 = vsel %vm1761, %v3372, 0.0
      %v3622 = vadd.f32 %v3620, %v3621
      %v3623 = vsel %vm1761, %v3377, 0.0
      %v3624 = vadd.f32 %v3622, %v3623
      %v3625 = vsel %vm1761, %v3380, 0.0
      %v3626 = vadd.f32 %v3624, %v3625
      %v3627 = vsel %vm1761, %v3385, 0.0
      %v3628 = vadd.f32 %v3626, %v3627
      %v3629 = vsel %vm1761, %v3388, 0.0
      %v3630 = vadd.f32 %v3628, %v3629
      %v3631 = vsel %vm1761, %v3393, 0.0
      %v3632 = vadd.f32 %v3630, %v3631
      %v3633 = vsel %vm1761, %v3396, 0.0
      %v3634 = vadd.f32 %v3632, %v3633
      %v3635 = vsel %vm1761, %v3401, 0.0
      %v3636 = vadd.f32 %v3634, %v3635
      %v3637 = vsel %vm1761, %v3404, 0.0
      %v3638 = vadd.f32 %v3636, %v3637
      %v3639 = vsel %vm1761, %v3409, 0.0
      %v3640 = vadd.f32 %v3638, %v3639
      %v3641 = vsel %vm1761, %v3412, 0.0
      %v3642 = vadd.f32 %v3640, %v3641
      %v3643 = vsel %vm1761, %v3417, 0.0
      %v3644 = vadd.f32 %v3642, %v3643
      %v3645 = vsel %vm1761, %v3420, 0.0
      %v3646 = vadd.f32 %v3644, %v3645
      %v3647 = vrot.slane %v3646, 4
      %v3648 = vadd.f32 %v3646, %v3647
      %v3649 = vrot.slane %v3648, 2
      %v3650 = vadd.f32 %v3648, %v3649
      %v3651 = vrot.slane %v3650, 1
      %v3652 = vadd.f32 %v3650, %v3651
      %v3653 = vmul.f32 %v3297, %v3297
      %v3654 = vmul.f32 %v3300, %v3300
      %v3655 = vmul.f32 %v3305, %v3305
      %v3656 = vmul.f32 %v3308, %v3308
      %v3657 = vmul.f32 %v3313, %v3313
      %v3658 = vmul.f32 %v3316, %v3316
      %v3659 = vmul.f32 %v3321, %v3321
      %v3660 = vmul.f32 %v3324, %v3324
      %v3661 = vmul.f32 %v3329, %v3329
      %v3662 = vmul.f32 %v3332, %v3332
      %v3663 = vmul.f32 %v3337, %v3337
      %v3664 = vmul.f32 %v3340, %v3340
      %v3665 = vmul.f32 %v3345, %v3345
      %v3666 = vmul.f32 %v3348, %v3348
      %v3667 = vmul.f32 %v3353, %v3353
      %v3668 = vmul.f32 %v3356, %v3356
      %v3669 = vmul.f32 %v3361, %v3361
      %v3670 = vmul.f32 %v3364, %v3364
      %v3671 = vmul.f32 %v3369, %v3369
      %v3672 = vmul.f32 %v3372, %v3372
      %v3673 = vmul.f32 %v3377, %v3377
      %v3674 = vmul.f32 %v3380, %v3380
      %v3675 = vmul.f32 %v3385, %v3385
      %v3676 = vmul.f32 %v3388, %v3388
      %v3677 = vmul.f32 %v3393, %v3393
      %v3678 = vmul.f32 %v3396, %v3396
      %v3679 = vmul.f32 %v3401, %v3401
      %v3680 = vmul.f32 %v3404, %v3404
      %v3681 = vmul.f32 %v3409, %v3409
      %v3682 = vmul.f32 %v3412, %v3412
      %v3683 = vmul.f32 %v3417, %v3417
      %v3684 = vmul.f32 %v3420, %v3420
      %v3685 = vsel %vm1761, %v3653, 0.0
      %v3686 = vsel %vm1761, %v3654, 0.0
      %v3687 = vadd.f32 %v3685, %v3686
      %v3688 = vsel %vm1761, %v3655, 0.0
      %v3689 = vadd.f32 %v3687, %v3688
      %v3690 = vsel %vm1761, %v3656, 0.0
      %v3691 = vadd.f32 %v3689, %v3690
      %v3692 = vsel %vm1761, %v3657, 0.0
      %v3693 = vadd.f32 %v3691, %v3692
      %v3694 = vsel %vm1761, %v3658, 0.0
      %v3695 = vadd.f32 %v3693, %v3694
      %v3696 = vsel %vm1761, %v3659, 0.0
      %v3697 = vadd.f32 %v3695, %v3696
      %v3698 = vsel %vm1761, %v3660, 0.0
      %v3699 = vadd.f32 %v3697, %v3698
      %v3700 = vsel %vm1761, %v3661, 0.0
      %v3701 = vadd.f32 %v3699, %v3700
      %v3702 = vsel %vm1761, %v3662, 0.0
      %v3703 = vadd.f32 %v3701, %v3702
      %v3704 = vsel %vm1761, %v3663, 0.0
      %v3705 = vadd.f32 %v3703, %v3704
      %v3706 = vsel %vm1761, %v3664, 0.0
      %v3707 = vadd.f32 %v3705, %v3706
      %v3708 = vsel %vm1761, %v3665, 0.0
      %v3709 = vadd.f32 %v3707, %v3708
      %v3710 = vsel %vm1761, %v3666, 0.0
      %v3711 = vadd.f32 %v3709, %v3710
      %v3712 = vsel %vm1761, %v3667, 0.0
      %v3713 = vadd.f32 %v3711, %v3712
      %v3714 = vsel %vm1761, %v3668, 0.0
      %v3715 = vadd.f32 %v3713, %v3714
      %v3716 = vsel %vm1761, %v3669, 0.0
      %v3717 = vadd.f32 %v3715, %v3716
      %v3718 = vsel %vm1761, %v3670, 0.0
      %v3719 = vadd.f32 %v3717, %v3718
      %v3720 = vsel %vm1761, %v3671, 0.0
      %v3721 = vadd.f32 %v3719, %v3720
      %v3722 = vsel %vm1761, %v3672, 0.0
      %v3723 = vadd.f32 %v3721, %v3722
      %v3724 = vsel %vm1761, %v3673, 0.0
      %v3725 = vadd.f32 %v3723, %v3724
      %v3726 = vsel %vm1761, %v3674, 0.0
      %v3727 = vadd.f32 %v3725, %v3726
      %v3728 = vsel %vm1761, %v3675, 0.0
      %v3729 = vadd.f32 %v3727, %v3728
      %v3730 = vsel %vm1761, %v3676, 0.0
      %v3731 = vadd.f32 %v3729, %v3730
      %v3732 = vsel %vm1761, %v3677, 0.0
      %v3733 = vadd.f32 %v3731, %v3732
      %v3734 = vsel %vm1761, %v3678, 0.0
      %v3735 = vadd.f32 %v3733, %v3734
      %v3736 = vsel %vm1761, %v3679, 0.0
      %v3737 = vadd.f32 %v3735, %v3736
      %v3738 = vsel %vm1761, %v3680, 0.0
      %v3739 = vadd.f32 %v3737, %v3738
      %v3740 = vsel %vm1761, %v3681, 0.0
      %v3741 = vadd.f32 %v3739, %v3740
      %v3742 = vsel %vm1761, %v3682, 0.0
      %v3743 = vadd.f32 %v3741, %v3742
      %v3744 = vsel %vm1761, %v3683, 0.0
      %v3745 = vadd.f32 %v3743, %v3744
      %v3746 = vsel %vm1761, %v3684, 0.0
      %v3747 = vadd.f32 %v3745, %v3746
      %v3748 = vrot.slane %v3747, 4
      %v3749 = vadd.f32 %v3747, %v3748
      %v3750 = vrot.slane %v3749, 2
      %v3751 = vadd.f32 %v3749, %v3750
      %v3752 = vrot.slane %v3751, 1
      %v3753 = vadd.f32 %v3751, %v3752
      %v3754 = vsel %vm629, %v3652, %v3753
      %vm3755 = vcmask 123904
      %3756 = vst.msk [vmem:[%s473] sm:$0x3] %vm3755, %v3754
      %s3757 = smul.u32 32, %s24
      %p3758 = scmp.lt.s32.totalorder %s23, 1
      %s3759 = scalar_select %p3758, %s23, 1
      %p3760 = scmp.lt.s32.totalorder %s3757, 31
      %s3761 = scalar_select %p3760, %s3757, 31
      %s3762 = smul.addr %s3759, 32
      %s3763 = sadd.s32 %s3761, %s3762
      %s3764 = smul.addr %s3763, 4
      %s3765 = scalar_lea.vmem %s6, %s3764
      %p3766 = scmp.lt.s32.totalorder %s23, 1
      %s3767 = scalar_select %p3766, %s23, 1
      %p3768 = scmp.lt.s32.totalorder %s24, 0
      %s3769 = scalar_select %p3768, %s24, 0
      %s3770 = sadd.s32 %s3769, %s3767
      %s3771 = smul.addr %s3770, 2
      %s3772 = scalar_lea.vmem %s7, %s3771
      // Predicated region
      $region45: #{double_conv.3} parent=43 // pred_check
        %p3773 = pneg %p214
      $region46: #{double_conv.3} parent=43 // pred_check_branch
        %3775 = sbr.rel (%p3773) target = $region48
      $region47: #{double_conv.3} parent=43 // pred_region
        %s3776 = smul.u32 32, %s24
      $region48: #{double_conv.3} parent=43 // pred_fallthru
        _
      // Predicated region
      $region49: #{double_conv.3} parent=43 // pred_check
        %p3777 = pneg %p242
      $region50: #{double_conv.3} parent=43 // pred_check_branch
        %3779 = sbr.rel (%p3777) target = $region52
      $region51: #{double_conv.3} parent=43 // pred_region
        _
      $region52: #{double_conv.3} parent=43 // pred_fallthru
        _
    $region44: #{double_conv.3} parent=5 // pred_fallthru
      _
    %p3780 = scmp.le.s32.totalorder 2, %s14
    // Predicated region
    $region53: #{double_conv.3} parent=5 // pred_check
      %p3781 = pneg %p3780
    $region54: #{double_conv.3} parent=5 // pred_check_branch
      %3783 = sbr.rel (%p3781) target = $region56
    $region55: #{double_conv.3} parent=5 // pred_region
      %s3784 = ssub.s32 %s14, 2
      // Predicated region
      $region57: #{double_conv.3} parent=55 // pred_check
        %p3785 = pneg %p220
      $region58: #{double_conv.3} parent=55 // pred_check_branch
        %3787 = sbr.rel (%p3785) target = $region60
      $region59: #{double_conv.3} parent=55 // pred_region
        %s3788 = smul.u32 32, %s26
        %p3789 = scmp.lt.s32.totalorder %s25, 1
        %s3790 = scalar_select %p3789, %s25, 1
        %p3791 = scmp.lt.s32.totalorder %s3788, 31
        %s3792 = scalar_select %p3791, %s3788, 31
        %s3793 = smul.addr %s3790, 32
        %s3794 = sadd.s32 %s3792, %s3793
        %s3795 = smul.addr %s3794, 4
        %s3796 = scalar_lea.vmem %s6, %s3795
      $region60: #{double_conv.3} parent=55 // pred_fallthru
        _
      // Predicated region
      $region61: #{double_conv.3} parent=55 // pred_check
        %p3797 = pneg %p248
      $region62: #{double_conv.3} parent=55 // pred_check_branch
        %3799 = sbr.rel (%p3797) target = $region64
      $region63: #{double_conv.3} parent=55 // pred_region
        %p3800 = scmp.lt.s32.totalorder %s25, 1
        %s3801 = scalar_select %p3800, %s25, 1
        %p3802 = scmp.lt.s32.totalorder %s26, 0
        %s3803 = scalar_select %p3802, %s26, 0
        %s3804 = sadd.s32 %s3803, %s3801
        %s3805 = smul.addr %s3804, 2
        %s3806 = scalar_lea.vmem %s7, %s3805
      $region64: #{double_conv.3} parent=55 // pred_fallthru
        _
    $region56: #{double_conv.3} parent=5 // pred_fallthru
      _
  $region6: #{double_conv.3} parent=0 // loop_footer
    %s18 = sadd.s32 1, %s14
  $region7: #{double_conv.3} parent=0 // loop_footer_branch
    %13 = sbr.rel target = $region3
  $region8: #{double_conv.3} parent=0 // loop_exit
    _

// kernel: double_conv.4
$region0: #{double_conv.4}
  #allocation0 [shape = 'u32[]', space=smem, size = 0x4, offset = 0x4, fixed_abs, tag = 'smem constant byte address 0x4 - core index']
  #allocation1 [shape = 'u32[144,128]{1,0:T(1,128)}', space=vmem, size = 0x12000, scoped, tag = 'internal scratch']
  %s0 = inlined_call_operand.vmem [shape: bf16[2,16,16,16], index: 0, kind: input, shape index: {}, may-alias: {0,1,2}]
  %s1 = inlined_call_operand.vmem [shape: bf16[2,16,16,16], index: 1, kind: input, shape index: {}, may-alias: {0,1,2}]
  %s2 = inlined_call_operand.vmem [shape: bf16[2,16,16,16], index: 2, kind: input, shape index: {}, may-alias: {0,1,2}]
  %s3 = inlined_call_operand.vmem [shape: f32[1,16], index: 3, kind: input, shape index: {}]
  %s4 = inlined_call_operand.vmem [shape: f32[1,16], index: 4, kind: input, shape index: {}]
  %s5 = inlined_call_operand.vmem [shape: bf16[400,16], index: 5, kind: input, shape index: {}]
  %s6 = inlined_call_operand.vmem [shape: bf16[2,256,16], index: 6, kind: output, shape index: {0}]
  %s7 = inlined_call_operand.vmem [shape: f32[2,1,2,16], index: 7, kind: output, shape index: {1}]
  %8 = xla_tuple %s6, %s7
  %s9 = sld [smem:[#allocation0]]
  $region65: #{double_conv.4} parent=0
    _
  %s11 = ssub.s32 1, %s9
  %s12 = scalar_select 0, %s11, %s9
  loop: start=0, step=1, limit=4
  $region2: #{double_conv.4} parent=0 // loop_pre_header
    _
  $region3: #{double_conv.4} parent=0 // loop_header
    %s14 = sphi 0, %s18
    %p15 = scmp.ge.s32.totalorder %s14, 4
    %s21 = sphi 0, %s33
    %s22 = sphi 0, %s29
    %s23 = sphi 0, %s21
    %s24 = sphi 0, %s22
    %s25 = sphi 0, %s23
    %s26 = sphi 0, %s24
    %s38 = sphi 0, %s40
    %s41 = sphi 0, %s38
    %s42 = sphi 0, %s41
    %s58 = sphi 0, %s42
    %s74 = sphi 0, %s76
    %s77 = sphi 0, %s74
    %s78 = sphi 0, %s77
    %s94 = sphi 0, %s78
    %s110 = sphi 0, %s112
    %s113 = sphi 0, %s110
    %s114 = sphi 0, %s113
    %s130 = sphi 0, %s114
    %s134 = sphi 0, %s134
    %s136 = sphi 0, %s134
    %s137 = sphi 0, %s136
    %s151 = sphi 0, %s137
    %s155 = sphi 0, %s155
    %s157 = sphi 0, %s155
    %s158 = sphi 0, %s157
    %s172 = sphi 0, %s158
    %s176 = sphi 0, %s176
    %s178 = sphi 0, %s176
    %s179 = sphi 0, %s178
    %s193 = sphi 0, %s179
    %s201 = sphi 0, %s203
    %s204 = sphi 0, %s201
    %s205 = sphi 0, %s204
    %s221 = sphi 0, %s205
    %s229 = sphi 0, %s231
    %s232 = sphi 0, %s229
    %s233 = sphi 0, %s232
    %s249 = sphi 0, %s233
  $region4: #{double_conv.4} parent=0 // loop_header_branch
    %17 = sbr.rel (%p15) target = $region8
  $region5: #{double_conv.4} parent=0 // loop_body
    %s19 = ssub.s32 %s14, 1
    %s20 = ssub.s32 %s14, 2
    %s27 = sadd.s32 1, %s22
    %p28 = scmp.ge.s32.totalorder %s27, 1
    %s29 = scalar_select %p28, 0, %s27
    %s30 = sadd.s32 1, %s21
    %s31 = scalar_select %p28, %s30, %s21
    %p32 = scmp.ge.s32.totalorder %s31, 2
    %s33 = scalar_select %p32, 0, %s31
    %s34 = ssub.s32 %s21, %s33
    %s35 = ssub.s32 %s22, %s29
    %s36 = sor.u32 %s34, %s35
    %p37 = scmp.eq.s32.totalorder %s36, 0
    %s39 = sadd.s32 %s38, 1
    %s40 = scalar_select %p37, %s38, %s39
    %p43 = pneg %p37
    %p44 = scmp.eq.s32.totalorder %s14, 1
    %p45 = por %p43, %p44
    %p46 = scmp.ne.s32.totalorder %s38, %s41
    %p47 = scmp.eq.s32.totalorder %s14, 0
    %p48 = por %p46, %p47
    %p49 = scmp.ne.s32.totalorder %s38, %s41
    %p50 = scmp.eq.s32.totalorder %s19, 1
    %p51 = por %p49, %p50
    %p52 = scmp.ne.s32.totalorder %s41, %s42
    %p53 = scmp.eq.s32.totalorder %s19, 0
    %p54 = por %p52, %p53
    %p55 = scmp.ne.s32.totalorder %s41, %s42
    %p56 = scmp.eq.s32.totalorder %s20, 1
    %p57 = por %p55, %p56
    %p59 = scmp.ne.s32.totalorder %s42, %s58
    %p60 = scmp.eq.s32.totalorder %s20, 0
    %p61 = por %p59, %p60
    %s62 = smul.u32 %s22, 4
    %s63 = ssub.s32 %s62, 1
    %p64 = scmp.gt.s32.totalorder %s63, 0
    %s65 = scalar_select %p64, %s63, 0
    %s66 = smul.u32 %s29, 4
    %s67 = ssub.s32 %s66, 1
    %p68 = scmp.gt.s32.totalorder %s67, 0
    %s69 = scalar_select %p68, %s67, 0
    %s70 = ssub.s32 %s21, %s33
    %s71 = ssub.s32 %s65, %s69
    %s72 = sor.u32 %s70, %s71
    %p73 = scmp.eq.s32.totalorder %s72, 0
    %s75 = sadd.s32 %s74, 1
    %s76 = scalar_select %p73, %s74, %s75
    %p79 = pneg %p73
    %p80 = scmp.eq.s32.totalorder %s14, 1
    %p81 = por %p79, %p80
    %p82 = scmp.ne.s32.totalorder %s74, %s77
    %p83 = scmp.eq.s32.totalorder %s14, 0
    %p84 = por %p82, %p83
    %p85 = scmp.ne.s32.totalorder %s74, %s77
    %p86 = scmp.eq.s32.totalorder %s19, 1
    %p87 = por %p85, %p86
    %p88 = scmp.ne.s32.totalorder %s77, %s78
    %p89 = scmp.eq.s32.totalorder %s19, 0
    %p90 = por %p88, %p89
    %p91 = scmp.ne.s32.totalorder %s77, %s78
    %p92 = scmp.eq.s32.totalorder %s20, 1
    %p93 = por %p91, %p92
    %p95 = scmp.ne.s32.totalorder %s78, %s94
    %p96 = scmp.eq.s32.totalorder %s20, 0
    %p97 = por %p95, %p96
    %s98 = sadd.s32 %s22, 1
    %s99 = smul.u32 %s98, 4
    %p100 = scmp.lt.s32.totalorder %s99, 3
    %s101 = scalar_select %p100, %s99, 3
    %s102 = sadd.s32 %s29, 1
    %s103 = smul.u32 %s102, 4
    %p104 = scmp.lt.s32.totalorder %s103, 3
    %s105 = scalar_select %p104, %s103, 3
    %s106 = ssub.s32 %s21, %s33
    %s107 = ssub.s32 %s101, %s105
    %s108 = sor.u32 %s106, %s107
    %p109 = scmp.eq.s32.totalorder %s108, 0
    %s111 = sadd.s32 %s110, 1
    %s112 = scalar_select %p109, %s110, %s111
    %p115 = pneg %p109
    %p116 = scmp.eq.s32.totalorder %s14, 1
    %p117 = por %p115, %p116
    %p118 = scmp.ne.s32.totalorder %s110, %s113
    %p119 = scmp.eq.s32.totalorder %s14, 0
    %p120 = por %p118, %p119
    %p121 = scmp.ne.s32.totalorder %s110, %s113
    %p122 = scmp.eq.s32.totalorder %s19, 1
    %p123 = por %p121, %p122
    %p124 = scmp.ne.s32.totalorder %s113, %s114
    %p125 = scmp.eq.s32.totalorder %s19, 0
    %p126 = por %p124, %p125
    %p127 = scmp.ne.s32.totalorder %s113, %s114
    %p128 = scmp.eq.s32.totalorder %s20, 1
    %p129 = por %p127, %p128
    %p131 = scmp.ne.s32.totalorder %s114, %s130
    %p132 = scmp.eq.s32.totalorder %s20, 0
    %p133 = por %p131, %p132
    %s135 = sadd.s32 %s134, 1
    %p138 = scmp.eq.s32.totalorder %s14, 1
    %p139 = scmp.ne.s32.totalorder %s134, %s136
    %p140 = scmp.eq.s32.totalorder %s14, 0
    %p141 = por %p139, %p140
    %p142 = scmp.ne.s32.totalorder %s134, %s136
    %p143 = scmp.eq.s32.totalorder %s19, 1
    %p144 = por %p142, %p143
    %p145 = scmp.ne.s32.totalorder %s136, %s137
    %p146 = scmp.eq.s32.totalorder %s19, 0
    %p147 = por %p145, %p146
    %p148 = scmp.ne.s32.totalorder %s136, %s137
    %p149 = scmp.eq.s32.totalorder %s20, 1
    %p150 = por %p148, %p149
    %p152 = scmp.ne.s32.totalorder %s137, %s151
    %p153 = scmp.eq.s32.totalorder %s20, 0
    %p154 = por %p152, %p153
    %s156 = sadd.s32 %s155, 1
    %p159 = scmp.eq.s32.totalorder %s14, 1
    %p160 = scmp.ne.s32.totalorder %s155, %s157
    %p161 = scmp.eq.s32.totalorder %s14, 0
    %p162 = por %p160, %p161
    %p163 = scmp.ne.s32.totalorder %s155, %s157
    %p164 = scmp.eq.s32.totalorder %s19, 1
    %p165 = por %p163, %p164
    %p166 = scmp.ne.s32.totalorder %s157, %s158
    %p167 = scmp.eq.s32.totalorder %s19, 0
    %p168 = por %p166, %p167
    %p169 = scmp.ne.s32.totalorder %s157, %s158
    %p170 = scmp.eq.s32.totalorder %s20, 1
    %p171 = por %p169, %p170
    %p173 = scmp.ne.s32.totalorder %s158, %s172
    %p174 = scmp.eq.s32.totalorder %s20, 0
    %p175 = por %p173, %p174
    %s177 = sadd.s32 %s176, 1
    %p180 = scmp.eq.s32.totalorder %s14, 1
    %p181 = scmp.ne.s32.totalorder %s176, %s178
    %p182 = scmp.eq.s32.totalorder %s14, 0
    %p183 = por %p181, %p182
    %p184 = scmp.ne.s32.totalorder %s176, %s178
    %p185 = scmp.eq.s32.totalorder %s19, 1
    %p186 = por %p184, %p185
    %p187 = scmp.ne.s32.totalorder %s178, %s179
    %p188 = scmp.eq.s32.totalorder %s19, 0
    %p189 = por %p187, %p188
    %p190 = scmp.ne.s32.totalorder %s178, %s179
    %p191 = scmp.eq.s32.totalorder %s20, 1
    %p192 = por %p190, %p191
    %p194 = scmp.ne.s32.totalorder %s179, %s193
    %p195 = scmp.eq.s32.totalorder %s20, 0
    %p196 = por %p194, %p195
    %s197 = ssub.s32 %s21, %s33
    %s198 = ssub.s32 %s22, %s29
    %s199 = sor.u32 %s197, %s198
    %p200 = scmp.eq.s32.totalorder %s199, 0
    %s202 = sadd.s32 %s201, 1
    %s203 = scalar_select %p200, %s201, %s202
    %p206 = pneg %p200
    %p207 = scmp.eq.s32.totalorder %s14, 1
    %p208 = por %p206, %p207
    %p209 = scmp.ne.s32.totalorder %s201, %s204
    %p210 = scmp.eq.s32.totalorder %s14, 0
    %p211 = por %p209, %p210
    %p212 = scmp.ne.s32.totalorder %s201, %s204
    %p213 = scmp.eq.s32.totalorder %s19, 1
    %p214 = por %p212, %p213
    %p215 = scmp.ne.s32.totalorder %s204, %s205
    %p216 = scmp.eq.s32.totalorder %s19, 0
    %p217 = por %p215, %p216
    %p218 = scmp.ne.s32.totalorder %s204, %s205
    %p219 = scmp.eq.s32.totalorder %s20, 1
    %p220 = por %p218, %p219
    %p222 = scmp.ne.s32.totalorder %s205, %s221
    %p223 = scmp.eq.s32.totalorder %s20, 0
    %p224 = por %p222, %p223
    %s225 = ssub.s32 %s21, %s33
    %s226 = ssub.s32 %s22, %s29
    %s227 = sor.u32 %s225, %s226
    %p228 = scmp.eq.s32.totalorder %s227, 0
    %s230 = sadd.s32 %s229, 1
    %s231 = scalar_select %p228, %s229, %s230
    %p234 = pneg %p228
    %p235 = scmp.eq.s32.totalorder %s14, 1
    %p236 = por %p234, %p235
    %p237 = scmp.ne.s32.totalorder %s229, %s232
    %p238 = scmp.eq.s32.totalorder %s14, 0
    %p239 = por %p237, %p238
    %p240 = scmp.ne.s32.totalorder %s229, %s232
    %p241 = scmp.eq.s32.totalorder %s19, 1
    %p242 = por %p240, %p241
    %p243 = scmp.ne.s32.totalorder %s232, %s233
    %p244 = scmp.eq.s32.totalorder %s19, 0
    %p245 = por %p243, %p244
    %p246 = scmp.ne.s32.totalorder %s232, %s233
    %p247 = scmp.eq.s32.totalorder %s20, 1
    %p248 = por %p246, %p247
    %p250 = scmp.ne.s32.totalorder %s233, %s249
    %p251 = scmp.eq.s32.totalorder %s20, 0
    %p252 = por %p250, %p251
    %p253 = scmp.le.s32.totalorder 1, %s14
    %p254 = scmp.lt.s32.totalorder %s14, 3
    %p255 = pnand %p253, %p254
    %p256 = pneg %p255
    // Predicated region
    $region9: #{double_conv.4} parent=5 // pred_check
      _
    $region10: #{double_conv.4} parent=5 // pred_check_branch
      %258 = sbr.rel (%p255) target = $region12
    $region11: #{double_conv.4} parent=5 // pred_region
      %s259 = ssub.s32 %s14, 1
      // Predicated region
      $region13: #{double_conv.4} parent=11 // pred_check
        %p260 = pneg %p147
      $region14: #{double_conv.4} parent=11 // pred_check_branch
        %262 = sbr.rel (%p260) target = $region16
      $region15: #{double_conv.4} parent=11 // pred_region
        _
      $region16: #{double_conv.4} parent=11 // pred_fallthru
        _
      // Predicated region
      $region17: #{double_conv.4} parent=11 // pred_check
        %p263 = pneg %p168
      $region18: #{double_conv.4} parent=11 // pred_check_branch
        %265 = sbr.rel (%p263) target = $region20
      $region19: #{double_conv.4} parent=11 // pred_region
        _
      $region20: #{double_conv.4} parent=11 // pred_fallthru
        _
      // Predicated region
      $region21: #{double_conv.4} parent=11 // pred_check
        %p266 = pneg %p189
      $region22: #{double_conv.4} parent=11 // pred_check_branch
        %268 = sbr.rel (%p266) target = $region24
      $region23: #{double_conv.4} parent=11 // pred_region
        _
      $region24: #{double_conv.4} parent=11 // pred_fallthru
        _
    $region12: #{double_conv.4} parent=5 // pred_fallthru
      _
    %p269 = scmp.lt.s32.totalorder %s14, 2
    // Predicated region
    $region25: #{double_conv.4} parent=5 // pred_check
      %p270 = pneg %p269
    $region26: #{double_conv.4} parent=5 // pred_check_branch
      %272 = sbr.rel (%p270) target = $region28
    $region27: #{double_conv.4} parent=5 // pred_region
      // Predicated region
      $region29: #{double_conv.4} parent=27 // pred_check
        %p273 = pneg %p48
      $region30: #{double_conv.4} parent=27 // pred_check_branch
        %275 = sbr.rel (%p273) target = $region32
      $region31: #{double_conv.4} parent=27 // pred_region
        %s276 = smul.u32 16, %s22
        %p277 = scmp.lt.s32.totalorder %s21, 1
        %s278 = scalar_select %p277, %s21, 1
        %p279 = scmp.lt.s32.totalorder %s276, 15
        %s280 = scalar_select %p279, %s276, 15
        %s281 = smul.addr %s280, 2
        %s282 = smul.addr %s278, 32
        %s283 = sadd.s32 %s281, %s282
        %s284 = smul.addr %s283, 4
        %s285 = scalar_lea.vmem %s0, %s284
        %s286 = smul.u32 16, %s22
      $region32: #{double_conv.4} parent=27 // pred_fallthru
        _
      // Predicated region
      $region33: #{double_conv.4} parent=27 // pred_check
        %p287 = pneg %p84
      $region34: #{double_conv.4} parent=27 // pred_check_branch
        %289 = sbr.rel (%p287) target = $region36
      $region35: #{double_conv.4} parent=27 // pred_region
        %s290 = smul.u32 %s22, 4
        %s291 = ssub.s32 %s290, 1
        %p292 = scmp.gt.s32.totalorder %s291, 0
        %s293 = scalar_select %p292, %s291, 0
        %s294 = smul.u32 4, %s293
        %p295 = scmp.lt.s32.totalorder %s21, 1
        %s296 = scalar_select %p295, %s21, 1
        %p297 = scmp.lt.s32.totalorder %s294, 15
        %s298 = scalar_select %p297, %s294, 15
        %s299 = smul.addr %s298, 2
        %s300 = smul.addr %s296, 32
        %s301 = sadd.s32 %s299, %s300
        %s302 = smul.addr %s301, 4
        %s303 = scalar_lea.vmem %s1, %s302
        %s304 = smul.u32 %s22, 4
        %s305 = ssub.s32 %s304, 1
        %p306 = scmp.gt.s32.totalorder %s305, 0
        %s307 = scalar_select %p306, %s305, 0
        %s308 = smul.u32 4, %s307
      $region36: #{double_conv.4} parent=27 // pred_fallthru
        _
      // Predicated region
      $region37: #{double_conv.4} parent=27 // pred_check
        %p309 = pneg %p120
      $region38: #{double_conv.4} parent=27 // pred_check_branch
        %311 = sbr.rel (%p309) target = $region40
      $region39: #{double_conv.4} parent=27 // pred_region
        %s312 = sadd.s32 %s22, 1
        %s313 = smul.u32 %s312, 4
        %p314 = scmp.lt.s32.totalorder %s313, 3
        %s315 = scalar_select %p314, %s313, 3
        %s316 = smul.u32 4, %s315
        %p317 = scmp.lt.s32.totalorder %s21, 1
        %s318 = scalar_select %p317, %s21, 1
        %p319 = scmp.lt.s32.totalorder %s316, 15
        %s320 = scalar_select %p319, %s316, 15
        %s321 = smul.addr %s320, 2
        %s322 = smul.addr %s318, 32
        %s323 = sadd.s32 %s321, %s322
        %s324 = smul.addr %s323, 4
        %s325 = scalar_lea.vmem %s2, %s324
        %s326 = sadd.s32 %s22, 1
        %s327 = smul.u32 %s326, 4
        %p328 = scmp.lt.s32.totalorder %s327, 3
        %s329 = scalar_select %p328, %s327, 3
        %s330 = smul.u32 4, %s329
      $region40: #{double_conv.4} parent=27 // pred_fallthru
        _
    $region28: #{double_conv.4} parent=5 // pred_fallthru
      _
    %p331 = scmp.le.s32.totalorder 1, %s14
    %p332 = scmp.lt.s32.totalorder %s14, 3
    %p333 = pnand %p331, %p332
    %p334 = pneg %p333
    // Predicated region
    $region41: #{double_conv.4} parent=5 // pred_check
      _
    $region42: #{double_conv.4} parent=5 // pred_check_branch
      %336 = sbr.rel (%p333) target = $region44
    $region43: #{double_conv.4} parent=5 // pred_region
      %s337 = ssub.s32 %s14, 1
      %s338 = smul.u32 16, %s24
      %p339 = scmp.lt.s32.totalorder %s23, 1
      %s340 = scalar_select %p339, %s23, 1
      %p341 = scmp.lt.s32.totalorder %s338, 15
      %s342 = scalar_select %p341, %s338, 15
      %s343 = smul.addr %s342, 2
      %s344 = smul.addr %s340, 32
      %s345 = sadd.s32 %s343, %s344
      %s346 = smul.addr %s345, 4
      %s347 = scalar_lea.vmem %s0, %s346
      %p348 = pneg %p54
      %p349 = pneg %p51
      %s350 = smul.u32 %s24, 4
      %s351 = ssub.s32 %s350, 1
      %p352 = scmp.gt.s32.totalorder %s351, 0
      %s353 = scalar_select %p352, %s351, 0
      %s354 = smul.u32 4, %s353
      %p355 = scmp.lt.s32.totalorder %s23, 1
      %s356 = scalar_select %p355, %s23, 1
      %p357 = scmp.lt.s32.totalorder %s354, 15
      %s358 = scalar_select %p357, %s354, 15
      %s359 = smul.addr %s358, 2
      %s360 = smul.addr %s356, 32
      %s361 = sadd.s32 %s359, %s360
      %s362 = smul.addr %s361, 4
      %s363 = scalar_lea.vmem %s1, %s362
      %p364 = pneg %p90
      %p365 = pneg %p87
      %s366 = sadd.s32 %s24, 1
      %s367 = smul.u32 %s366, 4
      %p368 = scmp.lt.s32.totalorder %s367, 3
      %s369 = scalar_select %p368, %s367, 3
      %s370 = smul.u32 4, %s369
      %p371 = scmp.lt.s32.totalorder %s23, 1
      %s372 = scalar_select %p371, %s23, 1
      %p373 = scmp.lt.s32.totalorder %s370, 15
      %s374 = scalar_select %p373, %s370, 15
      %s375 = smul.addr %s374, 2
      %s376 = smul.addr %s372, 32
      %s377 = sadd.s32 %s375, %s376
      %s378 = smul.addr %s377, 4
      %s379 = scalar_lea.vmem %s2, %s378
      %p380 = pneg %p126
      %p381 = pneg %p123
      %p382 = pneg %p147
      %p383 = pneg %p144
      %p384 = pneg %p168
      %p385 = pneg %p165
      %p386 = pneg %p189
      %p387 = pneg %p186
      %p388 = pneg %p217
      %p389 = pneg %p214
      %s390 = smul.u32 32, %s24
      %p391 = scmp.lt.s32.totalorder %s23, 1
      %s392 = scalar_select %p391, %s23, 1
      %p393 = scmp.lt.s32.totalorder %s390, 31
      %s394 = scalar_select %p393, %s390, 31
      %s395 = smul.addr %s392, 32
      %s396 = sadd.s32 %s394, %s395
      %s397 = smul.addr %s396, 4
      %s398 = scalar_lea.vmem %s6, %s397
      %p399 = pneg %p245
      %p400 = pneg %p242
      %p401 = scmp.lt.s32.totalorder %s23, 1
      %s402 = scalar_select %p401, %s23, 1
      %p403 = scmp.lt.s32.totalorder %s24, 0
      %s404 = scalar_select %p403, %s24, 0
      %s405 = sadd.s32 %s404, %s402
      %s406 = smul.addr %s405, 2
      %s407 = scalar_lea.vmem %s7, %s406
      %s408 = smul.u32 16, %s24
      %p409 = scmp.lt.s32.totalorder %s23, 1
      %s410 = scalar_select %p409, %s23, 1
      %p411 = scmp.lt.s32.totalorder %s408, 15
      %s412 = scalar_select %p411, %s408, 15
      %s413 = smul.addr %s412, 2
      %s414 = smul.addr %s410, 32
      %s415 = sadd.s32 %s413, %s414
      %s416 = smul.addr %s415, 4
      %s417 = scalar_lea.vmem %s0, %s416
      %s418 = smul.u32 16, %s24
      %s419 = smul.u32 %s24, 4
      %s420 = ssub.s32 %s419, 1
      %p421 = scmp.gt.s32.totalorder %s420, 0
      %s422 = scalar_select %p421, %s420, 0
      %s423 = smul.u32 4, %s422
      %p424 = scmp.lt.s32.totalorder %s23, 1
      %s425 = scalar_select %p424, %s23, 1
      %p426 = scmp.lt.s32.totalorder %s423, 15
      %s427 = scalar_select %p426, %s423, 15
      %s428 = smul.addr %s427, 2
      %s429 = smul.addr %s425, 32
      %s430 = sadd.s32 %s428, %s429
      %s431 = smul.addr %s430, 4
      %s432 = scalar_lea.vmem %s1, %s431
      %s433 = smul.u32 %s24, 4
      %s434 = ssub.s32 %s433, 1
      %p435 = scmp.gt.s32.totalorder %s434, 0
      %s436 = scalar_select %p435, %s434, 0
      %s437 = smul.u32 4, %s436
      %s438 = sadd.s32 %s24, 1
      %s439 = smul.u32 %s438, 4
      %p440 = scmp.lt.s32.totalorder %s439, 3
      %s441 = scalar_select %p440, %s439, 3
      %s442 = smul.u32 4, %s441
      %p443 = scmp.lt.s32.totalorder %s23, 1
      %s444 = scalar_select %p443, %s23, 1
      %p445 = scmp.lt.s32.totalorder %s442, 15
      %s446 = scalar_select %p445, %s442, 15
      %s447 = smul.addr %s446, 2
      %s448 = smul.addr %s444, 32
      %s449 = sadd.s32 %s447, %s448
      %s450 = smul.addr %s449, 4
      %s451 = scalar_lea.vmem %s2, %s450
      %s452 = sadd.s32 %s24, 1
      %s453 = smul.u32 %s452, 4
      %p454 = scmp.lt.s32.totalorder %s453, 3
      %s455 = scalar_select %p454, %s453, 3
      %s456 = smul.u32 4, %s455
      %s457 = smul.u32 32, %s24
      %p458 = scmp.lt.s32.totalorder %s23, 1
      %s459 = scalar_select %p458, %s23, 1
      %p460 = scmp.lt.s32.totalorder %s457, 31
      %s461 = scalar_select %p460, %s457, 31
      %s462 = smul.addr %s459, 32
      %s463 = sadd.s32 %s461, %s462
      %s464 = smul.addr %s463, 4
      %s465 = scalar_lea.vmem %s6, %s464
      %s466 = smul.u32 32, %s24
      %p467 = scmp.lt.s32.totalorder %s23, 1
      %s468 = scalar_select %p467, %s23, 1
      %p469 = scmp.lt.s32.totalorder %s24, 0
      %s470 = scalar_select %p469, %s24, 0
      %s471 = sadd.s32 %s470, %s468
      %s472 = smul.addr %s471, 2
      %s473 = scalar_lea.vmem %s7, %s472
      %v475 = vld [vmem:[%s3] sm:$0x1]
      %v476 = vld [vmem:[%s4] sm:$0x1]
      %v477 = vld [vmem:[%s417] sm:$0xf]
      %v478 = vld [vmem:[%s417 + $0x4] sm:$0xf]
      %v479 = vld [vmem:[%s417 + $0x8] sm:$0xf]
      %v480 = vld [vmem:[%s417 + $0xc] sm:$0xf]
      %v481 = vld [vmem:[%s417 + $0x10] sm:$0xf]
      %v482 = vld [vmem:[%s417 + $0x14] sm:$0xf]
      %v483 = vld [vmem:[%s417 + $0x18] sm:$0xf]
      %v484 = vld [vmem:[%s417 + $0x1c] sm:$0xf]
      %v485 = vld [vmem:[%s417 + $0x20] sm:$0xf]
      %v486 = vld [vmem:[%s417 + $0x24] sm:$0xf]
      %v487 = vld [vmem:[%s417 + $0x28] sm:$0xf]
      %v488 = vld [vmem:[%s417 + $0x2c] sm:$0xf]
      %v489 = vld [vmem:[%s417 + $0x30] sm:$0xf]
      %v490 = vld [vmem:[%s417 + $0x34] sm:$0xf]
      %v491 = vld [vmem:[%s417 + $0x38] sm:$0xf]
      %v492 = vld [vmem:[%s417 + $0x3c] sm:$0xf]
      %v493 = vld [vmem:[%s417 + $0x40] sm:$0xf]
      %v494 = vld [vmem:[%s417 + $0x44] sm:$0xf]
      %v495 = vld [vmem:[%s417 + $0x48] sm:$0xf]
      %v496 = vld [vmem:[%s417 + $0x4c] sm:$0xf]
      %v497 = vld [vmem:[%s417 + $0x50] sm:$0xf]
      %v498 = vld [vmem:[%s417 + $0x54] sm:$0xf]
      %v499 = vld [vmem:[%s417 + $0x58] sm:$0xf]
      %v500 = vld [vmem:[%s417 + $0x5c] sm:$0xf]
      %v501 = vld [vmem:[%s417 + $0x60] sm:$0xf]
      %v502 = vld [vmem:[%s417 + $0x64] sm:$0xf]
      %v503 = vld [vmem:[%s417 + $0x68] sm:$0xf]
      %v504 = vld [vmem:[%s417 + $0x6c] sm:$0xf]
      %v505 = vld [vmem:[%s417 + $0x70] sm:$0xf]
      %v506 = vld [vmem:[%s417 + $0x74] sm:$0xf]
      %v507 = vld [vmem:[%s417 + $0x78] sm:$0xf]
      %v508 = vld [vmem:[%s417 + $0x7c] sm:$0xf]
      %v509 = vunpack.c.l.bf16 %v477
      %v510 = vunpack.c.l.bf16 %v478
      %v511 = vunpack.c.l.bf16 %v479
      %v512 = vunpack.c.l.bf16 %v480
      %v513 = vunpack.c.l.bf16 %v481
      %v514 = vunpack.c.l.bf16 %v482
      %v515 = vunpack.c.l.bf16 %v483
      %v516 = vunpack.c.l.bf16 %v484
      %v517 = vunpack.c.l.bf16 %v485
      %v518 = vunpack.c.l.bf16 %v486
      %v519 = vunpack.c.l.bf16 %v487
      %v520 = vunpack.c.l.bf16 %v488
      %v521 = vunpack.c.l.bf16 %v489
      %v522 = vunpack.c.l.bf16 %v490
      %v523 = vunpack.c.l.bf16 %v491
      %v524 = vunpack.c.l.bf16 %v492
      %v525 = vunpack.c.l.bf16 %v493
      %v526 = vunpack.c.l.bf16 %v494
      %v527 = vunpack.c.l.bf16 %v495
      %v528 = vunpack.c.l.bf16 %v496
      %v529 = vunpack.c.l.bf16 %v497
      %v530 = vunpack.c.l.bf16 %v498
      %v531 = vunpack.c.l.bf16 %v499
      %v532 = vunpack.c.l.bf16 %v500
      %v533 = vunpack.c.l.bf16 %v501
      %v534 = vunpack.c.l.bf16 %v502
      %v535 = vunpack.c.l.bf16 %v503
      %v536 = vunpack.c.l.bf16 %v504
      %v537 = vunpack.c.l.bf16 %v505
      %v538 = vunpack.c.l.bf16 %v506
      %v539 = vunpack.c.l.bf16 %v507
      %v540 = vunpack.c.l.bf16 %v508
      %v542 = vlaneseq
      %v543 = vshrl.u32 %v542, 7
      %v544 = vsub.s32 0, %v543
      %v545 = vrot.slane %v475, %v544
      %v547 = vmul.f32 %v509, %v545
      %v548 = vmul.f32 %v510, %v545
      %v549 = vmul.f32 %v511, %v545
      %v550 = vmul.f32 %v512, %v545
      %v551 = vmul.f32 %v513, %v545
      %v552 = vmul.f32 %v514, %v545
      %v553 = vmul.f32 %v515, %v545
      %v554 = vmul.f32 %v516, %v545
      %v555 = vmul.f32 %v517, %v545
      %v556 = vmul.f32 %v518, %v545
      %v557 = vmul.f32 %v519, %v545
      %v558 = vmul.f32 %v520, %v545
      %v559 = vmul.f32 %v521, %v545
      %v560 = vmul.f32 %v522, %v545
      %v561 = vmul.f32 %v523, %v545
      %v562 = vmul.f32 %v524, %v545
      %v563 = vmul.f32 %v525, %v545
      %v564 = vmul.f32 %v526, %v545
      %v565 = vmul.f32 %v527, %v545
      %v566 = vmul.f32 %v528, %v545
      %v567 = vmul.f32 %v529, %v545
      %v568 = vmul.f32 %v530, %v545
      %v569 = vmul.f32 %v531, %v545
      %v570 = vmul.f32 %v532, %v545
      %v571 = vmul.f32 %v533, %v545
      %v572 = vmul.f32 %v534, %v545
      %v573 = vmul.f32 %v535, %v545
      %v574 = vmul.f32 %v536, %v545
      %v575 = vmul.f32 %v537, %v545
      %v576 = vmul.f32 %v538, %v545
      %v577 = vmul.f32 %v539, %v545
      %v578 = vmul.f32 %v540, %v545
      %v580 = vlaneseq
      %v581 = vshrl.u32 %v580, 7
      %v582 = vsub.s32 0, %v581
      %v583 = vrot.slane %v476, %v582
      %v585 = vadd.f32 %v547, %v583
      %v586 = vadd.f32 %v548, %v583
      %v587 = vadd.f32 %v549, %v583
      %v588 = vadd.f32 %v550, %v583
      %v589 = vadd.f32 %v551, %v583
      %v590 = vadd.f32 %v552, %v583
      %v591 = vadd.f32 %v553, %v583
      %v592 = vadd.f32 %v554, %v583
      %v593 = vadd.f32 %v555, %v583
      %v594 = vadd.f32 %v556, %v583
      %v595 = vadd.f32 %v557, %v583
      %v596 = vadd.f32 %v558, %v583
      %v597 = vadd.f32 %v559, %v583
      %v598 = vadd.f32 %v560, %v583
      %v599 = vadd.f32 %v561, %v583
      %v600 = vadd.f32 %v562, %v583
      %v601 = vadd.f32 %v563, %v583
      %v602 = vadd.f32 %v564, %v583
      %v603 = vadd.f32 %v565, %v583
      %v604 = vadd.f32 %v566, %v583
      %v605 = vadd.f32 %v567, %v583
      %v606 = vadd.f32 %v568, %v583
      %v607 = vadd.f32 %v569, %v583
      %v608 = vadd.f32 %v570, %v583
      %v609 = vadd.f32 %v571, %v583
      %v610 = vadd.f32 %v572, %v583
      %v611 = vadd.f32 %v573, %v583
      %v612 = vadd.f32 %v574, %v583
      %v613 = vadd.f32 %v575, %v583
      %v614 = vadd.f32 %v576, %v583
      %v615 = vadd.f32 %v577, %v583
      %v616 = vadd.f32 %v578, %v583
      %v617 = vmax.f32 %v585, 0.0
      %v618 = vmax.f32 %v586, 0.0
      %v619 = vmax.f32 %v587, 0.0
      %v620 = vmax.f32 %v588, 0.0
      %v621 = vmax.f32 %v589, 0.0
      %v622 = vmax.f32 %v590, 0.0
      %v623 = vmax.f32 %v591, 0.0
      %v624 = vmax.f32 %v592, 0.0
      %v625 = vmax.f32 %v593, 0.0
      %v626 = vmax.f32 %v594, 0.0
      %v627 = vmax.f32 %v595, 0.0
      %v628 = vmax.f32 %v596, 0.0
      %v629 = vmax.f32 %v597, 0.0
      %v630 = vmax.f32 %v598, 0.0
      %v631 = vmax.f32 %v599, 0.0
      %v632 = vmax.f32 %v600, 0.0
      %v633 = vmax.f32 %v601, 0.0
      %v634 = vmax.f32 %v602, 0.0
      %v635 = vmax.f32 %v603, 0.0
      %v636 = vmax.f32 %v604, 0.0
      %v637 = vmax.f32 %v605, 0.0
      %v638 = vmax.f32 %v606, 0.0
      %v639 = vmax.f32 %v607, 0.0
      %v640 = vmax.f32 %v608, 0.0
      %v641 = vmax.f32 %v609, 0.0
      %v642 = vmax.f32 %v610, 0.0
      %v643 = vmax.f32 %v611, 0.0
      %v644 = vmax.f32 %v612, 0.0
      %v645 = vmax.f32 %v613, 0.0
      %v646 = vmax.f32 %v614, 0.0
      %v647 = vmax.f32 %v615, 0.0
      %v648 = vmax.f32 %v616, 0.0
      %v649 = vld [vmem:[%s432 + $0x10] sm:$0xf]
      %v650 = vld [vmem:[%s432 + $0x14] sm:$0xf]
      %v651 = vld [vmem:[%s432 + $0x18] sm:$0xf]
      %v652 = vld [vmem:[%s432 + $0x1c] sm:$0xf]
      %v653 = vunpack.c.l.bf16 %v649
      %v654 = vunpack.c.l.bf16 %v650
      %v655 = vunpack.c.l.bf16 %v651
      %v656 = vunpack.c.l.bf16 %v652
      %v657 = vmul.f32 %v653, %v545
      %v658 = vmul.f32 %v654, %v545
      %v659 = vmul.f32 %v655, %v545
      %v660 = vmul.f32 %v656, %v545
      %v661 = vadd.f32 %v657, %v583
      %v662 = vadd.f32 %v658, %v583
      %v663 = vadd.f32 %v659, %v583
      %v664 = vadd.f32 %v660, %v583
      %v665 = vmax.f32 %v661, 0.0
      %v666 = vmax.f32 %v662, 0.0
      %v667 = vmax.f32 %v663, 0.0
      %v668 = vmax.f32 %v664, 0.0
      %v669 = vld [vmem:[%s451] sm:$0xf]
      %v670 = vld [vmem:[%s451 + $0x4] sm:$0xf]
      %v671 = vld [vmem:[%s451 + $0x8] sm:$0xf]
      %v672 = vld [vmem:[%s451 + $0xc] sm:$0xf]
      %v673 = vunpack.c.l.bf16 %v669
      %v674 = vunpack.c.l.bf16 %v670
      %v675 = vunpack.c.l.bf16 %v671
      %v676 = vunpack.c.l.bf16 %v672
      %v677 = vmul.f32 %v673, %v545
      %v678 = vmul.f32 %v674, %v545
      %v679 = vmul.f32 %v675, %v545
      %v680 = vmul.f32 %v676, %v545
      %v681 = vadd.f32 %v677, %v583
      %v682 = vadd.f32 %v678, %v583
      %v683 = vadd.f32 %v679, %v583
      %v684 = vadd.f32 %v680, %v583
      %v685 = vmax.f32 %v681, 0.0
      %v686 = vmax.f32 %v682, 0.0
      %v687 = vmax.f32 %v683, 0.0
      %v688 = vmax.f32 %v684, 0.0
      %p689 = scmp.gt.s32.totalorder %s24, 0
      %s690 = scalar_select %p689, 1.0, 0.0
      %v691 = vstv %s690
      %v692 = vmul.f32 %v665, %v691
      %v693 = vmul.f32 %v666, %v691
      %v694 = vmul.f32 %v667, %v691
      %v695 = vmul.f32 %v668, %v691
      %p696 = scmp.lt.s32.totalorder %s24, 0
      %s697 = scalar_select %p696, 1.0, 0.0
      %v698 = vstv %s697
      %v699 = vmul.f32 %v685, %v698
      %v700 = vmul.f32 %v686, %v698
      %v701 = vmul.f32 %v687, %v698
      %v702 = vmul.f32 %v688, %v698
      %v703 = vpack.c.bf16 %v693, %v692
      %v704 = vpack.c.bf16 %v695, %v694
      %v705 = vpack.c.bf16 %v618, %v617
      %v706 = vpack.c.bf16 %v620, %v619
      %v707 = vpack.c.bf16 %v622, %v621
      %v708 = vpack.c.bf16 %v624, %v623
      %v709 = vpack.c.bf16 %v626, %v625
      %v710 = vpack.c.bf16 %v628, %v627
      %v711 = vpack.c.bf16 %v630, %v629
      %v712 = vpack.c.bf16 %v632, %v631
      %v713 = vpack.c.bf16 %v634, %v633
      %v714 = vpack.c.bf16 %v636, %v635
      %v715 = vpack.c.bf16 %v638, %v637
      %v716 = vpack.c.bf16 %v640, %v639
      %v717 = vpack.c.bf16 %v642, %v641
      %v718 = vpack.c.bf16 %v644, %v643
      %v719 = vpack.c.bf16 %v646, %v645
      %v720 = vpack.c.bf16 %v648, %v647
      %v721 = vpack.c.bf16 %v700, %v699
      %v722 = vpack.c.bf16 %v702, %v701
      %v743 = vrot.slane %v703, 7
      %v744 = vrot.slane %v704, 7
      %v745 = vrot.slane %v705, 7
      %v746 = vrot.slane %v706, 7
      %v747 = vrot.slane %v707, 7
      %v748 = vrot.slane %v708, 7
      %v749 = vrot.slane %v709, 7
      %v750 = vrot.slane %v710, 7
      %v751 = vrot.slane %v711, 7
      %v752 = vrot.slane %v712, 7
      %v753 = vrot.slane %v713, 7
      %v754 = vrot.slane %v714, 7
      %v755 = vrot.slane %v715, 7
      %v756 = vrot.slane %v716, 7
      %v757 = vrot.slane %v717, 7
      %v758 = vrot.slane %v718, 7
      %v759 = vrot.slane %v719, 7
      %v760 = vrot.slane %v720, 7
      %v761 = vrot.slane %v721, 7
      %v762 = vrot.slane %v722, 7
      %vm763 = vcmask 1040384
      %v766 = vsel %vm763, 0, %v743
      %v768 = vsel %vm763, 0, %v744
      %v770 = vsel %vm763, 0, %v745
      %v772 = vsel %vm763, 0, %v746
      %v774 = vsel %vm763, 0, %v747
      %v776 = vsel %vm763, 0, %v748
      %v778 = vsel %vm763, 0, %v749
      %v780 = vsel %vm763, 0, %v750
      %v782 = vsel %vm763, 0, %v751
      %v784 = vsel %vm763, 0, %v752
      %v786 = vsel %vm763, 0, %v753
      %v788 = vsel %vm763, 0, %v754
      %v790 = vsel %vm763, 0, %v755
      %v792 = vsel %vm763, 0, %v756
      %v794 = vsel %vm763, 0, %v757
      %v796 = vsel %vm763, 0, %v758
      %v798 = vsel %vm763, 0, %v759
      %v800 = vsel %vm763, 0, %v760
      %v802 = vsel %vm763, 0, %v761
      %v804 = vsel %vm763, 0, %v762
      %v805 = vsel %vm763, %v743, 0
      %v806 = vsel %vm763, %v744, 0
      %v807 = vsel %vm763, %v745, 0
      %v808 = vsel %vm763, %v746, 0
      %v809 = vsel %vm763, %v747, 0
      %v810 = vsel %vm763, %v748, 0
      %v811 = vsel %vm763, %v749, 0
      %v812 = vsel %vm763, %v750, 0
      %v813 = vsel %vm763, %v751, 0
      %v814 = vsel %vm763, %v752, 0
      %v815 = vsel %vm763, %v753, 0
      %v816 = vsel %vm763, %v754, 0
      %v817 = vsel %vm763, %v755, 0
      %v818 = vsel %vm763, %v756, 0
      %v819 = vsel %vm763, %v757, 0
      %v820 = vsel %vm763, %v758, 0
      %v821 = vsel %vm763, %v759, 0
      %v822 = vsel %vm763, %v760, 0
      %v823 = vsel %vm763, %v761, 0
      %v824 = vsel %vm763, %v762, 0
      %vm825 = vsmask.f32 7424
      %v826 = vshrl.u32 %v766, 16
      %v828 = vshll.u32 %v766, 16
      %v830 = vrot.slane %v828, 1
      %v831 = vor.u32 %v826, %v830
      %v832 = vshll.u32 %v805, 16
      %v834 = vrot.slane %v832, 1
      %v835 = vsel %vm825, %v831, %v834
      %v836 = vshrl.u32 %v768, 16
      %v838 = vshll.u32 %v768, 16
      %v840 = vrot.slane %v838, 1
      %v841 = vor.u32 %v836, %v840
      %v842 = vshll.u32 %v806, 16
      %v844 = vrot.slane %v842, 1
      %v845 = vsel %vm825, %v841, %v844
      %v846 = vshrl.u32 %v770, 16
      %v848 = vshll.u32 %v770, 16
      %v850 = vrot.slane %v848, 1
      %v851 = vor.u32 %v846, %v850
      %v852 = vshll.u32 %v807, 16
      %v854 = vrot.slane %v852, 1
      %v855 = vsel %vm825, %v851, %v854
      %v856 = vshrl.u32 %v772, 16
      %v858 = vshll.u32 %v772, 16
      %v860 = vrot.slane %v858, 1
      %v861 = vor.u32 %v856, %v860
      %v862 = vshll.u32 %v808, 16
      %v864 = vrot.slane %v862, 1
      %v865 = vsel %vm825, %v861, %v864
      %v866 = vshrl.u32 %v774, 16
      %v868 = vshll.u32 %v774, 16
      %v870 = vrot.slane %v868, 1
      %v871 = vor.u32 %v866, %v870
      %v872 = vshll.u32 %v809, 16
      %v874 = vrot.slane %v872, 1
      %v875 = vsel %vm825, %v871, %v874
      %v876 = vshrl.u32 %v776, 16
      %v878 = vshll.u32 %v776, 16
      %v880 = vrot.slane %v878, 1
      %v881 = vor.u32 %v876, %v880
      %v882 = vshll.u32 %v810, 16
      %v884 = vrot.slane %v882, 1
      %v885 = vsel %vm825, %v881, %v884
      %v886 = vshrl.u32 %v778, 16
      %v888 = vshll.u32 %v778, 16
      %v890 = vrot.slane %v888, 1
      %v891 = vor.u32 %v886, %v890
      %v892 = vshll.u32 %v811, 16
      %v894 = vrot.slane %v892, 1
      %v895 = vsel %vm825, %v891, %v894
      %v896 = vshrl.u32 %v780, 16
      %v898 = vshll.u32 %v780, 16
      %v900 = vrot.slane %v898, 1
      %v901 = vor.u32 %v896, %v900
      %v902 = vshll.u32 %v812, 16
      %v904 = vrot.slane %v902, 1
      %v905 = vsel %vm825, %v901, %v904
      %v906 = vshrl.u32 %v782, 16
      %v908 = vshll.u32 %v782, 16
      %v910 = vrot.slane %v908, 1
      %v911 = vor.u32 %v906, %v910
      %v912 = vshll.u32 %v813, 16
      %v914 = vrot.slane %v912, 1
      %v915 = vsel %vm825, %v911, %v914
      %v916 = vshrl.u32 %v784, 16
      %v918 = vshll.u32 %v784, 16
      %v920 = vrot.slane %v918, 1
      %v921 = vor.u32 %v916, %v920
      %v922 = vshll.u32 %v814, 16
      %v924 = vrot.slane %v922, 1
      %v925 = vsel %vm825, %v921, %v924
      %v926 = vshrl.u32 %v786, 16
      %v928 = vshll.u32 %v786, 16
      %v930 = vrot.slane %v928, 1
      %v931 = vor.u32 %v926, %v930
      %v932 = vshll.u32 %v815, 16
      %v934 = vrot.slane %v932, 1
      %v935 = vsel %vm825, %v931, %v934
      %v936 = vshrl.u32 %v788, 16
      %v938 = vshll.u32 %v788, 16
      %v940 = vrot.slane %v938, 1
      %v941 = vor.u32 %v936, %v940
      %v942 = vshll.u32 %v816, 16
      %v944 = vrot.slane %v942, 1
      %v945 = vsel %vm825, %v941, %v944
      %v946 = vshrl.u32 %v790, 16
      %v948 = vshll.u32 %v790, 16
      %v950 = vrot.slane %v948, 1
      %v951 = vor.u32 %v946, %v950
      %v952 = vshll.u32 %v817, 16
      %v954 = vrot.slane %v952, 1
      %v955 = vsel %vm825, %v951, %v954
      %v956 = vshrl.u32 %v792, 16
      %v958 = vshll.u32 %v792, 16
      %v960 = vrot.slane %v958, 1
      %v961 = vor.u32 %v956, %v960
      %v962 = vshll.u32 %v818, 16
      %v964 = vrot.slane %v962, 1
      %v965 = vsel %vm825, %v961, %v964
      %v966 = vshrl.u32 %v794, 16
      %v968 = vshll.u32 %v794, 16
      %v970 = vrot.slane %v968, 1
      %v971 = vor.u32 %v966, %v970
      %v972 = vshll.u32 %v819, 16
      %v974 = vrot.slane %v972, 1
      %v975 = vsel %vm825, %v971, %v974
      %v976 = vshrl.u32 %v796, 16
      %v978 = vshll.u32 %v796, 16
      %v980 = vrot.slane %v978, 1
      %v981 = vor.u32 %v976, %v980
      %v982 = vshll.u32 %v820, 16
      %v984 = vrot.slane %v982, 1
      %v985 = vsel %vm825, %v981, %v984
      %986 = vrot.lane.b32.xlu0 %v835, 16
      %v987 = vpop.permute.xlu0 %986
      %988 = vrot.lane.b32.xlu0 %v845, 16
      %v989 = vpop.permute.xlu0 %988
      %990 = vrot.lane.b32.xlu0 %v855, 16
      %v991 = vpop.permute.xlu0 %990
      %992 = vrot.lane.b32.xlu0 %v865, 16
      %v993 = vpop.permute.xlu0 %992
      %994 = vrot.lane.b32.xlu0 %v875, 16
      %v995 = vpop.permute.xlu0 %994
      %996 = vrot.lane.b32.xlu0 %v885, 16
      %v997 = vpop.permute.xlu0 %996
      %998 = vrot.lane.b32.xlu0 %v895, 16
      %v999 = vpop.permute.xlu0 %998
      %1000 = vrot.lane.b32.xlu0 %v905, 16
      %v1001 = vpop.permute.xlu0 %1000
      %1002 = vrot.lane.b32.xlu0 %v915, 16
      %v1003 = vpop.permute.xlu0 %1002
      %1004 = vrot.lane.b32.xlu0 %v925, 16
      %v1005 = vpop.permute.xlu0 %1004
      %1006 = vrot.lane.b32.xlu0 %v935, 16
      %v1007 = vpop.permute.xlu0 %1006
      %1008 = vrot.lane.b32.xlu0 %v945, 16
      %v1009 = vpop.permute.xlu0 %1008
      %1010 = vrot.lane.b32.xlu0 %v955, 16
      %v1011 = vpop.permute.xlu0 %1010
      %1012 = vrot.lane.b32.xlu0 %v965, 16
      %v1013 = vpop.permute.xlu0 %1012
      %1014 = vrot.lane.b32.xlu0 %v975, 16
      %v1015 = vpop.permute.xlu0 %1014
      %1016 = vrot.lane.b32.xlu0 %v985, 16
      %v1017 = vpop.permute.xlu0 %1016
      %vm1050 = vcmask 1046528
      %v1051 = vrot.slane %v766, 1
      %v1052 = vrot.slane %v805, 1
      %v1053 = vsel %vm1050, %v1051, %v1052
      %v1054 = vrot.slane %v768, 1
      %v1055 = vrot.slane %v806, 1
      %v1056 = vsel %vm1050, %v1054, %v1055
      %v1057 = vrot.slane %v770, 1
      %v1058 = vrot.slane %v807, 1
      %v1059 = vsel %vm1050, %v1057, %v1058
      %v1060 = vrot.slane %v772, 1
      %v1061 = vrot.slane %v808, 1
      %v1062 = vsel %vm1050, %v1060, %v1061
      %v1063 = vrot.slane %v774, 1
      %v1064 = vrot.slane %v809, 1
      %v1065 = vsel %vm1050, %v1063, %v1064
      %v1066 = vrot.slane %v776, 1
      %v1067 = vrot.slane %v810, 1
      %v1068 = vsel %vm1050, %v1066, %v1067
      %v1069 = vrot.slane %v778, 1
      %v1070 = vrot.slane %v811, 1
      %v1071 = vsel %vm1050, %v1069, %v1070
      %v1072 = vrot.slane %v780, 1
      %v1073 = vrot.slane %v812, 1
      %v1074 = vsel %vm1050, %v1072, %v1073
      %v1075 = vrot.slane %v782, 1
      %v1076 = vrot.slane %v813, 1
      %v1077 = vsel %vm1050, %v1075, %v1076
      %v1078 = vrot.slane %v784, 1
      %v1079 = vrot.slane %v814, 1
      %v1080 = vsel %vm1050, %v1078, %v1079
      %v1081 = vrot.slane %v786, 1
      %v1082 = vrot.slane %v815, 1
      %v1083 = vsel %vm1050, %v1081, %v1082
      %v1084 = vrot.slane %v788, 1
      %v1085 = vrot.slane %v816, 1
      %v1086 = vsel %vm1050, %v1084, %v1085
      %v1087 = vrot.slane %v790, 1
      %v1088 = vrot.slane %v817, 1
      %v1089 = vsel %vm1050, %v1087, %v1088
      %v1090 = vrot.slane %v792, 1
      %v1091 = vrot.slane %v818, 1
      %v1092 = vsel %vm1050, %v1090, %v1091
      %v1093 = vrot.slane %v794, 1
      %v1094 = vrot.slane %v819, 1
      %v1095 = vsel %vm1050, %v1093, %v1094
      %v1096 = vrot.slane %v796, 1
      %v1097 = vrot.slane %v820, 1
      %v1098 = vsel %vm1050, %v1096, %v1097
      %1099 = vrot.lane.b32.xlu0 %v1053, 32
      %v1100 = vpop.permute.xlu0 %1099
      %1101 = vrot.lane.b32.xlu0 %v1056, 32
      %v1102 = vpop.permute.xlu0 %1101
      %1103 = vrot.lane.b32.xlu0 %v1059, 32
      %v1104 = vpop.permute.xlu0 %1103
      %1105 = vrot.lane.b32.xlu0 %v1062, 32
      %v1106 = vpop.permute.xlu0 %1105
      %1107 = vrot.lane.b32.xlu0 %v1065, 32
      %v1108 = vpop.permute.xlu0 %1107
      %1109 = vrot.lane.b32.xlu0 %v1068, 32
      %v1110 = vpop.permute.xlu0 %1109
      %1111 = vrot.lane.b32.xlu0 %v1071, 32
      %v1112 = vpop.permute.xlu0 %1111
      %1113 = vrot.lane.b32.xlu0 %v1074, 32
      %v1114 = vpop.permute.xlu0 %1113
      %1115 = vrot.lane.b32.xlu0 %v1077, 32
      %v1116 = vpop.permute.xlu0 %1115
      %1117 = vrot.lane.b32.xlu0 %v1080, 32
      %v1118 = vpop.permute.xlu0 %1117
      %1119 = vrot.lane.b32.xlu0 %v1083, 32
      %v1120 = vpop.permute.xlu0 %1119
      %1121 = vrot.lane.b32.xlu0 %v1086, 32
      %v1122 = vpop.permute.xlu0 %1121
      %1123 = vrot.lane.b32.xlu0 %v1089, 32
      %v1124 = vpop.permute.xlu0 %1123
      %1125 = vrot.lane.b32.xlu0 %v1092, 32
      %v1126 = vpop.permute.xlu0 %1125
      %1127 = vrot.lane.b32.xlu0 %v1095, 32
      %v1128 = vpop.permute.xlu0 %1127
      %1129 = vrot.lane.b32.xlu0 %v1098, 32
      %v1130 = vpop.permute.xlu0 %1129
      %vm1131 = vsmask.f32 6400
      %v1132 = vrot.slane %v826, 1
      %v1133 = vrot.slane %v828, 2
      %v1134 = vor.u32 %v1132, %v1133
      %v1135 = vshrl.u32 %v805, 16
      %v1137 = vrot.slane %v1135, 1
      %v1138 = vrot.slane %v832, 2
      %v1139 = vor.u32 %v1137, %v1138
      %v1140 = vsel %vm1131, %v1134, %v1139
      %v1141 = vrot.slane %v836, 1
      %v1142 = vrot.slane %v838, 2
      %v1143 = vor.u32 %v1141, %v1142
      %v1144 = vshrl.u32 %v806, 16
      %v1146 = vrot.slane %v1144, 1
      %v1147 = vrot.slane %v842, 2
      %v1148 = vor.u32 %v1146, %v1147
      %v1149 = vsel %vm1131, %v1143, %v1148
      %v1150 = vrot.slane %v846, 1
      %v1151 = vrot.slane %v848, 2
      %v1152 = vor.u32 %v1150, %v1151
      %v1153 = vshrl.u32 %v807, 16
      %v1155 = vrot.slane %v1153, 1
      %v1156 = vrot.slane %v852, 2
      %v1157 = vor.u32 %v1155, %v1156
      %v1158 = vsel %vm1131, %v1152, %v1157
      %v1159 = vrot.slane %v856, 1
      %v1160 = vrot.slane %v858, 2
      %v1161 = vor.u32 %v1159, %v1160
      %v1162 = vshrl.u32 %v808, 16
      %v1164 = vrot.slane %v1162, 1
      %v1165 = vrot.slane %v862, 2
      %v1166 = vor.u32 %v1164, %v1165
      %v1167 = vsel %vm1131, %v1161, %v1166
      %v1168 = vrot.slane %v866, 1
      %v1169 = vrot.slane %v868, 2
      %v1170 = vor.u32 %v1168, %v1169
      %v1171 = vshrl.u32 %v809, 16
      %v1173 = vrot.slane %v1171, 1
      %v1174 = vrot.slane %v872, 2
      %v1175 = vor.u32 %v1173, %v1174
      %v1176 = vsel %vm1131, %v1170, %v1175
      %v1177 = vrot.slane %v876, 1
      %v1178 = vrot.slane %v878, 2
      %v1179 = vor.u32 %v1177, %v1178
      %v1180 = vshrl.u32 %v810, 16
      %v1182 = vrot.slane %v1180, 1
      %v1183 = vrot.slane %v882, 2
      %v1184 = vor.u32 %v1182, %v1183
      %v1185 = vsel %vm1131, %v1179, %v1184
      %v1186 = vrot.slane %v886, 1
      %v1187 = vrot.slane %v888, 2
      %v1188 = vor.u32 %v1186, %v1187
      %v1189 = vshrl.u32 %v811, 16
      %v1191 = vrot.slane %v1189, 1
      %v1192 = vrot.slane %v892, 2
      %v1193 = vor.u32 %v1191, %v1192
      %v1194 = vsel %vm1131, %v1188, %v1193
      %v1195 = vrot.slane %v896, 1
      %v1196 = vrot.slane %v898, 2
      %v1197 = vor.u32 %v1195, %v1196
      %v1198 = vshrl.u32 %v812, 16
      %v1200 = vrot.slane %v1198, 1
      %v1201 = vrot.slane %v902, 2
      %v1202 = vor.u32 %v1200, %v1201
      %v1203 = vsel %vm1131, %v1197, %v1202
      %v1204 = vrot.slane %v906, 1
      %v1205 = vrot.slane %v908, 2
      %v1206 = vor.u32 %v1204, %v1205
      %v1207 = vshrl.u32 %v813, 16
      %v1209 = vrot.slane %v1207, 1
      %v1210 = vrot.slane %v912, 2
      %v1211 = vor.u32 %v1209, %v1210
      %v1212 = vsel %vm1131, %v1206, %v1211
      %v1213 = vrot.slane %v916, 1
      %v1214 = vrot.slane %v918, 2
      %v1215 = vor.u32 %v1213, %v1214
      %v1216 = vshrl.u32 %v814, 16
      %v1218 = vrot.slane %v1216, 1
      %v1219 = vrot.slane %v922, 2
      %v1220 = vor.u32 %v1218, %v1219
      %v1221 = vsel %vm1131, %v1215, %v1220
      %v1222 = vrot.slane %v926, 1
      %v1223 = vrot.slane %v928, 2
      %v1224 = vor.u32 %v1222, %v1223
      %v1225 = vshrl.u32 %v815, 16
      %v1227 = vrot.slane %v1225, 1
      %v1228 = vrot.slane %v932, 2
      %v1229 = vor.u32 %v1227, %v1228
      %v1230 = vsel %vm1131, %v1224, %v1229
      %v1231 = vrot.slane %v936, 1
      %v1232 = vrot.slane %v938, 2
      %v1233 = vor.u32 %v1231, %v1232
      %v1234 = vshrl.u32 %v816, 16
      %v1236 = vrot.slane %v1234, 1
      %v1237 = vrot.slane %v942, 2
      %v1238 = vor.u32 %v1236, %v1237
      %v1239 = vsel %vm1131, %v1233, %v1238
      %v1240 = vrot.slane %v946, 1
      %v1241 = vrot.slane %v948, 2
      %v1242 = vor.u32 %v1240, %v1241
      %v1243 = vshrl.u32 %v817, 16
      %v1245 = vrot.slane %v1243, 1
      %v1246 = vrot.slane %v952, 2
      %v1247 = vor.u32 %v1245, %v1246
      %v1248 = vsel %vm1131, %v1242, %v1247
      %v1249 = vrot.slane %v956, 1
      %v1250 = vrot.slane %v958, 2
      %v1251 = vor.u32 %v1249, %v1250
      %v1252 = vshrl.u32 %v818, 16
      %v1254 = vrot.slane %v1252, 1
      %v1255 = vrot.slane %v962, 2
      %v1256 = vor.u32 %v1254, %v1255
      %v1257 = vsel %vm1131, %v1251, %v1256
      %v1258 = vrot.slane %v966, 1
      %v1259 = vrot.slane %v968, 2
      %v1260 = vor.u32 %v1258, %v1259
      %v1261 = vshrl.u32 %v819, 16
      %v1263 = vrot.slane %v1261, 1
      %v1264 = vrot.slane %v972, 2
      %v1265 = vor.u32 %v1263, %v1264
      %v1266 = vsel %vm1131, %v1260, %v1265
      %v1267 = vrot.slane %v976, 1
      %v1268 = vrot.slane %v978, 2
      %v1269 = vor.u32 %v1267, %v1268
      %v1270 = vshrl.u32 %v820, 16
      %v1272 = vrot.slane %v1270, 1
      %v1273 = vrot.slane %v982, 2
      %v1274 = vor.u32 %v1272, %v1273
      %v1275 = vsel %vm1131, %v1269, %v1274
      %1276 = vrot.lane.b32.xlu0 %v1140, 48
      %v1277 = vpop.permute.xlu0 %1276
      %1278 = vrot.lane.b32.xlu0 %v1149, 48
      %v1279 = vpop.permute.xlu0 %1278
      %1280 = vrot.lane.b32.xlu0 %v1158, 48
      %v1281 = vpop.permute.xlu0 %1280
      %1282 = vrot.lane.b32.xlu0 %v1167, 48
      %v1283 = vpop.permute.xlu0 %1282
      %1284 = vrot.lane.b32.xlu0 %v1176, 48
      %v1285 = vpop.permute.xlu0 %1284
      %1286 = vrot.lane.b32.xlu0 %v1185, 48
      %v1287 = vpop.permute.xlu0 %1286
      %1288 = vrot.lane.b32.xlu0 %v1194, 48
      %v1289 = vpop.permute.xlu0 %1288
      %1290 = vrot.lane.b32.xlu0 %v1203, 48
      %v1291 = vpop.permute.xlu0 %1290
      %1292 = vrot.lane.b32.xlu0 %v1212, 48
      %v1293 = vpop.permute.xlu0 %1292
      %1294 = vrot.lane.b32.xlu0 %v1221, 48
      %v1295 = vpop.permute.xlu0 %1294
      %1296 = vrot.lane.b32.xlu0 %v1230, 48
      %v1297 = vpop.permute.xlu0 %1296
      %1298 = vrot.lane.b32.xlu0 %v1239, 48
      %v1299 = vpop.permute.xlu0 %1298
      %1300 = vrot.lane.b32.xlu0 %v1248, 48
      %v1301 = vpop.permute.xlu0 %1300
      %1302 = vrot.lane.b32.xlu0 %v1257, 48
      %v1303 = vpop.permute.xlu0 %1302
      %1304 = vrot.lane.b32.xlu0 %v1266, 48
      %v1305 = vpop.permute.xlu0 %1304
      %1306 = vrot.lane.b32.xlu0 %v1275, 48
      %v1307 = vpop.permute.xlu0 %1306
      %vm1308 = vcmask 1045504
      %v1309 = vrot.slane %v766, 2
      %v1310 = vrot.slane %v805, 2
      %v1311 = vsel %vm1308, %v1309, %v1310
      %v1312 = vrot.slane %v768, 2
      %v1313 = vrot.slane %v806, 2
      %v1314 = vsel %vm1308, %v1312, %v1313
      %v1315 = vrot.slane %v770, 2
      %v1316 = vrot.slane %v807, 2
      %v1317 = vsel %vm1308, %v1315, %v1316
      %v1318 = vrot.slane %v772, 2
      %v1319 = vrot.slane %v808, 2
      %v1320 = vsel %vm1308, %v1318, %v1319
      %v1321 = vrot.slane %v774, 2
      %v1322 = vrot.slane %v809, 2
      %v1323 = vsel %vm1308, %v1321, %v1322
      %v1324 = vrot.slane %v776, 2
      %v1325 = vrot.slane %v810, 2
      %v1326 = vsel %vm1308, %v1324, %v1325
      %v1327 = vrot.slane %v778, 2
      %v1328 = vrot.slane %v811, 2
      %v1329 = vsel %vm1308, %v1327, %v1328
      %v1330 = vrot.slane %v780, 2
      %v1331 = vrot.slane %v812, 2
      %v1332 = vsel %vm1308, %v1330, %v1331
      %v1333 = vrot.slane %v782, 2
      %v1334 = vrot.slane %v813, 2
      %v1335 = vsel %vm1308, %v1333, %v1334
      %v1336 = vrot.slane %v784, 2
      %v1337 = vrot.slane %v814, 2
      %v1338 = vsel %vm1308, %v1336, %v1337
      %v1339 = vrot.slane %v786, 2
      %v1340 = vrot.slane %v815, 2
      %v1341 = vsel %vm1308, %v1339, %v1340
      %v1342 = vrot.slane %v788, 2
      %v1343 = vrot.slane %v816, 2
      %v1344 = vsel %vm1308, %v1342, %v1343
      %v1345 = vrot.slane %v790, 2
      %v1346 = vrot.slane %v817, 2
      %v1347 = vsel %vm1308, %v1345, %v1346
      %v1348 = vrot.slane %v792, 2
      %v1349 = vrot.slane %v818, 2
      %v1350 = vsel %vm1308, %v1348, %v1349
      %v1351 = vrot.slane %v794, 2
      %v1352 = vrot.slane %v819, 2
      %v1353 = vsel %vm1308, %v1351, %v1352
      %v1354 = vrot.slane %v796, 2
      %v1355 = vrot.slane %v820, 2
      %v1356 = vsel %vm1308, %v1354, %v1355
      %1357 = vrot.lane.b32.xlu0 %v1311, 64
      %v1358 = vpop.permute.xlu0 %1357
      %1359 = vrot.lane.b32.xlu0 %v1314, 64
      %v1360 = vpop.permute.xlu0 %1359
      %1361 = vrot.lane.b32.xlu0 %v1317, 64
      %v1362 = vpop.permute.xlu0 %1361
      %1363 = vrot.lane.b32.xlu0 %v1320, 64
      %v1364 = vpop.permute.xlu0 %1363
      %1365 = vrot.lane.b32.xlu0 %v1323, 64
      %v1366 = vpop.permute.xlu0 %1365
      %1367 = vrot.lane.b32.xlu0 %v1326, 64
      %v1368 = vpop.permute.xlu0 %1367
      %1369 = vrot.lane.b32.xlu0 %v1329, 64
      %v1370 = vpop.permute.xlu0 %1369
      %1371 = vrot.lane.b32.xlu0 %v1332, 64
      %v1372 = vpop.permute.xlu0 %1371
      %1373 = vrot.lane.b32.xlu0 %v1335, 64
      %v1374 = vpop.permute.xlu0 %1373
      %1375 = vrot.lane.b32.xlu0 %v1338, 64
      %v1376 = vpop.permute.xlu0 %1375
      %1377 = vrot.lane.b32.xlu0 %v1341, 64
      %v1378 = vpop.permute.xlu0 %1377
      %1379 = vrot.lane.b32.xlu0 %v1344, 64
      %v1380 = vpop.permute.xlu0 %1379
      %1381 = vrot.lane.b32.xlu0 %v1347, 64
      %v1382 = vpop.permute.xlu0 %1381
      %1383 = vrot.lane.b32.xlu0 %v1350, 64
      %v1384 = vpop.permute.xlu0 %1383
      %1385 = vrot.lane.b32.xlu0 %v1353, 64
      %v1386 = vpop.permute.xlu0 %1385
      %1387 = vrot.lane.b32.xlu0 %v1356, 64
      %v1388 = vpop.permute.xlu0 %1387
      %1390 = vrot.lane.b32.xlu0 %v768, 80
      %v1391 = vpop.permute.xlu0 %1390
      %1392 = vrot.lane.b32.xlu0 %v770, 80
      %v1393 = vpop.permute.xlu0 %1392
      %1394 = vrot.lane.b32.xlu0 %v772, 80
      %v1395 = vpop.permute.xlu0 %1394
      %1396 = vrot.lane.b32.xlu0 %v774, 80
      %v1397 = vpop.permute.xlu0 %1396
      %1398 = vrot.lane.b32.xlu0 %v776, 80
      %v1399 = vpop.permute.xlu0 %1398
      %1400 = vrot.lane.b32.xlu0 %v778, 80
      %v1401 = vpop.permute.xlu0 %1400
      %1402 = vrot.lane.b32.xlu0 %v780, 80
      %v1403 = vpop.permute.xlu0 %1402
      %1404 = vrot.lane.b32.xlu0 %v782, 80
      %v1405 = vpop.permute.xlu0 %1404
      %1406 = vrot.lane.b32.xlu0 %v784, 80
      %v1407 = vpop.permute.xlu0 %1406
      %1408 = vrot.lane.b32.xlu0 %v786, 80
      %v1409 = vpop.permute.xlu0 %1408
      %1410 = vrot.lane.b32.xlu0 %v788, 80
      %v1411 = vpop.permute.xlu0 %1410
      %1412 = vrot.lane.b32.xlu0 %v790, 80
      %v1413 = vpop.permute.xlu0 %1412
      %1414 = vrot.lane.b32.xlu0 %v792, 80
      %v1415 = vpop.permute.xlu0 %1414
      %1416 = vrot.lane.b32.xlu0 %v794, 80
      %v1417 = vpop.permute.xlu0 %1416
      %1418 = vrot.lane.b32.xlu0 %v796, 80
      %v1419 = vpop.permute.xlu0 %1418
      %1420 = vrot.lane.b32.xlu0 %v798, 80
      %v1421 = vpop.permute.xlu0 %1420
      %v1422 = vshrl.u32 %v798, 16
      %v1424 = vshll.u32 %v798, 16
      %v1426 = vrot.slane %v1424, 1
      %v1427 = vor.u32 %v1422, %v1426
      %v1428 = vshll.u32 %v821, 16
      %v1430 = vrot.slane %v1428, 1
      %v1431 = vsel %vm825, %v1427, %v1430
      %1432 = vrot.lane.b32.xlu0 %v845, 96
      %v1433 = vpop.permute.xlu0 %1432
      %1434 = vrot.lane.b32.xlu0 %v855, 96
      %v1435 = vpop.permute.xlu0 %1434
      %1436 = vrot.lane.b32.xlu0 %v865, 96
      %v1437 = vpop.permute.xlu0 %1436
      %1438 = vrot.lane.b32.xlu0 %v875, 96
      %v1439 = vpop.permute.xlu0 %1438
      %1440 = vrot.lane.b32.xlu0 %v885, 96
      %v1441 = vpop.permute.xlu0 %1440
      %1442 = vrot.lane.b32.xlu0 %v895, 96
      %v1443 = vpop.permute.xlu0 %1442
      %1444 = vrot.lane.b32.xlu0 %v905, 96
      %v1445 = vpop.permute.xlu0 %1444
      %1446 = vrot.lane.b32.xlu0 %v915, 96
      %v1447 = vpop.permute.xlu0 %1446
      %1448 = vrot.lane.b32.xlu0 %v925, 96
      %v1449 = vpop.permute.xlu0 %1448
      %1450 = vrot.lane.b32.xlu0 %v935, 96
      %v1451 = vpop.permute.xlu0 %1450
      %1452 = vrot.lane.b32.xlu0 %v945, 96
      %v1453 = vpop.permute.xlu0 %1452
      %1454 = vrot.lane.b32.xlu0 %v955, 96
      %v1455 = vpop.permute.xlu0 %1454
      %1456 = vrot.lane.b32.xlu0 %v965, 96
      %v1457 = vpop.permute.xlu0 %1456
      %1458 = vrot.lane.b32.xlu0 %v975, 96
      %v1459 = vpop.permute.xlu0 %1458
      %1460 = vrot.lane.b32.xlu0 %v985, 96
      %v1461 = vpop.permute.xlu0 %1460
      %1462 = vrot.lane.b32.xlu0 %v1431, 96
      %v1463 = vpop.permute.xlu0 %1462
      %v1465 = vrot.slane %v798, 1
      %v1466 = vrot.slane %v821, 1
      %v1467 = vsel %vm1050, %v1465, %v1466
      %1468 = vrot.lane.b32.xlu0 %v1056, 112
      %v1469 = vpop.permute.xlu0 %1468
      %1470 = vrot.lane.b32.xlu0 %v1059, 112
      %v1471 = vpop.permute.xlu0 %1470
      %1472 = vrot.lane.b32.xlu0 %v1062, 112
      %v1473 = vpop.permute.xlu0 %1472
      %1474 = vrot.lane.b32.xlu0 %v1065, 112
      %v1475 = vpop.permute.xlu0 %1474
      %1476 = vrot.lane.b32.xlu0 %v1068, 112
      %v1477 = vpop.permute.xlu0 %1476
      %1478 = vrot.lane.b32.xlu0 %v1071, 112
      %v1479 = vpop.permute.xlu0 %1478
      %1480 = vrot.lane.b32.xlu0 %v1074, 112
      %v1481 = vpop.permute.xlu0 %1480
      %1482 = vrot.lane.b32.xlu0 %v1077, 112
      %v1483 = vpop.permute.xlu0 %1482
      %1484 = vrot.lane.b32.xlu0 %v1080, 112
      %v1485 = vpop.permute.xlu0 %1484
      %1486 = vrot.lane.b32.xlu0 %v1083, 112
      %v1487 = vpop.permute.xlu0 %1486
      %1488 = vrot.lane.b32.xlu0 %v1086, 112
      %v1489 = vpop.permute.xlu0 %1488
      %1490 = vrot.lane.b32.xlu0 %v1089, 112
      %v1491 = vpop.permute.xlu0 %1490
      %1492 = vrot.lane.b32.xlu0 %v1092, 112
      %v1493 = vpop.permute.xlu0 %1492
      %1494 = vrot.lane.b32.xlu0 %v1095, 112
      %v1495 = vpop.permute.xlu0 %1494
      %1496 = vrot.lane.b32.xlu0 %v1098, 112
      %v1497 = vpop.permute.xlu0 %1496
      %1498 = vrot.lane.b32.xlu0 %v1467, 112
      %v1499 = vpop.permute.xlu0 %1498
      %v1500 = vrot.slane %v1422, 1
      %v1501 = vrot.slane %v1424, 2
      %v1502 = vor.u32 %v1500, %v1501
      %v1503 = vshrl.u32 %v821, 16
      %v1505 = vrot.slane %v1503, 1
      %v1506 = vrot.slane %v1428, 2
      %v1507 = vor.u32 %v1505, %v1506
      %v1508 = vsel %vm1131, %v1502, %v1507
      %v1509 = vrot.slane %v798, 2
      %v1510 = vrot.slane %v821, 2
      %v1511 = vsel %vm1308, %v1509, %v1510
      %1512 = vrot.lane.b32.xlu0 %v1314, 16
      %v1513 = vpop.permute.xlu0 %1512
      %1514 = vrot.lane.b32.xlu0 %v1317, 16
      %v1515 = vpop.permute.xlu0 %1514
      %1516 = vrot.lane.b32.xlu0 %v1320, 16
      %v1517 = vpop.permute.xlu0 %1516
      %1518 = vrot.lane.b32.xlu0 %v1323, 16
      %v1519 = vpop.permute.xlu0 %1518
      %1520 = vrot.lane.b32.xlu0 %v1326, 16
      %v1521 = vpop.permute.xlu0 %1520
      %1522 = vrot.lane.b32.xlu0 %v1329, 16
      %v1523 = vpop.permute.xlu0 %1522
      %1524 = vrot.lane.b32.xlu0 %v1332, 16
      %v1525 = vpop.permute.xlu0 %1524
      %1526 = vrot.lane.b32.xlu0 %v1335, 16
      %v1527 = vpop.permute.xlu0 %1526
      %1528 = vrot.lane.b32.xlu0 %v1338, 16
      %v1529 = vpop.permute.xlu0 %1528
      %1530 = vrot.lane.b32.xlu0 %v1341, 16
      %v1531 = vpop.permute.xlu0 %1530
      %1532 = vrot.lane.b32.xlu0 %v1344, 16
      %v1533 = vpop.permute.xlu0 %1532
      %1534 = vrot.lane.b32.xlu0 %v1347, 16
      %v1535 = vpop.permute.xlu0 %1534
      %1536 = vrot.lane.b32.xlu0 %v1350, 16
      %v1537 = vpop.permute.xlu0 %1536
      %1538 = vrot.lane.b32.xlu0 %v1353, 16
      %v1539 = vpop.permute.xlu0 %1538
      %1540 = vrot.lane.b32.xlu0 %v1356, 16
      %v1541 = vpop.permute.xlu0 %1540
      %1542 = vrot.lane.b32.xlu0 %v1511, 16
      %v1543 = vpop.permute.xlu0 %1542
      %1545 = vrot.lane.b32.xlu0 %v770, 32
      %v1546 = vpop.permute.xlu0 %1545
      %1547 = vrot.lane.b32.xlu0 %v772, 32
      %v1548 = vpop.permute.xlu0 %1547
      %1549 = vrot.lane.b32.xlu0 %v774, 32
      %v1550 = vpop.permute.xlu0 %1549
      %1551 = vrot.lane.b32.xlu0 %v776, 32
      %v1552 = vpop.permute.xlu0 %1551
      %1553 = vrot.lane.b32.xlu0 %v778, 32
      %v1554 = vpop.permute.xlu0 %1553
      %1555 = vrot.lane.b32.xlu0 %v780, 32
      %v1556 = vpop.permute.xlu0 %1555
      %1557 = vrot.lane.b32.xlu0 %v782, 32
      %v1558 = vpop.permute.xlu0 %1557
      %1559 = vrot.lane.b32.xlu0 %v784, 32
      %v1560 = vpop.permute.xlu0 %1559
      %1561 = vrot.lane.b32.xlu0 %v786, 32
      %v1562 = vpop.permute.xlu0 %1561
      %1563 = vrot.lane.b32.xlu0 %v788, 32
      %v1564 = vpop.permute.xlu0 %1563
      %1565 = vrot.lane.b32.xlu0 %v790, 32
      %v1566 = vpop.permute.xlu0 %1565
      %1567 = vrot.lane.b32.xlu0 %v792, 32
      %v1568 = vpop.permute.xlu0 %1567
      %1569 = vrot.lane.b32.xlu0 %v794, 32
      %v1570 = vpop.permute.xlu0 %1569
      %1571 = vrot.lane.b32.xlu0 %v796, 32
      %v1572 = vpop.permute.xlu0 %1571
      %1573 = vrot.lane.b32.xlu0 %v798, 32
      %v1574 = vpop.permute.xlu0 %1573
      %1575 = vrot.lane.b32.xlu0 %v800, 32
      %v1576 = vpop.permute.xlu0 %1575
      %v1577 = vshrl.u32 %v800, 16
      %v1579 = vshll.u32 %v800, 16
      %v1581 = vrot.slane %v1579, 1
      %v1582 = vor.u32 %v1577, %v1581
      %v1583 = vshll.u32 %v822, 16
      %v1585 = vrot.slane %v1583, 1
      %v1586 = vsel %vm825, %v1582, %v1585
      %1587 = vrot.lane.b32.xlu0 %v855, 48
      %v1588 = vpop.permute.xlu0 %1587
      %1589 = vrot.lane.b32.xlu0 %v865, 48
      %v1590 = vpop.permute.xlu0 %1589
      %1591 = vrot.lane.b32.xlu0 %v875, 48
      %v1592 = vpop.permute.xlu0 %1591
      %1593 = vrot.lane.b32.xlu0 %v885, 48
      %v1594 = vpop.permute.xlu0 %1593
      %1595 = vrot.lane.b32.xlu0 %v895, 48
      %v1596 = vpop.permute.xlu0 %1595
      %1597 = vrot.lane.b32.xlu0 %v905, 48
      %v1598 = vpop.permute.xlu0 %1597
      %1599 = vrot.lane.b32.xlu0 %v915, 48
      %v1600 = vpop.permute.xlu0 %1599
      %1601 = vrot.lane.b32.xlu0 %v925, 48
      %v1602 = vpop.permute.xlu0 %1601
      %1603 = vrot.lane.b32.xlu0 %v935, 48
      %v1604 = vpop.permute.xlu0 %1603
      %1605 = vrot.lane.b32.xlu0 %v945, 48
      %v1606 = vpop.permute.xlu0 %1605
      %1607 = vrot.lane.b32.xlu0 %v955, 48
      %v1608 = vpop.permute.xlu0 %1607
      %1609 = vrot.lane.b32.xlu0 %v965, 48
      %v1610 = vpop.permute.xlu0 %1609
      %1611 = vrot.lane.b32.xlu0 %v975, 48
      %v1612 = vpop.permute.xlu0 %1611
      %1613 = vrot.lane.b32.xlu0 %v985, 48
      %v1614 = vpop.permute.xlu0 %1613
      %1615 = vrot.lane.b32.xlu0 %v1431, 48
      %v1616 = vpop.permute.xlu0 %1615
      %1617 = vrot.lane.b32.xlu0 %v1586, 48
      %v1618 = vpop.permute.xlu0 %1617
      %v1620 = vrot.slane %v800, 1
      %v1621 = vrot.slane %v822, 1
      %v1622 = vsel %vm1050, %v1620, %v1621
      %1623 = vrot.lane.b32.xlu0 %v1059, 64
      %v1624 = vpop.permute.xlu0 %1623
      %1625 = vrot.lane.b32.xlu0 %v1062, 64
      %v1626 = vpop.permute.xlu0 %1625
      %1627 = vrot.lane.b32.xlu0 %v1065, 64
      %v1628 = vpop.permute.xlu0 %1627
      %1629 = vrot.lane.b32.xlu0 %v1068, 64
      %v1630 = vpop.permute.xlu0 %1629
      %1631 = vrot.lane.b32.xlu0 %v1071, 64
      %v1632 = vpop.permute.xlu0 %1631
      %1633 = vrot.lane.b32.xlu0 %v1074, 64
      %v1634 = vpop.permute.xlu0 %1633
      %1635 = vrot.lane.b32.xlu0 %v1077, 64
      %v1636 = vpop.permute.xlu0 %1635
      %1637 = vrot.lane.b32.xlu0 %v1080, 64
      %v1638 = vpop.permute.xlu0 %1637
      %1639 = vrot.lane.b32.xlu0 %v1083, 64
      %v1640 = vpop.permute.xlu0 %1639
      %1641 = vrot.lane.b32.xlu0 %v1086, 64
      %v1642 = vpop.permute.xlu0 %1641
      %1643 = vrot.lane.b32.xlu0 %v1089, 64
      %v1644 = vpop.permute.xlu0 %1643
      %1645 = vrot.lane.b32.xlu0 %v1092, 64
      %v1646 = vpop.permute.xlu0 %1645
      %1647 = vrot.lane.b32.xlu0 %v1095, 64
      %v1648 = vpop.permute.xlu0 %1647
      %1649 = vrot.lane.b32.xlu0 %v1098, 64
      %v1650 = vpop.permute.xlu0 %1649
      %1651 = vrot.lane.b32.xlu0 %v1467, 64
      %v1652 = vpop.permute.xlu0 %1651
      %1653 = vrot.lane.b32.xlu0 %v1622, 64
      %v1654 = vpop.permute.xlu0 %1653
      %v1655 = vrot.slane %v1577, 1
      %v1656 = vrot.slane %v1579, 2
      %v1657 = vor.u32 %v1655, %v1656
      %v1658 = vshrl.u32 %v822, 16
      %v1660 = vrot.slane %v1658, 1
      %v1661 = vrot.slane %v1583, 2
      %v1662 = vor.u32 %v1660, %v1661
      %v1663 = vsel %vm1131, %v1657, %v1662
      %1664 = vrot.lane.b32.xlu0 %v1158, 80
      %v1665 = vpop.permute.xlu0 %1664
      %1666 = vrot.lane.b32.xlu0 %v1167, 80
      %v1667 = vpop.permute.xlu0 %1666
      %1668 = vrot.lane.b32.xlu0 %v1176, 80
      %v1669 = vpop.permute.xlu0 %1668
      %1670 = vrot.lane.b32.xlu0 %v1185, 80
      %v1671 = vpop.permute.xlu0 %1670
      %1672 = vrot.lane.b32.xlu0 %v1194, 80
      %v1673 = vpop.permute.xlu0 %1672
      %1674 = vrot.lane.b32.xlu0 %v1203, 80
      %v1675 = vpop.permute.xlu0 %1674
      %1676 = vrot.lane.b32.xlu0 %v1212, 80
      %v1677 = vpop.permute.xlu0 %1676
      %1678 = vrot.lane.b32.xlu0 %v1221, 80
      %v1679 = vpop.permute.xlu0 %1678
      %1680 = vrot.lane.b32.xlu0 %v1230, 80
      %v1681 = vpop.permute.xlu0 %1680
      %1682 = vrot.lane.b32.xlu0 %v1239, 80
      %v1683 = vpop.permute.xlu0 %1682
      %1684 = vrot.lane.b32.xlu0 %v1248, 80
      %v1685 = vpop.permute.xlu0 %1684
      %1686 = vrot.lane.b32.xlu0 %v1257, 80
      %v1687 = vpop.permute.xlu0 %1686
      %1688 = vrot.lane.b32.xlu0 %v1266, 80
      %v1689 = vpop.permute.xlu0 %1688
      %1690 = vrot.lane.b32.xlu0 %v1275, 80
      %v1691 = vpop.permute.xlu0 %1690
      %1692 = vrot.lane.b32.xlu0 %v1508, 80
      %v1693 = vpop.permute.xlu0 %1692
      %1694 = vrot.lane.b32.xlu0 %v1663, 80
      %v1695 = vpop.permute.xlu0 %1694
      %v1696 = vrot.slane %v800, 2
      %v1697 = vrot.slane %v822, 2
      %v1698 = vsel %vm1308, %v1696, %v1697
      %1699 = vrot.lane.b32.xlu0 %v1317, 96
      %v1700 = vpop.permute.xlu0 %1699
      %1701 = vrot.lane.b32.xlu0 %v1320, 96
      %v1702 = vpop.permute.xlu0 %1701
      %1703 = vrot.lane.b32.xlu0 %v1323, 96
      %v1704 = vpop.permute.xlu0 %1703
      %1705 = vrot.lane.b32.xlu0 %v1326, 96
      %v1706 = vpop.permute.xlu0 %1705
      %1707 = vrot.lane.b32.xlu0 %v1329, 96
      %v1708 = vpop.permute.xlu0 %1707
      %1709 = vrot.lane.b32.xlu0 %v1332, 96
      %v1710 = vpop.permute.xlu0 %1709
      %1711 = vrot.lane.b32.xlu0 %v1335, 96
      %v1712 = vpop.permute.xlu0 %1711
      %1713 = vrot.lane.b32.xlu0 %v1338, 96
      %v1714 = vpop.permute.xlu0 %1713
      %1715 = vrot.lane.b32.xlu0 %v1341, 96
      %v1716 = vpop.permute.xlu0 %1715
      %1717 = vrot.lane.b32.xlu0 %v1344, 96
      %v1718 = vpop.permute.xlu0 %1717
      %1719 = vrot.lane.b32.xlu0 %v1347, 96
      %v1720 = vpop.permute.xlu0 %1719
      %1721 = vrot.lane.b32.xlu0 %v1350, 96
      %v1722 = vpop.permute.xlu0 %1721
      %1723 = vrot.lane.b32.xlu0 %v1353, 96
      %v1724 = vpop.permute.xlu0 %1723
      %1725 = vrot.lane.b32.xlu0 %v1356, 96
      %v1726 = vpop.permute.xlu0 %1725
      %1727 = vrot.lane.b32.xlu0 %v1511, 96
      %v1728 = vpop.permute.xlu0 %1727
      %1729 = vrot.lane.b32.xlu0 %v1698, 96
      %v1730 = vpop.permute.xlu0 %1729
      %1732 = vrot.lane.b32.xlu0 %v772, 112
      %v1733 = vpop.permute.xlu0 %1732
      %1734 = vrot.lane.b32.xlu0 %v774, 112
      %v1735 = vpop.permute.xlu0 %1734
      %1736 = vrot.lane.b32.xlu0 %v776, 112
      %v1737 = vpop.permute.xlu0 %1736
      %1738 = vrot.lane.b32.xlu0 %v778, 112
      %v1739 = vpop.permute.xlu0 %1738
      %1740 = vrot.lane.b32.xlu0 %v780, 112
      %v1741 = vpop.permute.xlu0 %1740
      %1742 = vrot.lane.b32.xlu0 %v782, 112
      %v1743 = vpop.permute.xlu0 %1742
      %1744 = vrot.lane.b32.xlu0 %v784, 112
      %v1745 = vpop.permute.xlu0 %1744
      %1746 = vrot.lane.b32.xlu0 %v786, 112
      %v1747 = vpop.permute.xlu0 %1746
      %1748 = vrot.lane.b32.xlu0 %v788, 112
      %v1749 = vpop.permute.xlu0 %1748
      %1750 = vrot.lane.b32.xlu0 %v790, 112
      %v1751 = vpop.permute.xlu0 %1750
      %1752 = vrot.lane.b32.xlu0 %v792, 112
      %v1753 = vpop.permute.xlu0 %1752
      %1754 = vrot.lane.b32.xlu0 %v794, 112
      %v1755 = vpop.permute.xlu0 %1754
      %1756 = vrot.lane.b32.xlu0 %v796, 112
      %v1757 = vpop.permute.xlu0 %1756
      %1758 = vrot.lane.b32.xlu0 %v798, 112
      %v1759 = vpop.permute.xlu0 %1758
      %1760 = vrot.lane.b32.xlu0 %v800, 112
      %v1761 = vpop.permute.xlu0 %1760
      %1762 = vrot.lane.b32.xlu0 %v802, 112
      %v1763 = vpop.permute.xlu0 %1762
      %vm1764 = vcmask 130048
      %v1766 = vsel %vm1764, %v766, %v987
      %v1768 = vsel %vm1764, %v768, %v989
      %v1770 = vsel %vm1764, %v770, %v991
      %v1772 = vsel %vm1764, %v772, %v993
      %v1774 = vsel %vm1764, %v774, %v995
      %v1776 = vsel %vm1764, %v776, %v997
      %v1778 = vsel %vm1764, %v778, %v999
      %v1780 = vsel %vm1764, %v780, %v1001
      %v1782 = vsel %vm1764, %v782, %v1003
      %v1784 = vsel %vm1764, %v784, %v1005
      %v1786 = vsel %vm1764, %v786, %v1007
      %v1788 = vsel %vm1764, %v788, %v1009
      %v1790 = vsel %vm1764, %v790, %v1011
      %v1792 = vsel %vm1764, %v792, %v1013
      %v1794 = vsel %vm1764, %v794, %v1015
      %v1796 = vsel %vm1764, %v796, %v1017
      %vm1797 = vcmask 261120
      %v1799 = vsel %vm1797, %v1766, %v1100
      %v1801 = vsel %vm1797, %v1768, %v1102
      %v1803 = vsel %vm1797, %v1770, %v1104
      %v1805 = vsel %vm1797, %v1772, %v1106
      %v1807 = vsel %vm1797, %v1774, %v1108
      %v1809 = vsel %vm1797, %v1776, %v1110
      %v1811 = vsel %vm1797, %v1778, %v1112
      %v1813 = vsel %vm1797, %v1780, %v1114
      %v1815 = vsel %vm1797, %v1782, %v1116
      %v1817 = vsel %vm1797, %v1784, %v1118
      %v1819 = vsel %vm1797, %v1786, %v1120
      %v1821 = vsel %vm1797, %v1788, %v1122
      %v1823 = vsel %vm1797, %v1790, %v1124
      %v1825 = vsel %vm1797, %v1792, %v1126
      %v1827 = vsel %vm1797, %v1794, %v1128
      %v1829 = vsel %vm1797, %v1796, %v1130
      %vm1830 = vcmask 392192
      %v1832 = vsel %vm1830, %v1799, %v1277
      %v1834 = vsel %vm1830, %v1801, %v1279
      %v1836 = vsel %vm1830, %v1803, %v1281
      %v1838 = vsel %vm1830, %v1805, %v1283
      %v1840 = vsel %vm1830, %v1807, %v1285
      %v1842 = vsel %vm1830, %v1809, %v1287
      %v1844 = vsel %vm1830, %v1811, %v1289
      %v1846 = vsel %vm1830, %v1813, %v1291
      %v1848 = vsel %vm1830, %v1815, %v1293
      %v1850 = vsel %vm1830, %v1817, %v1295
      %v1852 = vsel %vm1830, %v1819, %v1297
      %v1854 = vsel %vm1830, %v1821, %v1299
      %v1856 = vsel %vm1830, %v1823, %v1301
      %v1858 = vsel %vm1830, %v1825, %v1303
      %v1860 = vsel %vm1830, %v1827, %v1305
      %v1862 = vsel %vm1830, %v1829, %v1307
      %vm1863 = vcmask 523264
      %v1865 = vsel %vm1863, %v1832, %v1358
      %v1867 = vsel %vm1863, %v1834, %v1360
      %v1869 = vsel %vm1863, %v1836, %v1362
      %v1871 = vsel %vm1863, %v1838, %v1364
      %v1873 = vsel %vm1863, %v1840, %v1366
      %v1875 = vsel %vm1863, %v1842, %v1368
      %v1877 = vsel %vm1863, %v1844, %v1370
      %v1879 = vsel %vm1863, %v1846, %v1372
      %v1881 = vsel %vm1863, %v1848, %v1374
      %v1883 = vsel %vm1863, %v1850, %v1376
      %v1885 = vsel %vm1863, %v1852, %v1378
      %v1887 = vsel %vm1863, %v1854, %v1380
      %v1889 = vsel %vm1863, %v1856, %v1382
      %v1891 = vsel %vm1863, %v1858, %v1384
      %v1893 = vsel %vm1863, %v1860, %v1386
      %v1895 = vsel %vm1863, %v1862, %v1388
      %vm1896 = vcmask 654336
      %v1898 = vsel %vm1896, %v1865, %v1391
      %v1900 = vsel %vm1896, %v1867, %v1393
      %v1902 = vsel %vm1896, %v1869, %v1395
      %v1904 = vsel %vm1896, %v1871, %v1397
      %v1906 = vsel %vm1896, %v1873, %v1399
      %v1908 = vsel %vm1896, %v1875, %v1401
      %v1910 = vsel %vm1896, %v1877, %v1403
      %v1912 = vsel %vm1896, %v1879, %v1405
      %v1914 = vsel %vm1896, %v1881, %v1407
      %v1916 = vsel %vm1896, %v1883, %v1409
      %v1918 = vsel %vm1896, %v1885, %v1411
      %v1920 = vsel %vm1896, %v1887, %v1413
      %v1922 = vsel %vm1896, %v1889, %v1415
      %v1924 = vsel %vm1896, %v1891, %v1417
      %v1926 = vsel %vm1896, %v1893, %v1419
      %v1928 = vsel %vm1896, %v1895, %v1421
      %vm1929 = vcmask 785408
      %v1931 = vsel %vm1929, %v1898, %v1433
      %v1933 = vsel %vm1929, %v1900, %v1435
      %v1935 = vsel %vm1929, %v1902, %v1437
      %v1937 = vsel %vm1929, %v1904, %v1439
      %v1939 = vsel %vm1929, %v1906, %v1441
      %v1941 = vsel %vm1929, %v1908, %v1443
      %v1943 = vsel %vm1929, %v1910, %v1445
      %v1945 = vsel %vm1929, %v1912, %v1447
      %v1947 = vsel %vm1929, %v1914, %v1449
      %v1949 = vsel %vm1929, %v1916, %v1451
      %v1951 = vsel %vm1929, %v1918, %v1453
      %v1953 = vsel %vm1929, %v1920, %v1455
      %v1955 = vsel %vm1929, %v1922, %v1457
      %v1957 = vsel %vm1929, %v1924, %v1459
      %v1959 = vsel %vm1929, %v1926, %v1461
      %v1961 = vsel %vm1929, %v1928, %v1463
      %vm1962 = vcmask 916480
      %v1964 = vsel %vm1962, %v1931, %v1469
      %v1967 = vsel %vm1962, %v1933, %v1471
      %v1970 = vsel %vm1962, %v1935, %v1473
      %v1973 = vsel %vm1962, %v1937, %v1475
      %v1976 = vsel %vm1962, %v1939, %v1477
      %v1979 = vsel %vm1962, %v1941, %v1479
      %v1982 = vsel %vm1962, %v1943, %v1481
      %v1985 = vsel %vm1962, %v1945, %v1483
      %v1988 = vsel %vm1962, %v1947, %v1485
      %v1991 = vsel %vm1962, %v1949, %v1487
      %v1994 = vsel %vm1962, %v1951, %v1489
      %v1997 = vsel %vm1962, %v1953, %v1491
      %v2000 = vsel %vm1962, %v1955, %v1493
      %v2003 = vsel %vm1962, %v1957, %v1495
      %v2006 = vsel %vm1962, %v1959, %v1497
      %v2009 = vsel %vm1962, %v1961, %v1499
      %v2013 = vsel %vm1764, %v1149, %v1513
      %v2016 = vsel %vm1764, %v1158, %v1515
      %v2019 = vsel %vm1764, %v1167, %v1517
      %v2022 = vsel %vm1764, %v1176, %v1519
      %v2025 = vsel %vm1764, %v1185, %v1521
      %v2028 = vsel %vm1764, %v1194, %v1523
      %v2031 = vsel %vm1764, %v1203, %v1525
      %v2034 = vsel %vm1764, %v1212, %v1527
      %v2037 = vsel %vm1764, %v1221, %v1529
      %v2040 = vsel %vm1764, %v1230, %v1531
      %v2043 = vsel %vm1764, %v1239, %v1533
      %v2046 = vsel %vm1764, %v1248, %v1535
      %v2049 = vsel %vm1764, %v1257, %v1537
      %v2052 = vsel %vm1764, %v1266, %v1539
      %v2055 = vsel %vm1764, %v1275, %v1541
      %v2058 = vsel %vm1764, %v1508, %v1543
      %v2060 = vsel %vm1797, %v2013, %v1546
      %v2062 = vsel %vm1797, %v2016, %v1548
      %v2064 = vsel %vm1797, %v2019, %v1550
      %v2066 = vsel %vm1797, %v2022, %v1552
      %v2068 = vsel %vm1797, %v2025, %v1554
      %v2070 = vsel %vm1797, %v2028, %v1556
      %v2072 = vsel %vm1797, %v2031, %v1558
      %v2074 = vsel %vm1797, %v2034, %v1560
      %v2076 = vsel %vm1797, %v2037, %v1562
      %v2078 = vsel %vm1797, %v2040, %v1564
      %v2080 = vsel %vm1797, %v2043, %v1566
      %v2082 = vsel %vm1797, %v2046, %v1568
      %v2084 = vsel %vm1797, %v2049, %v1570
      %v2086 = vsel %vm1797, %v2052, %v1572
      %v2088 = vsel %vm1797, %v2055, %v1574
      %v2090 = vsel %vm1797, %v2058, %v1576
      %v2092 = vsel %vm1830, %v2060, %v1588
      %v2094 = vsel %vm1830, %v2062, %v1590
      %v2096 = vsel %vm1830, %v2064, %v1592
      %v2098 = vsel %vm1830, %v2066, %v1594
      %v2100 = vsel %vm1830, %v2068, %v1596
      %v2102 = vsel %vm1830, %v2070, %v1598
      %v2104 = vsel %vm1830, %v2072, %v1600
      %v2106 = vsel %vm1830, %v2074, %v1602
      %v2108 = vsel %vm1830, %v2076, %v1604
      %v2110 = vsel %vm1830, %v2078, %v1606
      %v2112 = vsel %vm1830, %v2080, %v1608
      %v2114 = vsel %vm1830, %v2082, %v1610
      %v2116 = vsel %vm1830, %v2084, %v1612
      %v2118 = vsel %vm1830, %v2086, %v1614
      %v2120 = vsel %vm1830, %v2088, %v1616
      %v2122 = vsel %vm1830, %v2090, %v1618
      %v2124 = vsel %vm1863, %v2092, %v1624
      %v2126 = vsel %vm1863, %v2094, %v1626
      %v2128 = vsel %vm1863, %v2096, %v1628
      %v2130 = vsel %vm1863, %v2098, %v1630
      %v2132 = vsel %vm1863, %v2100, %v1632
      %v2134 = vsel %vm1863, %v2102, %v1634
      %v2136 = vsel %vm1863, %v2104, %v1636
      %v2138 = vsel %vm1863, %v2106, %v1638
      %v2140 = vsel %vm1863, %v2108, %v1640
      %v2142 = vsel %vm1863, %v2110, %v1642
      %v2144 = vsel %vm1863, %v2112, %v1644
      %v2146 = vsel %vm1863, %v2114, %v1646
      %v2148 = vsel %vm1863, %v2116, %v1648
      %v2150 = vsel %vm1863, %v2118, %v1650
      %v2152 = vsel %vm1863, %v2120, %v1652
      %v2154 = vsel %vm1863, %v2122, %v1654
      %v2156 = vsel %vm1896, %v2124, %v1665
      %v2158 = vsel %vm1896, %v2126, %v1667
      %v2160 = vsel %vm1896, %v2128, %v1669
      %v2162 = vsel %vm1896, %v2130, %v1671
      %v2164 = vsel %vm1896, %v2132, %v1673
      %v2166 = vsel %vm1896, %v2134, %v1675
      %v2168 = vsel %vm1896, %v2136, %v1677
      %v2170 = vsel %vm1896, %v2138, %v1679
      %v2172 = vsel %vm1896, %v2140, %v1681
      %v2174 = vsel %vm1896, %v2142, %v1683
      %v2176 = vsel %vm1896, %v2144, %v1685
      %v2178 = vsel %vm1896, %v2146, %v1687
      %v2180 = vsel %vm1896, %v2148, %v1689
      %v2182 = vsel %vm1896, %v2150, %v1691
      %v2184 = vsel %vm1896, %v2152, %v1693
      %v2186 = vsel %vm1896, %v2154, %v1695
      %v2188 = vsel %vm1929, %v2156, %v1700
      %v2190 = vsel %vm1929, %v2158, %v1702
      %v2192 = vsel %vm1929, %v2160, %v1704
      %v2194 = vsel %vm1929, %v2162, %v1706
      %v2196 = vsel %vm1929, %v2164, %v1708
      %v2198 = vsel %vm1929, %v2166, %v1710
      %v2200 = vsel %vm1929, %v2168, %v1712
      %v2202 = vsel %vm1929, %v2170, %v1714
      %v2204 = vsel %vm1929, %v2172, %v1716
      %v2206 = vsel %vm1929, %v2174, %v1718
      %v2208 = vsel %vm1929, %v2176, %v1720
      %v2210 = vsel %vm1929, %v2178, %v1722
      %v2212 = vsel %vm1929, %v2180, %v1724
      %v2214 = vsel %vm1929, %v2182, %v1726
      %v2216 = vsel %vm1929, %v2184, %v1728
      %v2218 = vsel %vm1929, %v2186, %v1730
      %v2220 = vsel %vm1962, %v2188, %v1733
      %v2223 = vsel %vm1962, %v2190, %v1735
      %v2226 = vsel %vm1962, %v2192, %v1737
      %v2229 = vsel %vm1962, %v2194, %v1739
      %v2232 = vsel %vm1962, %v2196, %v1741
      %v2235 = vsel %vm1962, %v2198, %v1743
      %v2238 = vsel %vm1962, %v2200, %v1745
      %v2241 = vsel %vm1962, %v2202, %v1747
      %v2244 = vsel %vm1962, %v2204, %v1749
      %v2247 = vsel %vm1962, %v2206, %v1751
      %v2250 = vsel %vm1962, %v2208, %v1753
      %v2253 = vsel %vm1962, %v2210, %v1755
      %v2256 = vsel %vm1962, %v2212, %v1757
      %v2259 = vsel %vm1962, %v2214, %v1759
      %v2262 = vsel %vm1962, %v2216, %v1761
      %v2265 = vsel %vm1962, %v2218, %v1763
      %v2267 = vshrl.u32 %v802, 16
      %v2269 = vshll.u32 %v802, 16
      %v2271 = vrot.slane %v2269, 1
      %v2272 = vor.u32 %v2267, %v2271
      %v2273 = vshll.u32 %v823, 16
      %v2275 = vrot.slane %v2273, 1
      %v2276 = vsel %vm825, %v2272, %v2275
      %v2277 = vshrl.u32 %v823, 16
      %2279 = vrot.lane.b32.xlu0 %v1162, 16
      %v2280 = vpop.permute.xlu0 %2279
      %2281 = vrot.lane.b32.xlu0 %v1171, 16
      %v2282 = vpop.permute.xlu0 %2281
      %2283 = vrot.lane.b32.xlu0 %v1180, 16
      %v2284 = vpop.permute.xlu0 %2283
      %2285 = vrot.lane.b32.xlu0 %v1189, 16
      %v2286 = vpop.permute.xlu0 %2285
      %2287 = vrot.lane.b32.xlu0 %v1198, 16
      %v2288 = vpop.permute.xlu0 %2287
      %2289 = vrot.lane.b32.xlu0 %v1207, 16
      %v2290 = vpop.permute.xlu0 %2289
      %2291 = vrot.lane.b32.xlu0 %v1216, 16
      %v2292 = vpop.permute.xlu0 %2291
      %2293 = vrot.lane.b32.xlu0 %v1225, 16
      %v2294 = vpop.permute.xlu0 %2293
      %2295 = vrot.lane.b32.xlu0 %v1234, 16
      %v2296 = vpop.permute.xlu0 %2295
      %2297 = vrot.lane.b32.xlu0 %v1243, 16
      %v2298 = vpop.permute.xlu0 %2297
      %2299 = vrot.lane.b32.xlu0 %v1252, 16
      %v2300 = vpop.permute.xlu0 %2299
      %2301 = vrot.lane.b32.xlu0 %v1261, 16
      %v2302 = vpop.permute.xlu0 %2301
      %2303 = vrot.lane.b32.xlu0 %v1270, 16
      %v2304 = vpop.permute.xlu0 %2303
      %2305 = vrot.lane.b32.xlu0 %v1431, 16
      %v2306 = vpop.permute.xlu0 %2305
      %2307 = vrot.lane.b32.xlu0 %v1503, 16
      %v2308 = vpop.permute.xlu0 %2307
      %2309 = vrot.lane.b32.xlu0 %v1586, 16
      %v2310 = vpop.permute.xlu0 %2309
      %2311 = vrot.lane.b32.xlu0 %v1658, 16
      %v2312 = vpop.permute.xlu0 %2311
      %2313 = vrot.lane.b32.xlu0 %v2276, 16
      %v2314 = vpop.permute.xlu0 %2313
      %2315 = vrot.lane.b32.xlu0 %v2277, 16
      %v2316 = vpop.permute.xlu0 %2315
      %v2318 = vrot.slane %v802, 1
      %v2319 = vrot.slane %v823, 1
      %v2320 = vsel %vm1050, %v2318, %v2319
      %2321 = vrot.lane.b32.xlu0 %v1061, 32
      %v2322 = vpop.permute.xlu0 %2321
      %2323 = vrot.lane.b32.xlu0 %v1064, 32
      %v2324 = vpop.permute.xlu0 %2323
      %2325 = vrot.lane.b32.xlu0 %v1067, 32
      %v2326 = vpop.permute.xlu0 %2325
      %2327 = vrot.lane.b32.xlu0 %v1070, 32
      %v2328 = vpop.permute.xlu0 %2327
      %2329 = vrot.lane.b32.xlu0 %v1073, 32
      %v2330 = vpop.permute.xlu0 %2329
      %2331 = vrot.lane.b32.xlu0 %v1076, 32
      %v2332 = vpop.permute.xlu0 %2331
      %2333 = vrot.lane.b32.xlu0 %v1079, 32
      %v2334 = vpop.permute.xlu0 %2333
      %2335 = vrot.lane.b32.xlu0 %v1082, 32
      %v2336 = vpop.permute.xlu0 %2335
      %2337 = vrot.lane.b32.xlu0 %v1085, 32
      %v2338 = vpop.permute.xlu0 %2337
      %2339 = vrot.lane.b32.xlu0 %v1088, 32
      %v2340 = vpop.permute.xlu0 %2339
      %2341 = vrot.lane.b32.xlu0 %v1091, 32
      %v2342 = vpop.permute.xlu0 %2341
      %2343 = vrot.lane.b32.xlu0 %v1094, 32
      %v2344 = vpop.permute.xlu0 %2343
      %2345 = vrot.lane.b32.xlu0 %v1097, 32
      %v2346 = vpop.permute.xlu0 %2345
      %2347 = vrot.lane.b32.xlu0 %v1467, 32
      %v2348 = vpop.permute.xlu0 %2347
      %2349 = vrot.lane.b32.xlu0 %v1466, 32
      %v2350 = vpop.permute.xlu0 %2349
      %2351 = vrot.lane.b32.xlu0 %v1622, 32
      %v2352 = vpop.permute.xlu0 %2351
      %2353 = vrot.lane.b32.xlu0 %v1621, 32
      %v2354 = vpop.permute.xlu0 %2353
      %2355 = vrot.lane.b32.xlu0 %v2320, 32
      %v2356 = vpop.permute.xlu0 %2355
      %2357 = vrot.lane.b32.xlu0 %v2319, 32
      %v2358 = vpop.permute.xlu0 %2357
      %v2359 = vrot.slane %v2267, 1
      %v2360 = vrot.slane %v2269, 2
      %v2361 = vor.u32 %v2359, %v2360
      %v2362 = vrot.slane %v2277, 1
      %v2363 = vrot.slane %v2273, 2
      %v2364 = vor.u32 %v2362, %v2363
      %v2365 = vsel %vm1131, %v2361, %v2364
      %2366 = vrot.lane.b32.xlu0 %v1164, 48
      %v2367 = vpop.permute.xlu0 %2366
      %2368 = vrot.lane.b32.xlu0 %v1173, 48
      %v2369 = vpop.permute.xlu0 %2368
      %2370 = vrot.lane.b32.xlu0 %v1182, 48
      %v2371 = vpop.permute.xlu0 %2370
      %2372 = vrot.lane.b32.xlu0 %v1191, 48
      %v2373 = vpop.permute.xlu0 %2372
      %2374 = vrot.lane.b32.xlu0 %v1200, 48
      %v2375 = vpop.permute.xlu0 %2374
      %2376 = vrot.lane.b32.xlu0 %v1209, 48
      %v2377 = vpop.permute.xlu0 %2376
      %2378 = vrot.lane.b32.xlu0 %v1218, 48
      %v2379 = vpop.permute.xlu0 %2378
      %2380 = vrot.lane.b32.xlu0 %v1227, 48
      %v2381 = vpop.permute.xlu0 %2380
      %2382 = vrot.lane.b32.xlu0 %v1236, 48
      %v2383 = vpop.permute.xlu0 %2382
      %2384 = vrot.lane.b32.xlu0 %v1245, 48
      %v2385 = vpop.permute.xlu0 %2384
      %2386 = vrot.lane.b32.xlu0 %v1254, 48
      %v2387 = vpop.permute.xlu0 %2386
      %2388 = vrot.lane.b32.xlu0 %v1263, 48
      %v2389 = vpop.permute.xlu0 %2388
      %2390 = vrot.lane.b32.xlu0 %v1272, 48
      %v2391 = vpop.permute.xlu0 %2390
      %2392 = vrot.lane.b32.xlu0 %v1508, 48
      %v2393 = vpop.permute.xlu0 %2392
      %2394 = vrot.lane.b32.xlu0 %v1505, 48
      %v2395 = vpop.permute.xlu0 %2394
      %2396 = vrot.lane.b32.xlu0 %v1663, 48
      %v2397 = vpop.permute.xlu0 %2396
      %2398 = vrot.lane.b32.xlu0 %v1660, 48
      %v2399 = vpop.permute.xlu0 %2398
      %2400 = vrot.lane.b32.xlu0 %v2365, 48
      %v2401 = vpop.permute.xlu0 %2400
      %2402 = vrot.lane.b32.xlu0 %v2362, 48
      %v2403 = vpop.permute.xlu0 %2402
      %v2404 = vrot.slane %v866, 7
      %v2405 = vor.u32 %v2404, %v868
      %v2406 = vrot.slane %v876, 7
      %v2407 = vor.u32 %v2406, %v878
      %v2408 = vrot.slane %v886, 7
      %v2409 = vor.u32 %v2408, %v888
      %v2410 = vrot.slane %v896, 7
      %v2411 = vor.u32 %v2410, %v898
      %v2412 = vrot.slane %v906, 7
      %v2413 = vor.u32 %v2412, %v908
      %v2414 = vrot.slane %v916, 7
      %v2415 = vor.u32 %v2414, %v918
      %v2416 = vrot.slane %v926, 7
      %v2417 = vor.u32 %v2416, %v928
      %v2418 = vrot.slane %v936, 7
      %v2419 = vor.u32 %v2418, %v938
      %v2420 = vrot.slane %v946, 7
      %v2421 = vor.u32 %v2420, %v948
      %v2422 = vrot.slane %v956, 7
      %v2423 = vor.u32 %v2422, %v958
      %v2424 = vrot.slane %v966, 7
      %v2425 = vor.u32 %v2424, %v968
      %v2426 = vrot.slane %v976, 7
      %v2427 = vor.u32 %v2426, %v978
      %v2428 = vrot.slane %v1422, 7
      %v2429 = vor.u32 %v2428, %v1424
      %v2430 = vrot.slane %v1577, 7
      %v2431 = vor.u32 %v2430, %v1579
      %v2432 = vrot.slane %v2267, 7
      %v2433 = vor.u32 %v2432, %v2269
      %v2434 = vshrl.u32 %v804, 16
      %v2436 = vrot.slane %v2434, 7
      %v2437 = vshll.u32 %v804, 16
      %v2439 = vor.u32 %v2436, %v2437
      %2440 = vrot.lane.b32.xlu0 %v2405, 64
      %v2441 = vpop.permute.xlu0 %2440
      %2442 = vrot.lane.b32.xlu0 %v2404, 64
      %v2443 = vpop.permute.xlu0 %2442
      %2444 = vrot.lane.b32.xlu0 %v2407, 64
      %v2445 = vpop.permute.xlu0 %2444
      %2446 = vrot.lane.b32.xlu0 %v2406, 64
      %v2447 = vpop.permute.xlu0 %2446
      %2448 = vrot.lane.b32.xlu0 %v2409, 64
      %v2449 = vpop.permute.xlu0 %2448
      %2450 = vrot.lane.b32.xlu0 %v2408, 64
      %v2451 = vpop.permute.xlu0 %2450
      %2452 = vrot.lane.b32.xlu0 %v2411, 64
      %v2453 = vpop.permute.xlu0 %2452
      %2454 = vrot.lane.b32.xlu0 %v2410, 64
      %v2455 = vpop.permute.xlu0 %2454
      %2456 = vrot.lane.b32.xlu0 %v2413, 64
      %v2457 = vpop.permute.xlu0 %2456
      %2458 = vrot.lane.b32.xlu0 %v2412, 64
      %v2459 = vpop.permute.xlu0 %2458
      %2460 = vrot.lane.b32.xlu0 %v2415, 64
      %v2461 = vpop.permute.xlu0 %2460
      %2462 = vrot.lane.b32.xlu0 %v2414, 64
      %v2463 = vpop.permute.xlu0 %2462
      %2464 = vrot.lane.b32.xlu0 %v2417, 64
      %v2465 = vpop.permute.xlu0 %2464
      %2466 = vrot.lane.b32.xlu0 %v2416, 64
      %v2467 = vpop.permute.xlu0 %2466
      %2468 = vrot.lane.b32.xlu0 %v2419, 64
      %v2469 = vpop.permute.xlu0 %2468
      %2470 = vrot.lane.b32.xlu0 %v2418, 64
      %v2471 = vpop.permute.xlu0 %2470
      %2472 = vrot.lane.b32.xlu0 %v2421, 64
      %v2473 = vpop.permute.xlu0 %2472
      %2474 = vrot.lane.b32.xlu0 %v2420, 64
      %v2475 = vpop.permute.xlu0 %2474
      %2476 = vrot.lane.b32.xlu0 %v2423, 64
      %v2477 = vpop.permute.xlu0 %2476
      %2478 = vrot.lane.b32.xlu0 %v2422, 64
      %v2479 = vpop.permute.xlu0 %2478
      %2480 = vrot.lane.b32.xlu0 %v2425, 64
      %v2481 = vpop.permute.xlu0 %2480
      %2482 = vrot.lane.b32.xlu0 %v2424, 64
      %v2483 = vpop.permute.xlu0 %2482
      %2484 = vrot.lane.b32.xlu0 %v2427, 64
      %v2485 = vpop.permute.xlu0 %2484
      %2486 = vrot.lane.b32.xlu0 %v2426, 64
      %v2487 = vpop.permute.xlu0 %2486
      %2488 = vrot.lane.b32.xlu0 %v2429, 64
      %v2489 = vpop.permute.xlu0 %2488
      %2490 = vrot.lane.b32.xlu0 %v2428, 64
      %v2491 = vpop.permute.xlu0 %2490
      %2492 = vrot.lane.b32.xlu0 %v2431, 64
      %v2493 = vpop.permute.xlu0 %2492
      %2494 = vrot.lane.b32.xlu0 %v2430, 64
      %v2495 = vpop.permute.xlu0 %2494
      %2496 = vrot.lane.b32.xlu0 %v2433, 64
      %v2497 = vpop.permute.xlu0 %2496
      %2498 = vrot.lane.b32.xlu0 %v2432, 64
      %v2499 = vpop.permute.xlu0 %2498
      %2500 = vrot.lane.b32.xlu0 %v2439, 64
      %v2501 = vpop.permute.xlu0 %2500
      %2502 = vrot.lane.b32.xlu0 %v2436, 64
      %v2503 = vpop.permute.xlu0 %2502
      %2506 = vrot.lane.b32.xlu0 %v809, 80
      %v2507 = vpop.permute.xlu0 %2506
      %2508 = vrot.lane.b32.xlu0 %v810, 80
      %v2509 = vpop.permute.xlu0 %2508
      %2510 = vrot.lane.b32.xlu0 %v811, 80
      %v2511 = vpop.permute.xlu0 %2510
      %2512 = vrot.lane.b32.xlu0 %v812, 80
      %v2513 = vpop.permute.xlu0 %2512
      %2514 = vrot.lane.b32.xlu0 %v813, 80
      %v2515 = vpop.permute.xlu0 %2514
      %2516 = vrot.lane.b32.xlu0 %v814, 80
      %v2517 = vpop.permute.xlu0 %2516
      %2518 = vrot.lane.b32.xlu0 %v815, 80
      %v2519 = vpop.permute.xlu0 %2518
      %2520 = vrot.lane.b32.xlu0 %v816, 80
      %v2521 = vpop.permute.xlu0 %2520
      %2522 = vrot.lane.b32.xlu0 %v817, 80
      %v2523 = vpop.permute.xlu0 %2522
      %2524 = vrot.lane.b32.xlu0 %v818, 80
      %v2525 = vpop.permute.xlu0 %2524
      %2526 = vrot.lane.b32.xlu0 %v819, 80
      %v2527 = vpop.permute.xlu0 %2526
      %2528 = vrot.lane.b32.xlu0 %v820, 80
      %v2529 = vpop.permute.xlu0 %2528
      %2530 = vrot.lane.b32.xlu0 %v821, 80
      %v2531 = vpop.permute.xlu0 %2530
      %2532 = vrot.lane.b32.xlu0 %v800, 80
      %v2533 = vpop.permute.xlu0 %2532
      %2534 = vrot.lane.b32.xlu0 %v822, 80
      %v2535 = vpop.permute.xlu0 %2534
      %2536 = vrot.lane.b32.xlu0 %v802, 80
      %v2537 = vpop.permute.xlu0 %2536
      %2538 = vrot.lane.b32.xlu0 %v823, 80
      %v2539 = vpop.permute.xlu0 %2538
      %2540 = vrot.lane.b32.xlu0 %v804, 80
      %v2541 = vpop.permute.xlu0 %2540
      %2542 = vrot.lane.b32.xlu0 %v824, 80
      %v2543 = vpop.permute.xlu0 %2542
      %v2544 = vrot.slane %v2437, 1
      %v2545 = vor.u32 %v2434, %v2544
      %v2546 = vshll.u32 %v824, 16
      %v2548 = vrot.slane %v2546, 1
      %v2549 = vsel %vm825, %v2545, %v2548
      %v2550 = vshrl.u32 %v824, 16
      %2552 = vrot.lane.b32.xlu0 %v1171, 96
      %v2553 = vpop.permute.xlu0 %2552
      %2554 = vrot.lane.b32.xlu0 %v1180, 96
      %v2555 = vpop.permute.xlu0 %2554
      %2556 = vrot.lane.b32.xlu0 %v1189, 96
      %v2557 = vpop.permute.xlu0 %2556
      %2558 = vrot.lane.b32.xlu0 %v1198, 96
      %v2559 = vpop.permute.xlu0 %2558
      %2560 = vrot.lane.b32.xlu0 %v1207, 96
      %v2561 = vpop.permute.xlu0 %2560
      %2562 = vrot.lane.b32.xlu0 %v1216, 96
      %v2563 = vpop.permute.xlu0 %2562
      %2564 = vrot.lane.b32.xlu0 %v1225, 96
      %v2565 = vpop.permute.xlu0 %2564
      %2566 = vrot.lane.b32.xlu0 %v1234, 96
      %v2567 = vpop.permute.xlu0 %2566
      %2568 = vrot.lane.b32.xlu0 %v1243, 96
      %v2569 = vpop.permute.xlu0 %2568
      %2570 = vrot.lane.b32.xlu0 %v1252, 96
      %v2571 = vpop.permute.xlu0 %2570
      %2572 = vrot.lane.b32.xlu0 %v1261, 96
      %v2573 = vpop.permute.xlu0 %2572
      %2574 = vrot.lane.b32.xlu0 %v1270, 96
      %v2575 = vpop.permute.xlu0 %2574
      %2576 = vrot.lane.b32.xlu0 %v1503, 96
      %v2577 = vpop.permute.xlu0 %2576
      %2578 = vrot.lane.b32.xlu0 %v1586, 96
      %v2579 = vpop.permute.xlu0 %2578
      %2580 = vrot.lane.b32.xlu0 %v1658, 96
      %v2581 = vpop.permute.xlu0 %2580
      %2582 = vrot.lane.b32.xlu0 %v2276, 96
      %v2583 = vpop.permute.xlu0 %2582
      %2584 = vrot.lane.b32.xlu0 %v2277, 96
      %v2585 = vpop.permute.xlu0 %2584
      %2586 = vrot.lane.b32.xlu0 %v2549, 96
      %v2587 = vpop.permute.xlu0 %2586
      %2588 = vrot.lane.b32.xlu0 %v2550, 96
      %v2589 = vpop.permute.xlu0 %2588
      %v2590 = vrot.slane %v804, 1
      %v2591 = vrot.slane %v824, 1
      %v2592 = vsel %vm1050, %v2590, %v2591
      %2593 = vrot.lane.b32.xlu0 %v1064, 112
      %v2594 = vpop.permute.xlu0 %2593
      %2595 = vrot.lane.b32.xlu0 %v1067, 112
      %v2596 = vpop.permute.xlu0 %2595
      %2597 = vrot.lane.b32.xlu0 %v1070, 112
      %v2598 = vpop.permute.xlu0 %2597
      %2599 = vrot.lane.b32.xlu0 %v1073, 112
      %v2600 = vpop.permute.xlu0 %2599
      %2601 = vrot.lane.b32.xlu0 %v1076, 112
      %v2602 = vpop.permute.xlu0 %2601
      %2603 = vrot.lane.b32.xlu0 %v1079, 112
      %v2604 = vpop.permute.xlu0 %2603
      %2605 = vrot.lane.b32.xlu0 %v1082, 112
      %v2606 = vpop.permute.xlu0 %2605
      %2607 = vrot.lane.b32.xlu0 %v1085, 112
      %v2608 = vpop.permute.xlu0 %2607
      %2609 = vrot.lane.b32.xlu0 %v1088, 112
      %v2610 = vpop.permute.xlu0 %2609
      %2611 = vrot.lane.b32.xlu0 %v1091, 112
      %v2612 = vpop.permute.xlu0 %2611
      %2613 = vrot.lane.b32.xlu0 %v1094, 112
      %v2614 = vpop.permute.xlu0 %2613
      %2615 = vrot.lane.b32.xlu0 %v1097, 112
      %v2616 = vpop.permute.xlu0 %2615
      %2617 = vrot.lane.b32.xlu0 %v1466, 112
      %v2618 = vpop.permute.xlu0 %2617
      %2619 = vrot.lane.b32.xlu0 %v1622, 112
      %v2620 = vpop.permute.xlu0 %2619
      %2621 = vrot.lane.b32.xlu0 %v1621, 112
      %v2622 = vpop.permute.xlu0 %2621
      %2623 = vrot.lane.b32.xlu0 %v2320, 112
      %v2624 = vpop.permute.xlu0 %2623
      %2625 = vrot.lane.b32.xlu0 %v2319, 112
      %v2626 = vpop.permute.xlu0 %2625
      %2627 = vrot.lane.b32.xlu0 %v2592, 112
      %v2628 = vpop.permute.xlu0 %2627
      %2629 = vrot.lane.b32.xlu0 %v2591, 112
      %v2630 = vpop.permute.xlu0 %2629
      %v2631 = vrot.slane %v2434, 1
      %v2632 = vrot.slane %v2437, 2
      %v2633 = vor.u32 %v2631, %v2632
      %v2634 = vrot.slane %v2550, 1
      %v2635 = vrot.slane %v2546, 2
      %v2636 = vor.u32 %v2634, %v2635
      %v2637 = vsel %vm1131, %v2633, %v2636
      %v2639 = vsel %vm1764, %v808, %v2280
      %v2641 = vsel %vm1764, %v809, %v2282
      %v2643 = vsel %vm1764, %v810, %v2284
      %v2645 = vsel %vm1764, %v811, %v2286
      %v2647 = vsel %vm1764, %v812, %v2288
      %v2649 = vsel %vm1764, %v813, %v2290
      %v2651 = vsel %vm1764, %v814, %v2292
      %v2653 = vsel %vm1764, %v815, %v2294
      %v2655 = vsel %vm1764, %v816, %v2296
      %v2657 = vsel %vm1764, %v817, %v2298
      %v2659 = vsel %vm1764, %v818, %v2300
      %v2661 = vsel %vm1764, %v819, %v2302
      %v2663 = vsel %vm1764, %v820, %v2304
      %v2665 = vsel %vm1764, %v798, %v2306
      %v2667 = vsel %vm1764, %v821, %v2308
      %v2669 = vsel %vm1764, %v800, %v2310
      %v2671 = vsel %vm1764, %v822, %v2312
      %v2673 = vsel %vm1764, %v802, %v2314
      %v2675 = vsel %vm1764, %v823, %v2316
      %v2677 = vsel %vm1797, %v2639, %v2322
      %v2679 = vsel %vm1797, %v2641, %v2324
      %v2681 = vsel %vm1797, %v2643, %v2326
      %v2683 = vsel %vm1797, %v2645, %v2328
      %v2685 = vsel %vm1797, %v2647, %v2330
      %v2687 = vsel %vm1797, %v2649, %v2332
      %v2689 = vsel %vm1797, %v2651, %v2334
      %v2691 = vsel %vm1797, %v2653, %v2336
      %v2693 = vsel %vm1797, %v2655, %v2338
      %v2695 = vsel %vm1797, %v2657, %v2340
      %v2697 = vsel %vm1797, %v2659, %v2342
      %v2699 = vsel %vm1797, %v2661, %v2344
      %v2701 = vsel %vm1797, %v2663, %v2346
      %v2703 = vsel %vm1797, %v2665, %v2348
      %v2705 = vsel %vm1797, %v2667, %v2350
      %v2707 = vsel %vm1797, %v2669, %v2352
      %v2709 = vsel %vm1797, %v2671, %v2354
      %v2711 = vsel %vm1797, %v2673, %v2356
      %v2713 = vsel %vm1797, %v2675, %v2358
      %v2715 = vsel %vm1830, %v2677, %v2367
      %v2717 = vsel %vm1830, %v2679, %v2369
      %v2719 = vsel %vm1830, %v2681, %v2371
      %v2721 = vsel %vm1830, %v2683, %v2373
      %v2723 = vsel %vm1830, %v2685, %v2375
      %v2725 = vsel %vm1830, %v2687, %v2377
      %v2727 = vsel %vm1830, %v2689, %v2379
      %v2729 = vsel %vm1830, %v2691, %v2381
      %v2731 = vsel %vm1830, %v2693, %v2383
      %v2733 = vsel %vm1830, %v2695, %v2385
      %v2735 = vsel %vm1830, %v2697, %v2387
      %v2737 = vsel %vm1830, %v2699, %v2389
      %v2739 = vsel %vm1830, %v2701, %v2391
      %v2741 = vsel %vm1830, %v2703, %v2393
      %v2743 = vsel %vm1830, %v2705, %v2395
      %v2745 = vsel %vm1830, %v2707, %v2397
      %v2747 = vsel %vm1830, %v2709, %v2399
      %v2749 = vsel %vm1830, %v2711, %v2401
      %v2751 = vsel %vm1830, %v2713, %v2403
      %v2753 = vsel %vm1863, %v1838, %v2441
      %v2755 = vsel %vm1863, %v2715, %v2443
      %v2757 = vsel %vm1863, %v1840, %v2445
      %v2759 = vsel %vm1863, %v2717, %v2447
      %v2761 = vsel %vm1863, %v1842, %v2449
      %v2763 = vsel %vm1863, %v2719, %v2451
      %v2765 = vsel %vm1863, %v1844, %v2453
      %v2767 = vsel %vm1863, %v2721, %v2455
      %v2769 = vsel %vm1863, %v1846, %v2457
      %v2771 = vsel %vm1863, %v2723, %v2459
      %v2773 = vsel %vm1863, %v1848, %v2461
      %v2775 = vsel %vm1863, %v2725, %v2463
      %v2777 = vsel %vm1863, %v1850, %v2465
      %v2779 = vsel %vm1863, %v2727, %v2467
      %v2781 = vsel %vm1863, %v1852, %v2469
      %v2783 = vsel %vm1863, %v2729, %v2471
      %v2785 = vsel %vm1863, %v1854, %v2473
      %v2787 = vsel %vm1863, %v2731, %v2475
      %v2789 = vsel %vm1863, %v1856, %v2477
      %v2791 = vsel %vm1863, %v2733, %v2479
      %v2793 = vsel %vm1863, %v1858, %v2481
      %v2795 = vsel %vm1863, %v2735, %v2483
      %v2797 = vsel %vm1863, %v1860, %v2485
      %v2799 = vsel %vm1863, %v2737, %v2487
      %v2801 = vsel %vm1863, %v1862, %v2489
      %v2803 = vsel %vm1863, %v2739, %v2491
      %v2805 = vsel %vm1863, %v2741, %v2493
      %v2807 = vsel %vm1863, %v2743, %v2495
      %v2809 = vsel %vm1863, %v2745, %v2497
      %v2811 = vsel %vm1863, %v2747, %v2499
      %v2813 = vsel %vm1863, %v2749, %v2501
      %v2815 = vsel %vm1863, %v2751, %v2503
      %v2816 = vsel %vm1896, %v2753, %v1397
      %v2818 = vsel %vm1896, %v2755, %v2507
      %v2819 = vsel %vm1896, %v2757, %v1399
      %v2821 = vsel %vm1896, %v2759, %v2509
      %v2822 = vsel %vm1896, %v2761, %v1401
      %v2824 = vsel %vm1896, %v2763, %v2511
      %v2825 = vsel %vm1896, %v2765, %v1403
      %v2827 = vsel %vm1896, %v2767, %v2513
      %v2828 = vsel %vm1896, %v2769, %v1405
      %v2830 = vsel %vm1896, %v2771, %v2515
      %v2831 = vsel %vm1896, %v2773, %v1407
      %v2833 = vsel %vm1896, %v2775, %v2517
      %v2834 = vsel %vm1896, %v2777, %v1409
      %v2836 = vsel %vm1896, %v2779, %v2519
      %v2837 = vsel %vm1896, %v2781, %v1411
      %v2839 = vsel %vm1896, %v2783, %v2521
      %v2840 = vsel %vm1896, %v2785, %v1413
      %v2842 = vsel %vm1896, %v2787, %v2523
      %v2843 = vsel %vm1896, %v2789, %v1415
      %v2845 = vsel %vm1896, %v2791, %v2525
      %v2846 = vsel %vm1896, %v2793, %v1417
      %v2848 = vsel %vm1896, %v2795, %v2527
      %v2849 = vsel %vm1896, %v2797, %v1419
      %v2851 = vsel %vm1896, %v2799, %v2529
      %v2852 = vsel %vm1896, %v2801, %v1421
      %v2854 = vsel %vm1896, %v2803, %v2531
      %v2856 = vsel %vm1896, %v2805, %v2533
      %v2858 = vsel %vm1896, %v2807, %v2535
      %v2860 = vsel %vm1896, %v2809, %v2537
      %v2862 = vsel %vm1896, %v2811, %v2539
      %v2864 = vsel %vm1896, %v2813, %v2541
      %v2866 = vsel %vm1896, %v2815, %v2543
      %v2867 = vsel %vm1929, %v2816, %v1439
      %v2869 = vsel %vm1929, %v2818, %v2553
      %v2870 = vsel %vm1929, %v2819, %v1441
      %v2872 = vsel %vm1929, %v2821, %v2555
      %v2873 = vsel %vm1929, %v2822, %v1443
      %v2875 = vsel %vm1929, %v2824, %v2557
      %v2876 = vsel %vm1929, %v2825, %v1445
      %v2878 = vsel %vm1929, %v2827, %v2559
      %v2879 = vsel %vm1929, %v2828, %v1447
      %v2881 = vsel %vm1929, %v2830, %v2561
      %v2882 = vsel %vm1929, %v2831, %v1449
      %v2884 = vsel %vm1929, %v2833, %v2563
      %v2885 = vsel %vm1929, %v2834, %v1451
      %v2887 = vsel %vm1929, %v2836, %v2565
      %v2888 = vsel %vm1929, %v2837, %v1453
      %v2890 = vsel %vm1929, %v2839, %v2567
      %v2891 = vsel %vm1929, %v2840, %v1455
      %v2893 = vsel %vm1929, %v2842, %v2569
      %v2894 = vsel %vm1929, %v2843, %v1457
      %v2896 = vsel %vm1929, %v2845, %v2571
      %v2897 = vsel %vm1929, %v2846, %v1459
      %v2899 = vsel %vm1929, %v2848, %v2573
      %v2900 = vsel %vm1929, %v2849, %v1461
      %v2902 = vsel %vm1929, %v2851, %v2575
      %v2903 = vsel %vm1929, %v2852, %v1463
      %v2905 = vsel %vm1929, %v2854, %v2577
      %v2907 = vsel %vm1929, %v2856, %v2579
      %v2909 = vsel %vm1929, %v2858, %v2581
      %v2911 = vsel %vm1929, %v2860, %v2583
      %v2913 = vsel %vm1929, %v2862, %v2585
      %v2915 = vsel %vm1929, %v2864, %v2587
      %v2917 = vsel %vm1929, %v2866, %v2589
      %v2918 = vsel %vm1962, %v2867, %v1475
      %v2920 = vsel %vm1962, %v2869, %v2594
      %v2921 = vsel %vm1962, %v2870, %v1477
      %v2923 = vsel %vm1962, %v2872, %v2596
      %v2924 = vsel %vm1962, %v2873, %v1479
      %v2926 = vsel %vm1962, %v2875, %v2598
      %v2927 = vsel %vm1962, %v2876, %v1481
      %v2929 = vsel %vm1962, %v2878, %v2600
      %v2930 = vsel %vm1962, %v2879, %v1483
      %v2932 = vsel %vm1962, %v2881, %v2602
      %v2933 = vsel %vm1962, %v2882, %v1485
      %v2935 = vsel %vm1962, %v2884, %v2604
      %v2936 = vsel %vm1962, %v2885, %v1487
      %v2938 = vsel %vm1962, %v2887, %v2606
      %v2939 = vsel %vm1962, %v2888, %v1489
      %v2941 = vsel %vm1962, %v2890, %v2608
      %v2942 = vsel %vm1962, %v2891, %v1491
      %v2944 = vsel %vm1962, %v2893, %v2610
      %v2945 = vsel %vm1962, %v2894, %v1493
      %v2947 = vsel %vm1962, %v2896, %v2612
      %v2948 = vsel %vm1962, %v2897, %v1495
      %v2950 = vsel %vm1962, %v2899, %v2614
      %v2951 = vsel %vm1962, %v2900, %v1497
      %v2953 = vsel %vm1962, %v2902, %v2616
      %v2954 = vsel %vm1962, %v2903, %v1499
      %v2956 = vsel %vm1962, %v2905, %v2618
      %v2958 = vsel %vm1962, %v2907, %v2620
      %v2960 = vsel %vm1962, %v2909, %v2622
      %v2962 = vsel %vm1962, %v2911, %v2624
      %v2964 = vsel %vm1962, %v2913, %v2626
      %v2966 = vsel %vm1962, %v2915, %v2628
      %v2968 = vsel %vm1962, %v2917, %v2630
      %v2969 = vshrl.u32 %v2918, 16
      %v2971 = vshll.u32 %v2918, 16
      %v2973 = vrot.slane %v2971, 1
      %v2974 = vor.u32 %v2969, %v2973
      %v2975 = vshll.u32 %v2920, 16
      %v2977 = vrot.slane %v2975, 1
      %v2978 = vsel %vm825, %v2974, %v2977
      %v2979 = vshrl.u32 %v1176, 16
      %v2981 = vshll.u32 %v1176, 16
      %v2983 = vrot.slane %v2981, 1
      %v2984 = vor.u32 %v2979, %v2983
      %v2986 = vshll.u32 %v1173, 16
      %v2988 = vrot.slane %v2986, 1
      %v2989 = vsel %vm825, %v2984, %v2988
      %v2990 = vshrl.u32 %v2921, 16
      %v2992 = vshll.u32 %v2921, 16
      %v2994 = vrot.slane %v2992, 1
      %v2995 = vor.u32 %v2990, %v2994
      %v2996 = vshll.u32 %v2923, 16
      %v2998 = vrot.slane %v2996, 1
      %v2999 = vsel %vm825, %v2995, %v2998
      %v3000 = vshrl.u32 %v1185, 16
      %v3002 = vshll.u32 %v1185, 16
      %v3004 = vrot.slane %v3002, 1
      %v3005 = vor.u32 %v3000, %v3004
      %v3007 = vshll.u32 %v1182, 16
      %v3009 = vrot.slane %v3007, 1
      %v3010 = vsel %vm825, %v3005, %v3009
      %v3011 = vshrl.u32 %v2924, 16
      %v3013 = vshll.u32 %v2924, 16
      %v3015 = vrot.slane %v3013, 1
      %v3016 = vor.u32 %v3011, %v3015
      %v3017 = vshll.u32 %v2926, 16
      %v3019 = vrot.slane %v3017, 1
      %v3020 = vsel %vm825, %v3016, %v3019
      %v3021 = vshrl.u32 %v1194, 16
      %v3023 = vshll.u32 %v1194, 16
      %v3025 = vrot.slane %v3023, 1
      %v3026 = vor.u32 %v3021, %v3025
      %v3028 = vshll.u32 %v1191, 16
      %v3030 = vrot.slane %v3028, 1
      %v3031 = vsel %vm825, %v3026, %v3030
      %v3032 = vshrl.u32 %v2927, 16
      %v3034 = vshll.u32 %v2927, 16
      %v3036 = vrot.slane %v3034, 1
      %v3037 = vor.u32 %v3032, %v3036
      %v3038 = vshll.u32 %v2929, 16
      %v3040 = vrot.slane %v3038, 1
      %v3041 = vsel %vm825, %v3037, %v3040
      %v3042 = vshrl.u32 %v1203, 16
      %v3044 = vshll.u32 %v1203, 16
      %v3046 = vrot.slane %v3044, 1
      %v3047 = vor.u32 %v3042, %v3046
      %v3049 = vshll.u32 %v1200, 16
      %v3051 = vrot.slane %v3049, 1
      %v3052 = vsel %vm825, %v3047, %v3051
      %v3053 = vshrl.u32 %v2930, 16
      %v3055 = vshll.u32 %v2930, 16
      %v3057 = vrot.slane %v3055, 1
      %v3058 = vor.u32 %v3053, %v3057
      %v3059 = vshll.u32 %v2932, 16
      %v3061 = vrot.slane %v3059, 1
      %v3062 = vsel %vm825, %v3058, %v3061
      %v3063 = vshrl.u32 %v1212, 16
      %v3065 = vshll.u32 %v1212, 16
      %v3067 = vrot.slane %v3065, 1
      %v3068 = vor.u32 %v3063, %v3067
      %v3070 = vshll.u32 %v1209, 16
      %v3072 = vrot.slane %v3070, 1
      %v3073 = vsel %vm825, %v3068, %v3072
      %v3074 = vshrl.u32 %v2933, 16
      %v3076 = vshll.u32 %v2933, 16
      %v3078 = vrot.slane %v3076, 1
      %v3079 = vor.u32 %v3074, %v3078
      %v3080 = vshll.u32 %v2935, 16
      %v3082 = vrot.slane %v3080, 1
      %v3083 = vsel %vm825, %v3079, %v3082
      %v3084 = vshrl.u32 %v1221, 16
      %v3086 = vshll.u32 %v1221, 16
      %v3088 = vrot.slane %v3086, 1
      %v3089 = vor.u32 %v3084, %v3088
      %v3091 = vshll.u32 %v1218, 16
      %v3093 = vrot.slane %v3091, 1
      %v3094 = vsel %vm825, %v3089, %v3093
      %v3095 = vshrl.u32 %v2936, 16
      %v3097 = vshll.u32 %v2936, 16
      %v3099 = vrot.slane %v3097, 1
      %v3100 = vor.u32 %v3095, %v3099
      %v3101 = vshll.u32 %v2938, 16
      %v3103 = vrot.slane %v3101, 1
      %v3104 = vsel %vm825, %v3100, %v3103
      %v3105 = vshrl.u32 %v1230, 16
      %v3107 = vshll.u32 %v1230, 16
      %v3109 = vrot.slane %v3107, 1
      %v3110 = vor.u32 %v3105, %v3109
      %v3112 = vshll.u32 %v1227, 16
      %v3114 = vrot.slane %v3112, 1
      %v3115 = vsel %vm825, %v3110, %v3114
      %v3116 = vshrl.u32 %v2939, 16
      %v3118 = vshll.u32 %v2939, 16
      %v3120 = vrot.slane %v3118, 1
      %v3121 = vor.u32 %v3116, %v3120
      %v3122 = vshll.u32 %v2941, 16
      %v3124 = vrot.slane %v3122, 1
      %v3125 = vsel %vm825, %v3121, %v3124
      %v3126 = vshrl.u32 %v1239, 16
      %v3128 = vshll.u32 %v1239, 16
      %v3130 = vrot.slane %v3128, 1
      %v3131 = vor.u32 %v3126, %v3130
      %v3133 = vshll.u32 %v1236, 16
      %v3135 = vrot.slane %v3133, 1
      %v3136 = vsel %vm825, %v3131, %v3135
      %v3137 = vshrl.u32 %v2942, 16
      %v3139 = vshll.u32 %v2942, 16
      %v3141 = vrot.slane %v3139, 1
      %v3142 = vor.u32 %v3137, %v3141
      %v3143 = vshll.u32 %v2944, 16
      %v3145 = vrot.slane %v3143, 1
      %v3146 = vsel %vm825, %v3142, %v3145
      %v3147 = vshrl.u32 %v1248, 16
      %v3149 = vshll.u32 %v1248, 16
      %v3151 = vrot.slane %v3149, 1
      %v3152 = vor.u32 %v3147, %v3151
      %v3154 = vshll.u32 %v1245, 16
      %v3156 = vrot.slane %v3154, 1
      %v3157 = vsel %vm825, %v3152, %v3156
      %v3158 = vshrl.u32 %v2945, 16
      %v3160 = vshll.u32 %v2945, 16
      %v3162 = vrot.slane %v3160, 1
      %v3163 = vor.u32 %v3158, %v3162
      %v3164 = vshll.u32 %v2947, 16
      %v3166 = vrot.slane %v3164, 1
      %v3167 = vsel %vm825, %v3163, %v3166
      %v3168 = vshrl.u32 %v1257, 16
      %v3170 = vshll.u32 %v1257, 16
      %v3172 = vrot.slane %v3170, 1
      %v3173 = vor.u32 %v3168, %v3172
      %v3175 = vshll.u32 %v1254, 16
      %v3177 = vrot.slane %v3175, 1
      %v3178 = vsel %vm825, %v3173, %v3177
      %v3179 = vshrl.u32 %v2948, 16
      %v3181 = vshll.u32 %v2948, 16
      %v3183 = vrot.slane %v3181, 1
      %v3184 = vor.u32 %v3179, %v3183
      %v3185 = vshll.u32 %v2950, 16
      %v3187 = vrot.slane %v3185, 1
      %v3188 = vsel %vm825, %v3184, %v3187
      %v3189 = vshrl.u32 %v1266, 16
      %v3191 = vshll.u32 %v1266, 16
      %v3193 = vrot.slane %v3191, 1
      %v3194 = vor.u32 %v3189, %v3193
      %v3196 = vshll.u32 %v1263, 16
      %v3198 = vrot.slane %v3196, 1
      %v3199 = vsel %vm825, %v3194, %v3198
      %v3200 = vshrl.u32 %v2951, 16
      %v3202 = vshll.u32 %v2951, 16
      %v3204 = vrot.slane %v3202, 1
      %v3205 = vor.u32 %v3200, %v3204
      %v3206 = vshll.u32 %v2953, 16
      %v3208 = vrot.slane %v3206, 1
      %v3209 = vsel %vm825, %v3205, %v3208
      %v3210 = vshrl.u32 %v1275, 16
      %v3212 = vshll.u32 %v1275, 16
      %v3214 = vrot.slane %v3212, 1
      %v3215 = vor.u32 %v3210, %v3214
      %v3217 = vshll.u32 %v1272, 16
      %v3219 = vrot.slane %v3217, 1
      %v3220 = vsel %vm825, %v3215, %v3219
      %v3221 = vshrl.u32 %v2954, 16
      %v3223 = vshll.u32 %v2954, 16
      %v3225 = vrot.slane %v3223, 1
      %v3226 = vor.u32 %v3221, %v3225
      %v3227 = vshll.u32 %v2956, 16
      %v3229 = vrot.slane %v3227, 1
      %v3230 = vsel %vm825, %v3226, %v3229
      %v3231 = vshrl.u32 %v1508, 16
      %v3233 = vshll.u32 %v1508, 16
      %v3235 = vrot.slane %v3233, 1
      %v3236 = vor.u32 %v3231, %v3235
      %v3238 = vshll.u32 %v1505, 16
      %v3240 = vrot.slane %v3238, 1
      %v3241 = vsel %vm825, %v3236, %v3240
      %v3242 = vshrl.u32 %v2958, 16
      %v3244 = vshll.u32 %v2958, 16
      %v3246 = vrot.slane %v3244, 1
      %v3247 = vor.u32 %v3242, %v3246
      %v3248 = vshll.u32 %v2960, 16
      %v3250 = vrot.slane %v3248, 1
      %v3251 = vsel %vm825, %v3247, %v3250
      %v3253 = vshrl.u32 %v1663, 16
      %v3255 = vshll.u32 %v1663, 16
      %v3257 = vrot.slane %v3255, 1
      %v3258 = vor.u32 %v3253, %v3257
      %v3260 = vshll.u32 %v1660, 16
      %v3262 = vrot.slane %v3260, 1
      %v3263 = vsel %vm825, %v3258, %v3262
      %v3264 = vshrl.u32 %v2962, 16
      %v3266 = vshll.u32 %v2962, 16
      %v3268 = vrot.slane %v3266, 1
      %v3269 = vor.u32 %v3264, %v3268
      %v3270 = vshll.u32 %v2964, 16
      %v3272 = vrot.slane %v3270, 1
      %v3273 = vsel %vm825, %v3269, %v3272
      %v3275 = vshrl.u32 %v2365, 16
      %v3277 = vshll.u32 %v2365, 16
      %v3279 = vrot.slane %v3277, 1
      %v3280 = vor.u32 %v3275, %v3279
      %v3282 = vshll.u32 %v2362, 16
      %v3284 = vrot.slane %v3282, 1
      %v3285 = vsel %vm825, %v3280, %v3284
      %v3286 = vshrl.u32 %v2966, 16
      %v3288 = vshll.u32 %v2966, 16
      %v3290 = vrot.slane %v3288, 1
      %v3291 = vor.u32 %v3286, %v3290
      %v3292 = vshll.u32 %v2968, 16
      %v3294 = vrot.slane %v3292, 1
      %v3295 = vsel %vm825, %v3291, %v3294
      %v3297 = vshrl.u32 %v2637, 16
      %v3299 = vshll.u32 %v2637, 16
      %v3301 = vrot.slane %v3299, 1
      %v3302 = vor.u32 %v3297, %v3301
      %v3304 = vshll.u32 %v2634, 16
      %v3306 = vrot.slane %v3304, 1
      %v3307 = vsel %vm825, %v3302, %v3306
      %v3324 = vld [vmem:[%s5] sm:$0xf]
      %v3325 = vld [vmem:[%s5 + $0x4] sm:$0xf]
      %v3326 = vld [vmem:[%s5 + $0x8] sm:$0xf]
      %v3327 = vld [vmem:[%s5 + $0xc] sm:$0xf]
      %v3328 = vld [vmem:[%s5 + $0x10] sm:$0xf]
      %v3329 = vld [vmem:[%s5 + $0x14] sm:$0xf]
      %v3330 = vld [vmem:[%s5 + $0x18] sm:$0xf]
      %v3331 = vld [vmem:[%s5 + $0x1c] sm:$0xf]
      %v3332 = vld [vmem:[%s5 + $0x20] sm:$0xf]
      %v3333 = vld [vmem:[%s5 + $0x24] sm:$0xf]
      %v3334 = vld [vmem:[%s5 + $0x28] sm:$0xf]
      %v3335 = vld [vmem:[%s5 + $0x2c] sm:$0xf]
      %v3336 = vld [vmem:[%s5 + $0x30] sm:$0xf]
      %v3337 = vld [vmem:[%s5 + $0x34] sm:$0xf]
      %v3338 = vld [vmem:[%s5 + $0x38] sm:$0xf]
      %v3339 = vld [vmem:[%s5 + $0x3c] sm:$0xf]
      %v3340 = vld [vmem:[%s5 + $0x40] sm:$0xf]
      %v3341 = vld [vmem:[%s5 + $0x44] sm:$0xf]
      %v3342 = vld [vmem:[%s5 + $0x48] sm:$0xf]
      %v3343 = vld [vmem:[%s5 + $0x4c] sm:$0xf]
      %v3344 = vld [vmem:[%s5 + $0x50] sm:$0xf]
      %v3345 = vld [vmem:[%s5 + $0x54] sm:$0xf]
      %v3346 = vld [vmem:[%s5 + $0x58] sm:$0xf]
      %v3347 = vld [vmem:[%s5 + $0x5c] sm:$0xf]
      %v3348 = vld [vmem:[%s5 + $0x60] sm:$0xf]
      %v3349 = vld [vmem:[%s5 + $0x64] sm:$0xf]
      %v3350 = vld [vmem:[%s5 + $0x68] sm:$0xf]
      %v3351 = vld [vmem:[%s5 + $0x6c] sm:$0xf]
      %v3352 = vld [vmem:[%s5 + $0x70] sm:$0xf]
      %v3353 = vld [vmem:[%s5 + $0x74] sm:$0xf]
      %v3354 = vld [vmem:[%s5 + $0x78] sm:$0xf]
      %v3355 = vld [vmem:[%s5 + $0x7c] sm:$0xf]
      %v3356 = vld [vmem:[%s5 + $0x80] sm:$0xf]
      %v3357 = vld [vmem:[%s5 + $0x84] sm:$0xf]
      %v3358 = vld [vmem:[%s5 + $0x88] sm:$0xf]
      %v3359 = vld [vmem:[%s5 + $0x8c] sm:$0xf]
      %v3360 = vld [vmem:[%s5 + $0x90] sm:$0xf]
      %v3361 = vld [vmem:[%s5 + $0x94] sm:$0xf]
      %v3362 = vld [vmem:[%s5 + $0x98] sm:$0xf]
      %v3363 = vld [vmem:[%s5 + $0x9c] sm:$0xf]
      %v3364 = vld [vmem:[%s5 + $0xa0] sm:$0xf]
      %v3365 = vld [vmem:[%s5 + $0xa4] sm:$0xf]
      %v3366 = vld [vmem:[%s5 + $0xa8] sm:$0xf]
      %v3367 = vld [vmem:[%s5 + $0xac] sm:$0xf]
      %v3368 = vld [vmem:[%s5 + $0xb0] sm:$0xf]
      %v3369 = vld [vmem:[%s5 + $0xb4] sm:$0xf]
      %v3370 = vld [vmem:[%s5 + $0xb8] sm:$0xf]
      %v3371 = vld [vmem:[%s5 + $0xbc] sm:$0xf]
      %v3372 = vld [vmem:[%s5 + $0xc0] sm:$0xf]
      %v3373 = vld [vmem:[%s5 + $0xc4] sm:$0xf]
      %v3424 = vunpack.c.l.b16 %v3324
      %v3425 = vunpack.c.l.b16 %v3325
      %v3426 = vunpack.c.l.b16 %v3326
      %v3427 = vunpack.c.l.b16 %v3327
      %v3428 = vunpack.c.l.b16 %v3328
      %v3429 = vunpack.c.l.b16 %v3329
      %v3430 = vunpack.c.l.b16 %v3330
      %v3431 = vunpack.c.l.b16 %v3331
      %v3432 = vunpack.c.l.b16 %v3332
      %v3433 = vunpack.c.l.b16 %v3333
      %v3434 = vunpack.c.l.b16 %v3334
      %v3435 = vunpack.c.l.b16 %v3335
      %v3436 = vunpack.c.l.b16 %v3336
      %v3437 = vunpack.c.l.b16 %v3337
      %v3438 = vunpack.c.l.b16 %v3338
      %v3439 = vunpack.c.l.b16 %v3339
      %v3440 = vunpack.c.l.b16 %v3340
      %v3441 = vunpack.c.l.b16 %v3341
      %v3442 = vunpack.c.l.b16 %v3342
      %v3443 = vunpack.c.l.b16 %v3343
      %v3444 = vunpack.c.l.b16 %v3344
      %v3445 = vunpack.c.l.b16 %v3345
      %v3446 = vunpack.c.l.b16 %v3346
      %v3447 = vunpack.c.l.b16 %v3347
      %v3448 = vunpack.c.l.b16 %v3348
      %v3449 = vunpack.c.l.b16 %v3349
      %v3450 = vunpack.c.l.b16 %v3350
      %v3451 = vunpack.c.l.b16 %v3351
      %v3452 = vunpack.c.l.b16 %v3352
      %v3453 = vunpack.c.l.b16 %v3353
      %v3454 = vunpack.c.l.b16 %v3354
      %v3455 = vunpack.c.l.b16 %v3355
      %v3456 = vunpack.c.l.b16 %v3356
      %v3457 = vunpack.c.l.b16 %v3357
      %v3458 = vunpack.c.l.b16 %v3358
      %v3459 = vunpack.c.l.b16 %v3359
      %v3460 = vunpack.c.l.b16 %v3360
      %v3461 = vunpack.c.l.b16 %v3361
      %v3462 = vunpack.c.l.b16 %v3362
      %v3463 = vunpack.c.l.b16 %v3363
      %v3464 = vunpack.c.l.b16 %v3364
      %v3465 = vunpack.c.l.b16 %v3365
      %v3466 = vunpack.c.l.b16 %v3366
      %v3467 = vunpack.c.l.b16 %v3367
      %v3468 = vunpack.c.l.b16 %v3368
      %v3469 = vunpack.c.l.b16 %v3369
      %v3470 = vunpack.c.l.b16 %v3370
      %v3471 = vunpack.c.l.b16 %v3371
      %v3472 = vunpack.c.l.b16 %v3372
      %v3473 = vunpack.c.l.b16 %v3373
      %v3474 = vpack.c.b16 %v3425, %v3424
      %v3475 = vpack.c.b16 %v3427, %v3426
      %v3476 = vpack.c.b16 %v3429, %v3428
      %v3477 = vpack.c.b16 %v3431, %v3430
      %v3478 = vpack.c.b16 %v3433, %v3432
      %v3479 = vpack.c.b16 %v3435, %v3434
      %v3480 = vpack.c.b16 %v3437, %v3436
      %v3481 = vpack.c.b16 %v3439, %v3438
      %v3482 = vpack.c.b16 %v3441, %v3440
      %v3483 = vpack.c.b16 %v3443, %v3442
      %v3484 = vpack.c.b16 %v3445, %v3444
      %v3485 = vpack.c.b16 %v3447, %v3446
      %v3486 = vpack.c.b16 %v3449, %v3448
      %v3487 = vpack.c.b16 %v3451, %v3450
      %v3488 = vpack.c.b16 %v3453, %v3452
      %v3489 = vpack.c.b16 %v3455, %v3454
      %v3490 = vpack.c.b16 %v3457, %v3456
      %v3491 = vpack.c.b16 %v3459, %v3458
      %v3492 = vpack.c.b16 %v3461, %v3460
      %v3493 = vpack.c.b16 %v3463, %v3462
      %v3494 = vpack.c.b16 %v3465, %v3464
      %v3495 = vpack.c.b16 %v3467, %v3466
      %v3496 = vpack.c.b16 %v3469, %v3468
      %v3497 = vpack.c.b16 %v3471, %v3470
      %v3498 = vpack.c.b16 %v3473, %v3472
      %v3525 = vsel %vm1764, %v2989, 0
      %v3528 = vsel %vm1764, %v3010, 0
      %v3531 = vsel %vm1764, %v3031, 0
      %v3534 = vsel %vm1764, %v3052, 0
      %v3537 = vsel %vm1764, %v3073, 0
      %v3540 = vsel %vm1764, %v3094, 0
      %v3543 = vsel %vm1764, %v3115, 0
      %v3546 = vsel %vm1764, %v3136, 0
      %v3549 = vsel %vm1764, %v3157, 0
      %v3552 = vsel %vm1764, %v3178, 0
      %v3555 = vsel %vm1764, %v3199, 0
      %v3558 = vsel %vm1764, %v3220, 0
      %v3561 = vsel %vm1764, %v3241, 0
      %v3564 = vsel %vm1764, %v3263, 0
      %v3567 = vsel %vm1764, %v3285, 0
      %v3570 = vsel %vm1764, %v3307, 0
      %3572 = vmatprep.subr.bf16.mxu0 0
      %3573 = vmatpush1.bf16.msra.mxu0 %v3474
      %3574 = vmatprep.subr.bf16.mxu0 0
      %3575 = vmatpush1.bf16.msra.mxu0 %v3475
      %3576 = vmatprep.subr.bf16.mxu0 0
      %3577 = vmatpush1.bf16.msra.mxu0 %v3476
      %3578 = vmatprep.subr.bf16.mxu0 0
      %3579 = vmatpush1.bf16.msra.mxu0 %v3477
      %3580 = vmatprep.subr.bf16.mxu0 0
      %3581 = vmatpush1.bf16.msra.mxu0 %v3478
      %3582 = vmatprep.subr.bf16.mxu0 0
      %3583 = vmatpush1.bf16.msra.mxu0 %v3479
      %3584 = vmatprep.subr.bf16.mxu0 0
      %3585 = vmatpush1.bf16.msra.mxu0 %v3480
      %3586 = vmatprep.subr.bf16.mxu0 0
      %3587 = vmatpush1.bf16.msra.mxu0 %v3481
      %3588 = vmatprep.subr.bf16.mxu0 0
      %3589 = vmatpush1.bf16.msra.mxu0 %v3482
      %3590 = vmatprep.subr.bf16.mxu0 0
      %3591 = vmatpush1.bf16.msra.mxu0 %v3483
      %3592 = vmatprep.subr.bf16.mxu0 0
      %3593 = vmatpush1.bf16.msra.mxu0 %v3484
      %3594 = vmatprep.subr.bf16.mxu0 0
      %3595 = vmatpush1.bf16.msra.mxu0 %v3485
      %3596 = vmatprep.subr.bf16.mxu0 0
      %3597 = vmatpush1.bf16.msra.mxu0 %v3486
      %3598 = vmatprep.subr.bf16.mxu0 0
      %3599 = vmatpush1.bf16.msra.mxu0 %v3487
      %3600 = vmatprep.subr.bf16.mxu0 0
      %3601 = vmatpush1.bf16.msra.mxu0 %v3488
      %3602 = vmatprep.subr.bf16.mxu0 0
      %3603 = vmatpush1.bf16.msra.mxu0 %v3489
      %3604 = vmatprep.mubr.bf16.mxu0 %v2220
      %3605 = vmatmul.mubr.bf16.gmra.mrb[0].mxu0 %v1964
      %v3606 = vpop.f32.mrb[0].mxu0
      %v3607 = vadd.f32 0.0, %v3606
      %v3608 = vpop.f32.mrb[0].mxu0
      %v3609 = vpop.f32.mrb[0].mxu0
      %v3610 = vadd.f32 0.0, %v3609
      %v3611 = vpop.f32.mrb[0].mxu0
      %3612 = vmatprep.mubr.bf16.mxu0 %v2223
      %3613 = vmatmul.mubr.bf16.gmra.mrb[0].mxu0 %v1967
      %v3614 = vpop.f32.mrb[0].mxu0
      %v3615 = vadd.f32 0.0, %v3614
      %v3616 = vpop.f32.mrb[0].mxu0
      %v3617 = vpop.f32.mrb[0].mxu0
      %v3618 = vadd.f32 0.0, %v3617
      %v3619 = vpop.f32.mrb[0].mxu0
      %3620 = vmatprep.mubr.bf16.mxu0 %v2226
      %3621 = vmatmul.mubr.bf16.gmra.mrb[0].mxu0 %v1970
      %v3622 = vpop.f32.mrb[0].mxu0
      %v3623 = vadd.f32 0.0, %v3622
      %v3624 = vpop.f32.mrb[0].mxu0
      %v3625 = vpop.f32.mrb[0].mxu0
      %v3626 = vadd.f32 0.0, %v3625
      %v3627 = vpop.f32.mrb[0].mxu0
      %3628 = vmatprep.mubr.bf16.mxu0 %v2229
      %3629 = vmatmul.mubr.bf16.gmra.mrb[0].mxu0 %v1973
      %v3630 = vpop.f32.mrb[0].mxu0
      %v3631 = vadd.f32 0.0, %v3630
      %v3632 = vpop.f32.mrb[0].mxu0
      %v3633 = vpop.f32.mrb[0].mxu0
      %v3634 = vadd.f32 0.0, %v3633
      %v3635 = vpop.f32.mrb[0].mxu0
      %3636 = vmatprep.mubr.bf16.mxu0 %v2232
      %3637 = vmatmul.mubr.bf16.gmra.mrb[0].mxu0 %v1976
      %v3638 = vpop.f32.mrb[0].mxu0
      %v3639 = vadd.f32 0.0, %v3638
      %v3640 = vpop.f32.mrb[0].mxu0
      %v3641 = vpop.f32.mrb[0].mxu0
      %v3642 = vadd.f32 0.0, %v3641
      %v3643 = vpop.f32.mrb[0].mxu0
      %3644 = vmatprep.mubr.bf16.mxu0 %v2235
      %3645 = vmatmul.mubr.bf16.gmra.mrb[0].mxu0 %v1979
      %v3646 = vpop.f32.mrb[0].mxu0
      %v3647 = vadd.f32 0.0, %v3646
      %v3648 = vpop.f32.mrb[0].mxu0
      %v3649 = vpop.f32.mrb[0].mxu0
      %v3650 = vadd.f32 0.0, %v3649
      %v3651 = vpop.f32.mrb[0].mxu0
      %3652 = vmatprep.mubr.bf16.mxu0 %v2238
      %3653 = vmatmul.mubr.bf16.gmra.mrb[0].mxu0 %v1982
      %v3654 = vpop.f32.mrb[0].mxu0
      %v3655 = vadd.f32 0.0, %v3654
      %v3656 = vpop.f32.mrb[0].mxu0
      %v3657 = vpop.f32.mrb[0].mxu0
      %v3658 = vadd.f32 0.0, %v3657
      %v3659 = vpop.f32.mrb[0].mxu0
      %3660 = vmatprep.mubr.bf16.mxu0 %v2241
      %3661 = vmatmul.mubr.bf16.gmra.mrb[0].mxu0 %v1985
      %v3662 = vpop.f32.mrb[0].mxu0
      %v3663 = vadd.f32 0.0, %v3662
      %v3664 = vpop.f32.mrb[0].mxu0
      %v3665 = vpop.f32.mrb[0].mxu0
      %v3666 = vadd.f32 0.0, %v3665
      %v3667 = vpop.f32.mrb[0].mxu0
      %3668 = vmatprep.mubr.bf16.mxu0 %v2244
      %3669 = vmatmul.mubr.bf16.gmra.mrb[0].mxu0 %v1988
      %v3670 = vpop.f32.mrb[0].mxu0
      %v3671 = vadd.f32 0.0, %v3670
      %v3672 = vpop.f32.mrb[0].mxu0
      %v3673 = vpop.f32.mrb[0].mxu0
      %v3674 = vadd.f32 0.0, %v3673
      %v3675 = vpop.f32.mrb[0].mxu0
      %3676 = vmatprep.mubr.bf16.mxu0 %v2247
      %3677 = vmatmul.mubr.bf16.gmra.mrb[0].mxu0 %v1991
      %v3678 = vpop.f32.mrb[0].mxu0
      %v3679 = vadd.f32 0.0, %v3678
      %v3680 = vpop.f32.mrb[0].mxu0
      %v3681 = vpop.f32.mrb[0].mxu0
      %v3682 = vadd.f32 0.0, %v3681
      %v3683 = vpop.f32.mrb[0].mxu0
      %3684 = vmatprep.mubr.bf16.mxu0 %v2250
      %3685 = vmatmul.mubr.bf16.gmra.mrb[0].mxu0 %v1994
      %v3686 = vpop.f32.mrb[0].mxu0
      %v3687 = vadd.f32 0.0, %v3686
      %v3688 = vpop.f32.mrb[0].mxu0
      %v3689 = vpop.f32.mrb[0].mxu0
      %v3690 = vadd.f32 0.0, %v3689
      %v3691 = vpop.f32.mrb[0].mxu0
      %3692 = vmatprep.mubr.bf16.mxu0 %v2253
      %3693 = vmatmul.mubr.bf16.gmra.mrb[0].mxu0 %v1997
      %v3694 = vpop.f32.mrb[0].mxu0
      %v3695 = vadd.f32 0.0, %v3694
      %v3696 = vpop.f32.mrb[0].mxu0
      %v3697 = vpop.f32.mrb[0].mxu0
      %v3698 = vadd.f32 0.0, %v3697
      %v3699 = vpop.f32.mrb[0].mxu0
      %3700 = vmatprep.mubr.bf16.mxu0 %v2256
      %3701 = vmatmul.mubr.bf16.gmra.mrb[0].mxu0 %v2000
      %v3702 = vpop.f32.mrb[0].mxu0
      %v3703 = vadd.f32 0.0, %v3702
      %v3704 = vpop.f32.mrb[0].mxu0
      %v3705 = vpop.f32.mrb[0].mxu0
      %v3706 = vadd.f32 0.0, %v3705
      %v3707 = vpop.f32.mrb[0].mxu0
      %3708 = vmatprep.mubr.bf16.mxu0 %v2259
      %3709 = vmatmul.mubr.bf16.gmra.mrb[0].mxu0 %v2003
      %v3710 = vpop.f32.mrb[0].mxu0
      %v3711 = vadd.f32 0.0, %v3710
      %v3712 = vpop.f32.mrb[0].mxu0
      %v3713 = vpop.f32.mrb[0].mxu0
      %v3714 = vadd.f32 0.0, %v3713
      %v3715 = vpop.f32.mrb[0].mxu0
      %3716 = vmatprep.mubr.bf16.mxu0 %v2262
      %3717 = vmatmul.mubr.bf16.gmra.mrb[0].mxu0 %v2006
      %v3718 = vpop.f32.mrb[0].mxu0
      %v3719 = vadd.f32 0.0, %v3718
      %v3720 = vpop.f32.mrb[0].mxu0
      %v3721 = vpop.f32.mrb[0].mxu0
      %v3722 = vadd.f32 0.0, %v3721
      %v3723 = vpop.f32.mrb[0].mxu0
      %3724 = vmatprep.mubr.bf16.mxu0 %v2265
      %3725 = vmatmul.mubr.bf16.gmra.mrb[0].mxu0 %v2009
      %v3726 = vpop.f32.mrb[0].mxu0
      %v3727 = vadd.f32 0.0, %v3726
      %v3728 = vpop.f32.mrb[0].mxu0
      %v3729 = vpop.f32.mrb[0].mxu0
      %v3730 = vadd.f32 0.0, %v3729
      %v3731 = vpop.f32.mrb[0].mxu0
      %3732 = vdwg.mxu0
      %3733 = vmatprep.subr.bf16.mxu0 0
      %3734 = vmatpush1.bf16.msra.mxu0 %v3490
      %3735 = vmatprep.subr.bf16.mxu0 0
      %3736 = vmatpush1.bf16.msra.mxu0 %v3491
      %3737 = vmatprep.subr.bf16.mxu0 0
      %3738 = vmatpush1.bf16.msra.mxu0 %v3492
      %3739 = vmatprep.subr.bf16.mxu0 0
      %3740 = vmatpush1.bf16.msra.mxu0 %v3493
      %3741 = vmatprep.subr.bf16.mxu0 0
      %3742 = vmatpush1.bf16.msra.mxu0 %v3494
      %3743 = vmatprep.subr.bf16.mxu0 0
      %3744 = vmatpush1.bf16.msra.mxu0 %v3495
      %3745 = vmatprep.subr.bf16.mxu0 0
      %3746 = vmatpush1.bf16.msra.mxu0 %v3496
      %3747 = vmatprep.subr.bf16.mxu0 0
      %3748 = vmatpush1.bf16.msra.mxu0 %v3497
      %3749 = vmatprep.subr.bf16.mxu0 0
      %3750 = vmatpush1.bf16.msra.mxu0 %v3498
      %3751 = vmatprep.subr.bf16.mxu0 0
      %3752 = vmatpush1.bf16.msra.mxu0 0
      %3753 = vmatprep.subr.bf16.mxu0 0
      %3754 = vmatpush1.bf16.msra.mxu0 0
      %3755 = vmatprep.subr.bf16.mxu0 0
      %3756 = vmatpush1.bf16.msra.mxu0 0
      %3757 = vmatprep.subr.bf16.mxu0 0
      %3758 = vmatpush1.bf16.msra.mxu0 0
      %3759 = vmatprep.subr.bf16.mxu0 0
      %3760 = vmatpush1.bf16.msra.mxu0 0
      %3761 = vmatprep.subr.bf16.mxu0 0
      %3762 = vmatpush1.bf16.msra.mxu0 0
      %3763 = vmatprep.subr.bf16.mxu0 0
      %3764 = vmatpush1.bf16.msra.mxu0 0
      %3765 = vmatprep.mubr.bf16.mxu0 %v3525
      %3766 = vmatmul.mubr.bf16.gmra.mrb[0].mxu0 %v2978
      %v3767 = vpop.f32.mrb[0].mxu0
      %v3768 = vadd.f32 %v3607, %v3767
      %v3769 = vpop.f32.mrb[0].mxu0
      %v3770 = vpop.f32.mrb[0].mxu0
      %v3771 = vadd.f32 %v3610, %v3770
      %v3772 = vpop.f32.mrb[0].mxu0
      %3773 = vmatprep.mubr.bf16.mxu0 %v3528
      %3774 = vmatmul.mubr.bf16.gmra.mrb[0].mxu0 %v2999
      %v3775 = vpop.f32.mrb[0].mxu0
      %v3776 = vadd.f32 %v3615, %v3775
      %v3777 = vpop.f32.mrb[0].mxu0
      %v3778 = vpop.f32.mrb[0].mxu0
      %v3779 = vadd.f32 %v3618, %v3778
      %v3780 = vpop.f32.mrb[0].mxu0
      %3781 = vmatprep.mubr.bf16.mxu0 %v3531
      %3782 = vmatmul.mubr.bf16.gmra.mrb[0].mxu0 %v3020
      %v3783 = vpop.f32.mrb[0].mxu0
      %v3784 = vadd.f32 %v3623, %v3783
      %v3785 = vpop.f32.mrb[0].mxu0
      %v3786 = vpop.f32.mrb[0].mxu0
      %v3787 = vadd.f32 %v3626, %v3786
      %v3788 = vpop.f32.mrb[0].mxu0
      %3789 = vmatprep.mubr.bf16.mxu0 %v3534
      %3790 = vmatmul.mubr.bf16.gmra.mrb[0].mxu0 %v3041
      %v3791 = vpop.f32.mrb[0].mxu0
      %v3792 = vadd.f32 %v3631, %v3791
      %v3793 = vpop.f32.mrb[0].mxu0
      %v3794 = vpop.f32.mrb[0].mxu0
      %v3795 = vadd.f32 %v3634, %v3794
      %v3796 = vpop.f32.mrb[0].mxu0
      %3797 = vmatprep.mubr.bf16.mxu0 %v3537
      %3798 = vmatmul.mubr.bf16.gmra.mrb[0].mxu0 %v3062
      %v3799 = vpop.f32.mrb[0].mxu0
      %v3800 = vadd.f32 %v3639, %v3799
      %v3801 = vpop.f32.mrb[0].mxu0
      %v3802 = vpop.f32.mrb[0].mxu0
      %v3803 = vadd.f32 %v3642, %v3802
      %v3804 = vpop.f32.mrb[0].mxu0
      %3805 = vmatprep.mubr.bf16.mxu0 %v3540
      %3806 = vmatmul.mubr.bf16.gmra.mrb[0].mxu0 %v3083
      %v3807 = vpop.f32.mrb[0].mxu0
      %v3808 = vadd.f32 %v3647, %v3807
      %v3809 = vpop.f32.mrb[0].mxu0
      %v3810 = vpop.f32.mrb[0].mxu0
      %v3811 = vadd.f32 %v3650, %v3810
      %v3812 = vpop.f32.mrb[0].mxu0
      %3813 = vmatprep.mubr.bf16.mxu0 %v3543
      %3814 = vmatmul.mubr.bf16.gmra.mrb[0].mxu0 %v3104
      %v3815 = vpop.f32.mrb[0].mxu0
      %v3816 = vadd.f32 %v3655, %v3815
      %v3817 = vpop.f32.mrb[0].mxu0
      %v3818 = vpop.f32.mrb[0].mxu0
      %v3819 = vadd.f32 %v3658, %v3818
      %v3820 = vpop.f32.mrb[0].mxu0
      %3821 = vmatprep.mubr.bf16.mxu0 %v3546
      %3822 = vmatmul.mubr.bf16.gmra.mrb[0].mxu0 %v3125
      %v3823 = vpop.f32.mrb[0].mxu0
      %v3824 = vadd.f32 %v3663, %v3823
      %v3825 = vpop.f32.mrb[0].mxu0
      %v3826 = vpop.f32.mrb[0].mxu0
      %v3827 = vadd.f32 %v3666, %v3826
      %v3828 = vpop.f32.mrb[0].mxu0
      %3829 = vmatprep.mubr.bf16.mxu0 %v3549
      %3830 = vmatmul.mubr.bf16.gmra.mrb[0].mxu0 %v3146
      %v3831 = vpop.f32.mrb[0].mxu0
      %v3832 = vadd.f32 %v3671, %v3831
      %v3833 = vpop.f32.mrb[0].mxu0
      %v3834 = vpop.f32.mrb[0].mxu0
      %v3835 = vadd.f32 %v3674, %v3834
      %v3836 = vpop.f32.mrb[0].mxu0
      %3837 = vmatprep.mubr.bf16.mxu0 %v3552
      %3838 = vmatmul.mubr.bf16.gmra.mrb[0].mxu0 %v3167
      %v3839 = vpop.f32.mrb[0].mxu0
      %v3840 = vadd.f32 %v3679, %v3839
      %v3841 = vpop.f32.mrb[0].mxu0
      %v3842 = vpop.f32.mrb[0].mxu0
      %v3843 = vadd.f32 %v3682, %v3842
      %v3844 = vpop.f32.mrb[0].mxu0
      %3845 = vmatprep.mubr.bf16.mxu0 %v3555
      %3846 = vmatmul.mubr.bf16.gmra.mrb[0].mxu0 %v3188
      %v3847 = vpop.f32.mrb[0].mxu0
      %v3848 = vadd.f32 %v3687, %v3847
      %v3849 = vpop.f32.mrb[0].mxu0
      %v3850 = vpop.f32.mrb[0].mxu0
      %v3851 = vadd.f32 %v3690, %v3850
      %v3852 = vpop.f32.mrb[0].mxu0
      %3853 = vmatprep.mubr.bf16.mxu0 %v3558
      %3854 = vmatmul.mubr.bf16.gmra.mrb[0].mxu0 %v3209
      %v3855 = vpop.f32.mrb[0].mxu0
      %v3856 = vadd.f32 %v3695, %v3855
      %v3857 = vpop.f32.mrb[0].mxu0
      %v3858 = vpop.f32.mrb[0].mxu0
      %v3859 = vadd.f32 %v3698, %v3858
      %v3860 = vpop.f32.mrb[0].mxu0
      %3861 = vmatprep.mubr.bf16.mxu0 %v3561
      %3862 = vmatmul.mubr.bf16.gmra.mrb[0].mxu0 %v3230
      %v3863 = vpop.f32.mrb[0].mxu0
      %v3864 = vadd.f32 %v3703, %v3863
      %v3865 = vpop.f32.mrb[0].mxu0
      %v3866 = vpop.f32.mrb[0].mxu0
      %v3867 = vadd.f32 %v3706, %v3866
      %v3868 = vpop.f32.mrb[0].mxu0
      %3869 = vmatprep.mubr.bf16.mxu0 %v3564
      %3870 = vmatmul.mubr.bf16.gmra.mrb[0].mxu0 %v3251
      %v3871 = vpop.f32.mrb[0].mxu0
      %v3872 = vadd.f32 %v3711, %v3871
      %v3873 = vpop.f32.mrb[0].mxu0
      %v3874 = vpop.f32.mrb[0].mxu0
      %v3875 = vadd.f32 %v3714, %v3874
      %v3876 = vpop.f32.mrb[0].mxu0
      %3877 = vmatprep.mubr.bf16.mxu0 %v3567
      %3878 = vmatmul.mubr.bf16.gmra.mrb[0].mxu0 %v3273
      %v3879 = vpop.f32.mrb[0].mxu0
      %v3880 = vadd.f32 %v3719, %v3879
      %v3881 = vpop.f32.mrb[0].mxu0
      %v3882 = vpop.f32.mrb[0].mxu0
      %v3883 = vadd.f32 %v3722, %v3882
      %v3884 = vpop.f32.mrb[0].mxu0
      %3885 = vmatprep.mubr.bf16.mxu0 %v3570
      %3886 = vmatmul.mubr.bf16.gmra.mrb[0].mxu0 %v3295
      %v3887 = vpop.f32.mrb[0].mxu0
      %v3888 = vadd.f32 %v3727, %v3887
      %v3889 = vpop.f32.mrb[0].mxu0
      %v3890 = vpop.f32.mrb[0].mxu0
      %v3891 = vadd.f32 %v3730, %v3890
      %v3892 = vpop.f32.mrb[0].mxu0
      %3893 = vdwg.mxu0
      %v3894 = vpack.c.bf16 %v3771, %v3768
      %v3895 = vpack.c.bf16 %v3779, %v3776
      %v3896 = vpack.c.bf16 %v3787, %v3784
      %v3897 = vpack.c.bf16 %v3795, %v3792
      %v3898 = vpack.c.bf16 %v3803, %v3800
      %v3899 = vpack.c.bf16 %v3811, %v3808
      %v3900 = vpack.c.bf16 %v3819, %v3816
      %v3901 = vpack.c.bf16 %v3827, %v3824
      %v3902 = vpack.c.bf16 %v3835, %v3832
      %v3903 = vpack.c.bf16 %v3843, %v3840
      %v3904 = vpack.c.bf16 %v3851, %v3848
      %v3905 = vpack.c.bf16 %v3859, %v3856
      %v3906 = vpack.c.bf16 %v3867, %v3864
      %v3907 = vpack.c.bf16 %v3875, %v3872
      %v3908 = vpack.c.bf16 %v3883, %v3880
      %v3909 = vpack.c.bf16 %v3891, %v3888
      %v3926 = vunpack.c.l.b16 %v3894
      %v3927 = vunpack.c.h.b16 %v3894
      %v3928 = vunpack.c.l.b16 %v3895
      %v3929 = vunpack.c.h.b16 %v3895
      %v3930 = vunpack.c.l.b16 %v3896
      %v3931 = vunpack.c.h.b16 %v3896
      %v3932 = vunpack.c.l.b16 %v3897
      %v3933 = vunpack.c.h.b16 %v3897
      %v3934 = vunpack.c.l.b16 %v3898
      %v3935 = vunpack.c.h.b16 %v3898
      %v3936 = vunpack.c.l.b16 %v3899
      %v3937 = vunpack.c.h.b16 %v3899
      %v3938 = vunpack.c.l.b16 %v3900
      %v3939 = vunpack.c.h.b16 %v3900
      %v3940 = vunpack.c.l.b16 %v3901
      %v3941 = vunpack.c.h.b16 %v3901
      %v3942 = vunpack.c.l.b16 %v3902
      %v3943 = vunpack.c.h.b16 %v3902
      %v3944 = vunpack.c.l.b16 %v3903
      %v3945 = vunpack.c.h.b16 %v3903
      %v3946 = vunpack.c.l.b16 %v3904
      %v3947 = vunpack.c.h.b16 %v3904
      %v3948 = vunpack.c.l.b16 %v3905
      %v3949 = vunpack.c.h.b16 %v3905
      %v3950 = vunpack.c.l.b16 %v3906
      %v3951 = vunpack.c.h.b16 %v3906
      %v3952 = vunpack.c.l.b16 %v3907
      %v3953 = vunpack.c.h.b16 %v3907
      %v3954 = vunpack.c.l.b16 %v3908
      %v3955 = vunpack.c.h.b16 %v3908
      %v3956 = vunpack.c.l.b16 %v3909
      %v3957 = vunpack.c.h.b16 %v3909
      %v3958 = vpack.c.b16 %v3926, %v3926
      %v3959 = vpack.c.b16 %v3927, %v3927
      %v3960 = vpack.c.b16 %v3928, %v3928
      %v3961 = vpack.c.b16 %v3929, %v3929
      %v3962 = vpack.c.b16 %v3930, %v3930
      %v3963 = vpack.c.b16 %v3931, %v3931
      %v3964 = vpack.c.b16 %v3932, %v3932
      %v3965 = vpack.c.b16 %v3933, %v3933
      %v3966 = vpack.c.b16 %v3934, %v3934
      %v3967 = vpack.c.b16 %v3935, %v3935
      %v3968 = vpack.c.b16 %v3936, %v3936
      %v3969 = vpack.c.b16 %v3937, %v3937
      %v3970 = vpack.c.b16 %v3938, %v3938
      %v3971 = vpack.c.b16 %v3939, %v3939
      %v3972 = vpack.c.b16 %v3940, %v3940
      %v3973 = vpack.c.b16 %v3941, %v3941
      %v3974 = vpack.c.b16 %v3942, %v3942
      %v3975 = vpack.c.b16 %v3943, %v3943
      %v3976 = vpack.c.b16 %v3944, %v3944
      %v3977 = vpack.c.b16 %v3945, %v3945
      %v3978 = vpack.c.b16 %v3946, %v3946
      %v3979 = vpack.c.b16 %v3947, %v3947
      %v3980 = vpack.c.b16 %v3948, %v3948
      %v3981 = vpack.c.b16 %v3949, %v3949
      %v3982 = vpack.c.b16 %v3950, %v3950
      %v3983 = vpack.c.b16 %v3951, %v3951
      %v3984 = vpack.c.b16 %v3952, %v3952
      %v3985 = vpack.c.b16 %v3953, %v3953
      %v3986 = vpack.c.b16 %v3954, %v3954
      %v3987 = vpack.c.b16 %v3955, %v3955
      %v3988 = vpack.c.b16 %v3956, %v3956
      %v3989 = vpack.c.b16 %v3957, %v3957
      %vm4022 = vcmask 125952
      %4023 = vst.msk [vmem:[%s465] sm:$0xf] %vm4022, %v3958
      %4024 = vst.msk [vmem:[%s465 + $0x4] sm:$0xf] %vm4022, %v3959
      %4025 = vst.msk [vmem:[%s465 + $0x8] sm:$0xf] %vm4022, %v3960
      %4026 = vst.msk [vmem:[%s465 + $0xc] sm:$0xf] %vm4022, %v3961
      %4027 = vst.msk [vmem:[%s465 + $0x10] sm:$0xf] %vm4022, %v3962
      %4028 = vst.msk [vmem:[%s465 + $0x14] sm:$0xf] %vm4022, %v3963
      %4029 = vst.msk [vmem:[%s465 + $0x18] sm:$0xf] %vm4022, %v3964
      %4030 = vst.msk [vmem:[%s465 + $0x1c] sm:$0xf] %vm4022, %v3965
      %4031 = vst.msk [vmem:[%s465 + $0x20] sm:$0xf] %vm4022, %v3966
      %4032 = vst.msk [vmem:[%s465 + $0x24] sm:$0xf] %vm4022, %v3967
      %4033 = vst.msk [vmem:[%s465 + $0x28] sm:$0xf] %vm4022, %v3968
      %4034 = vst.msk [vmem:[%s465 + $0x2c] sm:$0xf] %vm4022, %v3969
      %4035 = vst.msk [vmem:[%s465 + $0x30] sm:$0xf] %vm4022, %v3970
      %4036 = vst.msk [vmem:[%s465 + $0x34] sm:$0xf] %vm4022, %v3971
      %4037 = vst.msk [vmem:[%s465 + $0x38] sm:$0xf] %vm4022, %v3972
      %4038 = vst.msk [vmem:[%s465 + $0x3c] sm:$0xf] %vm4022, %v3973
      %4039 = vst.msk [vmem:[%s465 + $0x40] sm:$0xf] %vm4022, %v3974
      %4040 = vst.msk [vmem:[%s465 + $0x44] sm:$0xf] %vm4022, %v3975
      %4041 = vst.msk [vmem:[%s465 + $0x48] sm:$0xf] %vm4022, %v3976
      %4042 = vst.msk [vmem:[%s465 + $0x4c] sm:$0xf] %vm4022, %v3977
      %4043 = vst.msk [vmem:[%s465 + $0x50] sm:$0xf] %vm4022, %v3978
      %4044 = vst.msk [vmem:[%s465 + $0x54] sm:$0xf] %vm4022, %v3979
      %4045 = vst.msk [vmem:[%s465 + $0x58] sm:$0xf] %vm4022, %v3980
      %4046 = vst.msk [vmem:[%s465 + $0x5c] sm:$0xf] %vm4022, %v3981
      %4047 = vst.msk [vmem:[%s465 + $0x60] sm:$0xf] %vm4022, %v3982
      %4048 = vst.msk [vmem:[%s465 + $0x64] sm:$0xf] %vm4022, %v3983
      %4049 = vst.msk [vmem:[%s465 + $0x68] sm:$0xf] %vm4022, %v3984
      %4050 = vst.msk [vmem:[%s465 + $0x6c] sm:$0xf] %vm4022, %v3985
      %4051 = vst.msk [vmem:[%s465 + $0x70] sm:$0xf] %vm4022, %v3986
      %4052 = vst.msk [vmem:[%s465 + $0x74] sm:$0xf] %vm4022, %v3987
      %4053 = vst.msk [vmem:[%s465 + $0x78] sm:$0xf] %vm4022, %v3988
      %4054 = vst.msk [vmem:[%s465 + $0x7c] sm:$0xf] %vm4022, %v3989
      %v4055 = vsel %vm1764, %v3768, 0.0
      %v4056 = vsel %vm1764, %v3771, 0.0
      %v4057 = vadd.f32 %v4055, %v4056
      %v4058 = vsel %vm1764, %v3776, 0.0
      %v4059 = vadd.f32 %v4057, %v4058
      %v4060 = vsel %vm1764, %v3779, 0.0
      %v4061 = vadd.f32 %v4059, %v4060
      %v4062 = vsel %vm1764, %v3784, 0.0
      %v4063 = vadd.f32 %v4061, %v4062
      %v4064 = vsel %vm1764, %v3787, 0.0
      %v4065 = vadd.f32 %v4063, %v4064
      %v4066 = vsel %vm1764, %v3792, 0.0
      %v4067 = vadd.f32 %v4065, %v4066
      %v4068 = vsel %vm1764, %v3795, 0.0
      %v4069 = vadd.f32 %v4067, %v4068
      %v4070 = vsel %vm1764, %v3800, 0.0
      %v4071 = vadd.f32 %v4069, %v4070
      %v4072 = vsel %vm1764, %v3803, 0.0
      %v4073 = vadd.f32 %v4071, %v4072
      %v4074 = vsel %vm1764, %v3808, 0.0
      %v4075 = vadd.f32 %v4073, %v4074
      %v4076 = vsel %vm1764, %v3811, 0.0
      %v4077 = vadd.f32 %v4075, %v4076
      %v4078 = vsel %vm1764, %v3816, 0.0
      %v4079 = vadd.f32 %v4077, %v4078
      %v4080 = vsel %vm1764, %v3819, 0.0
      %v4081 = vadd.f32 %v4079, %v4080
      %v4082 = vsel %vm1764, %v3824, 0.0
      %v4083 = vadd.f32 %v4081, %v4082
      %v4084 = vsel %vm1764, %v3827, 0.0
      %v4085 = vadd.f32 %v4083, %v4084
      %v4086 = vsel %vm1764, %v3832, 0.0
      %v4087 = vadd.f32 %v4085, %v4086
      %v4088 = vsel %vm1764, %v3835, 0.0
      %v4089 = vadd.f32 %v4087, %v4088
      %v4090 = vsel %vm1764, %v3840, 0.0
      %v4091 = vadd.f32 %v4089, %v4090
      %v4092 = vsel %vm1764, %v3843, 0.0
      %v4093 = vadd.f32 %v4091, %v4092
      %v4094 = vsel %vm1764, %v3848, 0.0
      %v4095 = vadd.f32 %v4093, %v4094
      %v4096 = vsel %vm1764, %v3851, 0.0
      %v4097 = vadd.f32 %v4095, %v4096
      %v4098 = vsel %vm1764, %v3856, 0.0
      %v4099 = vadd.f32 %v4097, %v4098
      %v4100 = vsel %vm1764, %v3859, 0.0
      %v4101 = vadd.f32 %v4099, %v4100
      %v4102 = vsel %vm1764, %v3864, 0.0
      %v4103 = vadd.f32 %v4101, %v4102
      %v4104 = vsel %vm1764, %v3867, 0.0
      %v4105 = vadd.f32 %v4103, %v4104
      %v4106 = vsel %vm1764, %v3872, 0.0
      %v4107 = vadd.f32 %v4105, %v4106
      %v4108 = vsel %vm1764, %v3875, 0.0
      %v4109 = vadd.f32 %v4107, %v4108
      %v4110 = vsel %vm1764, %v3880, 0.0
      %v4111 = vadd.f32 %v4109, %v4110
      %v4112 = vsel %vm1764, %v3883, 0.0
      %v4113 = vadd.f32 %v4111, %v4112
      %v4114 = vsel %vm1764, %v3888, 0.0
      %v4115 = vadd.f32 %v4113, %v4114
      %v4116 = vsel %vm1764, %v3891, 0.0
      %v4117 = vadd.f32 %v4115, %v4116
      %v4118 = vrot.slane %v4117, 4
      %v4119 = vadd.f32 %v4117, %v4118
      %v4120 = vrot.slane %v4119, 2
      %v4121 = vadd.f32 %v4119, %v4120
      %v4122 = vrot.slane %v4121, 1
      %v4123 = vadd.f32 %v4121, %v4122
      %v4124 = vmul.f32 %v3768, %v3768
      %v4125 = vmul.f32 %v3771, %v3771
      %v4126 = vmul.f32 %v3776, %v3776
      %v4127 = vmul.f32 %v3779, %v3779
      %v4128 = vmul.f32 %v3784, %v3784
      %v4129 = vmul.f32 %v3787, %v3787
      %v4130 = vmul.f32 %v3792, %v3792
      %v4131 = vmul.f32 %v3795, %v3795
      %v4132 = vmul.f32 %v3800, %v3800
      %v4133 = vmul.f32 %v3803, %v3803
      %v4134 = vmul.f32 %v3808, %v3808
      %v4135 = vmul.f32 %v3811, %v3811
      %v4136 = vmul.f32 %v3816, %v3816
      %v4137 = vmul.f32 %v3819, %v3819
      %v4138 = vmul.f32 %v3824, %v3824
      %v4139 = vmul.f32 %v3827, %v3827
      %v4140 = vmul.f32 %v3832, %v3832
      %v4141 = vmul.f32 %v3835, %v3835
      %v4142 = vmul.f32 %v3840, %v3840
      %v4143 = vmul.f32 %v3843, %v3843
      %v4144 = vmul.f32 %v3848, %v3848
      %v4145 = vmul.f32 %v3851, %v3851
      %v4146 = vmul.f32 %v3856, %v3856
      %v4147 = vmul.f32 %v3859, %v3859
      %v4148 = vmul.f32 %v3864, %v3864
      %v4149 = vmul.f32 %v3867, %v3867
      %v4150 = vmul.f32 %v3872, %v3872
      %v4151 = vmul.f32 %v3875, %v3875
      %v4152 = vmul.f32 %v3880, %v3880
      %v4153 = vmul.f32 %v3883, %v3883
      %v4154 = vmul.f32 %v3888, %v3888
      %v4155 = vmul.f32 %v3891, %v3891
      %v4156 = vsel %vm1764, %v4124, 0.0
      %v4157 = vsel %vm1764, %v4125, 0.0
      %v4158 = vadd.f32 %v4156, %v4157
      %v4159 = vsel %vm1764, %v4126, 0.0
      %v4160 = vadd.f32 %v4158, %v4159
      %v4161 = vsel %vm1764, %v4127, 0.0
      %v4162 = vadd.f32 %v4160, %v4161
      %v4163 = vsel %vm1764, %v4128, 0.0
      %v4164 = vadd.f32 %v4162, %v4163
      %v4165 = vsel %vm1764, %v4129, 0.0
      %v4166 = vadd.f32 %v4164, %v4165
      %v4167 = vsel %vm1764, %v4130, 0.0
      %v4168 = vadd.f32 %v4166, %v4167
      %v4169 = vsel %vm1764, %v4131, 0.0
      %v4170 = vadd.f32 %v4168, %v4169
      %v4171 = vsel %vm1764, %v4132, 0.0
      %v4172 = vadd.f32 %v4170, %v4171
      %v4173 = vsel %vm1764, %v4133, 0.0
      %v4174 = vadd.f32 %v4172, %v4173
      %v4175 = vsel %vm1764, %v4134, 0.0
      %v4176 = vadd.f32 %v4174, %v4175
      %v4177 = vsel %vm1764, %v4135, 0.0
      %v4178 = vadd.f32 %v4176, %v4177
      %v4179 = vsel %vm1764, %v4136, 0.0
      %v4180 = vadd.f32 %v4178, %v4179
      %v4181 = vsel %vm1764, %v4137, 0.0
      %v4182 = vadd.f32 %v4180, %v4181
      %v4183 = vsel %vm1764, %v4138, 0.0
      %v4184 = vadd.f32 %v4182, %v4183
      %v4185 = vsel %vm1764, %v4139, 0.0
      %v4186 = vadd.f32 %v4184, %v4185
      %v4187 = vsel %vm1764, %v4140, 0.0
      %v4188 = vadd.f32 %v4186, %v4187
      %v4189 = vsel %vm1764, %v4141, 0.0
      %v4190 = vadd.f32 %v4188, %v4189
      %v4191 = vsel %vm1764, %v4142, 0.0
      %v4192 = vadd.f32 %v4190, %v4191
      %v4193 = vsel %vm1764, %v4143, 0.0
      %v4194 = vadd.f32 %v4192, %v4193
      %v4195 = vsel %vm1764, %v4144, 0.0
      %v4196 = vadd.f32 %v4194, %v4195
      %v4197 = vsel %vm1764, %v4145, 0.0
      %v4198 = vadd.f32 %v4196, %v4197
      %v4199 = vsel %vm1764, %v4146, 0.0
      %v4200 = vadd.f32 %v4198, %v4199
      %v4201 = vsel %vm1764, %v4147, 0.0
      %v4202 = vadd.f32 %v4200, %v4201
      %v4203 = vsel %vm1764, %v4148, 0.0
      %v4204 = vadd.f32 %v4202, %v4203
      %v4205 = vsel %vm1764, %v4149, 0.0
      %v4206 = vadd.f32 %v4204, %v4205
      %v4207 = vsel %vm1764, %v4150, 0.0
      %v4208 = vadd.f32 %v4206, %v4207
      %v4209 = vsel %vm1764, %v4151, 0.0
      %v4210 = vadd.f32 %v4208, %v4209
      %v4211 = vsel %vm1764, %v4152, 0.0
      %v4212 = vadd.f32 %v4210, %v4211
      %v4213 = vsel %vm1764, %v4153, 0.0
      %v4214 = vadd.f32 %v4212, %v4213
      %v4215 = vsel %vm1764, %v4154, 0.0
      %v4216 = vadd.f32 %v4214, %v4215
      %v4217 = vsel %vm1764, %v4155, 0.0
      %v4218 = vadd.f32 %v4216, %v4217
      %v4219 = vrot.slane %v4218, 4
      %v4220 = vadd.f32 %v4218, %v4219
      %v4221 = vrot.slane %v4220, 2
      %v4222 = vadd.f32 %v4220, %v4221
      %v4223 = vrot.slane %v4222, 1
      %v4224 = vadd.f32 %v4222, %v4223
      %v4225 = vsel %vm763, %v4123, %v4224
      %vm4226 = vcmask 123904
      %4227 = vst.msk [vmem:[%s473] sm:$0x3] %vm4226, %v4225
      %s4228 = smul.u32 32, %s24
      %p4229 = scmp.lt.s32.totalorder %s23, 1
      %s4230 = scalar_select %p4229, %s23, 1
      %p4231 = scmp.lt.s32.totalorder %s4228, 31
      %s4232 = scalar_select %p4231, %s4228, 31
      %s4233 = smul.addr %s4230, 32
      %s4234 = sadd.s32 %s4232, %s4233
      %s4235 = smul.addr %s4234, 4
      %s4236 = scalar_lea.vmem %s6, %s4235
      %p4237 = scmp.lt.s32.totalorder %s23, 1
      %s4238 = scalar_select %p4237, %s23, 1
      %p4239 = scmp.lt.s32.totalorder %s24, 0
      %s4240 = scalar_select %p4239, %s24, 0
      %s4241 = sadd.s32 %s4240, %s4238
      %s4242 = smul.addr %s4241, 2
      %s4243 = scalar_lea.vmem %s7, %s4242
      // Predicated region
      $region45: #{double_conv.4} parent=43 // pred_check
        %p4244 = pneg %p214
      $region46: #{double_conv.4} parent=43 // pred_check_branch
        %4246 = sbr.rel (%p4244) target = $region48
      $region47: #{double_conv.4} parent=43 // pred_region
        %s4247 = smul.u32 32, %s24
      $region48: #{double_conv.4} parent=43 // pred_fallthru
        _
      // Predicated region
      $region49: #{double_conv.4} parent=43 // pred_check
        %p4248 = pneg %p242
      $region50: #{double_conv.4} parent=43 // pred_check_branch
        %4250 = sbr.rel (%p4248) target = $region52
      $region51: #{double_conv.4} parent=43 // pred_region
        _
      $region52: #{double_conv.4} parent=43 // pred_fallthru
        _
    $region44: #{double_conv.4} parent=5 // pred_fallthru
      _
    %p4251 = scmp.le.s32.totalorder 2, %s14
    // Predicated region
    $region53: #{double_conv.4} parent=5 // pred_check
      %p4252 = pneg %p4251
    $region54: #{double_conv.4} parent=5 // pred_check_branch
      %4254 = sbr.rel (%p4252) target = $region56
    $region55: #{double_conv.4} parent=5 // pred_region
      %s4255 = ssub.s32 %s14, 2
      // Predicated region
      $region57: #{double_conv.4} parent=55 // pred_check
        %p4256 = pneg %p220
      $region58: #{double_conv.4} parent=55 // pred_check_branch
        %4258 = sbr.rel (%p4256) target = $region60
      $region59: #{double_conv.4} parent=55 // pred_region
        %s4259 = smul.u32 32, %s26
        %p4260 = scmp.lt.s32.totalorder %s25, 1
        %s4261 = scalar_select %p4260, %s25, 1
        %p4262 = scmp.lt.s32.totalorder %s4259, 31
        %s4263 = scalar_select %p4262, %s4259, 31
        %s4264 = smul.addr %s4261, 32
        %s4265 = sadd.s32 %s4263, %s4264
        %s4266 = smul.addr %s4265, 4
        %s4267 = scalar_lea.vmem %s6, %s4266
      $region60: #{double_conv.4} parent=55 // pred_fallthru
        _
      // Predicated region
      $region61: #{double_conv.4} parent=55 // pred_check
        %p4268 = pneg %p248
      $region62: #{double_conv.4} parent=55 // pred_check_branch
        %4270 = sbr.rel (%p4268) target = $region64
      $region63: #{double_conv.4} parent=55 // pred_region
        %p4271 = scmp.lt.s32.totalorder %s25, 1
        %s4272 = scalar_select %p4271, %s25, 1
        %p4273 = scmp.lt.s32.totalorder %s26, 0
        %s4274 = scalar_select %p4273, %s26, 0
        %s4275 = sadd.s32 %s4274, %s4272
        %s4276 = smul.addr %s4275, 2
        %s4277 = scalar_lea.vmem %s7, %s4276
      $region64: #{double_conv.4} parent=55 // pred_fallthru
        _
    $region56: #{double_conv.4} parent=5 // pred_fallthru
      _
  $region6: #{double_conv.4} parent=0 // loop_footer
    %s18 = sadd.s32 1, %s14
  $region7: #{double_conv.4} parent=0 // loop_footer_branch
    %13 = sbr.rel target = $region3
  $region8: #{double_conv.4} parent=0 // loop_exit
    _

</llo_original>
